<compile_context>
chip_gen: v7x
topology: tpu7x:2x2x1
jax: 0.10.0
libtpu: 0.0.40
codegen_flags: <defaults>
</compile_context>

<pallas_src>
import functools

import numpy as np
import jax
import jax.numpy as jnp
from jax import lax
from jax.experimental import pallas as pl
from jax.experimental.pallas import tpu as pltpu


# ---------------------------------------------------------------------------
# Pallas kernels
# ---------------------------------------------------------------------------
def _conv3x3_bn_kernel(x_ref, w_ref, scale_ref, shift_ref, mask_ref,
                       y_ref, sum_ref, ssq_ref, *, H, W, apply_bn_relu):
    """Fused (optional prev-stage BN+ReLU) -> 3x3 conv -> BN statistics.

    x_ref    : (1, Rf, Cin)   zero-padded, row-flattened frame, Rf=(H+3)*(W+2)
    w_ref    : (9, Cin, Cout) bf16 taps, index dy*3+dx
    scale_ref, shift_ref : (1, Cin) f32  previous-stage BN affine (identity for conv1)
    mask_ref : (1, Rf, 1) f32 1.0 at interior pixels, 0.0 at halo/junk positions
    y_ref    : (1, Rf, Cout)  raw conv output embedded in the *next* stage's frame
    sum_ref, ssq_ref : (1, 1, Cout) f32 per-image channel sum / sum of squares
    """
    Wp = W + 2                       # padded row stride
    Ry = H * Wp                      # rows carrying conv outputs (incl. 2 junk cols/row)
    off_out = Wp + 1                 # frame offset of output pixel (0,0) -> padded (1,1)
    Rf = y_ref.shape[1]
    Cout = y_ref.shape[2]

    x = x_ref[0]                     # (Rf, Cin) f32
    mask = mask_ref[0]               # (Rf, 1)  f32

    if apply_bn_relu:
        # Previous-stage BatchNorm + ReLU; re-zero the halo afterwards (BN(0) != 0).
        x = jnp.maximum(x * scale_ref[...] + shift_ref[...], 0.0) * mask

    xb = x.astype(jnp.bfloat16)      # MXU-native operands, f32 accumulation below.

    acc = jnp.zeros((Ry, Cout), jnp.float32)
    for dy in range(3):
        for dx in range(3):
            off = dy * Wp + dx       # static sublane offset of this tap
            acc = acc + jnp.dot(xb[off:off + Ry, :], w_ref[dy * 3 + dx],
                                preferred_element_type=jnp.float32)

    # Zero the 2 junk columns per row (they alias the next frame's halo slots).
    acc = acc * mask[off_out:off_out + Ry, :]

    # Per-image BatchNorm statistics; zeroed halo/junk positions contribute exactly 0.
    sum_ref[0] = jnp.sum(acc, axis=0, keepdims=True)
    ssq_ref[0] = jnp.sum(acc * acc, axis=0, keepdims=True)

    # Store the raw conv output already embedded in the next stage's padded frame.
    y_ref[0, 0:off_out, :] = jnp.zeros((off_out, Cout), y_ref.dtype)
    y_ref[0, off_out:off_out + Ry, :] = acc.astype(y_ref.dtype)
    y_ref[0, off_out + Ry:Rf, :] = jnp.zeros((Rf - off_out - Ry, Cout), y_ref.dtype)


def _bn_relu_kernel(x_ref, scale_ref, shift_ref, o_ref):
    # Lane-dense elementwise: x/o: (1, H+3, (W+2)*C); scale/shift: (1, (W+2)*C).
    o_ref[0] = jnp.maximum(x_ref[0] * scale_ref[...] + shift_ref[...], 0.0)


# ---------------------------------------------------------------------------
# Wrappers
# ---------------------------------------------------------------------------
def _conv_stage(x_frame, w_hwio, scale_in, shift_in, mask, *, H, W, apply_bn_relu):
    """One stage: (optional fused BN+ReLU of input) -> conv3x3 -> raw output + stats."""
    N, Rf, Cin = x_frame.shape
    Cout = w_hwio.shape[-1]
    w9 = w_hwio.reshape(9, Cin, Cout).astype(jnp.bfloat16)
    kernel = functools.partial(_conv3x3_bn_kernel, H=H, W=W,
                               apply_bn_relu=apply_bn_relu)
    return pl.pallas_call(
        kernel,
        out_shape=(
            jax.ShapeDtypeStruct((N, Rf, Cout), jnp.float32),
            jax.ShapeDtypeStruct((N, 1, Cout), jnp.float32),
            jax.ShapeDtypeStruct((N, 1, Cout), jnp.float32),
        ),
        grid=(N,),
        in_specs=[
            pl.BlockSpec((1, Rf, Cin), lambda n: (n, 0, 0)),
            pl.BlockSpec((9, Cin, Cout), lambda n: (0, 0, 0)),   # resident weights
            pl.BlockSpec((1, Cin), lambda n: (0, 0)),
            pl.BlockSpec((1, Cin), lambda n: (0, 0)),
            pl.BlockSpec((1, Rf, 1), lambda n: (0, 0, 0)),
        ],
        out_specs=(
            pl.BlockSpec((1, Rf, Cout), lambda n: (n, 0, 0)),
            pl.BlockSpec((1, 1, Cout), lambda n: (n, 0, 0)),
            pl.BlockSpec((1, 1, Cout), lambda n: (n, 0, 0)),
        ),
        compiler_params=pltpu.CompilerParams(dimension_semantics=("parallel",)),
    )(x_frame, w9, scale_in, shift_in, mask)


def _bn_relu_stage(raw_frame, scale, shift, *, H, W):
    """Final BN+ReLU on a lane-dense (N, H+3, (W+2)*C) view of the padded frame."""
    N, Rf, C = raw_frame.shape
    Wp, Hp = W + 2, H + 3
    x = raw_frame.reshape(N, Hp, Wp * C)                 # contiguous -> free reshape
    scale_t = jnp.tile(scale, Wp).reshape(1, Wp * C)
    shift_t = jnp.tile(shift, Wp).reshape(1, Wp * C)
    return pl.pallas_call(
        _bn_relu_kernel,
        out_shape=jax.ShapeDtypeStruct((N, Hp, Wp * C), jnp.float32),
        grid=(N,),
        in_specs=[
            pl.BlockSpec((1, Hp, Wp * C), lambda n: (n, 0, 0)),
            pl.BlockSpec((1, Wp * C), lambda n: (0, 0)),
            pl.BlockSpec((1, Wp * C), lambda n: (0, 0)),
        ],
        out_specs=pl.BlockSpec((1, Hp, Wp * C), lambda n: (n, 0, 0)),
        compiler_params=pltpu.CompilerParams(dimension_semantics=("parallel",)),
    )(x, scale_t, shift_t)


def _to_frame(x_nhwc):
    """(N,H,W,C) -> zero-padded, row-flattened frame (N, (H+3)*(W+2), C).

    One extra bottom row (H+3 instead of H+2) keeps the shifted tap slices for the
    junk columns in-bounds; those positions are masked to zero anyway.
    """
    N, H, W, C = x_nhwc.shape
    xp = jnp.pad(x_nhwc, ((0, 0), (1, 2), (1, 1), (0, 0)))
    return xp.reshape(N, (H + 3) * (W + 2), C)


def _interior_mask(H, W):
    """(1, (H+3)*(W+2), 1) mask: 1.0 on real pixels, 0.0 on halo / extra rows."""
    m = np.zeros((H + 3, W + 2, 1), np.float32)
    m[1:H + 1, 1:W + 1, :] = 1.0
    return jnp.asarray(m.reshape(1, (H + 3) * (W + 2), 1))


def _bn_affine(sums, ssqs, gamma, beta, count, eps):
    """Finalize training-mode BN from per-image sum/sumsq -> per-channel scale/shift."""
    s = jnp.sum(sums, axis=(0, 1))           # (C,)
    q = jnp.sum(ssqs, axis=(0, 1))           # (C,)
    mean = s / count
    var = q / count - mean * mean            # biased variance (PyTorch BN normalization)
    scale = gamma * lax.rsqrt(var + eps)
    shift = beta - mean * scale
    return scale, shift


def inconv_forward(x_nchw, params, eps=1e-5):
    """inconv forward: (conv3x3 -> BatchNorm(batch stats) -> ReLU) * 2. NCHW in/out."""
    N, Cin, H, W = x_nchw.shape
    Cout = params["w1"].shape[-1]

    x = jnp.transpose(x_nchw, (0, 2, 3, 1)).astype(jnp.float32)   # NCHW -> NHWC
    xf = _to_frame(x)                                             # (N, Rf, Cin)
    mask = _interior_mask(H, W)                                   # (1, Rf, 1)
    count = N * H * W

    # Stage 1: conv1 + BN1 statistics.  (Conv bias cancels exactly in batch-stat BN.)
    one = jnp.ones((1, Cin), jnp.float32)
    zero = jnp.zeros((1, Cin), jnp.float32)
    raw1, s1, q1 = _conv_stage(xf, params["w1"], one, zero, mask,
                               H=H, W=W, apply_bn_relu=False)
    scale1, shift1 = _bn_affine(s1, q1, params["g1"], params["be1"], count, eps)

    # Stage 2: BN1+ReLU fused into conv2's input path; conv2 + BN2 statistics.
    raw2, s2, q2 = _conv_stage(raw1, params["w2"],
                               scale1.reshape(1, Cout), shift1.reshape(1, Cout),
                               mask, H=H, W=W, apply_bn_relu=True)
    scale2, shift2 = _bn_affine(s2, q2, params["g2"], params["be2"], count, eps)

    # Final BN2 + ReLU (lane-dense).  Halo positions compute garbage but are sliced
    # away below before any result or statistic uses them.
    out_frame = _bn_relu_stage(raw2, scale2, shift2, H=H, W=W)
    out = out_frame.reshape(N, H + 3, W + 2, Cout)[:, 1:H + 1, 1:W + 1, :]
    return jnp.transpose(out, (0, 3, 1, 2))                        # NHWC -> NCHW


# ---------------------------------------------------------------------------
# Deterministic parameter init (shapes from nn.Conv2d / BatchNorm2d)
# ---------------------------------------------------------------------------
def init_params(key, in_ch, out_ch):
    ks = jax.random.split(key, 8)

    def conv_w(k, cin, cout):
        fan_in = cin * 9
        return jax.random.normal(k, (3, 3, cin, cout), jnp.float32) / jnp.sqrt(fan_in)

    return {
        "w1": conv_w(ks[0], in_ch, out_ch),
        "b1": 0.01 * jax.random.normal(ks[1], (out_ch,), jnp.float32),
        "g1": 1.0 + 0.1 * jax.random.normal(ks[2], (out_ch,), jnp.float32),
        "be1": 0.05 * jax.random.normal(ks[3], (out_ch,), jnp.float32),
        "w2": conv_w(ks[4], out_ch, out_ch),
        "b2": 0.01 * jax.random.normal(ks[5], (out_ch,), jnp.float32),
        "g2": 1.0 + 0.1 * jax.random.normal(ks[6], (out_ch,), jnp.float32),
        "be2": 0.05 * jax.random.normal(ks[7], (out_ch,), jnp.float32),
    }


# ---------------------------------------------------------------------------
# Pure-JAX reference (f32) for the correctness check
# ---------------------------------------------------------------------------
def _ref_forward(x_nchw, params, eps=1e-5):
    x = jnp.transpose(x_nchw, (0, 2, 3, 1)).astype(jnp.float32)

    def conv(x, w, b):
        y = lax.conv_general_dilated(
            x, w, window_strides=(1, 1), padding="SAME",
            dimension_numbers=("NHWC", "HWIO", "NHWC"))
        return y + b

    def bn_relu(x, g, be):
        mean = x.mean(axis=(0, 1, 2))
        var = x.var(axis=(0, 1, 2))
        y = (x - mean) / jnp.sqrt(var + eps) * g + be
        return jnp.maximum(y, 0.0)

    h = bn_relu(conv(x, params["w1"], params["b1"]), params["g1"], params["be1"])
    h = bn_relu(conv(h, params["w2"], params["b2"]), params["g2"], params["be2"])
    return jnp.transpose(h, (0, 3, 1, 2))


# ---------------------------------------------------------------------------
if __name__ == "__main__":
    key = jax.random.PRNGKey(0)
    k_x, k_p = jax.random.split(key)

    N, Cin, H, W = 2, 4, 16, 16
    Cout = 32

    x = jax.random.normal(k_x, (N, Cin, H, W), jnp.float32)
    params = init_params(k_p, Cin, Cout)

    fwd = jax.jit(inconv_forward)
    out = jax.block_until_ready(fwd(x, params))
    assert out.shape == (N, Cout, H, W), out.shape

    ref = jax.block_until_ready(_ref_forward(x, params))
    max_err = float(jnp.max(jnp.abs(out - ref)))
    # bf16 MXU operands (f32 accumulation) vs. pure-f32 reference -> ~1e-2 deviations.
    assert jnp.allclose(out, ref, atol=3e-2, rtol=3e-2), max_err

    print("KERNEL_OK")
</pallas_src>

<mosaic_0001>
module attributes {stable_mosaic.version = 11 : i64} {
  func.func @_conv3x3_bn_kernel(%arg0: i32, %arg1: memref<1x342x4xf32, #tpu.memory_space<vmem>>, %arg2: memref<9x4x32xbf16, #tpu.memory_space<vmem>>, %arg3: memref<1x4xf32, #tpu.memory_space<vmem>>, %arg4: memref<1x4xf32, #tpu.memory_space<vmem>>, %arg5: memref<1x342x1xf32, #tpu.memory_space<vmem>>, %arg6: memref<1x342x32xf32, #tpu.memory_space<vmem>>, %arg7: memref<1x1x32xf32, #tpu.memory_space<vmem>>, %arg8: memref<1x1x32xf32, #tpu.memory_space<vmem>>) attributes {dimension_semantics = [#tpu.dimension_semantics<parallel>], iteration_bounds = array<i64: 2>, scalar_prefetch = 0 : i64, scratch_operands = 0 : i64, tpu.core_type = #tpu.core_type<tc>, window_params = [{transform_indices = @transform_0, window_bounds = array<i64: 1, 342, 4>}, {pipeline_mode = #tpu.pipeline_mode<synchronous>, transform_indices = @transform_1, window_bounds = array<i64: 9, 4, 32>}, {pipeline_mode = #tpu.pipeline_mode<synchronous>, transform_indices = @transform_2, window_bounds = array<i64: 1, 4>}, {pipeline_mode = #tpu.pipeline_mode<synchronous>, transform_indices = @transform_3, window_bounds = array<i64: 1, 4>}, {pipeline_mode = #tpu.pipeline_mode<synchronous>, transform_indices = @transform_4, window_bounds = array<i64: 1, 342, 1>}, {transform_indices = @transform_5, window_bounds = array<i64: 1, 342, 32>}, {transform_indices = @transform_6, window_bounds = array<i64: 1, 1, 32>}, {transform_indices = @transform_7, window_bounds = array<i64: 1, 1, 32>}]} {
    %c0 = arith.constant 0 : index
    %c0_0 = arith.constant 0 : index
    %c0_1 = arith.constant 0 : index
    %0 = vector.load %arg1[%c0, %c0_0, %c0_1] : memref<1x342x4xf32, #tpu.memory_space<vmem>>, vector<1x342x4xf32>
    %1 = vector.shape_cast %0 : vector<1x342x4xf32> to vector<342x4xf32>
    %c0_2 = arith.constant 0 : index
    %c0_3 = arith.constant 0 : index
    %c0_4 = arith.constant 0 : index
    %2 = vector.load %arg5[%c0_2, %c0_3, %c0_4] : memref<1x342x1xf32, #tpu.memory_space<vmem>>, vector<1x342x1xf32>
    %3 = vector.shape_cast %2 : vector<1x342x1xf32> to vector<342x1xf32>
    %4 = arith.truncf %1 : vector<342x4xf32> to vector<342x4xbf16>
    %cst = arith.constant 0.000000e+00 : f32
    %5 = vector.broadcast %cst : f32 to vector<288x32xf32>
    %6 = vector.extract_strided_slice %4 {offsets = [0, 0], sizes = [288, 4], strides = [1, 1]} : vector<342x4xbf16> to vector<288x4xbf16>
    %c0_5 = arith.constant 0 : index
    %c0_6 = arith.constant 0 : index
    %c0_7 = arith.constant 0 : index
    %7 = vector.load %arg2[%c0_5, %c0_6, %c0_7] : memref<9x4x32xbf16, #tpu.memory_space<vmem>>, vector<1x4x32xbf16>
    %8 = vector.shape_cast %7 : vector<1x4x32xbf16> to vector<4x32xbf16>
    %cst_8 = arith.constant dense<0.000000e+00> : vector<288x32xf32>
    %9 = tpu.matmul %6, %8, %cst_8 {dimension_numbers = #tpu.dot_dimension_numbers<[1], [0], [0], [1], [0, 0, 1, 1], [], []>} : vector<288x4xbf16>, vector<4x32xbf16>, vector<288x32xf32> -> vector<288x32xf32>
    %10 = arith.addf %5, %9 : vector<288x32xf32>
    %11 = vector.extract_strided_slice %4 {offsets = [1, 0], sizes = [288, 4], strides = [1, 1]} : vector<342x4xbf16> to vector<288x4xbf16>
    %c1 = arith.constant 1 : index
    %c0_9 = arith.constant 0 : index
    %c0_10 = arith.constant 0 : index
    %12 = vector.load %arg2[%c1, %c0_9, %c0_10] : memref<9x4x32xbf16, #tpu.memory_space<vmem>>, vector<1x4x32xbf16>
    %13 = vector.shape_cast %12 : vector<1x4x32xbf16> to vector<4x32xbf16>
    %cst_11 = arith.constant dense<0.000000e+00> : vector<288x32xf32>
    %14 = tpu.matmul %11, %13, %cst_11 {dimension_numbers = #tpu.dot_dimension_numbers<[1], [0], [0], [1], [0, 0, 1, 1], [], []>} : vector<288x4xbf16>, vector<4x32xbf16>, vector<288x32xf32> -> vector<288x32xf32>
    %15 = arith.addf %10, %14 : vector<288x32xf32>
    %16 = vector.extract_strided_slice %4 {offsets = [2, 0], sizes = [288, 4], strides = [1, 1]} : vector<342x4xbf16> to vector<288x4xbf16>
    %c2 = arith.constant 2 : index
    %c0_12 = arith.constant 0 : index
    %c0_13 = arith.constant 0 : index
    %17 = vector.load %arg2[%c2, %c0_12, %c0_13] : memref<9x4x32xbf16, #tpu.memory_space<vmem>>, vector<1x4x32xbf16>
    %18 = vector.shape_cast %17 : vector<1x4x32xbf16> to vector<4x32xbf16>
    %cst_14 = arith.constant dense<0.000000e+00> : vector<288x32xf32>
    %19 = tpu.matmul %16, %18, %cst_14 {dimension_numbers = #tpu.dot_dimension_numbers<[1], [0], [0], [1], [0, 0, 1, 1], [], []>} : vector<288x4xbf16>, vector<4x32xbf16>, vector<288x32xf32> -> vector<288x32xf32>
    %20 = arith.addf %15, %19 : vector<288x32xf32>
    %21 = vector.extract_strided_slice %4 {offsets = [18, 0], sizes = [288, 4], strides = [1, 1]} : vector<342x4xbf16> to vector<288x4xbf16>
    %c3 = arith.constant 3 : index
    %c0_15 = arith.constant 0 : index
    %c0_16 = arith.constant 0 : index
    %22 = vector.load %arg2[%c3, %c0_15, %c0_16] : memref<9x4x32xbf16, #tpu.memory_space<vmem>>, vector<1x4x32xbf16>
    %23 = vector.shape_cast %22 : vector<1x4x32xbf16> to vector<4x32xbf16>
    %cst_17 = arith.constant dense<0.000000e+00> : vector<288x32xf32>
    %24 = tpu.matmul %21, %23, %cst_17 {dimension_numbers = #tpu.dot_dimension_numbers<[1], [0], [0], [1], [0, 0, 1, 1], [], []>} : vector<288x4xbf16>, vector<4x32xbf16>, vector<288x32xf32> -> vector<288x32xf32>
    %25 = arith.addf %20, %24 : vector<288x32xf32>
    %26 = vector.extract_strided_slice %4 {offsets = [19, 0], sizes = [288, 4], strides = [1, 1]} : vector<342x4xbf16> to vector<288x4xbf16>
    %c4 = arith.constant 4 : index
    %c0_18 = arith.constant 0 : index
    %c0_19 = arith.constant 0 : index
    %27 = vector.load %arg2[%c4, %c0_18, %c0_19] : memref<9x4x32xbf16, #tpu.memory_space<vmem>>, vector<1x4x32xbf16>
    %28 = vector.shape_cast %27 : vector<1x4x32xbf16> to vector<4x32xbf16>
    %cst_20 = arith.constant dense<0.000000e+00> : vector<288x32xf32>
    %29 = tpu.matmul %26, %28, %cst_20 {dimension_numbers = #tpu.dot_dimension_numbers<[1], [0], [0], [1], [0, 0, 1, 1], [], []>} : vector<288x4xbf16>, vector<4x32xbf16>, vector<288x32xf32> -> vector<288x32xf32>
    %30 = arith.addf %25, %29 : vector<288x32xf32>
    %31 = vector.extract_strided_slice %4 {offsets = [20, 0], sizes = [288, 4], strides = [1, 1]} : vector<342x4xbf16> to vector<288x4xbf16>
    %c5 = arith.constant 5 : index
    %c0_21 = arith.constant 0 : index
    %c0_22 = arith.constant 0 : index
    %32 = vector.load %arg2[%c5, %c0_21, %c0_22] : memref<9x4x32xbf16, #tpu.memory_space<vmem>>, vector<1x4x32xbf16>
    %33 = vector.shape_cast %32 : vector<1x4x32xbf16> to vector<4x32xbf16>
    %cst_23 = arith.constant dense<0.000000e+00> : vector<288x32xf32>
    %34 = tpu.matmul %31, %33, %cst_23 {dimension_numbers = #tpu.dot_dimension_numbers<[1], [0], [0], [1], [0, 0, 1, 1], [], []>} : vector<288x4xbf16>, vector<4x32xbf16>, vector<288x32xf32> -> vector<288x32xf32>
    %35 = arith.addf %30, %34 : vector<288x32xf32>
    %36 = vector.extract_strided_slice %4 {offsets = [36, 0], sizes = [288, 4], strides = [1, 1]} : vector<342x4xbf16> to vector<288x4xbf16>
    %c6 = arith.constant 6 : index
    %c0_24 = arith.constant 0 : index
    %c0_25 = arith.constant 0 : index
    %37 = vector.load %arg2[%c6, %c0_24, %c0_25] : memref<9x4x32xbf16, #tpu.memory_space<vmem>>, vector<1x4x32xbf16>
    %38 = vector.shape_cast %37 : vector<1x4x32xbf16> to vector<4x32xbf16>
    %cst_26 = arith.constant dense<0.000000e+00> : vector<288x32xf32>
    %39 = tpu.matmul %36, %38, %cst_26 {dimension_numbers = #tpu.dot_dimension_numbers<[1], [0], [0], [1], [0, 0, 1, 1], [], []>} : vector<288x4xbf16>, vector<4x32xbf16>, vector<288x32xf32> -> vector<288x32xf32>
    %40 = arith.addf %35, %39 : vector<288x32xf32>
    %41 = vector.extract_strided_slice %4 {offsets = [37, 0], sizes = [288, 4], strides = [1, 1]} : vector<342x4xbf16> to vector<288x4xbf16>
    %c7 = arith.constant 7 : index
    %c0_27 = arith.constant 0 : index
    %c0_28 = arith.constant 0 : index
    %42 = vector.load %arg2[%c7, %c0_27, %c0_28] : memref<9x4x32xbf16, #tpu.memory_space<vmem>>, vector<1x4x32xbf16>
    %43 = vector.shape_cast %42 : vector<1x4x32xbf16> to vector<4x32xbf16>
    %cst_29 = arith.constant dense<0.000000e+00> : vector<288x32xf32>
    %44 = tpu.matmul %41, %43, %cst_29 {dimension_numbers = #tpu.dot_dimension_numbers<[1], [0], [0], [1], [0, 0, 1, 1], [], []>} : vector<288x4xbf16>, vector<4x32xbf16>, vector<288x32xf32> -> vector<288x32xf32>
    %45 = arith.addf %40, %44 : vector<288x32xf32>
    %46 = vector.extract_strided_slice %4 {offsets = [38, 0], sizes = [288, 4], strides = [1, 1]} : vector<342x4xbf16> to vector<288x4xbf16>
    %c8 = arith.constant 8 : index
    %c0_30 = arith.constant 0 : index
    %c0_31 = arith.constant 0 : index
    %47 = vector.load %arg2[%c8, %c0_30, %c0_31] : memref<9x4x32xbf16, #tpu.memory_space<vmem>>, vector<1x4x32xbf16>
    %48 = vector.shape_cast %47 : vector<1x4x32xbf16> to vector<4x32xbf16>
    %cst_32 = arith.constant dense<0.000000e+00> : vector<288x32xf32>
    %49 = tpu.matmul %46, %48, %cst_32 {dimension_numbers = #tpu.dot_dimension_numbers<[1], [0], [0], [1], [0, 0, 1, 1], [], []>} : vector<288x4xbf16>, vector<4x32xbf16>, vector<288x32xf32> -> vector<288x32xf32>
    %50 = arith.addf %45, %49 : vector<288x32xf32>
    %51 = vector.extract_strided_slice %3 {offsets = [19, 0], sizes = [288, 1], strides = [1, 1]} : vector<342x1xf32> to vector<288x1xf32>
    %52 = vector.broadcast %51 : vector<288x1xf32> to vector<288x32xf32>
    %53 = arith.mulf %50, %52 : vector<288x32xf32>
    %cst_33 = arith.constant dense<0.000000e+00> : vector<32xf32>
    %54 = vector.multi_reduction <add>, %53, %cst_33 [0] : vector<288x32xf32> to vector<32xf32>
    %55 = vector.shape_cast %54 : vector<32xf32> to vector<1x32xf32>
    %c0_34 = arith.constant 0 : index
    %c0_35 = arith.constant 0 : index
    %c0_36 = arith.constant 0 : index
    %56 = vector.load %arg7[%c0_34, %c0_35, %c0_36] : memref<1x1x32xf32, #tpu.memory_space<vmem>>, vector<1x1x32xf32>
    %57 = vector.shape_cast %56 : vector<1x1x32xf32> to vector<1x32xf32>
    %58 = vector.shape_cast %55 : vector<1x32xf32> to vector<1x1x32xf32>
    tpu.vector_store %arg7[%c0_34, %c0_35, %c0_36], %58 {strides = array<i32>} : memref<1x1x32xf32, #tpu.memory_space<vmem>>, vector<1x1x32xf32>,
    %59 = arith.mulf %53, %53 : vector<288x32xf32>
    %cst_37 = arith.constant dense<0.000000e+00> : vector<32xf32>
    %60 = vector.multi_reduction <add>, %59, %cst_37 [0] : vector<288x32xf32> to vector<32xf32>
    %61 = vector.shape_cast %60 : vector<32xf32> to vector<1x32xf32>
    %c0_38 = arith.constant 0 : index
    %c0_39 = arith.constant 0 : index
    %c0_40 = arith.constant 0 : index
    %62 = vector.load %arg8[%c0_38, %c0_39, %c0_40] : memref<1x1x32xf32, #tpu.memory_space<vmem>>, vector<1x1x32xf32>
    %63 = vector.shape_cast %62 : vector<1x1x32xf32> to vector<1x32xf32>
    %64 = vector.shape_cast %61 : vector<1x32xf32> to vector<1x1x32xf32>
    tpu.vector_store %arg8[%c0_38, %c0_39, %c0_40], %64 {strides = array<i32>} : memref<1x1x32xf32, #tpu.memory_space<vmem>>, vector<1x1x32xf32>,
    %cst_41 = arith.constant 0.000000e+00 : f32
    %65 = vector.broadcast %cst_41 : f32 to vector<19x32xf32>
    %c0_42 = arith.constant 0 : index
    %c0_43 = arith.constant 0 : index
    %c0_44 = arith.constant 0 : index
    %66 = vector.load %arg6[%c0_42, %c0_43, %c0_44] : memref<1x342x32xf32, #tpu.memory_space<vmem>>, vector<1x19x32xf32>
    %67 = vector.shape_cast %66 : vector<1x19x32xf32> to vector<19x32xf32>
    %68 = vector.shape_cast %65 : vector<19x32xf32> to vector<1x19x32xf32>
    tpu.vector_store %arg6[%c0_42, %c0_43, %c0_44], %68 {strides = array<i32>} : memref<1x342x32xf32, #tpu.memory_space<vmem>>, vector<1x19x32xf32>,
    %c0_45 = arith.constant 0 : index
    %c19 = arith.constant 19 : index
    %c0_46 = arith.constant 0 : index
    %69 = vector.load %arg6[%c0_45, %c19, %c0_46] : memref<1x342x32xf32, #tpu.memory_space<vmem>>, vector<1x288x32xf32>
    %70 = vector.shape_cast %69 : vector<1x288x32xf32> to vector<288x32xf32>
    %71 = vector.shape_cast %53 : vector<288x32xf32> to vector<1x288x32xf32>
    tpu.vector_store %arg6[%c0_45, %c19, %c0_46], %71 {strides = array<i32>} : memref<1x342x32xf32, #tpu.memory_space<vmem>>, vector<1x288x32xf32>,
    %cst_47 = arith.constant 0.000000e+00 : f32
    %72 = vector.broadcast %cst_47 : f32 to vector<35x32xf32>
    %c0_48 = arith.constant 0 : index
    %c307 = arith.constant 307 : index
    %c0_49 = arith.constant 0 : index
    %73 = vector.load %arg6[%c0_48, %c307, %c0_49] : memref<1x342x32xf32, #tpu.memory_space<vmem>>, vector<1x35x32xf32>
    %74 = vector.shape_cast %73 : vector<1x35x32xf32> to vector<35x32xf32>
    %75 = vector.shape_cast %72 : vector<35x32xf32> to vector<1x35x32xf32>
    tpu.vector_store %arg6[%c0_48, %c307, %c0_49], %75 {strides = array<i32>} : memref<1x342x32xf32, #tpu.memory_space<vmem>>, vector<1x35x32xf32>,
    return
  }
  func.func @transform_0(%arg0: i32) -> (i32, i32, i32) {
    %c0_i32 = arith.constant 0 : i32
    %c0_i32_0 = arith.constant 0 : i32
    %c0_i32_1 = arith.constant 0 : i32
    return %arg0, %c0_i32, %c0_i32_0 : i32, i32, i32
  }
  func.func @transform_1(%arg0: i32) -> (i32, i32, i32) {
    %c0_i32 = arith.constant 0 : i32
    %c0_i32_0 = arith.constant 0 : i32
    %c0_i32_1 = arith.constant 0 : i32
    %c0_i32_2 = arith.constant 0 : i32
    return %c0_i32, %c0_i32_0, %c0_i32_1 : i32, i32, i32
  }
  func.func @transform_2(%arg0: i32) -> (i32, i32) {
    %c0_i32 = arith.constant 0 : i32
    %c0_i32_0 = arith.constant 0 : i32
    %c0_i32_1 = arith.constant 0 : i32
    return %c0_i32, %c0_i32_0 : i32, i32
  }
  func.func @transform_3(%arg0: i32) -> (i32, i32) {
    %c0_i32 = arith.constant 0 : i32
    %c0_i32_0 = arith.constant 0 : i32
    %c0_i32_1 = arith.constant 0 : i32
    return %c0_i32, %c0_i32_0 : i32, i32
  }
  func.func @transform_4(%arg0: i32) -> (i32, i32, i32) {
    %c0_i32 = arith.constant 0 : i32
    %c0_i32_0 = arith.constant 0 : i32
    %c0_i32_1 = arith.constant 0 : i32
    %c0_i32_2 = arith.constant 0 : i32
    return %c0_i32, %c0_i32_0, %c0_i32_1 : i32, i32, i32
  }
  func.func @transform_5(%arg0: i32) -> (i32, i32, i32) {
    %c0_i32 = arith.constant 0 : i32
    %c0_i32_0 = arith.constant 0 : i32
    %c0_i32_1 = arith.constant 0 : i32
    return %arg0, %c0_i32, %c0_i32_0 : i32, i32, i32
  }
  func.func @transform_6(%arg0: i32) -> (i32, i32, i32) {
    %c0_i32 = arith.constant 0 : i32
    %c0_i32_0 = arith.constant 0 : i32
    %c0_i32_1 = arith.constant 0 : i32
    return %arg0, %c0_i32, %c0_i32_0 : i32, i32, i32
  }
  func.func @transform_7(%arg0: i32) -> (i32, i32, i32) {
    %c0_i32 = arith.constant 0 : i32
    %c0_i32_0 = arith.constant 0 : i32
    %c0_i32_1 = arith.constant 0 : i32
    return %arg0, %c0_i32, %c0_i32_0 : i32, i32, i32
  }
}

module attributes {stable_mosaic.version = 11 : i64} {
  func.func @_conv3x3_bn_kernel(%arg0: i32, %arg1: memref<1x342x32xf32, #tpu.memory_space<vmem>>, %arg2: memref<9x32x32xbf16, #tpu.memory_space<vmem>>, %arg3: memref<1x32xf32, #tpu.memory_space<vmem>>, %arg4: memref<1x32xf32, #tpu.memory_space<vmem>>, %arg5: memref<1x342x1xf32, #tpu.memory_space<vmem>>, %arg6: memref<1x342x32xf32, #tpu.memory_space<vmem>>, %arg7: memref<1x1x32xf32, #tpu.memory_space<vmem>>, %arg8: memref<1x1x32xf32, #tpu.memory_space<vmem>>) attributes {dimension_semantics = [#tpu.dimension_semantics<parallel>], iteration_bounds = array<i64: 2>, scalar_prefetch = 0 : i64, scratch_operands = 0 : i64, tpu.core_type = #tpu.core_type<tc>, window_params = [{transform_indices = @transform_0, window_bounds = array<i64: 1, 342, 32>}, {pipeline_mode = #tpu.pipeline_mode<synchronous>, transform_indices = @transform_1, window_bounds = array<i64: 9, 32, 32>}, {pipeline_mode = #tpu.pipeline_mode<synchronous>, transform_indices = @transform_2, window_bounds = array<i64: 1, 32>}, {pipeline_mode = #tpu.pipeline_mode<synchronous>, transform_indices = @transform_3, window_bounds = array<i64: 1, 32>}, {pipeline_mode = #tpu.pipeline_mode<synchronous>, transform_indices = @transform_4, window_bounds = array<i64: 1, 342, 1>}, {transform_indices = @transform_5, window_bounds = array<i64: 1, 342, 32>}, {transform_indices = @transform_6, window_bounds = array<i64: 1, 1, 32>}, {transform_indices = @transform_7, window_bounds = array<i64: 1, 1, 32>}]} {
    %c0 = arith.constant 0 : index
    %c0_0 = arith.constant 0 : index
    %c0_1 = arith.constant 0 : index
    %0 = vector.load %arg1[%c0, %c0_0, %c0_1] : memref<1x342x32xf32, #tpu.memory_space<vmem>>, vector<1x342x32xf32>
    %1 = vector.shape_cast %0 : vector<1x342x32xf32> to vector<342x32xf32>
    %c0_2 = arith.constant 0 : index
    %c0_3 = arith.constant 0 : index
    %c0_4 = arith.constant 0 : index
    %2 = vector.load %arg5[%c0_2, %c0_3, %c0_4] : memref<1x342x1xf32, #tpu.memory_space<vmem>>, vector<1x342x1xf32>
    %3 = vector.shape_cast %2 : vector<1x342x1xf32> to vector<342x1xf32>
    %c0_5 = arith.constant 0 : index
    %c0_6 = arith.constant 0 : index
    %4 = vector.load %arg3[%c0_5, %c0_6] : memref<1x32xf32, #tpu.memory_space<vmem>>, vector<1x32xf32>
    %5 = vector.broadcast %4 : vector<1x32xf32> to vector<342x32xf32>
    %6 = arith.mulf %1, %5 : vector<342x32xf32>
    %c0_7 = arith.constant 0 : index
    %c0_8 = arith.constant 0 : index
    %7 = vector.load %arg4[%c0_7, %c0_8] : memref<1x32xf32, #tpu.memory_space<vmem>>, vector<1x32xf32>
    %8 = vector.broadcast %7 : vector<1x32xf32> to vector<342x32xf32>
    %9 = arith.addf %6, %8 : vector<342x32xf32>
    %cst = arith.constant 0.000000e+00 : f32
    %10 = vector.broadcast %cst : f32 to vector<342x32xf32>
    %11 = arith.maximumf %9, %10 : vector<342x32xf32>
    %12 = vector.broadcast %3 : vector<342x1xf32> to vector<342x32xf32>
    %13 = arith.mulf %11, %12 : vector<342x32xf32>
    %14 = arith.truncf %13 : vector<342x32xf32> to vector<342x32xbf16>
    %cst_9 = arith.constant 0.000000e+00 : f32
    %15 = vector.broadcast %cst_9 : f32 to vector<288x32xf32>
    %16 = vector.extract_strided_slice %14 {offsets = [0, 0], sizes = [288, 32], strides = [1, 1]} : vector<342x32xbf16> to vector<288x32xbf16>
    %c0_10 = arith.constant 0 : index
    %c0_11 = arith.constant 0 : index
    %c0_12 = arith.constant 0 : index
    %17 = vector.load %arg2[%c0_10, %c0_11, %c0_12] : memref<9x32x32xbf16, #tpu.memory_space<vmem>>, vector<1x32x32xbf16>
    %18 = vector.shape_cast %17 : vector<1x32x32xbf16> to vector<32x32xbf16>
    %cst_13 = arith.constant dense<0.000000e+00> : vector<288x32xf32>
    %19 = tpu.matmul %16, %18, %cst_13 {dimension_numbers = #tpu.dot_dimension_numbers<[1], [0], [0], [1], [0, 0, 1, 1], [], []>} : vector<288x32xbf16>, vector<32x32xbf16>, vector<288x32xf32> -> vector<288x32xf32>
    %20 = arith.addf %15, %19 : vector<288x32xf32>
    %21 = vector.extract_strided_slice %14 {offsets = [1, 0], sizes = [288, 32], strides = [1, 1]} : vector<342x32xbf16> to vector<288x32xbf16>
    %c1 = arith.constant 1 : index
    %c0_14 = arith.constant 0 : index
    %c0_15 = arith.constant 0 : index
    %22 = vector.load %arg2[%c1, %c0_14, %c0_15] : memref<9x32x32xbf16, #tpu.memory_space<vmem>>, vector<1x32x32xbf16>
    %23 = vector.shape_cast %22 : vector<1x32x32xbf16> to vector<32x32xbf16>
    %cst_16 = arith.constant dense<0.000000e+00> : vector<288x32xf32>
    %24 = tpu.matmul %21, %23, %cst_16 {dimension_numbers = #tpu.dot_dimension_numbers<[1], [0], [0], [1], [0, 0, 1, 1], [], []>} : vector<288x32xbf16>, vector<32x32xbf16>, vector<288x32xf32> -> vector<288x32xf32>
    %25 = arith.addf %20, %24 : vector<288x32xf32>
    %26 = vector.extract_strided_slice %14 {offsets = [2, 0], sizes = [288, 32], strides = [1, 1]} : vector<342x32xbf16> to vector<288x32xbf16>
    %c2 = arith.constant 2 : index
    %c0_17 = arith.constant 0 : index
    %c0_18 = arith.constant 0 : index
    %27 = vector.load %arg2[%c2, %c0_17, %c0_18] : memref<9x32x32xbf16, #tpu.memory_space<vmem>>, vector<1x32x32xbf16>
    %28 = vector.shape_cast %27 : vector<1x32x32xbf16> to vector<32x32xbf16>
    %cst_19 = arith.constant dense<0.000000e+00> : vector<288x32xf32>
    %29 = tpu.matmul %26, %28, %cst_19 {dimension_numbers = #tpu.dot_dimension_numbers<[1], [0], [0], [1], [0, 0, 1, 1], [], []>} : vector<288x32xbf16>, vector<32x32xbf16>, vector<288x32xf32> -> vector<288x32xf32>
    %30 = arith.addf %25, %29 : vector<288x32xf32>
    %31 = vector.extract_strided_slice %14 {offsets = [18, 0], sizes = [288, 32], strides = [1, 1]} : vector<342x32xbf16> to vector<288x32xbf16>
    %c3 = arith.constant 3 : index
    %c0_20 = arith.constant 0 : index
    %c0_21 = arith.constant 0 : index
    %32 = vector.load %arg2[%c3, %c0_20, %c0_21] : memref<9x32x32xbf16, #tpu.memory_space<vmem>>, vector<1x32x32xbf16>
    %33 = vector.shape_cast %32 : vector<1x32x32xbf16> to vector<32x32xbf16>
    %cst_22 = arith.constant dense<0.000000e+00> : vector<288x32xf32>
    %34 = tpu.matmul %31, %33, %cst_22 {dimension_numbers = #tpu.dot_dimension_numbers<[1], [0], [0], [1], [0, 0, 1, 1], [], []>} : vector<288x32xbf16>, vector<32x32xbf16>, vector<288x32xf32> -> vector<288x32xf32>
    %35 = arith.addf %30, %34 : vector<288x32xf32>
    %36 = vector.extract_strided_slice %14 {offsets = [19, 0], sizes = [288, 32], strides = [1, 1]} : vector<342x32xbf16> to vector<288x32xbf16>
    %c4 = arith.constant 4 : index
    %c0_23 = arith.constant 0 : index
    %c0_24 = arith.constant 0 : index
    %37 = vector.load %arg2[%c4, %c0_23, %c0_24] : memref<9x32x32xbf16, #tpu.memory_space<vmem>>, vector<1x32x32xbf16>
    %38 = vector.shape_cast %37 : vector<1x32x32xbf16> to vector<32x32xbf16>
    %cst_25 = arith.constant dense<0.000000e+00> : vector<288x32xf32>
    %39 = tpu.matmul %36, %38, %cst_25 {dimension_numbers = #tpu.dot_dimension_numbers<[1], [0], [0], [1], [0, 0, 1, 1], [], []>} : vector<288x32xbf16>, vector<32x32xbf16>, vector<288x32xf32> -> vector<288x32xf32>
    %40 = arith.addf %35, %39 : vector<288x32xf32>
    %41 = vector.extract_strided_slice %14 {offsets = [20, 0], sizes = [288, 32], strides = [1, 1]} : vector<342x32xbf16> to vector<288x32xbf16>
    %c5 = arith.constant 5 : index
    %c0_26 = arith.constant 0 : index
    %c0_27 = arith.constant 0 : index
    %42 = vector.load %arg2[%c5, %c0_26, %c0_27] : memref<9x32x32xbf16, #tpu.memory_space<vmem>>, vector<1x32x32xbf16>
    %43 = vector.shape_cast %42 : vector<1x32x32xbf16> to vector<32x32xbf16>
    %cst_28 = arith.constant dense<0.000000e+00> : vector<288x32xf32>
    %44 = tpu.matmul %41, %43, %cst_28 {dimension_numbers = #tpu.dot_dimension_numbers<[1], [0], [0], [1], [0, 0, 1, 1], [], []>} : vector<288x32xbf16>, vector<32x32xbf16>, vector<288x32xf32> -> vector<288x32xf32>
    %45 = arith.addf %40, %44 : vector<288x32xf32>
    %46 = vector.extract_strided_slice %14 {offsets = [36, 0], sizes = [288, 32], strides = [1, 1]} : vector<342x32xbf16> to vector<288x32xbf16>
    %c6 = arith.constant 6 : index
    %c0_29 = arith.constant 0 : index
    %c0_30 = arith.constant 0 : index
    %47 = vector.load %arg2[%c6, %c0_29, %c0_30] : memref<9x32x32xbf16, #tpu.memory_space<vmem>>, vector<1x32x32xbf16>
    %48 = vector.shape_cast %47 : vector<1x32x32xbf16> to vector<32x32xbf16>
    %cst_31 = arith.constant dense<0.000000e+00> : vector<288x32xf32>
    %49 = tpu.matmul %46, %48, %cst_31 {dimension_numbers = #tpu.dot_dimension_numbers<[1], [0], [0], [1], [0, 0, 1, 1], [], []>} : vector<288x32xbf16>, vector<32x32xbf16>, vector<288x32xf32> -> vector<288x32xf32>
    %50 = arith.addf %45, %49 : vector<288x32xf32>
    %51 = vector.extract_strided_slice %14 {offsets = [37, 0], sizes = [288, 32], strides = [1, 1]} : vector<342x32xbf16> to vector<288x32xbf16>
    %c7 = arith.constant 7 : index
    %c0_32 = arith.constant 0 : index
    %c0_33 = arith.constant 0 : index
    %52 = vector.load %arg2[%c7, %c0_32, %c0_33] : memref<9x32x32xbf16, #tpu.memory_space<vmem>>, vector<1x32x32xbf16>
    %53 = vector.shape_cast %52 : vector<1x32x32xbf16> to vector<32x32xbf16>
    %cst_34 = arith.constant dense<0.000000e+00> : vector<288x32xf32>
    %54 = tpu.matmul %51, %53, %cst_34 {dimension_numbers = #tpu.dot_dimension_numbers<[1], [0], [0], [1], [0, 0, 1, 1], [], []>} : vector<288x32xbf16>, vector<32x32xbf16>, vector<288x32xf32> -> vector<288x32xf32>
    %55 = arith.addf %50, %54 : vector<288x32xf32>
    %56 = vector.extract_strided_slice %14 {offsets = [38, 0], sizes = [288, 32], strides = [1, 1]} : vector<342x32xbf16> to vector<288x32xbf16>
    %c8 = arith.constant 8 : index
    %c0_35 = arith.constant 0 : index
    %c0_36 = arith.constant 0 : index
    %57 = vector.load %arg2[%c8, %c0_35, %c0_36] : memref<9x32x32xbf16, #tpu.memory_space<vmem>>, vector<1x32x32xbf16>
    %58 = vector.shape_cast %57 : vector<1x32x32xbf16> to vector<32x32xbf16>
    %cst_37 = arith.constant dense<0.000000e+00> : vector<288x32xf32>
    %59 = tpu.matmul %56, %58, %cst_37 {dimension_numbers = #tpu.dot_dimension_numbers<[1], [0], [0], [1], [0, 0, 1, 1], [], []>} : vector<288x32xbf16>, vector<32x32xbf16>, vector<288x32xf32> -> vector<288x32xf32>
    %60 = arith.addf %55, %59 : vector<288x32xf32>
    %61 = vector.extract_strided_slice %3 {offsets = [19, 0], sizes = [288, 1], strides = [1, 1]} : vector<342x1xf32> to vector<288x1xf32>
    %62 = vector.broadcast %61 : vector<288x1xf32> to vector<288x32xf32>
    %63 = arith.mulf %60, %62 : vector<288x32xf32>
    %cst_38 = arith.constant dense<0.000000e+00> : vector<32xf32>
    %64 = vector.multi_reduction <add>, %63, %cst_38 [0] : vector<288x32xf32> to vector<32xf32>
    %65 = vector.shape_cast %64 : vector<32xf32> to vector<1x32xf32>
    %c0_39 = arith.constant 0 : index
    %c0_40 = arith.constant 0 : index
    %c0_41 = arith.constant 0 : index
    %66 = vector.load %arg7[%c0_39, %c0_40, %c0_41] : memref<1x1x32xf32, #tpu.memory_space<vmem>>, vector<1x1x32xf32>
    %67 = vector.shape_cast %66 : vector<1x1x32xf32> to vector<1x32xf32>
    %68 = vector.shape_cast %65 : vector<1x32xf32> to vector<1x1x32xf32>
    tpu.vector_store %arg7[%c0_39, %c0_40, %c0_41], %68 {strides = array<i32>} : memref<1x1x32xf32, #tpu.memory_space<vmem>>, vector<1x1x32xf32>,
    %69 = arith.mulf %63, %63 : vector<288x32xf32>
    %cst_42 = arith.constant dense<0.000000e+00> : vector<32xf32>
    %70 = vector.multi_reduction <add>, %69, %cst_42 [0] : vector<288x32xf32> to vector<32xf32>
    %71 = vector.shape_cast %70 : vector<32xf32> to vector<1x32xf32>
    %c0_43 = arith.constant 0 : index
    %c0_44 = arith.constant 0 : index
    %c0_45 = arith.constant 0 : index
    %72 = vector.load %arg8[%c0_43, %c0_44, %c0_45] : memref<1x1x32xf32, #tpu.memory_space<vmem>>, vector<1x1x32xf32>
    %73 = vector.shape_cast %72 : vector<1x1x32xf32> to vector<1x32xf32>
    %74 = vector.shape_cast %71 : vector<1x32xf32> to vector<1x1x32xf32>
    tpu.vector_store %arg8[%c0_43, %c0_44, %c0_45], %74 {strides = array<i32>} : memref<1x1x32xf32, #tpu.memory_space<vmem>>, vector<1x1x32xf32>,
    %cst_46 = arith.constant 0.000000e+00 : f32
    %75 = vector.broadcast %cst_46 : f32 to vector<19x32xf32>
    %c0_47 = arith.constant 0 : index
    %c0_48 = arith.constant 0 : index
    %c0_49 = arith.constant 0 : index
    %76 = vector.load %arg6[%c0_47, %c0_48, %c0_49] : memref<1x342x32xf32, #tpu.memory_space<vmem>>, vector<1x19x32xf32>
    %77 = vector.shape_cast %76 : vector<1x19x32xf32> to vector<19x32xf32>
    %78 = vector.shape_cast %75 : vector<19x32xf32> to vector<1x19x32xf32>
    tpu.vector_store %arg6[%c0_47, %c0_48, %c0_49], %78 {strides = array<i32>} : memref<1x342x32xf32, #tpu.memory_space<vmem>>, vector<1x19x32xf32>,
    %c0_50 = arith.constant 0 : index
    %c19 = arith.constant 19 : index
    %c0_51 = arith.constant 0 : index
    %79 = vector.load %arg6[%c0_50, %c19, %c0_51] : memref<1x342x32xf32, #tpu.memory_space<vmem>>, vector<1x288x32xf32>
    %80 = vector.shape_cast %79 : vector<1x288x32xf32> to vector<288x32xf32>
    %81 = vector.shape_cast %63 : vector<288x32xf32> to vector<1x288x32xf32>
    tpu.vector_store %arg6[%c0_50, %c19, %c0_51], %81 {strides = array<i32>} : memref<1x342x32xf32, #tpu.memory_space<vmem>>, vector<1x288x32xf32>,
    %cst_52 = arith.constant 0.000000e+00 : f32
    %82 = vector.broadcast %cst_52 : f32 to vector<35x32xf32>
    %c0_53 = arith.constant 0 : index
    %c307 = arith.constant 307 : index
    %c0_54 = arith.constant 0 : index
    %83 = vector.load %arg6[%c0_53, %c307, %c0_54] : memref<1x342x32xf32, #tpu.memory_space<vmem>>, vector<1x35x32xf32>
    %84 = vector.shape_cast %83 : vector<1x35x32xf32> to vector<35x32xf32>
    %85 = vector.shape_cast %82 : vector<35x32xf32> to vector<1x35x32xf32>
    tpu.vector_store %arg6[%c0_53, %c307, %c0_54], %85 {strides = array<i32>} : memref<1x342x32xf32, #tpu.memory_space<vmem>>, vector<1x35x32xf32>,
    return
  }
  func.func @transform_0(%arg0: i32) -> (i32, i32, i32) {
    %c0_i32 = arith.constant 0 : i32
    %c0_i32_0 = arith.constant 0 : i32
    %c0_i32_1 = arith.constant 0 : i32
    return %arg0, %c0_i32, %c0_i32_0 : i32, i32, i32
  }
  func.func @transform_1(%arg0: i32) -> (i32, i32, i32) {
    %c0_i32 = arith.constant 0 : i32
    %c0_i32_0 = arith.constant 0 : i32
    %c0_i32_1 = arith.constant 0 : i32
    %c0_i32_2 = arith.constant 0 : i32
    return %c0_i32, %c0_i32_0, %c0_i32_1 : i32, i32, i32
  }
  func.func @transform_2(%arg0: i32) -> (i32, i32) {
    %c0_i32 = arith.constant 0 : i32
    %c0_i32_0 = arith.constant 0 : i32
    %c0_i32_1 = arith.constant 0 : i32
    return %c0_i32, %c0_i32_0 : i32, i32
  }
  func.func @transform_3(%arg0: i32) -> (i32, i32) {
    %c0_i32 = arith.constant 0 : i32
    %c0_i32_0 = arith.constant 0 : i32
    %c0_i32_1 = arith.constant 0 : i32
    return %c0_i32, %c0_i32_0 : i32, i32
  }
  func.func @transform_4(%arg0: i32) -> (i32, i32, i32) {
    %c0_i32 = arith.constant 0 : i32
    %c0_i32_0 = arith.constant 0 : i32
    %c0_i32_1 = arith.constant 0 : i32
    %c0_i32_2 = arith.constant 0 : i32
    return %c0_i32, %c0_i32_0, %c0_i32_1 : i32, i32, i32
  }
  func.func @transform_5(%arg0: i32) -> (i32, i32, i32) {
    %c0_i32 = arith.constant 0 : i32
    %c0_i32_0 = arith.constant 0 : i32
    %c0_i32_1 = arith.constant 0 : i32
    return %arg0, %c0_i32, %c0_i32_0 : i32, i32, i32
  }
  func.func @transform_6(%arg0: i32) -> (i32, i32, i32) {
    %c0_i32 = arith.constant 0 : i32
    %c0_i32_0 = arith.constant 0 : i32
    %c0_i32_1 = arith.constant 0 : i32
    return %arg0, %c0_i32, %c0_i32_0 : i32, i32, i32
  }
  func.func @transform_7(%arg0: i32) -> (i32, i32, i32) {
    %c0_i32 = arith.constant 0 : i32
    %c0_i32_0 = arith.constant 0 : i32
    %c0_i32_1 = arith.constant 0 : i32
    return %arg0, %c0_i32, %c0_i32_0 : i32, i32, i32
  }
}

module attributes {stable_mosaic.version = 11 : i64} {
  func.func @_bn_relu_kernel(%arg0: i32, %arg1: memref<1x19x576xf32, #tpu.memory_space<vmem>>, %arg2: memref<1x576xf32, #tpu.memory_space<vmem>>, %arg3: memref<1x576xf32, #tpu.memory_space<vmem>>, %arg4: memref<1x19x576xf32, #tpu.memory_space<vmem>>) attributes {dimension_semantics = [#tpu.dimension_semantics<parallel>], iteration_bounds = array<i64: 2>, scalar_prefetch = 0 : i64, scratch_operands = 0 : i64, tpu.core_type = #tpu.core_type<tc>, window_params = [{transform_indices = @transform_0, window_bounds = array<i64: 1, 19, 576>}, {pipeline_mode = #tpu.pipeline_mode<synchronous>, transform_indices = @transform_1, window_bounds = array<i64: 1, 576>}, {pipeline_mode = #tpu.pipeline_mode<synchronous>, transform_indices = @transform_2, window_bounds = array<i64: 1, 576>}, {transform_indices = @transform_3, window_bounds = array<i64: 1, 19, 576>}]} {
    %c0 = arith.constant 0 : index
    %c0_0 = arith.constant 0 : index
    %c0_1 = arith.constant 0 : index
    %0 = vector.load %arg1[%c0, %c0_0, %c0_1] : memref<1x19x576xf32, #tpu.memory_space<vmem>>, vector<1x19x576xf32>
    %1 = vector.shape_cast %0 : vector<1x19x576xf32> to vector<19x576xf32>
    %c0_2 = arith.constant 0 : index
    %c0_3 = arith.constant 0 : index
    %2 = vector.load %arg2[%c0_2, %c0_3] : memref<1x576xf32, #tpu.memory_space<vmem>>, vector<1x576xf32>
    %3 = vector.broadcast %2 : vector<1x576xf32> to vector<19x576xf32>
    %4 = arith.mulf %1, %3 : vector<19x576xf32>
    %c0_4 = arith.constant 0 : index
    %c0_5 = arith.constant 0 : index
    %5 = vector.load %arg3[%c0_4, %c0_5] : memref<1x576xf32, #tpu.memory_space<vmem>>, vector<1x576xf32>
    %6 = vector.broadcast %5 : vector<1x576xf32> to vector<19x576xf32>
    %7 = arith.addf %4, %6 : vector<19x576xf32>
    %cst = arith.constant 0.000000e+00 : f32
    %8 = vector.broadcast %cst : f32 to vector<19x576xf32>
    %9 = arith.maximumf %7, %8 : vector<19x576xf32>
    %c0_6 = arith.constant 0 : index
    %c0_7 = arith.constant 0 : index
    %c0_8 = arith.constant 0 : index
    %10 = vector.load %arg4[%c0_6, %c0_7, %c0_8] : memref<1x19x576xf32, #tpu.memory_space<vmem>>, vector<1x19x576xf32>
    %11 = vector.shape_cast %10 : vector<1x19x576xf32> to vector<19x576xf32>
    %12 = vector.shape_cast %9 : vector<19x576xf32> to vector<1x19x576xf32>
    tpu.vector_store %arg4[%c0_6, %c0_7, %c0_8], %12 {strides = array<i32>} : memref<1x19x576xf32, #tpu.memory_space<vmem>>, vector<1x19x576xf32>,
    return
  }
  func.func @transform_0(%arg0: i32) -> (i32, i32, i32) {
    %c0_i32 = arith.constant 0 : i32
    %c0_i32_0 = arith.constant 0 : i32
    %c0_i32_1 = arith.constant 0 : i32
    return %arg0, %c0_i32, %c0_i32_0 : i32, i32, i32
  }
  func.func @transform_1(%arg0: i32) -> (i32, i32) {
    %c0_i32 = arith.constant 0 : i32
    %c0_i32_0 = arith.constant 0 : i32
    %c0_i32_1 = arith.constant 0 : i32
    return %c0_i32, %c0_i32_0 : i32, i32
  }
  func.func @transform_2(%arg0: i32) -> (i32, i32) {
    %c0_i32 = arith.constant 0 : i32
    %c0_i32_0 = arith.constant 0 : i32
    %c0_i32_1 = arith.constant 0 : i32
    return %c0_i32, %c0_i32_0 : i32, i32
  }
  func.func @transform_3(%arg0: i32) -> (i32, i32, i32) {
    %c0_i32 = arith.constant 0 : i32
    %c0_i32_0 = arith.constant 0 : i32
    %c0_i32_1 = arith.constant 0 : i32
    return %arg0, %c0_i32, %c0_i32_0 : i32, i32, i32
  }
}

</mosaic_0001>

<llo_original>
// kernel: tile.13
$region0: #{tile.13}
  #allocation0 [shape = 's32[1]{0}', space=sflag, size = 0x4, scoped, tag = 'scoped memory for tile.13']
  %s0 = inlined_call_operand.vmem [shape: f32[32], index: 0, kind: input, shape index: {}]
  %s1 = inlined_call_operand.vmem [shape: f32[18,32], index: 1, kind: output, shape index: {}]
  // Predicated region
  $region2: #{tile.13} parent=0 // pred_check
    _
  $region3: #{tile.13} parent=0 // pred_check_branch
    %3 = sbr.rel (0) target = $region5
  $region4: #{tile.13} parent=0 // pred_region
    _
  $region5: #{tile.13} parent=0 // pred_fallthru
    _
  %v4 = vld [vmem:[%s0] ss:$0 sm:$0xff]
  %5 = vst [vmem:[%s1] sm:$0xff] %v4
  %s6 = scalar_lea.vmem %s1, 8
  %7 = vst [vmem:[%s6] sm:$0xff] %v4
  %s8 = scalar_lea.vmem %s1, 16
  %9 = vst [vmem:[%s8] sm:$0xff] %v4

// kernel: tile.14
$region0: #{tile.14}
  %s0 = inlined_call_operand.vmem [shape: f32[18,32], index: 0, kind: input, shape index: {}]
  %s1 = inlined_call_operand.vmem [shape: f32[1,576], index: 1, kind: output, shape index: {}]
  $region1: #{tile.14} parent=0
    #allocation0 [shape = 'u8[20480]{0}', space=vmem, size = 0x5000, scoped, tag = 'scoped mem for output reshape']
    %v2 = vld [vmem:[%s0] ss:$4 sm:$0x1f]
    %vm3 = vcmask 261120
    %4 = vst.msk [vmem:[#allocation0] ss:$8 sm:$0xf] %vm3, %v2
    %s5 = scalar_lea.vmem [#allocation0], 28
    %6 = vst.msk [vmem:[%s5] sm:$0x10] %vm3, %v2
    %s7 = scalar_lea.vmem %s0, 3
    %v8 = vld [vmem:[%s7] ss:$4 sm:$0xf]
    %9 = vrot.lane.b32.xlu0 %v8, 96
    %v10 = vpop.permute.xlu0 %9
    %vm11 = vcmask 1048320
    %12 = vst.msk [vmem:[#allocation0] ss:$8 sm:$0xf] %vm11, %v10
    %s13 = scalar_lea.vmem %s0, 2
    %v14 = vld [vmem:[%s13] ss:$4 sm:$0xf]
    %15 = vrot.lane.b32.xlu0 %v14, 64
    %v16 = vpop.permute.xlu0 %15
    %vm17 = vcmask 785920
    %18 = vst.msk [vmem:[#allocation0] ss:$8 sm:$0xf] %vm17, %v16
    %s19 = scalar_lea.vmem %s0, 1
    %v20 = vld [vmem:[%s19] ss:$4 sm:$0x1f]
    %21 = vrot.lane.b32.xlu0 %v20, 32
    %v22 = vpop.permute.xlu0 %21
    %vm23 = vcmask 523520
    %24 = vst.msk [vmem:[#allocation0] ss:$8 sm:$0xf] %vm23, %v22
    %s25 = scalar_lea.vmem [#allocation0], 28
    %26 = vst.msk [vmem:[%s25] sm:$0x10] %vm23, %v22
    %s28 = sshllo.u32 0, 1
    %v30 = vld [vmem:[#allocation0] sm:%s28]
    %s31 = sshllo.u32 0, 1
    %32 = vst [vmem:[%s1] sm:%s31] %v30
    %s33 = scalar_lea.vmem [#allocation0], 8
    %v34 = vld [vmem:[%s33] sm:%s28]
    %s35 = sshllo.u32 0, 1
    %s36 = scalar_lea.vmem %s1, 1
    %37 = vst [vmem:[%s36] sm:%s35] %v34
    %s38 = scalar_lea.vmem [#allocation0], 16
    %v39 = vld [vmem:[%s38] sm:%s28]
    %s40 = sshllo.u32 0, 1
    %s41 = smul.addr 1, 2
    %s42 = scalar_lea.vmem %s1, %s41
    %43 = vst [vmem:[%s42] sm:%s40] %v39
    %s44 = scalar_lea.vmem [#allocation0], 24
    %v45 = vld [vmem:[%s44] sm:%s28]
    %s46 = sshllo.u32 0, 1
    %s47 = smul.addr 1, 3
    %s48 = scalar_lea.vmem %s1, %s47
    %49 = vst [vmem:[%s48] sm:%s46] %v45
    %s50 = scalar_lea.vmem [#allocation0], 32
    %v51 = vld [vmem:[%s50] sm:%s28]
    %s52 = sshllo.u32 0, 1
    %s53 = smul.addr 1, 4
    %s54 = scalar_lea.vmem %s1, %s53
    %55 = vst [vmem:[%s54] sm:%s52] %v51

// kernel: inconv_forward.5
$region0: #{inconv_forward.5}
  #allocation0 [shape = 'u32[]', space=smem, size = 0x4, offset = 0x4, fixed_abs, tag = 'smem constant byte address 0x4 - core index']
  #allocation1 [shape = 'u32[144,128]{1,0:T(1,128)}', space=vmem, size = 0x12000, scoped, tag = 'internal scratch']
  %s0 = inlined_call_operand.vmem [shape: f32[2,19,576], index: 0, kind: input, shape index: {}]
  %s1 = inlined_call_operand.vmem [shape: f32[1,576], index: 1, kind: input, shape index: {}]
  %s2 = inlined_call_operand.vmem [shape: f32[1,576], index: 2, kind: input, shape index: {}]
  %s3 = inlined_call_operand.vmem [shape: f32[2,19,576], index: 3, kind: output, shape index: {}]
  %s4 = sld [smem:[#allocation0]]
  $region45: #{inconv_forward.5} parent=0
    _
  %s6 = ssub.s32 1, %s4
  %s7 = scalar_select 0, %s6, %s4
  loop: start=0, step=1, limit=4
  $region2: #{inconv_forward.5} parent=0 // loop_pre_header
    _
  $region3: #{inconv_forward.5} parent=0 // loop_header
    %s9 = sphi 0, %s13
    %p10 = scmp.ge.s32.totalorder %s9, 4
    %s19 = sphi 0, %s21
    %s22 = sphi 0, %s19
    %s23 = sphi 0, %s22
    %s39 = sphi 0, %s23
    %s43 = sphi 0, %s43
    %s45 = sphi 0, %s43
    %s46 = sphi 0, %s45
    %s60 = sphi 0, %s46
    %s64 = sphi 0, %s64
    %s66 = sphi 0, %s64
    %s67 = sphi 0, %s66
    %s81 = sphi 0, %s67
    %s87 = sphi 0, %s89
    %s90 = sphi 0, %s87
    %s91 = sphi 0, %s90
    %s107 = sphi 0, %s91
  $region4: #{inconv_forward.5} parent=0 // loop_header_branch
    %12 = sbr.rel (%p10) target = $region8
  $region5: #{inconv_forward.5} parent=0 // loop_body
    %s14 = ssub.s32 %s9, 1
    %s15 = ssub.s32 %s9, 2
    %s16 = sadd.s32 %s9, 1
    %s17 = ssub.s32 %s9, %s16
    %p18 = scmp.eq.s32.totalorder %s17, 0
    %s20 = sadd.s32 %s19, 1
    %s21 = scalar_select %p18, %s19, %s20
    %p24 = pneg %p18
    %p25 = scmp.eq.s32.totalorder %s9, 1
    %p26 = por %p24, %p25
    %p27 = scmp.ne.s32.totalorder %s19, %s22
    %p28 = scmp.eq.s32.totalorder %s9, 0
    %p29 = por %p27, %p28
    %p30 = scmp.ne.s32.totalorder %s19, %s22
    %p31 = scmp.eq.s32.totalorder %s14, 1
    %p32 = por %p30, %p31
    %p33 = scmp.ne.s32.totalorder %s22, %s23
    %p34 = scmp.eq.s32.totalorder %s14, 0
    %p35 = por %p33, %p34
    %p36 = scmp.ne.s32.totalorder %s22, %s23
    %p37 = scmp.eq.s32.totalorder %s15, 1
    %p38 = por %p36, %p37
    %p40 = scmp.ne.s32.totalorder %s23, %s39
    %p41 = scmp.eq.s32.totalorder %s15, 0
    %p42 = por %p40, %p41
    %s44 = sadd.s32 %s43, 1
    %p47 = scmp.eq.s32.totalorder %s9, 1
    %p48 = scmp.ne.s32.totalorder %s43, %s45
    %p49 = scmp.eq.s32.totalorder %s9, 0
    %p50 = por %p48, %p49
    %p51 = scmp.ne.s32.totalorder %s43, %s45
    %p52 = scmp.eq.s32.totalorder %s14, 1
    %p53 = por %p51, %p52
    %p54 = scmp.ne.s32.totalorder %s45, %s46
    %p55 = scmp.eq.s32.totalorder %s14, 0
    %p56 = por %p54, %p55
    %p57 = scmp.ne.s32.totalorder %s45, %s46
    %p58 = scmp.eq.s32.totalorder %s15, 1
    %p59 = por %p57, %p58
    %p61 = scmp.ne.s32.totalorder %s46, %s60
    %p62 = scmp.eq.s32.totalorder %s15, 0
    %p63 = por %p61, %p62
    %s65 = sadd.s32 %s64, 1
    %p68 = scmp.eq.s32.totalorder %s9, 1
    %p69 = scmp.ne.s32.totalorder %s64, %s66
    %p70 = scmp.eq.s32.totalorder %s9, 0
    %p71 = por %p69, %p70
    %p72 = scmp.ne.s32.totalorder %s64, %s66
    %p73 = scmp.eq.s32.totalorder %s14, 1
    %p74 = por %p72, %p73
    %p75 = scmp.ne.s32.totalorder %s66, %s67
    %p76 = scmp.eq.s32.totalorder %s14, 0
    %p77 = por %p75, %p76
    %p78 = scmp.ne.s32.totalorder %s66, %s67
    %p79 = scmp.eq.s32.totalorder %s15, 1
    %p80 = por %p78, %p79
    %p82 = scmp.ne.s32.totalorder %s67, %s81
    %p83 = scmp.eq.s32.totalorder %s15, 0
    %p84 = por %p82, %p83
    %s85 = ssub.s32 %s9, %s16
    %p86 = scmp.eq.s32.totalorder %s85, 0
    %s88 = sadd.s32 %s87, 1
    %s89 = scalar_select %p86, %s87, %s88
    %p92 = pneg %p86
    %p93 = scmp.eq.s32.totalorder %s9, 1
    %p94 = por %p92, %p93
    %p95 = scmp.ne.s32.totalorder %s87, %s90
    %p96 = scmp.eq.s32.totalorder %s9, 0
    %p97 = por %p95, %p96
    %p98 = scmp.ne.s32.totalorder %s87, %s90
    %p99 = scmp.eq.s32.totalorder %s14, 1
    %p100 = por %p98, %p99
    %p101 = scmp.ne.s32.totalorder %s90, %s91
    %p102 = scmp.eq.s32.totalorder %s14, 0
    %p103 = por %p101, %p102
    %p104 = scmp.ne.s32.totalorder %s90, %s91
    %p105 = scmp.eq.s32.totalorder %s15, 1
    %p106 = por %p104, %p105
    %p108 = scmp.ne.s32.totalorder %s91, %s107
    %p109 = scmp.eq.s32.totalorder %s15, 0
    %p110 = por %p108, %p109
    %p111 = scmp.le.s32.totalorder 1, %s9
    %p112 = scmp.lt.s32.totalorder %s9, 3
    %p113 = pnand %p111, %p112
    %p114 = pneg %p113
    // Predicated region
    $region9: #{inconv_forward.5} parent=5 // pred_check
      _
    $region10: #{inconv_forward.5} parent=5 // pred_check_branch
      %116 = sbr.rel (%p113) target = $region12
    $region11: #{inconv_forward.5} parent=5 // pred_region
      %s117 = ssub.s32 %s9, 1
      // Predicated region
      $region13: #{inconv_forward.5} parent=11 // pred_check
        %p118 = pneg %p56
      $region14: #{inconv_forward.5} parent=11 // pred_check_branch
        %120 = sbr.rel (%p118) target = $region16
      $region15: #{inconv_forward.5} parent=11 // pred_region
        _
      $region16: #{inconv_forward.5} parent=11 // pred_fallthru
        _
      // Predicated region
      $region17: #{inconv_forward.5} parent=11 // pred_check
        %p121 = pneg %p77
      $region18: #{inconv_forward.5} parent=11 // pred_check_branch
        %123 = sbr.rel (%p121) target = $region20
      $region19: #{inconv_forward.5} parent=11 // pred_region
        _
      $region20: #{inconv_forward.5} parent=11 // pred_fallthru
        _
    $region12: #{inconv_forward.5} parent=5 // pred_fallthru
      _
    %p124 = scmp.lt.s32.totalorder %s9, 2
    // Predicated region
    $region21: #{inconv_forward.5} parent=5 // pred_check
      %p125 = pneg %p124
    $region22: #{inconv_forward.5} parent=5 // pred_check_branch
      %127 = sbr.rel (%p125) target = $region24
    $region23: #{inconv_forward.5} parent=5 // pred_region
      // Predicated region
      $region25: #{inconv_forward.5} parent=23 // pred_check
        %p128 = pneg %p29
      $region26: #{inconv_forward.5} parent=23 // pred_check_branch
        %130 = sbr.rel (%p128) target = $region28
      $region27: #{inconv_forward.5} parent=23 // pred_region
        %p131 = scmp.lt.s32.totalorder %s9, 1
        %s132 = scalar_select %p131, %s9, 1
        %s133 = smul.addr %s132, 15
        %s134 = smul.addr %s133, 8
        %s135 = scalar_lea.vmem %s0, %s134
      $region28: #{inconv_forward.5} parent=23 // pred_fallthru
        _
    $region24: #{inconv_forward.5} parent=5 // pred_fallthru
      _
    %p136 = scmp.le.s32.totalorder 1, %s9
    %p137 = scmp.lt.s32.totalorder %s9, 3
    %p138 = pnand %p136, %p137
    %p139 = pneg %p138
    // Predicated region
    $region29: #{inconv_forward.5} parent=5 // pred_check
      _
    $region30: #{inconv_forward.5} parent=5 // pred_check_branch
      %141 = sbr.rel (%p138) target = $region32
    $region31: #{inconv_forward.5} parent=5 // pred_region
      %s142 = ssub.s32 %s9, 1
      %p143 = scmp.lt.s32.totalorder %s14, 1
      %s144 = scalar_select %p143, %s14, 1
      %s145 = smul.addr %s144, 15
      %s146 = smul.addr %s145, 8
      %s147 = scalar_lea.vmem %s0, %s146
      %p148 = pneg %p35
      %p149 = pneg %p32
      %p150 = pneg %p56
      %p151 = pneg %p53
      %p152 = pneg %p77
      %p153 = pneg %p74
      %p154 = pneg %p103
      %p155 = pneg %p100
      %p156 = scmp.lt.s32.totalorder %s14, 1
      %s157 = scalar_select %p156, %s14, 1
      %s158 = smul.addr %s157, 15
      %s159 = smul.addr %s158, 8
      %s160 = scalar_lea.vmem %s3, %s159
      %p161 = scmp.lt.s32.totalorder %s14, 1
      %s162 = scalar_select %p161, %s14, 1
      %s163 = smul.addr %s162, 15
      %s164 = smul.addr %s163, 8
      %s165 = scalar_lea.vmem %s0, %s164
      %p166 = scmp.lt.s32.totalorder %s14, 1
      %s167 = scalar_select %p166, %s14, 1
      %s168 = smul.addr %s167, 15
      %s169 = smul.addr %s168, 8
      %s170 = scalar_lea.vmem %s3, %s169
      %v171 = vld [vmem:[%s165] sm:$0xff]
      %v172 = vld [vmem:[%s165 + $0x8] sm:$0xff]
      %v173 = vld [vmem:[%s165 + $0x10] sm:$0xff]
      %v174 = vld [vmem:[%s165 + $0x18] sm:$0xff]
      %v175 = vld [vmem:[%s165 + $0x20] sm:$0xff]
      %v176 = vld [vmem:[%s165 + $0x28] sm:$0xff]
      %v177 = vld [vmem:[%s165 + $0x30] sm:$0xff]
      %v178 = vld [vmem:[%s165 + $0x38] sm:$0xff]
      %v179 = vld [vmem:[%s165 + $0x40] sm:$0xff]
      %v180 = vld [vmem:[%s165 + $0x48] sm:$0xff]
      %v181 = vld [vmem:[%s165 + $0x50] sm:$0x7]
      %v182 = vld [vmem:[%s165 + $0x58] sm:$0x7]
      %v183 = vld [vmem:[%s165 + $0x60] sm:$0x7]
      %v184 = vld [vmem:[%s165 + $0x68] sm:$0x7]
      %v185 = vld [vmem:[%s165 + $0x70] sm:$0x7]
      %v186 = vld [vmem:[%s1] sm:$0x1f]
      %v188 = vlaneseq
      %v189 = vshrl.u32 %v188, 7
      %v190 = vsub.s32 0, %v189
      %v191 = vrot.slane %v186, %v190
      %v192 = vlaneseq
      %v193 = vshrl.u32 %v192, 7
      %v194 = vsub.s32 1, %v193
      %v195 = vrot.slane %v186, %v194
      %v196 = vlaneseq
      %v197 = vshrl.u32 %v196, 7
      %v198 = vsub.s32 2, %v197
      %v199 = vrot.slane %v186, %v198
      %v200 = vlaneseq
      %v201 = vshrl.u32 %v200, 7
      %v202 = vsub.s32 3, %v201
      %v203 = vrot.slane %v186, %v202
      %v204 = vlaneseq
      %v205 = vshrl.u32 %v204, 7
      %v206 = vsub.s32 4, %v205
      %v207 = vrot.slane %v186, %v206
      %v213 = vmul.f32 %v171, %v191
      %v214 = vmul.f32 %v172, %v195
      %v215 = vmul.f32 %v173, %v199
      %v216 = vmul.f32 %v174, %v203
      %v217 = vmul.f32 %v175, %v207
      %v218 = vmul.f32 %v176, %v191
      %v219 = vmul.f32 %v177, %v195
      %v220 = vmul.f32 %v178, %v199
      %v221 = vmul.f32 %v179, %v203
      %v222 = vmul.f32 %v180, %v207
      %v223 = vmul.f32 %v181, %v191
      %v224 = vmul.f32 %v182, %v195
      %v225 = vmul.f32 %v183, %v199
      %v226 = vmul.f32 %v184, %v203
      %v227 = vmul.f32 %v185, %v207
      %v228 = vld [vmem:[%s2] sm:$0x1f]
      %v230 = vlaneseq
      %v231 = vshrl.u32 %v230, 7
      %v232 = vsub.s32 0, %v231
      %v233 = vrot.slane %v228, %v232
      %v234 = vlaneseq
      %v235 = vshrl.u32 %v234, 7
      %v236 = vsub.s32 1, %v235
      %v237 = vrot.slane %v228, %v236
      %v238 = vlaneseq
      %v239 = vshrl.u32 %v238, 7
      %v240 = vsub.s32 2, %v239
      %v241 = vrot.slane %v228, %v240
      %v242 = vlaneseq
      %v243 = vshrl.u32 %v242, 7
      %v244 = vsub.s32 3, %v243
      %v245 = vrot.slane %v228, %v244
      %v246 = vlaneseq
      %v247 = vshrl.u32 %v246, 7
      %v248 = vsub.s32 4, %v247
      %v249 = vrot.slane %v228, %v248
      %v255 = vadd.f32 %v213, %v233
      %v256 = vadd.f32 %v214, %v237
      %v257 = vadd.f32 %v215, %v241
      %v258 = vadd.f32 %v216, %v245
      %v259 = vadd.f32 %v217, %v249
      %v260 = vadd.f32 %v218, %v233
      %v261 = vadd.f32 %v219, %v237
      %v262 = vadd.f32 %v220, %v241
      %v263 = vadd.f32 %v221, %v245
      %v264 = vadd.f32 %v222, %v249
      %v265 = vadd.f32 %v223, %v233
      %v266 = vadd.f32 %v224, %v237
      %v267 = vadd.f32 %v225, %v241
      %v268 = vadd.f32 %v226, %v245
      %v269 = vadd.f32 %v227, %v249
      %v270 = vmax.f32 %v255, 0.0
      %v271 = vmax.f32 %v256, 0.0
      %v272 = vmax.f32 %v257, 0.0
      %v273 = vmax.f32 %v258, 0.0
      %v274 = vmax.f32 %v259, 0.0
      %v275 = vmax.f32 %v260, 0.0
      %v276 = vmax.f32 %v261, 0.0
      %v277 = vmax.f32 %v262, 0.0
      %v278 = vmax.f32 %v263, 0.0
      %v279 = vmax.f32 %v264, 0.0
      %v280 = vmax.f32 %v265, 0.0
      %v281 = vmax.f32 %v266, 0.0
      %v282 = vmax.f32 %v267, 0.0
      %v283 = vmax.f32 %v268, 0.0
      %v284 = vmax.f32 %v269, 0.0
      %285 = vst [vmem:[%s170] sm:$0xff] %v270
      %286 = vst [vmem:[%s170 + $0x8] sm:$0xff] %v271
      %287 = vst [vmem:[%s170 + $0x10] sm:$0xff] %v272
      %288 = vst [vmem:[%s170 + $0x18] sm:$0xff] %v273
      %vm289 = vcmask 523264
      %290 = vst.msk [vmem:[%s170 + $0x20] sm:$0xff] %vm289, %v274
      %291 = vst [vmem:[%s170 + $0x28] sm:$0xff] %v275
      %292 = vst [vmem:[%s170 + $0x30] sm:$0xff] %v276
      %293 = vst [vmem:[%s170 + $0x38] sm:$0xff] %v277
      %294 = vst [vmem:[%s170 + $0x40] sm:$0xff] %v278
      %295 = vst.msk [vmem:[%s170 + $0x48] sm:$0xff] %vm289, %v279
      %296 = vst [vmem:[%s170 + $0x50] sm:$0x7] %v280
      %297 = vst [vmem:[%s170 + $0x58] sm:$0x7] %v281
      %298 = vst [vmem:[%s170 + $0x60] sm:$0x7] %v282
      %299 = vst [vmem:[%s170 + $0x68] sm:$0x7] %v283
      %vm300 = vcmask 518144
      %301 = vst.msk [vmem:[%s170 + $0x70] sm:$0x7] %vm300, %v284
      %p302 = scmp.lt.s32.totalorder %s14, 1
      %s303 = scalar_select %p302, %s14, 1
      %s304 = smul.addr %s303, 15
      %s305 = smul.addr %s304, 8
      %s306 = scalar_lea.vmem %s3, %s305
      // Predicated region
      $region33: #{inconv_forward.5} parent=31 // pred_check
        %p307 = pneg %p100
      $region34: #{inconv_forward.5} parent=31 // pred_check_branch
        %309 = sbr.rel (%p307) target = $region36
      $region35: #{inconv_forward.5} parent=31 // pred_region
        _
      $region36: #{inconv_forward.5} parent=31 // pred_fallthru
        _
    $region32: #{inconv_forward.5} parent=5 // pred_fallthru
      _
    %p310 = scmp.le.s32.totalorder 2, %s9
    // Predicated region
    $region37: #{inconv_forward.5} parent=5 // pred_check
      %p311 = pneg %p310
    $region38: #{inconv_forward.5} parent=5 // pred_check_branch
      %313 = sbr.rel (%p311) target = $region40
    $region39: #{inconv_forward.5} parent=5 // pred_region
      %s314 = ssub.s32 %s9, 2
      // Predicated region
      $region41: #{inconv_forward.5} parent=39 // pred_check
        %p315 = pneg %p106
      $region42: #{inconv_forward.5} parent=39 // pred_check_branch
        %317 = sbr.rel (%p315) target = $region44
      $region43: #{inconv_forward.5} parent=39 // pred_region
        %p318 = scmp.lt.s32.totalorder %s15, 1
        %s319 = scalar_select %p318, %s15, 1
        %s320 = smul.addr %s319, 15
        %s321 = smul.addr %s320, 8
        %s322 = scalar_lea.vmem %s3, %s321
      $region44: #{inconv_forward.5} parent=39 // pred_fallthru
        _
    $region40: #{inconv_forward.5} parent=5 // pred_fallthru
      _
  $region6: #{inconv_forward.5} parent=0 // loop_footer
    %s13 = sadd.s32 1, %s9
  $region7: #{inconv_forward.5} parent=0 // loop_footer_branch
    %8 = sbr.rel target = $region3
  $region8: #{inconv_forward.5} parent=0 // loop_exit
    _

// kernel: inconv_forward.3
$region0: #{inconv_forward.3}
  #allocation0 [shape = 'u32[]', space=smem, size = 0x4, offset = 0x4, fixed_abs, tag = 'smem constant byte address 0x4 - core index']
  #allocation1 [shape = 'u32[144,128]{1,0:T(1,128)}', space=vmem, size = 0x12000, scoped, tag = 'internal scratch']
  %s0 = inlined_call_operand.vmem [shape: f32[2,342,4], index: 0, kind: input, shape index: {}]
  %s1 = inlined_call_operand.vmem [shape: bf16[9,4,32], index: 1, kind: input, shape index: {}]
  %s2 = inlined_call_operand.vmem [shape: f32[1,4], index: 2, kind: input, shape index: {}]
  %s3 = inlined_call_operand.vmem [shape: f32[1,4], index: 3, kind: input, shape index: {}]
  %s4 = inlined_call_operand.vmem [shape: f32[1,342,1], index: 4, kind: input, shape index: {}]
  %s5 = inlined_call_operand.vmem [shape: f32[2,342,32], index: 5, kind: output, shape index: {0}]
  %s6 = inlined_call_operand.vmem [shape: f32[2,1,32], index: 6, kind: output, shape index: {1}]
  %s7 = inlined_call_operand.vmem [shape: f32[2,1,32], index: 7, kind: output, shape index: {2}]
  %8 = xla_tuple %s5, %s6, %s7
  %s9 = sld [smem:[#allocation0]]
  $region69: #{inconv_forward.3} parent=0
    _
  %s11 = ssub.s32 1, %s9
  %s12 = scalar_select 0, %s11, %s9
  loop: start=0, step=1, limit=4
  $region2: #{inconv_forward.3} parent=0 // loop_pre_header
    _
  $region3: #{inconv_forward.3} parent=0 // loop_header
    %s14 = sphi 0, %s18
    %p15 = scmp.ge.s32.totalorder %s14, 4
    %s24 = sphi 0, %s26
    %s27 = sphi 0, %s24
    %s28 = sphi 0, %s27
    %s44 = sphi 0, %s28
    %s48 = sphi 0, %s48
    %s50 = sphi 0, %s48
    %s51 = sphi 0, %s50
    %s65 = sphi 0, %s51
    %s69 = sphi 0, %s69
    %s71 = sphi 0, %s69
    %s72 = sphi 0, %s71
    %s86 = sphi 0, %s72
    %s90 = sphi 0, %s90
    %s92 = sphi 0, %s90
    %s93 = sphi 0, %s92
    %s107 = sphi 0, %s93
    %s111 = sphi 0, %s111
    %s113 = sphi 0, %s111
    %s114 = sphi 0, %s113
    %s128 = sphi 0, %s114
    %s134 = sphi 0, %s136
    %s137 = sphi 0, %s134
    %s138 = sphi 0, %s137
    %s154 = sphi 0, %s138
    %s160 = sphi 0, %s162
    %s163 = sphi 0, %s160
    %s164 = sphi 0, %s163
    %s180 = sphi 0, %s164
    %s186 = sphi 0, %s188
    %s189 = sphi 0, %s186
    %s190 = sphi 0, %s189
    %s206 = sphi 0, %s190
  $region4: #{inconv_forward.3} parent=0 // loop_header_branch
    %17 = sbr.rel (%p15) target = $region8
  $region5: #{inconv_forward.3} parent=0 // loop_body
    %s19 = ssub.s32 %s14, 1
    %s20 = ssub.s32 %s14, 2
    %s21 = sadd.s32 %s14, 1
    %s22 = ssub.s32 %s14, %s21
    %p23 = scmp.eq.s32.totalorder %s22, 0
    %s25 = sadd.s32 %s24, 1
    %s26 = scalar_select %p23, %s24, %s25
    %p29 = pneg %p23
    %p30 = scmp.eq.s32.totalorder %s14, 1
    %p31 = por %p29, %p30
    %p32 = scmp.ne.s32.totalorder %s24, %s27
    %p33 = scmp.eq.s32.totalorder %s14, 0
    %p34 = por %p32, %p33
    %p35 = scmp.ne.s32.totalorder %s24, %s27
    %p36 = scmp.eq.s32.totalorder %s19, 1
    %p37 = por %p35, %p36
    %p38 = scmp.ne.s32.totalorder %s27, %s28
    %p39 = scmp.eq.s32.totalorder %s19, 0
    %p40 = por %p38, %p39
    %p41 = scmp.ne.s32.totalorder %s27, %s28
    %p42 = scmp.eq.s32.totalorder %s20, 1
    %p43 = por %p41, %p42
    %p45 = scmp.ne.s32.totalorder %s28, %s44
    %p46 = scmp.eq.s32.totalorder %s20, 0
    %p47 = por %p45, %p46
    %s49 = sadd.s32 %s48, 1
    %p52 = scmp.eq.s32.totalorder %s14, 1
    %p53 = scmp.ne.s32.totalorder %s48, %s50
    %p54 = scmp.eq.s32.totalorder %s14, 0
    %p55 = por %p53, %p54
    %p56 = scmp.ne.s32.totalorder %s48, %s50
    %p57 = scmp.eq.s32.totalorder %s19, 1
    %p58 = por %p56, %p57
    %p59 = scmp.ne.s32.totalorder %s50, %s51
    %p60 = scmp.eq.s32.totalorder %s19, 0
    %p61 = por %p59, %p60
    %p62 = scmp.ne.s32.totalorder %s50, %s51
    %p63 = scmp.eq.s32.totalorder %s20, 1
    %p64 = por %p62, %p63
    %p66 = scmp.ne.s32.totalorder %s51, %s65
    %p67 = scmp.eq.s32.totalorder %s20, 0
    %p68 = por %p66, %p67
    %s70 = sadd.s32 %s69, 1
    %p73 = scmp.eq.s32.totalorder %s14, 1
    %p74 = scmp.ne.s32.totalorder %s69, %s71
    %p75 = scmp.eq.s32.totalorder %s14, 0
    %p76 = por %p74, %p75
    %p77 = scmp.ne.s32.totalorder %s69, %s71
    %p78 = scmp.eq.s32.totalorder %s19, 1
    %p79 = por %p77, %p78
    %p80 = scmp.ne.s32.totalorder %s71, %s72
    %p81 = scmp.eq.s32.totalorder %s19, 0
    %p82 = por %p80, %p81
    %p83 = scmp.ne.s32.totalorder %s71, %s72
    %p84 = scmp.eq.s32.totalorder %s20, 1
    %p85 = por %p83, %p84
    %p87 = scmp.ne.s32.totalorder %s72, %s86
    %p88 = scmp.eq.s32.totalorder %s20, 0
    %p89 = por %p87, %p88
    %s91 = sadd.s32 %s90, 1
    %p94 = scmp.eq.s32.totalorder %s14, 1
    %p95 = scmp.ne.s32.totalorder %s90, %s92
    %p96 = scmp.eq.s32.totalorder %s14, 0
    %p97 = por %p95, %p96
    %p98 = scmp.ne.s32.totalorder %s90, %s92
    %p99 = scmp.eq.s32.totalorder %s19, 1
    %p100 = por %p98, %p99
    %p101 = scmp.ne.s32.totalorder %s92, %s93
    %p102 = scmp.eq.s32.totalorder %s19, 0
    %p103 = por %p101, %p102
    %p104 = scmp.ne.s32.totalorder %s92, %s93
    %p105 = scmp.eq.s32.totalorder %s20, 1
    %p106 = por %p104, %p105
    %p108 = scmp.ne.s32.totalorder %s93, %s107
    %p109 = scmp.eq.s32.totalorder %s20, 0
    %p110 = por %p108, %p109
    %s112 = sadd.s32 %s111, 1
    %p115 = scmp.eq.s32.totalorder %s14, 1
    %p116 = scmp.ne.s32.totalorder %s111, %s113
    %p117 = scmp.eq.s32.totalorder %s14, 0
    %p118 = por %p116, %p117
    %p119 = scmp.ne.s32.totalorder %s111, %s113
    %p120 = scmp.eq.s32.totalorder %s19, 1
    %p121 = por %p119, %p120
    %p122 = scmp.ne.s32.totalorder %s113, %s114
    %p123 = scmp.eq.s32.totalorder %s19, 0
    %p124 = por %p122, %p123
    %p125 = scmp.ne.s32.totalorder %s113, %s114
    %p126 = scmp.eq.s32.totalorder %s20, 1
    %p127 = por %p125, %p126
    %p129 = scmp.ne.s32.totalorder %s114, %s128
    %p130 = scmp.eq.s32.totalorder %s20, 0
    %p131 = por %p129, %p130
    %s132 = ssub.s32 %s14, %s21
    %p133 = scmp.eq.s32.totalorder %s132, 0
    %s135 = sadd.s32 %s134, 1
    %s136 = scalar_select %p133, %s134, %s135
    %p139 = pneg %p133
    %p140 = scmp.eq.s32.totalorder %s14, 1
    %p141 = por %p139, %p140
    %p142 = scmp.ne.s32.totalorder %s134, %s137
    %p143 = scmp.eq.s32.totalorder %s14, 0
    %p144 = por %p142, %p143
    %p145 = scmp.ne.s32.totalorder %s134, %s137
    %p146 = scmp.eq.s32.totalorder %s19, 1
    %p147 = por %p145, %p146
    %p148 = scmp.ne.s32.totalorder %s137, %s138
    %p149 = scmp.eq.s32.totalorder %s19, 0
    %p150 = por %p148, %p149
    %p151 = scmp.ne.s32.totalorder %s137, %s138
    %p152 = scmp.eq.s32.totalorder %s20, 1
    %p153 = por %p151, %p152
    %p155 = scmp.ne.s32.totalorder %s138, %s154
    %p156 = scmp.eq.s32.totalorder %s20, 0
    %p157 = por %p155, %p156
    %s158 = ssub.s32 %s14, %s21
    %p159 = scmp.eq.s32.totalorder %s158, 0
    %s161 = sadd.s32 %s160, 1
    %s162 = scalar_select %p159, %s160, %s161
    %p165 = pneg %p159
    %p166 = scmp.eq.s32.totalorder %s14, 1
    %p167 = por %p165, %p166
    %p168 = scmp.ne.s32.totalorder %s160, %s163
    %p169 = scmp.eq.s32.totalorder %s14, 0
    %p170 = por %p168, %p169
    %p171 = scmp.ne.s32.totalorder %s160, %s163
    %p172 = scmp.eq.s32.totalorder %s19, 1
    %p173 = por %p171, %p172
    %p174 = scmp.ne.s32.totalorder %s163, %s164
    %p175 = scmp.eq.s32.totalorder %s19, 0
    %p176 = por %p174, %p175
    %p177 = scmp.ne.s32.totalorder %s163, %s164
    %p178 = scmp.eq.s32.totalorder %s20, 1
    %p179 = por %p177, %p178
    %p181 = scmp.ne.s32.totalorder %s164, %s180
    %p182 = scmp.eq.s32.totalorder %s20, 0
    %p183 = por %p181, %p182
    %s184 = ssub.s32 %s14, %s21
    %p185 = scmp.eq.s32.totalorder %s184, 0
    %s187 = sadd.s32 %s186, 1
    %s188 = scalar_select %p185, %s186, %s187
    %p191 = pneg %p185
    %p192 = scmp.eq.s32.totalorder %s14, 1
    %p193 = por %p191, %p192
    %p194 = scmp.ne.s32.totalorder %s186, %s189
    %p195 = scmp.eq.s32.totalorder %s14, 0
    %p196 = por %p194, %p195
    %p197 = scmp.ne.s32.totalorder %s186, %s189
    %p198 = scmp.eq.s32.totalorder %s19, 1
    %p199 = por %p197, %p198
    %p200 = scmp.ne.s32.totalorder %s189, %s190
    %p201 = scmp.eq.s32.totalorder %s19, 0
    %p202 = por %p200, %p201
    %p203 = scmp.ne.s32.totalorder %s189, %s190
    %p204 = scmp.eq.s32.totalorder %s20, 1
    %p205 = por %p203, %p204
    %p207 = scmp.ne.s32.totalorder %s190, %s206
    %p208 = scmp.eq.s32.totalorder %s20, 0
    %p209 = por %p207, %p208
    %p210 = scmp.le.s32.totalorder 1, %s14
    %p211 = scmp.lt.s32.totalorder %s14, 3
    %p212 = pnand %p210, %p211
    %p213 = pneg %p212
    // Predicated region
    $region9: #{inconv_forward.3} parent=5 // pred_check
      _
    $region10: #{inconv_forward.3} parent=5 // pred_check_branch
      %215 = sbr.rel (%p212) target = $region12
    $region11: #{inconv_forward.3} parent=5 // pred_region
      %s216 = ssub.s32 %s14, 1
      // Predicated region
      $region13: #{inconv_forward.3} parent=11 // pred_check
        %p217 = pneg %p61
      $region14: #{inconv_forward.3} parent=11 // pred_check_branch
        %219 = sbr.rel (%p217) target = $region16
      $region15: #{inconv_forward.3} parent=11 // pred_region
        _
      $region16: #{inconv_forward.3} parent=11 // pred_fallthru
        _
      // Predicated region
      $region17: #{inconv_forward.3} parent=11 // pred_check
        %p220 = pneg %p82
      $region18: #{inconv_forward.3} parent=11 // pred_check_branch
        %222 = sbr.rel (%p220) target = $region20
      $region19: #{inconv_forward.3} parent=11 // pred_region
        _
      $region20: #{inconv_forward.3} parent=11 // pred_fallthru
        _
      // Predicated region
      $region21: #{inconv_forward.3} parent=11 // pred_check
        %p223 = pneg %p103
      $region22: #{inconv_forward.3} parent=11 // pred_check_branch
        %225 = sbr.rel (%p223) target = $region24
      $region23: #{inconv_forward.3} parent=11 // pred_region
        _
      $region24: #{inconv_forward.3} parent=11 // pred_fallthru
        _
      // Predicated region
      $region25: #{inconv_forward.3} parent=11 // pred_check
        %p226 = pneg %p124
      $region26: #{inconv_forward.3} parent=11 // pred_check_branch
        %228 = sbr.rel (%p226) target = $region28
      $region27: #{inconv_forward.3} parent=11 // pred_region
        _
      $region28: #{inconv_forward.3} parent=11 // pred_fallthru
        _
    $region12: #{inconv_forward.3} parent=5 // pred_fallthru
      _
    %p229 = scmp.lt.s32.totalorder %s14, 2
    // Predicated region
    $region29: #{inconv_forward.3} parent=5 // pred_check
      %p230 = pneg %p229
    $region30: #{inconv_forward.3} parent=5 // pred_check_branch
      %232 = sbr.rel (%p230) target = $region32
    $region31: #{inconv_forward.3} parent=5 // pred_region
      // Predicated region
      $region33: #{inconv_forward.3} parent=31 // pred_check
        %p233 = pneg %p34
      $region34: #{inconv_forward.3} parent=31 // pred_check_branch
        %235 = sbr.rel (%p233) target = $region36
      $region35: #{inconv_forward.3} parent=31 // pred_region
        %p236 = scmp.lt.s32.totalorder %s14, 1
        %s237 = scalar_select %p236, %s14, 1
        %s238 = smul.addr %s237, 43
        %s239 = smul.addr %s238, 8
        %s240 = scalar_lea.vmem %s0, %s239
      $region36: #{inconv_forward.3} parent=31 // pred_fallthru
        _
    $region32: #{inconv_forward.3} parent=5 // pred_fallthru
      _
    %p241 = scmp.le.s32.totalorder 1, %s14
    %p242 = scmp.lt.s32.totalorder %s14, 3
    %p243 = pnand %p241, %p242
    %p244 = pneg %p243
    // Predicated region
    $region37: #{inconv_forward.3} parent=5 // pred_check
      _
    $region38: #{inconv_forward.3} parent=5 // pred_check_branch
      %246 = sbr.rel (%p243) target = $region40
    $region39: #{inconv_forward.3} parent=5 // pred_region
      %s247 = ssub.s32 %s14, 1
      %p248 = scmp.lt.s32.totalorder %s19, 1
      %s249 = scalar_select %p248, %s19, 1
      %s250 = smul.addr %s249, 43
      %s251 = smul.addr %s250, 8
      %s252 = scalar_lea.vmem %s0, %s251
      %p253 = pneg %p40
      %p254 = pneg %p37
      %p255 = pneg %p61
      %p256 = pneg %p58
      %p257 = pneg %p82
      %p258 = pneg %p79
      %p259 = pneg %p103
      %p260 = pneg %p100
      %p261 = pneg %p124
      %p262 = pneg %p121
      %p263 = pneg %p150
      %p264 = pneg %p147
      %p265 = scmp.lt.s32.totalorder %s19, 1
      %s266 = scalar_select %p265, %s19, 1
      %s267 = smul.addr %s266, 43
      %s268 = smul.addr %s267, 8
      %s269 = scalar_lea.vmem %s5, %s268
      %p270 = pneg %p176
      %p271 = pneg %p173
      %p272 = scmp.lt.s32.totalorder %s19, 1
      %s273 = scalar_select %p272, %s19, 1
      %s274 = scalar_lea.vmem %s6, %s273
      %p275 = pneg %p202
      %p276 = pneg %p199
      %p277 = scmp.lt.s32.totalorder %s19, 1
      %s278 = scalar_select %p277, %s19, 1
      %s279 = scalar_lea.vmem %s7, %s278
      %p280 = scmp.lt.s32.totalorder %s19, 1
      %s281 = scalar_select %p280, %s19, 1
      %s282 = smul.addr %s281, 43
      %s283 = smul.addr %s282, 8
      %s284 = scalar_lea.vmem %s0, %s283
      %p285 = scmp.lt.s32.totalorder %s19, 1
      %s286 = scalar_select %p285, %s19, 1
      %s287 = smul.addr %s286, 43
      %s288 = smul.addr %s287, 8
      %s289 = scalar_lea.vmem %s5, %s288
      %p290 = scmp.lt.s32.totalorder %s19, 1
      %s291 = scalar_select %p290, %s19, 1
      %s292 = scalar_lea.vmem %s6, %s291
      %p293 = scmp.lt.s32.totalorder %s19, 1
      %s294 = scalar_select %p293, %s19, 1
      %s295 = scalar_lea.vmem %s7, %s294
      %v297 = vld [vmem:[%s284] sm:$0xff]
      %v298 = vld [vmem:[%s284 + $0x8] sm:$0xff]
      %v299 = vld [vmem:[%s284 + $0x10] sm:$0xff]
      %v300 = vld [vmem:[%s284 + $0x18] sm:$0xff]
      %v301 = vld [vmem:[%s284 + $0x20] sm:$0xff]
      %v302 = vld [vmem:[%s284 + $0x28] sm:$0xff]
      %v303 = vld [vmem:[%s284 + $0x30] sm:$0xff]
      %v304 = vld [vmem:[%s284 + $0x38] sm:$0xff]
      %v305 = vld [vmem:[%s284 + $0x40] sm:$0xff]
      %v306 = vld [vmem:[%s284 + $0x48] sm:$0xff]
      %v307 = vld [vmem:[%s284 + $0x50] sm:$0xff]
      %v308 = vld [vmem:[%s284 + $0x58] sm:$0xff]
      %v309 = vld [vmem:[%s284 + $0x60] sm:$0xff]
      %v310 = vld [vmem:[%s284 + $0x68] sm:$0xff]
      %v311 = vld [vmem:[%s284 + $0x70] sm:$0xff]
      %v312 = vld [vmem:[%s284 + $0x78] sm:$0xff]
      %v313 = vld [vmem:[%s284 + $0x80] sm:$0xff]
      %v314 = vld [vmem:[%s284 + $0x88] sm:$0xff]
      %v315 = vld [vmem:[%s284 + $0x90] sm:$0xff]
      %v316 = vld [vmem:[%s284 + $0x98] sm:$0xff]
      %v317 = vld [vmem:[%s284 + $0xa0] sm:$0xff]
      %v318 = vld [vmem:[%s284 + $0xa8] sm:$0xff]
      %v319 = vld [vmem:[%s284 + $0xb0] sm:$0xff]
      %v320 = vld [vmem:[%s284 + $0xb8] sm:$0xff]
      %v321 = vld [vmem:[%s284 + $0xc0] sm:$0xff]
      %v322 = vld [vmem:[%s284 + $0xc8] sm:$0xff]
      %v323 = vld [vmem:[%s284 + $0xd0] sm:$0xff]
      %v324 = vld [vmem:[%s284 + $0xd8] sm:$0xff]
      %v325 = vld [vmem:[%s284 + $0xe0] sm:$0xff]
      %v326 = vld [vmem:[%s284 + $0xe8] sm:$0xff]
      %v327 = vld [vmem:[%s284 + $0xf0] sm:$0xff]
      %v328 = vld [vmem:[%s284 + $0xf8] sm:$0xff]
      %v329 = vld [vmem:[%s284 + $0x100] sm:$0xff]
      %v330 = vld [vmem:[%s284 + $0x108] sm:$0xff]
      %v331 = vld [vmem:[%s284 + $0x110] sm:$0xff]
      %v332 = vld [vmem:[%s284 + $0x118] sm:$0xff]
      %v333 = vld [vmem:[%s284 + $0x120] sm:$0xff]
      %v334 = vld [vmem:[%s284 + $0x128] sm:$0xff]
      %v335 = vld [vmem:[%s284 + $0x130] sm:$0xff]
      %v336 = vld [vmem:[%s284 + $0x138] sm:$0xff]
      %v337 = vld [vmem:[%s284 + $0x140] sm:$0xff]
      %v338 = vld [vmem:[%s284 + $0x148] sm:$0xff]
      %v339 = vld [vmem:[%s4 + $0x10] sm:$0xff]
      %v340 = vld [vmem:[%s4 + $0x18] sm:$0xff]
      %v341 = vld [vmem:[%s4 + $0x20] sm:$0xff]
      %v342 = vld [vmem:[%s4 + $0x28] sm:$0xff]
      %v343 = vld [vmem:[%s4 + $0x30] sm:$0xff]
      %v344 = vld [vmem:[%s4 + $0x38] sm:$0xff]
      %v345 = vld [vmem:[%s4 + $0x40] sm:$0xff]
      %v346 = vld [vmem:[%s4 + $0x48] sm:$0xff]
      %v347 = vld [vmem:[%s4 + $0x50] sm:$0xff]
      %v348 = vld [vmem:[%s4 + $0x58] sm:$0xff]
      %v349 = vld [vmem:[%s4 + $0x60] sm:$0xff]
      %v350 = vld [vmem:[%s4 + $0x68] sm:$0xff]
      %v351 = vld [vmem:[%s4 + $0x70] sm:$0xff]
      %v352 = vld [vmem:[%s4 + $0x78] sm:$0xff]
      %v353 = vld [vmem:[%s4 + $0x80] sm:$0xff]
      %v354 = vld [vmem:[%s4 + $0x88] sm:$0xff]
      %v355 = vld [vmem:[%s4 + $0x90] sm:$0xff]
      %v356 = vld [vmem:[%s4 + $0x98] sm:$0xff]
      %v357 = vld [vmem:[%s4 + $0xa0] sm:$0xff]
      %v358 = vld [vmem:[%s4 + $0xa8] sm:$0xff]
      %v359 = vld [vmem:[%s4 + $0xb0] sm:$0xff]
      %v360 = vld [vmem:[%s4 + $0xb8] sm:$0xff]
      %v361 = vld [vmem:[%s4 + $0xc0] sm:$0xff]
      %v362 = vld [vmem:[%s4 + $0xc8] sm:$0xff]
      %v363 = vld [vmem:[%s4 + $0xd0] sm:$0xff]
      %v364 = vld [vmem:[%s4 + $0xd8] sm:$0xff]
      %v365 = vld [vmem:[%s4 + $0xe0] sm:$0xff]
      %v366 = vld [vmem:[%s4 + $0xe8] sm:$0xff]
      %v367 = vld [vmem:[%s4 + $0xf0] sm:$0xff]
      %v368 = vld [vmem:[%s4 + $0xf8] sm:$0xff]
      %v369 = vld [vmem:[%s4 + $0x100] sm:$0xff]
      %v370 = vld [vmem:[%s4 + $0x108] sm:$0xff]
      %v371 = vld [vmem:[%s4 + $0x110] sm:$0xff]
      %v372 = vld [vmem:[%s4 + $0x118] sm:$0xff]
      %v373 = vld [vmem:[%s4 + $0x120] sm:$0xff]
      %v374 = vld [vmem:[%s4 + $0x128] sm:$0xff]
      %v375 = vld [vmem:[%s4 + $0x130] sm:$0xff]
      %v376 = vpack.c.bf16 %v298, %v297
      %v377 = vpack.c.bf16 %v300, %v299
      %v378 = vpack.c.bf16 %v302, %v301
      %v379 = vpack.c.bf16 %v304, %v303
      %v380 = vpack.c.bf16 %v306, %v305
      %v381 = vpack.c.bf16 %v308, %v307
      %v382 = vpack.c.bf16 %v310, %v309
      %v383 = vpack.c.bf16 %v312, %v311
      %v384 = vpack.c.bf16 %v314, %v313
      %v385 = vpack.c.bf16 %v316, %v315
      %v386 = vpack.c.bf16 %v318, %v317
      %v387 = vpack.c.bf16 %v320, %v319
      %v388 = vpack.c.bf16 %v322, %v321
      %v389 = vpack.c.bf16 %v324, %v323
      %v390 = vpack.c.bf16 %v326, %v325
      %v391 = vpack.c.bf16 %v328, %v327
      %v392 = vpack.c.bf16 %v330, %v329
      %v393 = vpack.c.bf16 %v332, %v331
      %v394 = vpack.c.bf16 %v334, %v333
      %v395 = vpack.c.bf16 %v336, %v335
      %v396 = vpack.c.bf16 %v338, %v337
      %v397 = vld [vmem:[%s1] sm:$0x3]
      %s398 = scalar_lea.vmem %s1, 2
      %v399 = vld [vmem:[%s398] sm:$0x3]
      %vm400 = vsmask.f32 7424
      %v402 = vshrl.u32 %v376, 16
      %v404 = vshll.u32 %v376, 16
      %v406 = vrot.slane %v404, 1
      %v407 = vor.u32 %v402, %v406
      %v409 = vshll.u32 %v377, 16
      %v411 = vrot.slane %v409, 1
      %v412 = vsel %vm400, %v407, %v411
      %v413 = vshrl.u32 %v377, 16
      %v415 = vor.u32 %v413, %v411
      %v417 = vshll.u32 %v378, 16
      %v419 = vrot.slane %v417, 1
      %v420 = vsel %vm400, %v415, %v419
      %v421 = vshrl.u32 %v378, 16
      %v423 = vor.u32 %v421, %v419
      %v425 = vshll.u32 %v379, 16
      %v427 = vrot.slane %v425, 1
      %v428 = vsel %vm400, %v423, %v427
      %v429 = vshrl.u32 %v379, 16
      %v431 = vor.u32 %v429, %v427
      %v433 = vshll.u32 %v380, 16
      %v435 = vrot.slane %v433, 1
      %v436 = vsel %vm400, %v431, %v435
      %v437 = vshrl.u32 %v380, 16
      %v439 = vor.u32 %v437, %v435
      %v441 = vshll.u32 %v381, 16
      %v443 = vrot.slane %v441, 1
      %v444 = vsel %vm400, %v439, %v443
      %v445 = vshrl.u32 %v381, 16
      %v447 = vor.u32 %v445, %v443
      %v449 = vshll.u32 %v382, 16
      %v451 = vrot.slane %v449, 1
      %v452 = vsel %vm400, %v447, %v451
      %v453 = vshrl.u32 %v382, 16
      %v455 = vor.u32 %v453, %v451
      %v457 = vshll.u32 %v383, 16
      %v459 = vrot.slane %v457, 1
      %v460 = vsel %vm400, %v455, %v459
      %v461 = vshrl.u32 %v383, 16
      %v463 = vor.u32 %v461, %v459
      %v465 = vshll.u32 %v384, 16
      %v467 = vrot.slane %v465, 1
      %v468 = vsel %vm400, %v463, %v467
      %v469 = vshrl.u32 %v384, 16
      %v471 = vor.u32 %v469, %v467
      %v473 = vshll.u32 %v385, 16
      %v475 = vrot.slane %v473, 1
      %v476 = vsel %vm400, %v471, %v475
      %v477 = vshrl.u32 %v385, 16
      %v479 = vor.u32 %v477, %v475
      %v481 = vshll.u32 %v386, 16
      %v483 = vrot.slane %v481, 1
      %v484 = vsel %vm400, %v479, %v483
      %v485 = vshrl.u32 %v386, 16
      %v487 = vor.u32 %v485, %v483
      %v489 = vshll.u32 %v387, 16
      %v491 = vrot.slane %v489, 1
      %v492 = vsel %vm400, %v487, %v491
      %v493 = vshrl.u32 %v387, 16
      %v495 = vor.u32 %v493, %v491
      %v497 = vshll.u32 %v388, 16
      %v499 = vrot.slane %v497, 1
      %v500 = vsel %vm400, %v495, %v499
      %v501 = vshrl.u32 %v388, 16
      %v503 = vor.u32 %v501, %v499
      %v505 = vshll.u32 %v389, 16
      %v507 = vrot.slane %v505, 1
      %v508 = vsel %vm400, %v503, %v507
      %v509 = vshrl.u32 %v389, 16
      %v511 = vor.u32 %v509, %v507
      %v513 = vshll.u32 %v390, 16
      %v515 = vrot.slane %v513, 1
      %v516 = vsel %vm400, %v511, %v515
      %v517 = vshrl.u32 %v390, 16
      %v519 = vor.u32 %v517, %v515
      %v521 = vshll.u32 %v391, 16
      %v523 = vrot.slane %v521, 1
      %v524 = vsel %vm400, %v519, %v523
      %v525 = vshrl.u32 %v391, 16
      %v527 = vor.u32 %v525, %v523
      %v529 = vshll.u32 %v392, 16
      %v531 = vrot.slane %v529, 1
      %v532 = vsel %vm400, %v527, %v531
      %v533 = vshrl.u32 %v392, 16
      %v535 = vor.u32 %v533, %v531
      %v537 = vshll.u32 %v393, 16
      %v539 = vrot.slane %v537, 1
      %v540 = vsel %vm400, %v535, %v539
      %v541 = vshrl.u32 %v393, 16
      %v543 = vor.u32 %v541, %v539
      %v545 = vshll.u32 %v394, 16
      %v547 = vrot.slane %v545, 1
      %v548 = vsel %vm400, %v543, %v547
      %vm549 = vcmask 31744
      %v551 = vsel %vm549, %v412, 0
      %v554 = vsel %vm549, %v420, 0
      %v557 = vsel %vm549, %v428, 0
      %v560 = vsel %vm549, %v436, 0
      %v563 = vsel %vm549, %v444, 0
      %v566 = vsel %vm549, %v452, 0
      %v569 = vsel %vm549, %v460, 0
      %v572 = vsel %vm549, %v468, 0
      %v575 = vsel %vm549, %v476, 0
      %v578 = vsel %vm549, %v484, 0
      %v581 = vsel %vm549, %v492, 0
      %v584 = vsel %vm549, %v500, 0
      %v587 = vsel %vm549, %v508, 0
      %v590 = vsel %vm549, %v516, 0
      %v593 = vsel %vm549, %v524, 0
      %v596 = vsel %vm549, %v532, 0
      %v599 = vsel %vm549, %v540, 0
      %v602 = vsel %vm549, %v548, 0
      %vm604 = vcmask 1041408
      %v606 = vsel %vm604, %v399, 0
      %608 = vmatprep.subr.bf16.mxu0 0
      %609 = vmatpush1.bf16.msra.mxu0 %v606
      %610 = vmatprep.subr.bf16.mxu0 0
      %611 = vmatpush1.bf16.msra.mxu0 0
      %612 = vmatprep.subr.bf16.mxu0 0
      %613 = vmatpush1.bf16.msra.mxu0 0
      %614 = vmatprep.subr.bf16.mxu0 0
      %615 = vmatpush1.bf16.msra.mxu0 0
      %616 = vmatprep.subr.bf16.mxu0 0
      %617 = vmatpush1.bf16.msra.mxu0 0
      %618 = vmatprep.subr.bf16.mxu0 0
      %619 = vmatpush1.bf16.msra.mxu0 0
      %620 = vmatprep.subr.bf16.mxu0 0
      %621 = vmatpush1.bf16.msra.mxu0 0
      %622 = vmatprep.subr.bf16.mxu0 0
      %623 = vmatpush1.bf16.msra.mxu0 0
      %624 = vmatprep.subr.bf16.mxu0 0
      %625 = vmatpush1.bf16.msra.mxu0 0
      %626 = vmatprep.subr.bf16.mxu0 0
      %627 = vmatpush1.bf16.msra.mxu0 0
      %628 = vmatprep.subr.bf16.mxu0 0
      %629 = vmatpush1.bf16.msra.mxu0 0
      %630 = vmatprep.subr.bf16.mxu0 0
      %631 = vmatpush1.bf16.msra.mxu0 0
      %632 = vmatprep.subr.bf16.mxu0 0
      %633 = vmatpush1.bf16.msra.mxu0 0
      %634 = vmatprep.subr.bf16.mxu0 0
      %635 = vmatpush1.bf16.msra.mxu0 0
      %636 = vmatprep.subr.bf16.mxu0 0
      %637 = vmatpush1.bf16.msra.mxu0 0
      %638 = vmatprep.subr.bf16.mxu0 0
      %639 = vmatpush1.bf16.msra.mxu0 0
      %640 = vmatprep.mubr.bf16.mxu0 0
      %641 = vmatmul.mubr.bf16.gmra.mrb[0].mxu0 %v551
      %v642 = vpop.f32.mrb[0].mxu0
      %v643 = vadd.f32 0.0, %v642
      %v644 = vpop.f32.mrb[0].mxu0
      %v645 = vpop.f32.mrb[0].mxu0
      %v646 = vadd.f32 0.0, %v645
      %v647 = vpop.f32.mrb[0].mxu0
      %648 = vmatprep.mubr.bf16.mxu0 0
      %649 = vmatmul.mubr.bf16.gmra.mrb[0].mxu0 %v554
      %v650 = vpop.f32.mrb[0].mxu0
      %v651 = vadd.f32 0.0, %v650
      %v652 = vpop.f32.mrb[0].mxu0
      %v653 = vpop.f32.mrb[0].mxu0
      %v654 = vadd.f32 0.0, %v653
      %v655 = vpop.f32.mrb[0].mxu0
      %656 = vmatprep.mubr.bf16.mxu0 0
      %657 = vmatmul.mubr.bf16.gmra.mrb[0].mxu0 %v557
      %v658 = vpop.f32.mrb[0].mxu0
      %v659 = vadd.f32 0.0, %v658
      %v660 = vpop.f32.mrb[0].mxu0
      %v661 = vpop.f32.mrb[0].mxu0
      %v662 = vadd.f32 0.0, %v661
      %v663 = vpop.f32.mrb[0].mxu0
      %664 = vmatprep.mubr.bf16.mxu0 0
      %665 = vmatmul.mubr.bf16.gmra.mrb[0].mxu0 %v560
      %v666 = vpop.f32.mrb[0].mxu0
      %v667 = vadd.f32 0.0, %v666
      %v668 = vpop.f32.mrb[0].mxu0
      %v669 = vpop.f32.mrb[0].mxu0
      %v670 = vadd.f32 0.0, %v669
      %v671 = vpop.f32.mrb[0].mxu0
      %672 = vmatprep.mubr.bf16.mxu0 0
      %673 = vmatmul.mubr.bf16.gmra.mrb[0].mxu0 %v563
      %v674 = vpop.f32.mrb[0].mxu0
      %v675 = vadd.f32 0.0, %v674
      %v676 = vpop.f32.mrb[0].mxu0
      %v677 = vpop.f32.mrb[0].mxu0
      %v678 = vadd.f32 0.0, %v677
      %v679 = vpop.f32.mrb[0].mxu0
      %680 = vmatprep.mubr.bf16.mxu0 0
      %681 = vmatmul.mubr.bf16.gmra.mrb[0].mxu0 %v566
      %v682 = vpop.f32.mrb[0].mxu0
      %v683 = vadd.f32 0.0, %v682
      %v684 = vpop.f32.mrb[0].mxu0
      %v685 = vpop.f32.mrb[0].mxu0
      %v686 = vadd.f32 0.0, %v685
      %v687 = vpop.f32.mrb[0].mxu0
      %688 = vmatprep.mubr.bf16.mxu0 0
      %689 = vmatmul.mubr.bf16.gmra.mrb[0].mxu0 %v569
      %v690 = vpop.f32.mrb[0].mxu0
      %v691 = vadd.f32 0.0, %v690
      %v692 = vpop.f32.mrb[0].mxu0
      %v693 = vpop.f32.mrb[0].mxu0
      %v694 = vadd.f32 0.0, %v693
      %v695 = vpop.f32.mrb[0].mxu0
      %696 = vmatprep.mubr.bf16.mxu0 0
      %697 = vmatmul.mubr.bf16.gmra.mrb[0].mxu0 %v572
      %v698 = vpop.f32.mrb[0].mxu0
      %v699 = vadd.f32 0.0, %v698
      %v700 = vpop.f32.mrb[0].mxu0
      %v701 = vpop.f32.mrb[0].mxu0
      %v702 = vadd.f32 0.0, %v701
      %v703 = vpop.f32.mrb[0].mxu0
      %704 = vmatprep.mubr.bf16.mxu0 0
      %705 = vmatmul.mubr.bf16.gmra.mrb[0].mxu0 %v575
      %v706 = vpop.f32.mrb[0].mxu0
      %v707 = vadd.f32 0.0, %v706
      %v708 = vpop.f32.mrb[0].mxu0
      %v709 = vpop.f32.mrb[0].mxu0
      %v710 = vadd.f32 0.0, %v709
      %v711 = vpop.f32.mrb[0].mxu0
      %712 = vmatprep.mubr.bf16.mxu0 0
      %713 = vmatmul.mubr.bf16.gmra.mrb[0].mxu0 %v578
      %v714 = vpop.f32.mrb[0].mxu0
      %v715 = vadd.f32 0.0, %v714
      %v716 = vpop.f32.mrb[0].mxu0
      %v717 = vpop.f32.mrb[0].mxu0
      %v718 = vadd.f32 0.0, %v717
      %v719 = vpop.f32.mrb[0].mxu0
      %720 = vmatprep.mubr.bf16.mxu0 0
      %721 = vmatmul.mubr.bf16.gmra.mrb[0].mxu0 %v581
      %v722 = vpop.f32.mrb[0].mxu0
      %v723 = vadd.f32 0.0, %v722
      %v724 = vpop.f32.mrb[0].mxu0
      %v725 = vpop.f32.mrb[0].mxu0
      %v726 = vadd.f32 0.0, %v725
      %v727 = vpop.f32.mrb[0].mxu0
      %728 = vmatprep.mubr.bf16.mxu0 0
      %729 = vmatmul.mubr.bf16.gmra.mrb[0].mxu0 %v584
      %v730 = vpop.f32.mrb[0].mxu0
      %v731 = vadd.f32 0.0, %v730
      %v732 = vpop.f32.mrb[0].mxu0
      %v733 = vpop.f32.mrb[0].mxu0
      %v734 = vadd.f32 0.0, %v733
      %v735 = vpop.f32.mrb[0].mxu0
      %736 = vmatprep.mubr.bf16.mxu0 0
      %737 = vmatmul.mubr.bf16.gmra.mrb[0].mxu0 %v587
      %v738 = vpop.f32.mrb[0].mxu0
      %v739 = vadd.f32 0.0, %v738
      %v740 = vpop.f32.mrb[0].mxu0
      %v741 = vpop.f32.mrb[0].mxu0
      %v742 = vadd.f32 0.0, %v741
      %v743 = vpop.f32.mrb[0].mxu0
      %744 = vmatprep.mubr.bf16.mxu0 0
      %745 = vmatmul.mubr.bf16.gmra.mrb[0].mxu0 %v590
      %v746 = vpop.f32.mrb[0].mxu0
      %v747 = vadd.f32 0.0, %v746
      %v748 = vpop.f32.mrb[0].mxu0
      %v749 = vpop.f32.mrb[0].mxu0
      %v750 = vadd.f32 0.0, %v749
      %v751 = vpop.f32.mrb[0].mxu0
      %752 = vmatprep.mubr.bf16.mxu0 0
      %753 = vmatmul.mubr.bf16.gmra.mrb[0].mxu0 %v593
      %v754 = vpop.f32.mrb[0].mxu0
      %v755 = vadd.f32 0.0, %v754
      %v756 = vpop.f32.mrb[0].mxu0
      %v757 = vpop.f32.mrb[0].mxu0
      %v758 = vadd.f32 0.0, %v757
      %v759 = vpop.f32.mrb[0].mxu0
      %760 = vmatprep.mubr.bf16.mxu0 0
      %761 = vmatmul.mubr.bf16.gmra.mrb[0].mxu0 %v596
      %v762 = vpop.f32.mrb[0].mxu0
      %v763 = vadd.f32 0.0, %v762
      %v764 = vpop.f32.mrb[0].mxu0
      %v765 = vpop.f32.mrb[0].mxu0
      %v766 = vadd.f32 0.0, %v765
      %v767 = vpop.f32.mrb[0].mxu0
      %768 = vmatprep.mubr.bf16.mxu0 0
      %769 = vmatmul.mubr.bf16.gmra.mrb[0].mxu0 %v599
      %v770 = vpop.f32.mrb[0].mxu0
      %v771 = vadd.f32 0.0, %v770
      %v772 = vpop.f32.mrb[0].mxu0
      %v773 = vpop.f32.mrb[0].mxu0
      %v774 = vadd.f32 0.0, %v773
      %v775 = vpop.f32.mrb[0].mxu0
      %776 = vmatprep.mubr.bf16.mxu0 0
      %777 = vmatmul.mubr.bf16.gmra.mrb[0].mxu0 %v602
      %v778 = vpop.f32.mrb[0].mxu0
      %v779 = vadd.f32 0.0, %v778
      %v780 = vpop.f32.mrb[0].mxu0
      %v781 = vpop.f32.mrb[0].mxu0
      %v782 = vadd.f32 0.0, %v781
      %v783 = vpop.f32.mrb[0].mxu0
      %784 = vdwg.mxu0
      %v785 = vsel %vm549, %v376, 0
      %v787 = vsel %vm549, %v377, 0
      %v789 = vsel %vm549, %v378, 0
      %v791 = vsel %vm549, %v379, 0
      %v793 = vsel %vm549, %v380, 0
      %v795 = vsel %vm549, %v381, 0
      %v797 = vsel %vm549, %v382, 0
      %v799 = vsel %vm549, %v383, 0
      %v801 = vsel %vm549, %v384, 0
      %v803 = vsel %vm549, %v385, 0
      %v805 = vsel %vm549, %v386, 0
      %v807 = vsel %vm549, %v387, 0
      %v809 = vsel %vm549, %v388, 0
      %v811 = vsel %vm549, %v389, 0
      %v813 = vsel %vm549, %v390, 0
      %v815 = vsel %vm549, %v391, 0
      %v817 = vsel %vm549, %v392, 0
      %v819 = vsel %vm549, %v393, 0
      %v822 = vsel %vm604, %v397, 0
      %824 = vmatprep.subr.bf16.mxu0 0
      %825 = vmatpush1.bf16.msra.mxu0 %v822
      %826 = vmatprep.subr.bf16.mxu0 0
      %827 = vmatpush1.bf16.msra.mxu0 0
      %828 = vmatprep.subr.bf16.mxu0 0
      %829 = vmatpush1.bf16.msra.mxu0 0
      %830 = vmatprep.subr.bf16.mxu0 0
      %831 = vmatpush1.bf16.msra.mxu0 0
      %832 = vmatprep.subr.bf16.mxu0 0
      %833 = vmatpush1.bf16.msra.mxu0 0
      %834 = vmatprep.subr.bf16.mxu0 0
      %835 = vmatpush1.bf16.msra.mxu0 0
      %836 = vmatprep.subr.bf16.mxu0 0
      %837 = vmatpush1.bf16.msra.mxu0 0
      %838 = vmatprep.subr.bf16.mxu0 0
      %839 = vmatpush1.bf16.msra.mxu0 0
      %840 = vmatprep.subr.bf16.mxu0 0
      %841 = vmatpush1.bf16.msra.mxu0 0
      %842 = vmatprep.subr.bf16.mxu0 0
      %843 = vmatpush1.bf16.msra.mxu0 0
      %844 = vmatprep.subr.bf16.mxu0 0
      %845 = vmatpush1.bf16.msra.mxu0 0
      %846 = vmatprep.subr.bf16.mxu0 0
      %847 = vmatpush1.bf16.msra.mxu0 0
      %848 = vmatprep.subr.bf16.mxu0 0
      %849 = vmatpush1.bf16.msra.mxu0 0
      %850 = vmatprep.subr.bf16.mxu0 0
      %851 = vmatpush1.bf16.msra.mxu0 0
      %852 = vmatprep.subr.bf16.mxu0 0
      %853 = vmatpush1.bf16.msra.mxu0 0
      %854 = vmatprep.subr.bf16.mxu0 0
      %855 = vmatpush1.bf16.msra.mxu0 0
      %856 = vmatprep.mubr.bf16.mxu0 0
      %857 = vmatmul.mubr.bf16.gmra.mrb[0].mxu0 %v785
      %v858 = vpop.f32.mrb[0].mxu0
      %v859 = vadd.f32 %v643, %v858
      %v860 = vpop.f32.mrb[0].mxu0
      %v861 = vpop.f32.mrb[0].mxu0
      %v862 = vadd.f32 %v646, %v861
      %v863 = vpop.f32.mrb[0].mxu0
      %864 = vmatprep.mubr.bf16.mxu0 0
      %865 = vmatmul.mubr.bf16.gmra.mrb[0].mxu0 %v787
      %v866 = vpop.f32.mrb[0].mxu0
      %v867 = vadd.f32 %v651, %v866
      %v868 = vpop.f32.mrb[0].mxu0
      %v869 = vpop.f32.mrb[0].mxu0
      %v870 = vadd.f32 %v654, %v869
      %v871 = vpop.f32.mrb[0].mxu0
      %872 = vmatprep.mubr.bf16.mxu0 0
      %873 = vmatmul.mubr.bf16.gmra.mrb[0].mxu0 %v789
      %v874 = vpop.f32.mrb[0].mxu0
      %v875 = vadd.f32 %v659, %v874
      %v876 = vpop.f32.mrb[0].mxu0
      %v877 = vpop.f32.mrb[0].mxu0
      %v878 = vadd.f32 %v662, %v877
      %v879 = vpop.f32.mrb[0].mxu0
      %880 = vmatprep.mubr.bf16.mxu0 0
      %881 = vmatmul.mubr.bf16.gmra.mrb[0].mxu0 %v791
      %v882 = vpop.f32.mrb[0].mxu0
      %v883 = vadd.f32 %v667, %v882
      %v884 = vpop.f32.mrb[0].mxu0
      %v885 = vpop.f32.mrb[0].mxu0
      %v886 = vadd.f32 %v670, %v885
      %v887 = vpop.f32.mrb[0].mxu0
      %888 = vmatprep.mubr.bf16.mxu0 0
      %889 = vmatmul.mubr.bf16.gmra.mrb[0].mxu0 %v793
      %v890 = vpop.f32.mrb[0].mxu0
      %v891 = vadd.f32 %v675, %v890
      %v892 = vpop.f32.mrb[0].mxu0
      %v893 = vpop.f32.mrb[0].mxu0
      %v894 = vadd.f32 %v678, %v893
      %v895 = vpop.f32.mrb[0].mxu0
      %896 = vmatprep.mubr.bf16.mxu0 0
      %897 = vmatmul.mubr.bf16.gmra.mrb[0].mxu0 %v795
      %v898 = vpop.f32.mrb[0].mxu0
      %v899 = vadd.f32 %v683, %v898
      %v900 = vpop.f32.mrb[0].mxu0
      %v901 = vpop.f32.mrb[0].mxu0
      %v902 = vadd.f32 %v686, %v901
      %v903 = vpop.f32.mrb[0].mxu0
      %904 = vmatprep.mubr.bf16.mxu0 0
      %905 = vmatmul.mubr.bf16.gmra.mrb[0].mxu0 %v797
      %v906 = vpop.f32.mrb[0].mxu0
      %v907 = vadd.f32 %v691, %v906
      %v908 = vpop.f32.mrb[0].mxu0
      %v909 = vpop.f32.mrb[0].mxu0
      %v910 = vadd.f32 %v694, %v909
      %v911 = vpop.f32.mrb[0].mxu0
      %912 = vmatprep.mubr.bf16.mxu0 0
      %913 = vmatmul.mubr.bf16.gmra.mrb[0].mxu0 %v799
      %v914 = vpop.f32.mrb[0].mxu0
      %v915 = vadd.f32 %v699, %v914
      %v916 = vpop.f32.mrb[0].mxu0
      %v917 = vpop.f32.mrb[0].mxu0
      %v918 = vadd.f32 %v702, %v917
      %v919 = vpop.f32.mrb[0].mxu0
      %920 = vmatprep.mubr.bf16.mxu0 0
      %921 = vmatmul.mubr.bf16.gmra.mrb[0].mxu0 %v801
      %v922 = vpop.f32.mrb[0].mxu0
      %v923 = vadd.f32 %v707, %v922
      %v924 = vpop.f32.mrb[0].mxu0
      %v925 = vpop.f32.mrb[0].mxu0
      %v926 = vadd.f32 %v710, %v925
      %v927 = vpop.f32.mrb[0].mxu0
      %928 = vmatprep.mubr.bf16.mxu0 0
      %929 = vmatmul.mubr.bf16.gmra.mrb[0].mxu0 %v803
      %v930 = vpop.f32.mrb[0].mxu0
      %v931 = vadd.f32 %v715, %v930
      %v932 = vpop.f32.mrb[0].mxu0
      %v933 = vpop.f32.mrb[0].mxu0
      %v934 = vadd.f32 %v718, %v933
      %v935 = vpop.f32.mrb[0].mxu0
      %936 = vmatprep.mubr.bf16.mxu0 0
      %937 = vmatmul.mubr.bf16.gmra.mrb[0].mxu0 %v805
      %v938 = vpop.f32.mrb[0].mxu0
      %v939 = vadd.f32 %v723, %v938
      %v940 = vpop.f32.mrb[0].mxu0
      %v941 = vpop.f32.mrb[0].mxu0
      %v942 = vadd.f32 %v726, %v941
      %v943 = vpop.f32.mrb[0].mxu0
      %944 = vmatprep.mubr.bf16.mxu0 0
      %945 = vmatmul.mubr.bf16.gmra.mrb[0].mxu0 %v807
      %v946 = vpop.f32.mrb[0].mxu0
      %v947 = vadd.f32 %v731, %v946
      %v948 = vpop.f32.mrb[0].mxu0
      %v949 = vpop.f32.mrb[0].mxu0
      %v950 = vadd.f32 %v734, %v949
      %v951 = vpop.f32.mrb[0].mxu0
      %952 = vmatprep.mubr.bf16.mxu0 0
      %953 = vmatmul.mubr.bf16.gmra.mrb[0].mxu0 %v809
      %v954 = vpop.f32.mrb[0].mxu0
      %v955 = vadd.f32 %v739, %v954
      %v956 = vpop.f32.mrb[0].mxu0
      %v957 = vpop.f32.mrb[0].mxu0
      %v958 = vadd.f32 %v742, %v957
      %v959 = vpop.f32.mrb[0].mxu0
      %960 = vmatprep.mubr.bf16.mxu0 0
      %961 = vmatmul.mubr.bf16.gmra.mrb[0].mxu0 %v811
      %v962 = vpop.f32.mrb[0].mxu0
      %v963 = vadd.f32 %v747, %v962
      %v964 = vpop.f32.mrb[0].mxu0
      %v965 = vpop.f32.mrb[0].mxu0
      %v966 = vadd.f32 %v750, %v965
      %v967 = vpop.f32.mrb[0].mxu0
      %968 = vmatprep.mubr.bf16.mxu0 0
      %969 = vmatmul.mubr.bf16.gmra.mrb[0].mxu0 %v813
      %v970 = vpop.f32.mrb[0].mxu0
      %v971 = vadd.f32 %v755, %v970
      %v972 = vpop.f32.mrb[0].mxu0
      %v973 = vpop.f32.mrb[0].mxu0
      %v974 = vadd.f32 %v758, %v973
      %v975 = vpop.f32.mrb[0].mxu0
      %976 = vmatprep.mubr.bf16.mxu0 0
      %977 = vmatmul.mubr.bf16.gmra.mrb[0].mxu0 %v815
      %v978 = vpop.f32.mrb[0].mxu0
      %v979 = vadd.f32 %v763, %v978
      %v980 = vpop.f32.mrb[0].mxu0
      %v981 = vpop.f32.mrb[0].mxu0
      %v982 = vadd.f32 %v766, %v981
      %v983 = vpop.f32.mrb[0].mxu0
      %984 = vmatprep.mubr.bf16.mxu0 0
      %985 = vmatmul.mubr.bf16.gmra.mrb[0].mxu0 %v817
      %v986 = vpop.f32.mrb[0].mxu0
      %v987 = vadd.f32 %v771, %v986
      %v988 = vpop.f32.mrb[0].mxu0
      %v989 = vpop.f32.mrb[0].mxu0
      %v990 = vadd.f32 %v774, %v989
      %v991 = vpop.f32.mrb[0].mxu0
      %992 = vmatprep.mubr.bf16.mxu0 0
      %993 = vmatmul.mubr.bf16.gmra.mrb[0].mxu0 %v819
      %v994 = vpop.f32.mrb[0].mxu0
      %v995 = vadd.f32 %v779, %v994
      %v996 = vpop.f32.mrb[0].mxu0
      %v997 = vpop.f32.mrb[0].mxu0
      %v998 = vadd.f32 %v782, %v997
      %v999 = vpop.f32.mrb[0].mxu0
      %1000 = vdwg.mxu0
      %s1001 = scalar_lea.vmem %s1, 4
      %v1002 = vld [vmem:[%s1001] sm:$0x3]
      %vm1022 = vcmask 1046528
      %v1023 = vrot.slane %v376, 1
      %v1024 = vrot.slane %v377, 1
      %v1025 = vsel %vm1022, %v1023, %v1024
      %v1026 = vrot.slane %v378, 1
      %v1027 = vsel %vm1022, %v1024, %v1026
      %v1028 = vrot.slane %v379, 1
      %v1029 = vsel %vm1022, %v1026, %v1028
      %v1030 = vrot.slane %v380, 1
      %v1031 = vsel %vm1022, %v1028, %v1030
      %v1032 = vrot.slane %v381, 1
      %v1033 = vsel %vm1022, %v1030, %v1032
      %v1034 = vrot.slane %v382, 1
      %v1035 = vsel %vm1022, %v1032, %v1034
      %v1036 = vrot.slane %v383, 1
      %v1037 = vsel %vm1022, %v1034, %v1036
      %v1038 = vrot.slane %v384, 1
      %v1039 = vsel %vm1022, %v1036, %v1038
      %v1040 = vrot.slane %v385, 1
      %v1041 = vsel %vm1022, %v1038, %v1040
      %v1042 = vrot.slane %v386, 1
      %v1043 = vsel %vm1022, %v1040, %v1042
      %v1044 = vrot.slane %v387, 1
      %v1045 = vsel %vm1022, %v1042, %v1044
      %v1046 = vrot.slane %v388, 1
      %v1047 = vsel %vm1022, %v1044, %v1046
      %v1048 = vrot.slane %v389, 1
      %v1049 = vsel %vm1022, %v1046, %v1048
      %v1050 = vrot.slane %v390, 1
      %v1051 = vsel %vm1022, %v1048, %v1050
      %v1052 = vrot.slane %v391, 1
      %v1053 = vsel %vm1022, %v1050, %v1052
      %v1054 = vrot.slane %v392, 1
      %v1055 = vsel %vm1022, %v1052, %v1054
      %v1056 = vrot.slane %v393, 1
      %v1057 = vsel %vm1022, %v1054, %v1056
      %v1058 = vrot.slane %v394, 1
      %v1059 = vsel %vm1022, %v1056, %v1058
      %v1061 = vsel %vm549, %v1025, 0
      %v1064 = vsel %vm549, %v1027, 0
      %v1067 = vsel %vm549, %v1029, 0
      %v1070 = vsel %vm549, %v1031, 0
      %v1073 = vsel %vm549, %v1033, 0
      %v1076 = vsel %vm549, %v1035, 0
      %v1079 = vsel %vm549, %v1037, 0
      %v1082 = vsel %vm549, %v1039, 0
      %v1085 = vsel %vm549, %v1041, 0
      %v1088 = vsel %vm549, %v1043, 0
      %v1091 = vsel %vm549, %v1045, 0
      %v1094 = vsel %vm549, %v1047, 0
      %v1097 = vsel %vm549, %v1049, 0
      %v1100 = vsel %vm549, %v1051, 0
      %v1103 = vsel %vm549, %v1053, 0
      %v1106 = vsel %vm549, %v1055, 0
      %v1109 = vsel %vm549, %v1057, 0
      %v1112 = vsel %vm549, %v1059, 0
      %v1115 = vsel %vm604, %v1002, 0
      %1117 = vmatprep.subr.bf16.mxu0 0
      %1118 = vmatpush1.bf16.msra.mxu0 %v1115
      %1119 = vmatprep.subr.bf16.mxu0 0
      %1120 = vmatpush1.bf16.msra.mxu0 0
      %1121 = vmatprep.subr.bf16.mxu0 0
      %1122 = vmatpush1.bf16.msra.mxu0 0
      %1123 = vmatprep.subr.bf16.mxu0 0
      %1124 = vmatpush1.bf16.msra.mxu0 0
      %1125 = vmatprep.subr.bf16.mxu0 0
      %1126 = vmatpush1.bf16.msra.mxu0 0
      %1127 = vmatprep.subr.bf16.mxu0 0
      %1128 = vmatpush1.bf16.msra.mxu0 0
      %1129 = vmatprep.subr.bf16.mxu0 0
      %1130 = vmatpush1.bf16.msra.mxu0 0
      %1131 = vmatprep.subr.bf16.mxu0 0
      %1132 = vmatpush1.bf16.msra.mxu0 0
      %1133 = vmatprep.subr.bf16.mxu0 0
      %1134 = vmatpush1.bf16.msra.mxu0 0
      %1135 = vmatprep.subr.bf16.mxu0 0
      %1136 = vmatpush1.bf16.msra.mxu0 0
      %1137 = vmatprep.subr.bf16.mxu0 0
      %1138 = vmatpush1.bf16.msra.mxu0 0
      %1139 = vmatprep.subr.bf16.mxu0 0
      %1140 = vmatpush1.bf16.msra.mxu0 0
      %1141 = vmatprep.subr.bf16.mxu0 0
      %1142 = vmatpush1.bf16.msra.mxu0 0
      %1143 = vmatprep.subr.bf16.mxu0 0
      %1144 = vmatpush1.bf16.msra.mxu0 0
      %1145 = vmatprep.subr.bf16.mxu0 0
      %1146 = vmatpush1.bf16.msra.mxu0 0
      %1147 = vmatprep.subr.bf16.mxu0 0
      %1148 = vmatpush1.bf16.msra.mxu0 0
      %1149 = vmatprep.mubr.bf16.mxu0 0
      %1150 = vmatmul.mubr.bf16.gmra.mrb[0].mxu0 %v1061
      %v1151 = vpop.f32.mrb[0].mxu0
      %v1152 = vadd.f32 0.0, %v1151
      %v1153 = vpop.f32.mrb[0].mxu0
      %v1154 = vpop.f32.mrb[0].mxu0
      %v1155 = vadd.f32 0.0, %v1154
      %v1156 = vpop.f32.mrb[0].mxu0
      %1157 = vmatprep.mubr.bf16.mxu0 0
      %1158 = vmatmul.mubr.bf16.gmra.mrb[0].mxu0 %v1064
      %v1159 = vpop.f32.mrb[0].mxu0
      %v1160 = vadd.f32 0.0, %v1159
      %v1161 = vpop.f32.mrb[0].mxu0
      %v1162 = vpop.f32.mrb[0].mxu0
      %v1163 = vadd.f32 0.0, %v1162
      %v1164 = vpop.f32.mrb[0].mxu0
      %1165 = vmatprep.mubr.bf16.mxu0 0
      %1166 = vmatmul.mubr.bf16.gmra.mrb[0].mxu0 %v1067
      %v1167 = vpop.f32.mrb[0].mxu0
      %v1168 = vadd.f32 0.0, %v1167
      %v1169 = vpop.f32.mrb[0].mxu0
      %v1170 = vpop.f32.mrb[0].mxu0
      %v1171 = vadd.f32 0.0, %v1170
      %v1172 = vpop.f32.mrb[0].mxu0
      %1173 = vmatprep.mubr.bf16.mxu0 0
      %1174 = vmatmul.mubr.bf16.gmra.mrb[0].mxu0 %v1070
      %v1175 = vpop.f32.mrb[0].mxu0
      %v1176 = vadd.f32 0.0, %v1175
      %v1177 = vpop.f32.mrb[0].mxu0
      %v1178 = vpop.f32.mrb[0].mxu0
      %v1179 = vadd.f32 0.0, %v1178
      %v1180 = vpop.f32.mrb[0].mxu0
      %1181 = vmatprep.mubr.bf16.mxu0 0
      %1182 = vmatmul.mubr.bf16.gmra.mrb[0].mxu0 %v1073
      %v1183 = vpop.f32.mrb[0].mxu0
      %v1184 = vadd.f32 0.0, %v1183
      %v1185 = vpop.f32.mrb[0].mxu0
      %v1186 = vpop.f32.mrb[0].mxu0
      %v1187 = vadd.f32 0.0, %v1186
      %v1188 = vpop.f32.mrb[0].mxu0
      %1189 = vmatprep.mubr.bf16.mxu0 0
      %1190 = vmatmul.mubr.bf16.gmra.mrb[0].mxu0 %v1076
      %v1191 = vpop.f32.mrb[0].mxu0
      %v1192 = vadd.f32 0.0, %v1191
      %v1193 = vpop.f32.mrb[0].mxu0
      %v1194 = vpop.f32.mrb[0].mxu0
      %v1195 = vadd.f32 0.0, %v1194
      %v1196 = vpop.f32.mrb[0].mxu0
      %1197 = vmatprep.mubr.bf16.mxu0 0
      %1198 = vmatmul.mubr.bf16.gmra.mrb[0].mxu0 %v1079
      %v1199 = vpop.f32.mrb[0].mxu0
      %v1200 = vadd.f32 0.0, %v1199
      %v1201 = vpop.f32.mrb[0].mxu0
      %v1202 = vpop.f32.mrb[0].mxu0
      %v1203 = vadd.f32 0.0, %v1202
      %v1204 = vpop.f32.mrb[0].mxu0
      %1205 = vmatprep.mubr.bf16.mxu0 0
      %1206 = vmatmul.mubr.bf16.gmra.mrb[0].mxu0 %v1082
      %v1207 = vpop.f32.mrb[0].mxu0
      %v1208 = vadd.f32 0.0, %v1207
      %v1209 = vpop.f32.mrb[0].mxu0
      %v1210 = vpop.f32.mrb[0].mxu0
      %v1211 = vadd.f32 0.0, %v1210
      %v1212 = vpop.f32.mrb[0].mxu0
      %1213 = vmatprep.mubr.bf16.mxu0 0
      %1214 = vmatmul.mubr.bf16.gmra.mrb[0].mxu0 %v1085
      %v1215 = vpop.f32.mrb[0].mxu0
      %v1216 = vadd.f32 0.0, %v1215
      %v1217 = vpop.f32.mrb[0].mxu0
      %v1218 = vpop.f32.mrb[0].mxu0
      %v1219 = vadd.f32 0.0, %v1218
      %v1220 = vpop.f32.mrb[0].mxu0
      %1221 = vmatprep.mubr.bf16.mxu0 0
      %1222 = vmatmul.mubr.bf16.gmra.mrb[0].mxu0 %v1088
      %v1223 = vpop.f32.mrb[0].mxu0
      %v1224 = vadd.f32 0.0, %v1223
      %v1225 = vpop.f32.mrb[0].mxu0
      %v1226 = vpop.f32.mrb[0].mxu0
      %v1227 = vadd.f32 0.0, %v1226
      %v1228 = vpop.f32.mrb[0].mxu0
      %1229 = vmatprep.mubr.bf16.mxu0 0
      %1230 = vmatmul.mubr.bf16.gmra.mrb[0].mxu0 %v1091
      %v1231 = vpop.f32.mrb[0].mxu0
      %v1232 = vadd.f32 0.0, %v1231
      %v1233 = vpop.f32.mrb[0].mxu0
      %v1234 = vpop.f32.mrb[0].mxu0
      %v1235 = vadd.f32 0.0, %v1234
      %v1236 = vpop.f32.mrb[0].mxu0
      %1237 = vmatprep.mubr.bf16.mxu0 0
      %1238 = vmatmul.mubr.bf16.gmra.mrb[0].mxu0 %v1094
      %v1239 = vpop.f32.mrb[0].mxu0
      %v1240 = vadd.f32 0.0, %v1239
      %v1241 = vpop.f32.mrb[0].mxu0
      %v1242 = vpop.f32.mrb[0].mxu0
      %v1243 = vadd.f32 0.0, %v1242
      %v1244 = vpop.f32.mrb[0].mxu0
      %1245 = vmatprep.mubr.bf16.mxu0 0
      %1246 = vmatmul.mubr.bf16.gmra.mrb[0].mxu0 %v1097
      %v1247 = vpop.f32.mrb[0].mxu0
      %v1248 = vadd.f32 0.0, %v1247
      %v1249 = vpop.f32.mrb[0].mxu0
      %v1250 = vpop.f32.mrb[0].mxu0
      %v1251 = vadd.f32 0.0, %v1250
      %v1252 = vpop.f32.mrb[0].mxu0
      %1253 = vmatprep.mubr.bf16.mxu0 0
      %1254 = vmatmul.mubr.bf16.gmra.mrb[0].mxu0 %v1100
      %v1255 = vpop.f32.mrb[0].mxu0
      %v1256 = vadd.f32 0.0, %v1255
      %v1257 = vpop.f32.mrb[0].mxu0
      %v1258 = vpop.f32.mrb[0].mxu0
      %v1259 = vadd.f32 0.0, %v1258
      %v1260 = vpop.f32.mrb[0].mxu0
      %1261 = vmatprep.mubr.bf16.mxu0 0
      %1262 = vmatmul.mubr.bf16.gmra.mrb[0].mxu0 %v1103
      %v1263 = vpop.f32.mrb[0].mxu0
      %v1264 = vadd.f32 0.0, %v1263
      %v1265 = vpop.f32.mrb[0].mxu0
      %v1266 = vpop.f32.mrb[0].mxu0
      %v1267 = vadd.f32 0.0, %v1266
      %v1268 = vpop.f32.mrb[0].mxu0
      %1269 = vmatprep.mubr.bf16.mxu0 0
      %1270 = vmatmul.mubr.bf16.gmra.mrb[0].mxu0 %v1106
      %v1271 = vpop.f32.mrb[0].mxu0
      %v1272 = vadd.f32 0.0, %v1271
      %v1273 = vpop.f32.mrb[0].mxu0
      %v1274 = vpop.f32.mrb[0].mxu0
      %v1275 = vadd.f32 0.0, %v1274
      %v1276 = vpop.f32.mrb[0].mxu0
      %1277 = vmatprep.mubr.bf16.mxu0 0
      %1278 = vmatmul.mubr.bf16.gmra.mrb[0].mxu0 %v1109
      %v1279 = vpop.f32.mrb[0].mxu0
      %v1280 = vadd.f32 0.0, %v1279
      %v1281 = vpop.f32.mrb[0].mxu0
      %v1282 = vpop.f32.mrb[0].mxu0
      %v1283 = vadd.f32 0.0, %v1282
      %v1284 = vpop.f32.mrb[0].mxu0
      %1285 = vmatprep.mubr.bf16.mxu0 0
      %1286 = vmatmul.mubr.bf16.gmra.mrb[0].mxu0 %v1112
      %v1287 = vpop.f32.mrb[0].mxu0
      %v1288 = vadd.f32 0.0, %v1287
      %v1289 = vpop.f32.mrb[0].mxu0
      %v1290 = vpop.f32.mrb[0].mxu0
      %v1291 = vadd.f32 0.0, %v1290
      %v1292 = vpop.f32.mrb[0].mxu0
      %1293 = vdwg.mxu0
      %v1294 = vadd.f32 %v859, %v1152
      %v1295 = vadd.f32 %v862, %v1155
      %v1296 = vadd.f32 %v867, %v1160
      %v1297 = vadd.f32 %v870, %v1163
      %v1298 = vadd.f32 %v875, %v1168
      %v1299 = vadd.f32 %v878, %v1171
      %v1300 = vadd.f32 %v883, %v1176
      %v1301 = vadd.f32 %v886, %v1179
      %v1302 = vadd.f32 %v891, %v1184
      %v1303 = vadd.f32 %v894, %v1187
      %v1304 = vadd.f32 %v899, %v1192
      %v1305 = vadd.f32 %v902, %v1195
      %v1306 = vadd.f32 %v907, %v1200
      %v1307 = vadd.f32 %v910, %v1203
      %v1308 = vadd.f32 %v915, %v1208
      %v1309 = vadd.f32 %v918, %v1211
      %v1310 = vadd.f32 %v923, %v1216
      %v1311 = vadd.f32 %v926, %v1219
      %v1312 = vadd.f32 %v931, %v1224
      %v1313 = vadd.f32 %v934, %v1227
      %v1314 = vadd.f32 %v939, %v1232
      %v1315 = vadd.f32 %v942, %v1235
      %v1316 = vadd.f32 %v947, %v1240
      %v1317 = vadd.f32 %v950, %v1243
      %v1318 = vadd.f32 %v955, %v1248
      %v1319 = vadd.f32 %v958, %v1251
      %v1320 = vadd.f32 %v963, %v1256
      %v1321 = vadd.f32 %v966, %v1259
      %v1322 = vadd.f32 %v971, %v1264
      %v1323 = vadd.f32 %v974, %v1267
      %v1324 = vadd.f32 %v979, %v1272
      %v1325 = vadd.f32 %v982, %v1275
      %v1326 = vadd.f32 %v987, %v1280
      %v1327 = vadd.f32 %v990, %v1283
      %v1328 = vadd.f32 %v995, %v1288
      %v1329 = vadd.f32 %v998, %v1291
      %s1330 = scalar_lea.vmem %s1, 6
      %v1331 = vld [vmem:[%s1330] sm:$0x3]
      %v1333 = vrot.slane %v395, 1
      %v1334 = vsel %vm1022, %v1058, %v1333
      %v1336 = vsel %vm549, %v1334, 0
      %v1339 = vsel %vm604, %v1331, 0
      %1341 = vmatprep.subr.bf16.mxu0 0
      %1342 = vmatpush1.bf16.msra.mxu0 %v1339
      %1343 = vmatprep.subr.bf16.mxu0 0
      %1344 = vmatpush1.bf16.msra.mxu0 0
      %1345 = vmatprep.subr.bf16.mxu0 0
      %1346 = vmatpush1.bf16.msra.mxu0 0
      %1347 = vmatprep.subr.bf16.mxu0 0
      %1348 = vmatpush1.bf16.msra.mxu0 0
      %1349 = vmatprep.subr.bf16.mxu0 0
      %1350 = vmatpush1.bf16.msra.mxu0 0
      %1351 = vmatprep.subr.bf16.mxu0 0
      %1352 = vmatpush1.bf16.msra.mxu0 0
      %1353 = vmatprep.subr.bf16.mxu0 0
      %1354 = vmatpush1.bf16.msra.mxu0 0
      %1355 = vmatprep.subr.bf16.mxu0 0
      %1356 = vmatpush1.bf16.msra.mxu0 0
      %1357 = vmatprep.subr.bf16.mxu0 0
      %1358 = vmatpush1.bf16.msra.mxu0 0
      %1359 = vmatprep.subr.bf16.mxu0 0
      %1360 = vmatpush1.bf16.msra.mxu0 0
      %1361 = vmatprep.subr.bf16.mxu0 0
      %1362 = vmatpush1.bf16.msra.mxu0 0
      %1363 = vmatprep.subr.bf16.mxu0 0
      %1364 = vmatpush1.bf16.msra.mxu0 0
      %1365 = vmatprep.subr.bf16.mxu0 0
      %1366 = vmatpush1.bf16.msra.mxu0 0
      %1367 = vmatprep.subr.bf16.mxu0 0
      %1368 = vmatpush1.bf16.msra.mxu0 0
      %1369 = vmatprep.subr.bf16.mxu0 0
      %1370 = vmatpush1.bf16.msra.mxu0 0
      %1371 = vmatprep.subr.bf16.mxu0 0
      %1372 = vmatpush1.bf16.msra.mxu0 0
      %1373 = vmatprep.mubr.bf16.mxu0 0
      %1374 = vmatmul.mubr.bf16.gmra.mrb[0].mxu0 %v1064
      %v1375 = vpop.f32.mrb[0].mxu0
      %v1376 = vadd.f32 0.0, %v1375
      %v1377 = vpop.f32.mrb[0].mxu0
      %v1378 = vpop.f32.mrb[0].mxu0
      %v1379 = vadd.f32 0.0, %v1378
      %v1380 = vpop.f32.mrb[0].mxu0
      %1381 = vmatprep.mubr.bf16.mxu0 0
      %1382 = vmatmul.mubr.bf16.gmra.mrb[0].mxu0 %v1067
      %v1383 = vpop.f32.mrb[0].mxu0
      %v1384 = vadd.f32 0.0, %v1383
      %v1385 = vpop.f32.mrb[0].mxu0
      %v1386 = vpop.f32.mrb[0].mxu0
      %v1387 = vadd.f32 0.0, %v1386
      %v1388 = vpop.f32.mrb[0].mxu0
      %1389 = vmatprep.mubr.bf16.mxu0 0
      %1390 = vmatmul.mubr.bf16.gmra.mrb[0].mxu0 %v1070
      %v1391 = vpop.f32.mrb[0].mxu0
      %v1392 = vadd.f32 0.0, %v1391
      %v1393 = vpop.f32.mrb[0].mxu0
      %v1394 = vpop.f32.mrb[0].mxu0
      %v1395 = vadd.f32 0.0, %v1394
      %v1396 = vpop.f32.mrb[0].mxu0
      %1397 = vmatprep.mubr.bf16.mxu0 0
      %1398 = vmatmul.mubr.bf16.gmra.mrb[0].mxu0 %v1073
      %v1399 = vpop.f32.mrb[0].mxu0
      %v1400 = vadd.f32 0.0, %v1399
      %v1401 = vpop.f32.mrb[0].mxu0
      %v1402 = vpop.f32.mrb[0].mxu0
      %v1403 = vadd.f32 0.0, %v1402
      %v1404 = vpop.f32.mrb[0].mxu0
      %1405 = vmatprep.mubr.bf16.mxu0 0
      %1406 = vmatmul.mubr.bf16.gmra.mrb[0].mxu0 %v1076
      %v1407 = vpop.f32.mrb[0].mxu0
      %v1408 = vadd.f32 0.0, %v1407
      %v1409 = vpop.f32.mrb[0].mxu0
      %v1410 = vpop.f32.mrb[0].mxu0
      %v1411 = vadd.f32 0.0, %v1410
      %v1412 = vpop.f32.mrb[0].mxu0
      %1413 = vmatprep.mubr.bf16.mxu0 0
      %1414 = vmatmul.mubr.bf16.gmra.mrb[0].mxu0 %v1079
      %v1415 = vpop.f32.mrb[0].mxu0
      %v1416 = vadd.f32 0.0, %v1415
      %v1417 = vpop.f32.mrb[0].mxu0
      %v1418 = vpop.f32.mrb[0].mxu0
      %v1419 = vadd.f32 0.0, %v1418
      %v1420 = vpop.f32.mrb[0].mxu0
      %1421 = vmatprep.mubr.bf16.mxu0 0
      %1422 = vmatmul.mubr.bf16.gmra.mrb[0].mxu0 %v1082
      %v1423 = vpop.f32.mrb[0].mxu0
      %v1424 = vadd.f32 0.0, %v1423
      %v1425 = vpop.f32.mrb[0].mxu0
      %v1426 = vpop.f32.mrb[0].mxu0
      %v1427 = vadd.f32 0.0, %v1426
      %v1428 = vpop.f32.mrb[0].mxu0
      %1429 = vmatprep.mubr.bf16.mxu0 0
      %1430 = vmatmul.mubr.bf16.gmra.mrb[0].mxu0 %v1085
      %v1431 = vpop.f32.mrb[0].mxu0
      %v1432 = vadd.f32 0.0, %v1431
      %v1433 = vpop.f32.mrb[0].mxu0
      %v1434 = vpop.f32.mrb[0].mxu0
      %v1435 = vadd.f32 0.0, %v1434
      %v1436 = vpop.f32.mrb[0].mxu0
      %1437 = vmatprep.mubr.bf16.mxu0 0
      %1438 = vmatmul.mubr.bf16.gmra.mrb[0].mxu0 %v1088
      %v1439 = vpop.f32.mrb[0].mxu0
      %v1440 = vadd.f32 0.0, %v1439
      %v1441 = vpop.f32.mrb[0].mxu0
      %v1442 = vpop.f32.mrb[0].mxu0
      %v1443 = vadd.f32 0.0, %v1442
      %v1444 = vpop.f32.mrb[0].mxu0
      %1445 = vmatprep.mubr.bf16.mxu0 0
      %1446 = vmatmul.mubr.bf16.gmra.mrb[0].mxu0 %v1091
      %v1447 = vpop.f32.mrb[0].mxu0
      %v1448 = vadd.f32 0.0, %v1447
      %v1449 = vpop.f32.mrb[0].mxu0
      %v1450 = vpop.f32.mrb[0].mxu0
      %v1451 = vadd.f32 0.0, %v1450
      %v1452 = vpop.f32.mrb[0].mxu0
      %1453 = vmatprep.mubr.bf16.mxu0 0
      %1454 = vmatmul.mubr.bf16.gmra.mrb[0].mxu0 %v1094
      %v1455 = vpop.f32.mrb[0].mxu0
      %v1456 = vadd.f32 0.0, %v1455
      %v1457 = vpop.f32.mrb[0].mxu0
      %v1458 = vpop.f32.mrb[0].mxu0
      %v1459 = vadd.f32 0.0, %v1458
      %v1460 = vpop.f32.mrb[0].mxu0
      %1461 = vmatprep.mubr.bf16.mxu0 0
      %1462 = vmatmul.mubr.bf16.gmra.mrb[0].mxu0 %v1097
      %v1463 = vpop.f32.mrb[0].mxu0
      %v1464 = vadd.f32 0.0, %v1463
      %v1465 = vpop.f32.mrb[0].mxu0
      %v1466 = vpop.f32.mrb[0].mxu0
      %v1467 = vadd.f32 0.0, %v1466
      %v1468 = vpop.f32.mrb[0].mxu0
      %1469 = vmatprep.mubr.bf16.mxu0 0
      %1470 = vmatmul.mubr.bf16.gmra.mrb[0].mxu0 %v1100
      %v1471 = vpop.f32.mrb[0].mxu0
      %v1472 = vadd.f32 0.0, %v1471
      %v1473 = vpop.f32.mrb[0].mxu0
      %v1474 = vpop.f32.mrb[0].mxu0
      %v1475 = vadd.f32 0.0, %v1474
      %v1476 = vpop.f32.mrb[0].mxu0
      %1477 = vmatprep.mubr.bf16.mxu0 0
      %1478 = vmatmul.mubr.bf16.gmra.mrb[0].mxu0 %v1103
      %v1479 = vpop.f32.mrb[0].mxu0
      %v1480 = vadd.f32 0.0, %v1479
      %v1481 = vpop.f32.mrb[0].mxu0
      %v1482 = vpop.f32.mrb[0].mxu0
      %v1483 = vadd.f32 0.0, %v1482
      %v1484 = vpop.f32.mrb[0].mxu0
      %1485 = vmatprep.mubr.bf16.mxu0 0
      %1486 = vmatmul.mubr.bf16.gmra.mrb[0].mxu0 %v1106
      %v1487 = vpop.f32.mrb[0].mxu0
      %v1488 = vadd.f32 0.0, %v1487
      %v1489 = vpop.f32.mrb[0].mxu0
      %v1490 = vpop.f32.mrb[0].mxu0
      %v1491 = vadd.f32 0.0, %v1490
      %v1492 = vpop.f32.mrb[0].mxu0
      %1493 = vmatprep.mubr.bf16.mxu0 0
      %1494 = vmatmul.mubr.bf16.gmra.mrb[0].mxu0 %v1109
      %v1495 = vpop.f32.mrb[0].mxu0
      %v1496 = vadd.f32 0.0, %v1495
      %v1497 = vpop.f32.mrb[0].mxu0
      %v1498 = vpop.f32.mrb[0].mxu0
      %v1499 = vadd.f32 0.0, %v1498
      %v1500 = vpop.f32.mrb[0].mxu0
      %1501 = vmatprep.mubr.bf16.mxu0 0
      %1502 = vmatmul.mubr.bf16.gmra.mrb[0].mxu0 %v1112
      %v1503 = vpop.f32.mrb[0].mxu0
      %v1504 = vadd.f32 0.0, %v1503
      %v1505 = vpop.f32.mrb[0].mxu0
      %v1506 = vpop.f32.mrb[0].mxu0
      %v1507 = vadd.f32 0.0, %v1506
      %v1508 = vpop.f32.mrb[0].mxu0
      %1509 = vmatprep.mubr.bf16.mxu0 0
      %1510 = vmatmul.mubr.bf16.gmra.mrb[0].mxu0 %v1336
      %v1511 = vpop.f32.mrb[0].mxu0
      %v1512 = vadd.f32 0.0, %v1511
      %v1513 = vpop.f32.mrb[0].mxu0
      %v1514 = vpop.f32.mrb[0].mxu0
      %v1515 = vadd.f32 0.0, %v1514
      %v1516 = vpop.f32.mrb[0].mxu0
      %1517 = vdwg.mxu0
      %v1518 = vadd.f32 %v1294, %v1376
      %v1519 = vadd.f32 %v1295, %v1379
      %v1520 = vadd.f32 %v1296, %v1384
      %v1521 = vadd.f32 %v1297, %v1387
      %v1522 = vadd.f32 %v1298, %v1392
      %v1523 = vadd.f32 %v1299, %v1395
      %v1524 = vadd.f32 %v1300, %v1400
      %v1525 = vadd.f32 %v1301, %v1403
      %v1526 = vadd.f32 %v1302, %v1408
      %v1527 = vadd.f32 %v1303, %v1411
      %v1528 = vadd.f32 %v1304, %v1416
      %v1529 = vadd.f32 %v1305, %v1419
      %v1530 = vadd.f32 %v1306, %v1424
      %v1531 = vadd.f32 %v1307, %v1427
      %v1532 = vadd.f32 %v1308, %v1432
      %v1533 = vadd.f32 %v1309, %v1435
      %v1534 = vadd.f32 %v1310, %v1440
      %v1535 = vadd.f32 %v1311, %v1443
      %v1536 = vadd.f32 %v1312, %v1448
      %v1537 = vadd.f32 %v1313, %v1451
      %v1538 = vadd.f32 %v1314, %v1456
      %v1539 = vadd.f32 %v1315, %v1459
      %v1540 = vadd.f32 %v1316, %v1464
      %v1541 = vadd.f32 %v1317, %v1467
      %v1542 = vadd.f32 %v1318, %v1472
      %v1543 = vadd.f32 %v1319, %v1475
      %v1544 = vadd.f32 %v1320, %v1480
      %v1545 = vadd.f32 %v1321, %v1483
      %v1546 = vadd.f32 %v1322, %v1488
      %v1547 = vadd.f32 %v1323, %v1491
      %v1548 = vadd.f32 %v1324, %v1496
      %v1549 = vadd.f32 %v1325, %v1499
      %v1550 = vadd.f32 %v1326, %v1504
      %v1551 = vadd.f32 %v1327, %v1507
      %v1552 = vadd.f32 %v1328, %v1512
      %v1553 = vadd.f32 %v1329, %v1515
      %s1554 = scalar_lea.vmem %s1, 8
      %v1555 = vld [vmem:[%s1554] sm:$0x3]
      %vm1556 = vsmask.f32 6400
      %v1557 = vrot.slane %v413, 1
      %v1558 = vrot.slane %v409, 2
      %v1559 = vor.u32 %v1557, %v1558
      %v1560 = vrot.slane %v421, 1
      %v1561 = vrot.slane %v417, 2
      %v1562 = vor.u32 %v1560, %v1561
      %v1563 = vsel %vm1556, %v1559, %v1562
      %v1564 = vrot.slane %v429, 1
      %v1565 = vrot.slane %v425, 2
      %v1566 = vor.u32 %v1564, %v1565
      %v1567 = vsel %vm1556, %v1562, %v1566
      %v1568 = vrot.slane %v437, 1
      %v1569 = vrot.slane %v433, 2
      %v1570 = vor.u32 %v1568, %v1569
      %v1571 = vsel %vm1556, %v1566, %v1570
      %v1572 = vrot.slane %v445, 1
      %v1573 = vrot.slane %v441, 2
      %v1574 = vor.u32 %v1572, %v1573
      %v1575 = vsel %vm1556, %v1570, %v1574
      %v1576 = vrot.slane %v453, 1
      %v1577 = vrot.slane %v449, 2
      %v1578 = vor.u32 %v1576, %v1577
      %v1579 = vsel %vm1556, %v1574, %v1578
      %v1580 = vrot.slane %v461, 1
      %v1581 = vrot.slane %v457, 2
      %v1582 = vor.u32 %v1580, %v1581
      %v1583 = vsel %vm1556, %v1578, %v1582
      %v1584 = vrot.slane %v469, 1
      %v1585 = vrot.slane %v465, 2
      %v1586 = vor.u32 %v1584, %v1585
      %v1587 = vsel %vm1556, %v1582, %v1586
      %v1588 = vrot.slane %v477, 1
      %v1589 = vrot.slane %v473, 2
      %v1590 = vor.u32 %v1588, %v1589
      %v1591 = vsel %vm1556, %v1586, %v1590
      %v1592 = vrot.slane %v485, 1
      %v1593 = vrot.slane %v481, 2
      %v1594 = vor.u32 %v1592, %v1593
      %v1595 = vsel %vm1556, %v1590, %v1594
      %v1596 = vrot.slane %v493, 1
      %v1597 = vrot.slane %v489, 2
      %v1598 = vor.u32 %v1596, %v1597
      %v1599 = vsel %vm1556, %v1594, %v1598
      %v1600 = vrot.slane %v501, 1
      %v1601 = vrot.slane %v497, 2
      %v1602 = vor.u32 %v1600, %v1601
      %v1603 = vsel %vm1556, %v1598, %v1602
      %v1604 = vrot.slane %v509, 1
      %v1605 = vrot.slane %v505, 2
      %v1606 = vor.u32 %v1604, %v1605
      %v1607 = vsel %vm1556, %v1602, %v1606
      %v1608 = vrot.slane %v517, 1
      %v1609 = vrot.slane %v513, 2
      %v1610 = vor.u32 %v1608, %v1609
      %v1611 = vsel %vm1556, %v1606, %v1610
      %v1612 = vrot.slane %v525, 1
      %v1613 = vrot.slane %v521, 2
      %v1614 = vor.u32 %v1612, %v1613
      %v1615 = vsel %vm1556, %v1610, %v1614
      %v1616 = vrot.slane %v533, 1
      %v1617 = vrot.slane %v529, 2
      %v1618 = vor.u32 %v1616, %v1617
      %v1619 = vsel %vm1556, %v1614, %v1618
      %v1620 = vrot.slane %v541, 1
      %v1621 = vrot.slane %v537, 2
      %v1622 = vor.u32 %v1620, %v1621
      %v1623 = vsel %vm1556, %v1618, %v1622
      %v1624 = vshrl.u32 %v394, 16
      %v1626 = vrot.slane %v1624, 1
      %v1627 = vrot.slane %v545, 2
      %v1628 = vor.u32 %v1626, %v1627
      %v1629 = vsel %vm1556, %v1622, %v1628
      %v1631 = vshrl.u32 %v395, 16
      %v1633 = vrot.slane %v1631, 1
      %v1634 = vshll.u32 %v395, 16
      %v1636 = vrot.slane %v1634, 2
      %v1637 = vor.u32 %v1633, %v1636
      %v1638 = vsel %vm1556, %v1628, %v1637
      %v1640 = vsel %vm549, %v1563, 0
      %v1643 = vsel %vm549, %v1567, 0
      %v1646 = vsel %vm549, %v1571, 0
      %v1649 = vsel %vm549, %v1575, 0
      %v1652 = vsel %vm549, %v1579, 0
      %v1655 = vsel %vm549, %v1583, 0
      %v1658 = vsel %vm549, %v1587, 0
      %v1661 = vsel %vm549, %v1591, 0
      %v1664 = vsel %vm549, %v1595, 0
      %v1667 = vsel %vm549, %v1599, 0
      %v1670 = vsel %vm549, %v1603, 0
      %v1673 = vsel %vm549, %v1607, 0
      %v1676 = vsel %vm549, %v1611, 0
      %v1679 = vsel %vm549, %v1615, 0
      %v1682 = vsel %vm549, %v1619, 0
      %v1685 = vsel %vm549, %v1623, 0
      %v1688 = vsel %vm549, %v1629, 0
      %v1691 = vsel %vm549, %v1638, 0
      %v1694 = vsel %vm604, %v1555, 0
      %1696 = vmatprep.subr.bf16.mxu0 0
      %1697 = vmatpush1.bf16.msra.mxu0 %v1694
      %1698 = vmatprep.subr.bf16.mxu0 0
      %1699 = vmatpush1.bf16.msra.mxu0 0
      %1700 = vmatprep.subr.bf16.mxu0 0
      %1701 = vmatpush1.bf16.msra.mxu0 0
      %1702 = vmatprep.subr.bf16.mxu0 0
      %1703 = vmatpush1.bf16.msra.mxu0 0
      %1704 = vmatprep.subr.bf16.mxu0 0
      %1705 = vmatpush1.bf16.msra.mxu0 0
      %1706 = vmatprep.subr.bf16.mxu0 0
      %1707 = vmatpush1.bf16.msra.mxu0 0
      %1708 = vmatprep.subr.bf16.mxu0 0
      %1709 = vmatpush1.bf16.msra.mxu0 0
      %1710 = vmatprep.subr.bf16.mxu0 0
      %1711 = vmatpush1.bf16.msra.mxu0 0
      %1712 = vmatprep.subr.bf16.mxu0 0
      %1713 = vmatpush1.bf16.msra.mxu0 0
      %1714 = vmatprep.subr.bf16.mxu0 0
      %1715 = vmatpush1.bf16.msra.mxu0 0
      %1716 = vmatprep.subr.bf16.mxu0 0
      %1717 = vmatpush1.bf16.msra.mxu0 0
      %1718 = vmatprep.subr.bf16.mxu0 0
      %1719 = vmatpush1.bf16.msra.mxu0 0
      %1720 = vmatprep.subr.bf16.mxu0 0
      %1721 = vmatpush1.bf16.msra.mxu0 0
      %1722 = vmatprep.subr.bf16.mxu0 0
      %1723 = vmatpush1.bf16.msra.mxu0 0
      %1724 = vmatprep.subr.bf16.mxu0 0
      %1725 = vmatpush1.bf16.msra.mxu0 0
      %1726 = vmatprep.subr.bf16.mxu0 0
      %1727 = vmatpush1.bf16.msra.mxu0 0
      %1728 = vmatprep.mubr.bf16.mxu0 0
      %1729 = vmatmul.mubr.bf16.gmra.mrb[0].mxu0 %v1640
      %v1730 = vpop.f32.mrb[0].mxu0
      %v1731 = vadd.f32 0.0, %v1730
      %v1732 = vpop.f32.mrb[0].mxu0
      %v1733 = vpop.f32.mrb[0].mxu0
      %v1734 = vadd.f32 0.0, %v1733
      %v1735 = vpop.f32.mrb[0].mxu0
      %1736 = vmatprep.mubr.bf16.mxu0 0
      %1737 = vmatmul.mubr.bf16.gmra.mrb[0].mxu0 %v1643
      %v1738 = vpop.f32.mrb[0].mxu0
      %v1739 = vadd.f32 0.0, %v1738
      %v1740 = vpop.f32.mrb[0].mxu0
      %v1741 = vpop.f32.mrb[0].mxu0
      %v1742 = vadd.f32 0.0, %v1741
      %v1743 = vpop.f32.mrb[0].mxu0
      %1744 = vmatprep.mubr.bf16.mxu0 0
      %1745 = vmatmul.mubr.bf16.gmra.mrb[0].mxu0 %v1646
      %v1746 = vpop.f32.mrb[0].mxu0
      %v1747 = vadd.f32 0.0, %v1746
      %v1748 = vpop.f32.mrb[0].mxu0
      %v1749 = vpop.f32.mrb[0].mxu0
      %v1750 = vadd.f32 0.0, %v1749
      %v1751 = vpop.f32.mrb[0].mxu0
      %1752 = vmatprep.mubr.bf16.mxu0 0
      %1753 = vmatmul.mubr.bf16.gmra.mrb[0].mxu0 %v1649
      %v1754 = vpop.f32.mrb[0].mxu0
      %v1755 = vadd.f32 0.0, %v1754
      %v1756 = vpop.f32.mrb[0].mxu0
      %v1757 = vpop.f32.mrb[0].mxu0
      %v1758 = vadd.f32 0.0, %v1757
      %v1759 = vpop.f32.mrb[0].mxu0
      %1760 = vmatprep.mubr.bf16.mxu0 0
      %1761 = vmatmul.mubr.bf16.gmra.mrb[0].mxu0 %v1652
      %v1762 = vpop.f32.mrb[0].mxu0
      %v1763 = vadd.f32 0.0, %v1762
      %v1764 = vpop.f32.mrb[0].mxu0
      %v1765 = vpop.f32.mrb[0].mxu0
      %v1766 = vadd.f32 0.0, %v1765
      %v1767 = vpop.f32.mrb[0].mxu0
      %1768 = vmatprep.mubr.bf16.mxu0 0
      %1769 = vmatmul.mubr.bf16.gmra.mrb[0].mxu0 %v1655
      %v1770 = vpop.f32.mrb[0].mxu0
      %v1771 = vadd.f32 0.0, %v1770
      %v1772 = vpop.f32.mrb[0].mxu0
      %v1773 = vpop.f32.mrb[0].mxu0
      %v1774 = vadd.f32 0.0, %v1773
      %v1775 = vpop.f32.mrb[0].mxu0
      %1776 = vmatprep.mubr.bf16.mxu0 0
      %1777 = vmatmul.mubr.bf16.gmra.mrb[0].mxu0 %v1658
      %v1778 = vpop.f32.mrb[0].mxu0
      %v1779 = vadd.f32 0.0, %v1778
      %v1780 = vpop.f32.mrb[0].mxu0
      %v1781 = vpop.f32.mrb[0].mxu0
      %v1782 = vadd.f32 0.0, %v1781
      %v1783 = vpop.f32.mrb[0].mxu0
      %1784 = vmatprep.mubr.bf16.mxu0 0
      %1785 = vmatmul.mubr.bf16.gmra.mrb[0].mxu0 %v1661
      %v1786 = vpop.f32.mrb[0].mxu0
      %v1787 = vadd.f32 0.0, %v1786
      %v1788 = vpop.f32.mrb[0].mxu0
      %v1789 = vpop.f32.mrb[0].mxu0
      %v1790 = vadd.f32 0.0, %v1789
      %v1791 = vpop.f32.mrb[0].mxu0
      %1792 = vmatprep.mubr.bf16.mxu0 0
      %1793 = vmatmul.mubr.bf16.gmra.mrb[0].mxu0 %v1664
      %v1794 = vpop.f32.mrb[0].mxu0
      %v1795 = vadd.f32 0.0, %v1794
      %v1796 = vpop.f32.mrb[0].mxu0
      %v1797 = vpop.f32.mrb[0].mxu0
      %v1798 = vadd.f32 0.0, %v1797
      %v1799 = vpop.f32.mrb[0].mxu0
      %1800 = vmatprep.mubr.bf16.mxu0 0
      %1801 = vmatmul.mubr.bf16.gmra.mrb[0].mxu0 %v1667
      %v1802 = vpop.f32.mrb[0].mxu0
      %v1803 = vadd.f32 0.0, %v1802
      %v1804 = vpop.f32.mrb[0].mxu0
      %v1805 = vpop.f32.mrb[0].mxu0
      %v1806 = vadd.f32 0.0, %v1805
      %v1807 = vpop.f32.mrb[0].mxu0
      %1808 = vmatprep.mubr.bf16.mxu0 0
      %1809 = vmatmul.mubr.bf16.gmra.mrb[0].mxu0 %v1670
      %v1810 = vpop.f32.mrb[0].mxu0
      %v1811 = vadd.f32 0.0, %v1810
      %v1812 = vpop.f32.mrb[0].mxu0
      %v1813 = vpop.f32.mrb[0].mxu0
      %v1814 = vadd.f32 0.0, %v1813
      %v1815 = vpop.f32.mrb[0].mxu0
      %1816 = vmatprep.mubr.bf16.mxu0 0
      %1817 = vmatmul.mubr.bf16.gmra.mrb[0].mxu0 %v1673
      %v1818 = vpop.f32.mrb[0].mxu0
      %v1819 = vadd.f32 0.0, %v1818
      %v1820 = vpop.f32.mrb[0].mxu0
      %v1821 = vpop.f32.mrb[0].mxu0
      %v1822 = vadd.f32 0.0, %v1821
      %v1823 = vpop.f32.mrb[0].mxu0
      %1824 = vmatprep.mubr.bf16.mxu0 0
      %1825 = vmatmul.mubr.bf16.gmra.mrb[0].mxu0 %v1676
      %v1826 = vpop.f32.mrb[0].mxu0
      %v1827 = vadd.f32 0.0, %v1826
      %v1828 = vpop.f32.mrb[0].mxu0
      %v1829 = vpop.f32.mrb[0].mxu0
      %v1830 = vadd.f32 0.0, %v1829
      %v1831 = vpop.f32.mrb[0].mxu0
      %1832 = vmatprep.mubr.bf16.mxu0 0
      %1833 = vmatmul.mubr.bf16.gmra.mrb[0].mxu0 %v1679
      %v1834 = vpop.f32.mrb[0].mxu0
      %v1835 = vadd.f32 0.0, %v1834
      %v1836 = vpop.f32.mrb[0].mxu0
      %v1837 = vpop.f32.mrb[0].mxu0
      %v1838 = vadd.f32 0.0, %v1837
      %v1839 = vpop.f32.mrb[0].mxu0
      %1840 = vmatprep.mubr.bf16.mxu0 0
      %1841 = vmatmul.mubr.bf16.gmra.mrb[0].mxu0 %v1682
      %v1842 = vpop.f32.mrb[0].mxu0
      %v1843 = vadd.f32 0.0, %v1842
      %v1844 = vpop.f32.mrb[0].mxu0
      %v1845 = vpop.f32.mrb[0].mxu0
      %v1846 = vadd.f32 0.0, %v1845
      %v1847 = vpop.f32.mrb[0].mxu0
      %1848 = vmatprep.mubr.bf16.mxu0 0
      %1849 = vmatmul.mubr.bf16.gmra.mrb[0].mxu0 %v1685
      %v1850 = vpop.f32.mrb[0].mxu0
      %v1851 = vadd.f32 0.0, %v1850
      %v1852 = vpop.f32.mrb[0].mxu0
      %v1853 = vpop.f32.mrb[0].mxu0
      %v1854 = vadd.f32 0.0, %v1853
      %v1855 = vpop.f32.mrb[0].mxu0
      %1856 = vmatprep.mubr.bf16.mxu0 0
      %1857 = vmatmul.mubr.bf16.gmra.mrb[0].mxu0 %v1688
      %v1858 = vpop.f32.mrb[0].mxu0
      %v1859 = vadd.f32 0.0, %v1858
      %v1860 = vpop.f32.mrb[0].mxu0
      %v1861 = vpop.f32.mrb[0].mxu0
      %v1862 = vadd.f32 0.0, %v1861
      %v1863 = vpop.f32.mrb[0].mxu0
      %1864 = vmatprep.mubr.bf16.mxu0 0
      %1865 = vmatmul.mubr.bf16.gmra.mrb[0].mxu0 %v1691
      %v1866 = vpop.f32.mrb[0].mxu0
      %v1867 = vadd.f32 0.0, %v1866
      %v1868 = vpop.f32.mrb[0].mxu0
      %v1869 = vpop.f32.mrb[0].mxu0
      %v1870 = vadd.f32 0.0, %v1869
      %v1871 = vpop.f32.mrb[0].mxu0
      %1872 = vdwg.mxu0
      %v1873 = vadd.f32 %v1518, %v1731
      %v1874 = vadd.f32 %v1519, %v1734
      %v1875 = vadd.f32 %v1520, %v1739
      %v1876 = vadd.f32 %v1521, %v1742
      %v1877 = vadd.f32 %v1522, %v1747
      %v1878 = vadd.f32 %v1523, %v1750
      %v1879 = vadd.f32 %v1524, %v1755
      %v1880 = vadd.f32 %v1525, %v1758
      %v1881 = vadd.f32 %v1526, %v1763
      %v1882 = vadd.f32 %v1527, %v1766
      %v1883 = vadd.f32 %v1528, %v1771
      %v1884 = vadd.f32 %v1529, %v1774
      %v1885 = vadd.f32 %v1530, %v1779
      %v1886 = vadd.f32 %v1531, %v1782
      %v1887 = vadd.f32 %v1532, %v1787
      %v1888 = vadd.f32 %v1533, %v1790
      %v1889 = vadd.f32 %v1534, %v1795
      %v1890 = vadd.f32 %v1535, %v1798
      %v1891 = vadd.f32 %v1536, %v1803
      %v1892 = vadd.f32 %v1537, %v1806
      %v1893 = vadd.f32 %v1538, %v1811
      %v1894 = vadd.f32 %v1539, %v1814
      %v1895 = vadd.f32 %v1540, %v1819
      %v1896 = vadd.f32 %v1541, %v1822
      %v1897 = vadd.f32 %v1542, %v1827
      %v1898 = vadd.f32 %v1543, %v1830
      %v1899 = vadd.f32 %v1544, %v1835
      %v1900 = vadd.f32 %v1545, %v1838
      %v1901 = vadd.f32 %v1546, %v1843
      %v1902 = vadd.f32 %v1547, %v1846
      %v1903 = vadd.f32 %v1548, %v1851
      %v1904 = vadd.f32 %v1549, %v1854
      %v1905 = vadd.f32 %v1550, %v1859
      %v1906 = vadd.f32 %v1551, %v1862
      %v1907 = vadd.f32 %v1552, %v1867
      %v1908 = vadd.f32 %v1553, %v1870
      %s1909 = scalar_lea.vmem %s1, 10
      %v1910 = vld [vmem:[%s1909] sm:$0x3]
      %vm1911 = vcmask 1045504
      %v1912 = vrot.slane %v377, 2
      %v1913 = vrot.slane %v378, 2
      %v1914 = vsel %vm1911, %v1912, %v1913
      %v1915 = vrot.slane %v379, 2
      %v1916 = vsel %vm1911, %v1913, %v1915
      %v1917 = vrot.slane %v380, 2
      %v1918 = vsel %vm1911, %v1915, %v1917
      %v1919 = vrot.slane %v381, 2
      %v1920 = vsel %vm1911, %v1917, %v1919
      %v1921 = vrot.slane %v382, 2
      %v1922 = vsel %vm1911, %v1919, %v1921
      %v1923 = vrot.slane %v383, 2
      %v1924 = vsel %vm1911, %v1921, %v1923
      %v1925 = vrot.slane %v384, 2
      %v1926 = vsel %vm1911, %v1923, %v1925
      %v1927 = vrot.slane %v385, 2
      %v1928 = vsel %vm1911, %v1925, %v1927
      %v1929 = vrot.slane %v386, 2
      %v1930 = vsel %vm1911, %v1927, %v1929
      %v1931 = vrot.slane %v387, 2
      %v1932 = vsel %vm1911, %v1929, %v1931
      %v1933 = vrot.slane %v388, 2
      %v1934 = vsel %vm1911, %v1931, %v1933
      %v1935 = vrot.slane %v389, 2
      %v1936 = vsel %vm1911, %v1933, %v1935
      %v1937 = vrot.slane %v390, 2
      %v1938 = vsel %vm1911, %v1935, %v1937
      %v1939 = vrot.slane %v391, 2
      %v1940 = vsel %vm1911, %v1937, %v1939
      %v1941 = vrot.slane %v392, 2
      %v1942 = vsel %vm1911, %v1939, %v1941
      %v1943 = vrot.slane %v393, 2
      %v1944 = vsel %vm1911, %v1941, %v1943
      %v1945 = vrot.slane %v394, 2
      %v1946 = vsel %vm1911, %v1943, %v1945
      %v1947 = vrot.slane %v395, 2
      %v1948 = vsel %vm1911, %v1945, %v1947
      %v1950 = vsel %vm549, %v1914, 0
      %v1953 = vsel %vm549, %v1916, 0
      %v1956 = vsel %vm549, %v1918, 0
      %v1959 = vsel %vm549, %v1920, 0
      %v1962 = vsel %vm549, %v1922, 0
      %v1965 = vsel %vm549, %v1924, 0
      %v1968 = vsel %vm549, %v1926, 0
      %v1971 = vsel %vm549, %v1928, 0
      %v1974 = vsel %vm549, %v1930, 0
      %v1977 = vsel %vm549, %v1932, 0
      %v1980 = vsel %vm549, %v1934, 0
      %v1983 = vsel %vm549, %v1936, 0
      %v1986 = vsel %vm549, %v1938, 0
      %v1989 = vsel %vm549, %v1940, 0
      %v1992 = vsel %vm549, %v1942, 0
      %v1995 = vsel %vm549, %v1944, 0
      %v1998 = vsel %vm549, %v1946, 0
      %v2001 = vsel %vm549, %v1948, 0
      %v2004 = vsel %vm604, %v1910, 0
      %2006 = vmatprep.subr.bf16.mxu0 0
      %2007 = vmatpush1.bf16.msra.mxu0 %v2004
      %2008 = vmatprep.subr.bf16.mxu0 0
      %2009 = vmatpush1.bf16.msra.mxu0 0
      %2010 = vmatprep.subr.bf16.mxu0 0
      %2011 = vmatpush1.bf16.msra.mxu0 0
      %2012 = vmatprep.subr.bf16.mxu0 0
      %2013 = vmatpush1.bf16.msra.mxu0 0
      %2014 = vmatprep.subr.bf16.mxu0 0
      %2015 = vmatpush1.bf16.msra.mxu0 0
      %2016 = vmatprep.subr.bf16.mxu0 0
      %2017 = vmatpush1.bf16.msra.mxu0 0
      %2018 = vmatprep.subr.bf16.mxu0 0
      %2019 = vmatpush1.bf16.msra.mxu0 0
      %2020 = vmatprep.subr.bf16.mxu0 0
      %2021 = vmatpush1.bf16.msra.mxu0 0
      %2022 = vmatprep.subr.bf16.mxu0 0
      %2023 = vmatpush1.bf16.msra.mxu0 0
      %2024 = vmatprep.subr.bf16.mxu0 0
      %2025 = vmatpush1.bf16.msra.mxu0 0
      %2026 = vmatprep.subr.bf16.mxu0 0
      %2027 = vmatpush1.bf16.msra.mxu0 0
      %2028 = vmatprep.subr.bf16.mxu0 0
      %2029 = vmatpush1.bf16.msra.mxu0 0
      %2030 = vmatprep.subr.bf16.mxu0 0
      %2031 = vmatpush1.bf16.msra.mxu0 0
      %2032 = vmatprep.subr.bf16.mxu0 0
      %2033 = vmatpush1.bf16.msra.mxu0 0
      %2034 = vmatprep.subr.bf16.mxu0 0
      %2035 = vmatpush1.bf16.msra.mxu0 0
      %2036 = vmatprep.subr.bf16.mxu0 0
      %2037 = vmatpush1.bf16.msra.mxu0 0
      %2038 = vmatprep.mubr.bf16.mxu0 0
      %2039 = vmatmul.mubr.bf16.gmra.mrb[0].mxu0 %v1950
      %v2040 = vpop.f32.mrb[0].mxu0
      %v2041 = vadd.f32 0.0, %v2040
      %v2042 = vpop.f32.mrb[0].mxu0
      %v2043 = vpop.f32.mrb[0].mxu0
      %v2044 = vadd.f32 0.0, %v2043
      %v2045 = vpop.f32.mrb[0].mxu0
      %2046 = vmatprep.mubr.bf16.mxu0 0
      %2047 = vmatmul.mubr.bf16.gmra.mrb[0].mxu0 %v1953
      %v2048 = vpop.f32.mrb[0].mxu0
      %v2049 = vadd.f32 0.0, %v2048
      %v2050 = vpop.f32.mrb[0].mxu0
      %v2051 = vpop.f32.mrb[0].mxu0
      %v2052 = vadd.f32 0.0, %v2051
      %v2053 = vpop.f32.mrb[0].mxu0
      %2054 = vmatprep.mubr.bf16.mxu0 0
      %2055 = vmatmul.mubr.bf16.gmra.mrb[0].mxu0 %v1956
      %v2056 = vpop.f32.mrb[0].mxu0
      %v2057 = vadd.f32 0.0, %v2056
      %v2058 = vpop.f32.mrb[0].mxu0
      %v2059 = vpop.f32.mrb[0].mxu0
      %v2060 = vadd.f32 0.0, %v2059
      %v2061 = vpop.f32.mrb[0].mxu0
      %2062 = vmatprep.mubr.bf16.mxu0 0
      %2063 = vmatmul.mubr.bf16.gmra.mrb[0].mxu0 %v1959
      %v2064 = vpop.f32.mrb[0].mxu0
      %v2065 = vadd.f32 0.0, %v2064
      %v2066 = vpop.f32.mrb[0].mxu0
      %v2067 = vpop.f32.mrb[0].mxu0
      %v2068 = vadd.f32 0.0, %v2067
      %v2069 = vpop.f32.mrb[0].mxu0
      %2070 = vmatprep.mubr.bf16.mxu0 0
      %2071 = vmatmul.mubr.bf16.gmra.mrb[0].mxu0 %v1962
      %v2072 = vpop.f32.mrb[0].mxu0
      %v2073 = vadd.f32 0.0, %v2072
      %v2074 = vpop.f32.mrb[0].mxu0
      %v2075 = vpop.f32.mrb[0].mxu0
      %v2076 = vadd.f32 0.0, %v2075
      %v2077 = vpop.f32.mrb[0].mxu0
      %2078 = vmatprep.mubr.bf16.mxu0 0
      %2079 = vmatmul.mubr.bf16.gmra.mrb[0].mxu0 %v1965
      %v2080 = vpop.f32.mrb[0].mxu0
      %v2081 = vadd.f32 0.0, %v2080
      %v2082 = vpop.f32.mrb[0].mxu0
      %v2083 = vpop.f32.mrb[0].mxu0
      %v2084 = vadd.f32 0.0, %v2083
      %v2085 = vpop.f32.mrb[0].mxu0
      %2086 = vmatprep.mubr.bf16.mxu0 0
      %2087 = vmatmul.mubr.bf16.gmra.mrb[0].mxu0 %v1968
      %v2088 = vpop.f32.mrb[0].mxu0
      %v2089 = vadd.f32 0.0, %v2088
      %v2090 = vpop.f32.mrb[0].mxu0
      %v2091 = vpop.f32.mrb[0].mxu0
      %v2092 = vadd.f32 0.0, %v2091
      %v2093 = vpop.f32.mrb[0].mxu0
      %2094 = vmatprep.mubr.bf16.mxu0 0
      %2095 = vmatmul.mubr.bf16.gmra.mrb[0].mxu0 %v1971
      %v2096 = vpop.f32.mrb[0].mxu0
      %v2097 = vadd.f32 0.0, %v2096
      %v2098 = vpop.f32.mrb[0].mxu0
      %v2099 = vpop.f32.mrb[0].mxu0
      %v2100 = vadd.f32 0.0, %v2099
      %v2101 = vpop.f32.mrb[0].mxu0
      %2102 = vmatprep.mubr.bf16.mxu0 0
      %2103 = vmatmul.mubr.bf16.gmra.mrb[0].mxu0 %v1974
      %v2104 = vpop.f32.mrb[0].mxu0
      %v2105 = vadd.f32 0.0, %v2104
      %v2106 = vpop.f32.mrb[0].mxu0
      %v2107 = vpop.f32.mrb[0].mxu0
      %v2108 = vadd.f32 0.0, %v2107
      %v2109 = vpop.f32.mrb[0].mxu0
      %2110 = vmatprep.mubr.bf16.mxu0 0
      %2111 = vmatmul.mubr.bf16.gmra.mrb[0].mxu0 %v1977
      %v2112 = vpop.f32.mrb[0].mxu0
      %v2113 = vadd.f32 0.0, %v2112
      %v2114 = vpop.f32.mrb[0].mxu0
      %v2115 = vpop.f32.mrb[0].mxu0
      %v2116 = vadd.f32 0.0, %v2115
      %v2117 = vpop.f32.mrb[0].mxu0
      %2118 = vmatprep.mubr.bf16.mxu0 0
      %2119 = vmatmul.mubr.bf16.gmra.mrb[0].mxu0 %v1980
      %v2120 = vpop.f32.mrb[0].mxu0
      %v2121 = vadd.f32 0.0, %v2120
      %v2122 = vpop.f32.mrb[0].mxu0
      %v2123 = vpop.f32.mrb[0].mxu0
      %v2124 = vadd.f32 0.0, %v2123
      %v2125 = vpop.f32.mrb[0].mxu0
      %2126 = vmatprep.mubr.bf16.mxu0 0
      %2127 = vmatmul.mubr.bf16.gmra.mrb[0].mxu0 %v1983
      %v2128 = vpop.f32.mrb[0].mxu0
      %v2129 = vadd.f32 0.0, %v2128
      %v2130 = vpop.f32.mrb[0].mxu0
      %v2131 = vpop.f32.mrb[0].mxu0
      %v2132 = vadd.f32 0.0, %v2131
      %v2133 = vpop.f32.mrb[0].mxu0
      %2134 = vmatprep.mubr.bf16.mxu0 0
      %2135 = vmatmul.mubr.bf16.gmra.mrb[0].mxu0 %v1986
      %v2136 = vpop.f32.mrb[0].mxu0
      %v2137 = vadd.f32 0.0, %v2136
      %v2138 = vpop.f32.mrb[0].mxu0
      %v2139 = vpop.f32.mrb[0].mxu0
      %v2140 = vadd.f32 0.0, %v2139
      %v2141 = vpop.f32.mrb[0].mxu0
      %2142 = vmatprep.mubr.bf16.mxu0 0
      %2143 = vmatmul.mubr.bf16.gmra.mrb[0].mxu0 %v1989
      %v2144 = vpop.f32.mrb[0].mxu0
      %v2145 = vadd.f32 0.0, %v2144
      %v2146 = vpop.f32.mrb[0].mxu0
      %v2147 = vpop.f32.mrb[0].mxu0
      %v2148 = vadd.f32 0.0, %v2147
      %v2149 = vpop.f32.mrb[0].mxu0
      %2150 = vmatprep.mubr.bf16.mxu0 0
      %2151 = vmatmul.mubr.bf16.gmra.mrb[0].mxu0 %v1992
      %v2152 = vpop.f32.mrb[0].mxu0
      %v2153 = vadd.f32 0.0, %v2152
      %v2154 = vpop.f32.mrb[0].mxu0
      %v2155 = vpop.f32.mrb[0].mxu0
      %v2156 = vadd.f32 0.0, %v2155
      %v2157 = vpop.f32.mrb[0].mxu0
      %2158 = vmatprep.mubr.bf16.mxu0 0
      %2159 = vmatmul.mubr.bf16.gmra.mrb[0].mxu0 %v1995
      %v2160 = vpop.f32.mrb[0].mxu0
      %v2161 = vadd.f32 0.0, %v2160
      %v2162 = vpop.f32.mrb[0].mxu0
      %v2163 = vpop.f32.mrb[0].mxu0
      %v2164 = vadd.f32 0.0, %v2163
      %v2165 = vpop.f32.mrb[0].mxu0
      %2166 = vmatprep.mubr.bf16.mxu0 0
      %2167 = vmatmul.mubr.bf16.gmra.mrb[0].mxu0 %v1998
      %v2168 = vpop.f32.mrb[0].mxu0
      %v2169 = vadd.f32 0.0, %v2168
      %v2170 = vpop.f32.mrb[0].mxu0
      %v2171 = vpop.f32.mrb[0].mxu0
      %v2172 = vadd.f32 0.0, %v2171
      %v2173 = vpop.f32.mrb[0].mxu0
      %2174 = vmatprep.mubr.bf16.mxu0 0
      %2175 = vmatmul.mubr.bf16.gmra.mrb[0].mxu0 %v2001
      %v2176 = vpop.f32.mrb[0].mxu0
      %v2177 = vadd.f32 0.0, %v2176
      %v2178 = vpop.f32.mrb[0].mxu0
      %v2179 = vpop.f32.mrb[0].mxu0
      %v2180 = vadd.f32 0.0, %v2179
      %v2181 = vpop.f32.mrb[0].mxu0
      %2182 = vdwg.mxu0
      %v2183 = vadd.f32 %v1873, %v2041
      %v2184 = vadd.f32 %v1874, %v2044
      %v2185 = vadd.f32 %v1875, %v2049
      %v2186 = vadd.f32 %v1876, %v2052
      %v2187 = vadd.f32 %v1877, %v2057
      %v2188 = vadd.f32 %v1878, %v2060
      %v2189 = vadd.f32 %v1879, %v2065
      %v2190 = vadd.f32 %v1880, %v2068
      %v2191 = vadd.f32 %v1881, %v2073
      %v2192 = vadd.f32 %v1882, %v2076
      %v2193 = vadd.f32 %v1883, %v2081
      %v2194 = vadd.f32 %v1884, %v2084
      %v2195 = vadd.f32 %v1885, %v2089
      %v2196 = vadd.f32 %v1886, %v2092
      %v2197 = vadd.f32 %v1887, %v2097
      %v2198 = vadd.f32 %v1888, %v2100
      %v2199 = vadd.f32 %v1889, %v2105
      %v2200 = vadd.f32 %v1890, %v2108
      %v2201 = vadd.f32 %v1891, %v2113
      %v2202 = vadd.f32 %v1892, %v2116
      %v2203 = vadd.f32 %v1893, %v2121
      %v2204 = vadd.f32 %v1894, %v2124
      %v2205 = vadd.f32 %v1895, %v2129
      %v2206 = vadd.f32 %v1896, %v2132
      %v2207 = vadd.f32 %v1897, %v2137
      %v2208 = vadd.f32 %v1898, %v2140
      %v2209 = vadd.f32 %v1899, %v2145
      %v2210 = vadd.f32 %v1900, %v2148
      %v2211 = vadd.f32 %v1901, %v2153
      %v2212 = vadd.f32 %v1902, %v2156
      %v2213 = vadd.f32 %v1903, %v2161
      %v2214 = vadd.f32 %v1904, %v2164
      %v2215 = vadd.f32 %v1905, %v2169
      %v2216 = vadd.f32 %v1906, %v2172
      %v2217 = vadd.f32 %v1907, %v2177
      %v2218 = vadd.f32 %v1908, %v2180
      %s2219 = scalar_lea.vmem %s1, 12
      %v2220 = vld [vmem:[%s2219] sm:$0x3]
      %v2222 = vrot.slane %v396, 2
      %v2223 = vsel %vm1911, %v1947, %v2222
      %v2225 = vsel %vm549, %v2223, 0
      %v2228 = vsel %vm604, %v2220, 0
      %2230 = vmatprep.subr.bf16.mxu0 0
      %2231 = vmatpush1.bf16.msra.mxu0 %v2228
      %2232 = vmatprep.subr.bf16.mxu0 0
      %2233 = vmatpush1.bf16.msra.mxu0 0
      %2234 = vmatprep.subr.bf16.mxu0 0
      %2235 = vmatpush1.bf16.msra.mxu0 0
      %2236 = vmatprep.subr.bf16.mxu0 0
      %2237 = vmatpush1.bf16.msra.mxu0 0
      %2238 = vmatprep.subr.bf16.mxu0 0
      %2239 = vmatpush1.bf16.msra.mxu0 0
      %2240 = vmatprep.subr.bf16.mxu0 0
      %2241 = vmatpush1.bf16.msra.mxu0 0
      %2242 = vmatprep.subr.bf16.mxu0 0
      %2243 = vmatpush1.bf16.msra.mxu0 0
      %2244 = vmatprep.subr.bf16.mxu0 0
      %2245 = vmatpush1.bf16.msra.mxu0 0
      %2246 = vmatprep.subr.bf16.mxu0 0
      %2247 = vmatpush1.bf16.msra.mxu0 0
      %2248 = vmatprep.subr.bf16.mxu0 0
      %2249 = vmatpush1.bf16.msra.mxu0 0
      %2250 = vmatprep.subr.bf16.mxu0 0
      %2251 = vmatpush1.bf16.msra.mxu0 0
      %2252 = vmatprep.subr.bf16.mxu0 0
      %2253 = vmatpush1.bf16.msra.mxu0 0
      %2254 = vmatprep.subr.bf16.mxu0 0
      %2255 = vmatpush1.bf16.msra.mxu0 0
      %2256 = vmatprep.subr.bf16.mxu0 0
      %2257 = vmatpush1.bf16.msra.mxu0 0
      %2258 = vmatprep.subr.bf16.mxu0 0
      %2259 = vmatpush1.bf16.msra.mxu0 0
      %2260 = vmatprep.subr.bf16.mxu0 0
      %2261 = vmatpush1.bf16.msra.mxu0 0
      %2262 = vmatprep.mubr.bf16.mxu0 0
      %2263 = vmatmul.mubr.bf16.gmra.mrb[0].mxu0 %v1953
      %v2264 = vpop.f32.mrb[0].mxu0
      %v2265 = vadd.f32 0.0, %v2264
      %v2266 = vpop.f32.mrb[0].mxu0
      %v2267 = vpop.f32.mrb[0].mxu0
      %v2268 = vadd.f32 0.0, %v2267
      %v2269 = vpop.f32.mrb[0].mxu0
      %2270 = vmatprep.mubr.bf16.mxu0 0
      %2271 = vmatmul.mubr.bf16.gmra.mrb[0].mxu0 %v1956
      %v2272 = vpop.f32.mrb[0].mxu0
      %v2273 = vadd.f32 0.0, %v2272
      %v2274 = vpop.f32.mrb[0].mxu0
      %v2275 = vpop.f32.mrb[0].mxu0
      %v2276 = vadd.f32 0.0, %v2275
      %v2277 = vpop.f32.mrb[0].mxu0
      %2278 = vmatprep.mubr.bf16.mxu0 0
      %2279 = vmatmul.mubr.bf16.gmra.mrb[0].mxu0 %v1959
      %v2280 = vpop.f32.mrb[0].mxu0
      %v2281 = vadd.f32 0.0, %v2280
      %v2282 = vpop.f32.mrb[0].mxu0
      %v2283 = vpop.f32.mrb[0].mxu0
      %v2284 = vadd.f32 0.0, %v2283
      %v2285 = vpop.f32.mrb[0].mxu0
      %2286 = vmatprep.mubr.bf16.mxu0 0
      %2287 = vmatmul.mubr.bf16.gmra.mrb[0].mxu0 %v1962
      %v2288 = vpop.f32.mrb[0].mxu0
      %v2289 = vadd.f32 0.0, %v2288
      %v2290 = vpop.f32.mrb[0].mxu0
      %v2291 = vpop.f32.mrb[0].mxu0
      %v2292 = vadd.f32 0.0, %v2291
      %v2293 = vpop.f32.mrb[0].mxu0
      %2294 = vmatprep.mubr.bf16.mxu0 0
      %2295 = vmatmul.mubr.bf16.gmra.mrb[0].mxu0 %v1965
      %v2296 = vpop.f32.mrb[0].mxu0
      %v2297 = vadd.f32 0.0, %v2296
      %v2298 = vpop.f32.mrb[0].mxu0
      %v2299 = vpop.f32.mrb[0].mxu0
      %v2300 = vadd.f32 0.0, %v2299
      %v2301 = vpop.f32.mrb[0].mxu0
      %2302 = vmatprep.mubr.bf16.mxu0 0
      %2303 = vmatmul.mubr.bf16.gmra.mrb[0].mxu0 %v1968
      %v2304 = vpop.f32.mrb[0].mxu0
      %v2305 = vadd.f32 0.0, %v2304
      %v2306 = vpop.f32.mrb[0].mxu0
      %v2307 = vpop.f32.mrb[0].mxu0
      %v2308 = vadd.f32 0.0, %v2307
      %v2309 = vpop.f32.mrb[0].mxu0
      %2310 = vmatprep.mubr.bf16.mxu0 0
      %2311 = vmatmul.mubr.bf16.gmra.mrb[0].mxu0 %v1971
      %v2312 = vpop.f32.mrb[0].mxu0
      %v2313 = vadd.f32 0.0, %v2312
      %v2314 = vpop.f32.mrb[0].mxu0
      %v2315 = vpop.f32.mrb[0].mxu0
      %v2316 = vadd.f32 0.0, %v2315
      %v2317 = vpop.f32.mrb[0].mxu0
      %2318 = vmatprep.mubr.bf16.mxu0 0
      %2319 = vmatmul.mubr.bf16.gmra.mrb[0].mxu0 %v1974
      %v2320 = vpop.f32.mrb[0].mxu0
      %v2321 = vadd.f32 0.0, %v2320
      %v2322 = vpop.f32.mrb[0].mxu0
      %v2323 = vpop.f32.mrb[0].mxu0
      %v2324 = vadd.f32 0.0, %v2323
      %v2325 = vpop.f32.mrb[0].mxu0
      %2326 = vmatprep.mubr.bf16.mxu0 0
      %2327 = vmatmul.mubr.bf16.gmra.mrb[0].mxu0 %v1977
      %v2328 = vpop.f32.mrb[0].mxu0
      %v2329 = vadd.f32 0.0, %v2328
      %v2330 = vpop.f32.mrb[0].mxu0
      %v2331 = vpop.f32.mrb[0].mxu0
      %v2332 = vadd.f32 0.0, %v2331
      %v2333 = vpop.f32.mrb[0].mxu0
      %2334 = vmatprep.mubr.bf16.mxu0 0
      %2335 = vmatmul.mubr.bf16.gmra.mrb[0].mxu0 %v1980
      %v2336 = vpop.f32.mrb[0].mxu0
      %v2337 = vadd.f32 0.0, %v2336
      %v2338 = vpop.f32.mrb[0].mxu0
      %v2339 = vpop.f32.mrb[0].mxu0
      %v2340 = vadd.f32 0.0, %v2339
      %v2341 = vpop.f32.mrb[0].mxu0
      %2342 = vmatprep.mubr.bf16.mxu0 0
      %2343 = vmatmul.mubr.bf16.gmra.mrb[0].mxu0 %v1983
      %v2344 = vpop.f32.mrb[0].mxu0
      %v2345 = vadd.f32 0.0, %v2344
      %v2346 = vpop.f32.mrb[0].mxu0
      %v2347 = vpop.f32.mrb[0].mxu0
      %v2348 = vadd.f32 0.0, %v2347
      %v2349 = vpop.f32.mrb[0].mxu0
      %2350 = vmatprep.mubr.bf16.mxu0 0
      %2351 = vmatmul.mubr.bf16.gmra.mrb[0].mxu0 %v1986
      %v2352 = vpop.f32.mrb[0].mxu0
      %v2353 = vadd.f32 0.0, %v2352
      %v2354 = vpop.f32.mrb[0].mxu0
      %v2355 = vpop.f32.mrb[0].mxu0
      %v2356 = vadd.f32 0.0, %v2355
      %v2357 = vpop.f32.mrb[0].mxu0
      %2358 = vmatprep.mubr.bf16.mxu0 0
      %2359 = vmatmul.mubr.bf16.gmra.mrb[0].mxu0 %v1989
      %v2360 = vpop.f32.mrb[0].mxu0
      %v2361 = vadd.f32 0.0, %v2360
      %v2362 = vpop.f32.mrb[0].mxu0
      %v2363 = vpop.f32.mrb[0].mxu0
      %v2364 = vadd.f32 0.0, %v2363
      %v2365 = vpop.f32.mrb[0].mxu0
      %2366 = vmatprep.mubr.bf16.mxu0 0
      %2367 = vmatmul.mubr.bf16.gmra.mrb[0].mxu0 %v1992
      %v2368 = vpop.f32.mrb[0].mxu0
      %v2369 = vadd.f32 0.0, %v2368
      %v2370 = vpop.f32.mrb[0].mxu0
      %v2371 = vpop.f32.mrb[0].mxu0
      %v2372 = vadd.f32 0.0, %v2371
      %v2373 = vpop.f32.mrb[0].mxu0
      %2374 = vmatprep.mubr.bf16.mxu0 0
      %2375 = vmatmul.mubr.bf16.gmra.mrb[0].mxu0 %v1995
      %v2376 = vpop.f32.mrb[0].mxu0
      %v2377 = vadd.f32 0.0, %v2376
      %v2378 = vpop.f32.mrb[0].mxu0
      %v2379 = vpop.f32.mrb[0].mxu0
      %v2380 = vadd.f32 0.0, %v2379
      %v2381 = vpop.f32.mrb[0].mxu0
      %2382 = vmatprep.mubr.bf16.mxu0 0
      %2383 = vmatmul.mubr.bf16.gmra.mrb[0].mxu0 %v1998
      %v2384 = vpop.f32.mrb[0].mxu0
      %v2385 = vadd.f32 0.0, %v2384
      %v2386 = vpop.f32.mrb[0].mxu0
      %v2387 = vpop.f32.mrb[0].mxu0
      %v2388 = vadd.f32 0.0, %v2387
      %v2389 = vpop.f32.mrb[0].mxu0
      %2390 = vmatprep.mubr.bf16.mxu0 0
      %2391 = vmatmul.mubr.bf16.gmra.mrb[0].mxu0 %v2001
      %v2392 = vpop.f32.mrb[0].mxu0
      %v2393 = vadd.f32 0.0, %v2392
      %v2394 = vpop.f32.mrb[0].mxu0
      %v2395 = vpop.f32.mrb[0].mxu0
      %v2396 = vadd.f32 0.0, %v2395
      %v2397 = vpop.f32.mrb[0].mxu0
      %2398 = vmatprep.mubr.bf16.mxu0 0
      %2399 = vmatmul.mubr.bf16.gmra.mrb[0].mxu0 %v2225
      %v2400 = vpop.f32.mrb[0].mxu0
      %v2401 = vadd.f32 0.0, %v2400
      %v2402 = vpop.f32.mrb[0].mxu0
      %v2403 = vpop.f32.mrb[0].mxu0
      %v2404 = vadd.f32 0.0, %v2403
      %v2405 = vpop.f32.mrb[0].mxu0
      %2406 = vdwg.mxu0
      %v2407 = vadd.f32 %v2183, %v2265
      %v2408 = vadd.f32 %v2184, %v2268
      %v2409 = vadd.f32 %v2185, %v2273
      %v2410 = vadd.f32 %v2186, %v2276
      %v2411 = vadd.f32 %v2187, %v2281
      %v2412 = vadd.f32 %v2188, %v2284
      %v2413 = vadd.f32 %v2189, %v2289
      %v2414 = vadd.f32 %v2190, %v2292
      %v2415 = vadd.f32 %v2191, %v2297
      %v2416 = vadd.f32 %v2192, %v2300
      %v2417 = vadd.f32 %v2193, %v2305
      %v2418 = vadd.f32 %v2194, %v2308
      %v2419 = vadd.f32 %v2195, %v2313
      %v2420 = vadd.f32 %v2196, %v2316
      %v2421 = vadd.f32 %v2197, %v2321
      %v2422 = vadd.f32 %v2198, %v2324
      %v2423 = vadd.f32 %v2199, %v2329
      %v2424 = vadd.f32 %v2200, %v2332
      %v2425 = vadd.f32 %v2201, %v2337
      %v2426 = vadd.f32 %v2202, %v2340
      %v2427 = vadd.f32 %v2203, %v2345
      %v2428 = vadd.f32 %v2204, %v2348
      %v2429 = vadd.f32 %v2205, %v2353
      %v2430 = vadd.f32 %v2206, %v2356
      %v2431 = vadd.f32 %v2207, %v2361
      %v2432 = vadd.f32 %v2208, %v2364
      %v2433 = vadd.f32 %v2209, %v2369
      %v2434 = vadd.f32 %v2210, %v2372
      %v2435 = vadd.f32 %v2211, %v2377
      %v2436 = vadd.f32 %v2212, %v2380
      %v2437 = vadd.f32 %v2213, %v2385
      %v2438 = vadd.f32 %v2214, %v2388
      %v2439 = vadd.f32 %v2215, %v2393
      %v2440 = vadd.f32 %v2216, %v2396
      %v2441 = vadd.f32 %v2217, %v2401
      %v2442 = vadd.f32 %v2218, %v2404
      %s2443 = scalar_lea.vmem %s1, 14
      %v2444 = vld [vmem:[%s2443] sm:$0x3]
      %vm2445 = vsmask.f32 5376
      %v2446 = vrot.slane %v421, 2
      %v2447 = vrot.slane %v417, 3
      %v2448 = vor.u32 %v2446, %v2447
      %v2449 = vrot.slane %v429, 2
      %v2450 = vrot.slane %v425, 3
      %v2451 = vor.u32 %v2449, %v2450
      %v2452 = vsel %vm2445, %v2448, %v2451
      %v2453 = vrot.slane %v437, 2
      %v2454 = vrot.slane %v433, 3
      %v2455 = vor.u32 %v2453, %v2454
      %v2456 = vsel %vm2445, %v2451, %v2455
      %v2457 = vrot.slane %v445, 2
      %v2458 = vrot.slane %v441, 3
      %v2459 = vor.u32 %v2457, %v2458
      %v2460 = vsel %vm2445, %v2455, %v2459
      %v2461 = vrot.slane %v453, 2
      %v2462 = vrot.slane %v449, 3
      %v2463 = vor.u32 %v2461, %v2462
      %v2464 = vsel %vm2445, %v2459, %v2463
      %v2465 = vrot.slane %v461, 2
      %v2466 = vrot.slane %v457, 3
      %v2467 = vor.u32 %v2465, %v2466
      %v2468 = vsel %vm2445, %v2463, %v2467
      %v2469 = vrot.slane %v469, 2
      %v2470 = vrot.slane %v465, 3
      %v2471 = vor.u32 %v2469, %v2470
      %v2472 = vsel %vm2445, %v2467, %v2471
      %v2473 = vrot.slane %v477, 2
      %v2474 = vrot.slane %v473, 3
      %v2475 = vor.u32 %v2473, %v2474
      %v2476 = vsel %vm2445, %v2471, %v2475
      %v2477 = vrot.slane %v485, 2
      %v2478 = vrot.slane %v481, 3
      %v2479 = vor.u32 %v2477, %v2478
      %v2480 = vsel %vm2445, %v2475, %v2479
      %v2481 = vrot.slane %v493, 2
      %v2482 = vrot.slane %v489, 3
      %v2483 = vor.u32 %v2481, %v2482
      %v2484 = vsel %vm2445, %v2479, %v2483
      %v2485 = vrot.slane %v501, 2
      %v2486 = vrot.slane %v497, 3
      %v2487 = vor.u32 %v2485, %v2486
      %v2488 = vsel %vm2445, %v2483, %v2487
      %v2489 = vrot.slane %v509, 2
      %v2490 = vrot.slane %v505, 3
      %v2491 = vor.u32 %v2489, %v2490
      %v2492 = vsel %vm2445, %v2487, %v2491
      %v2493 = vrot.slane %v517, 2
      %v2494 = vrot.slane %v513, 3
      %v2495 = vor.u32 %v2493, %v2494
      %v2496 = vsel %vm2445, %v2491, %v2495
      %v2497 = vrot.slane %v525, 2
      %v2498 = vrot.slane %v521, 3
      %v2499 = vor.u32 %v2497, %v2498
      %v2500 = vsel %vm2445, %v2495, %v2499
      %v2501 = vrot.slane %v533, 2
      %v2502 = vrot.slane %v529, 3
      %v2503 = vor.u32 %v2501, %v2502
      %v2504 = vsel %vm2445, %v2499, %v2503
      %v2505 = vrot.slane %v541, 2
      %v2506 = vrot.slane %v537, 3
      %v2507 = vor.u32 %v2505, %v2506
      %v2508 = vsel %vm2445, %v2503, %v2507
      %v2509 = vrot.slane %v1624, 2
      %v2510 = vrot.slane %v545, 3
      %v2511 = vor.u32 %v2509, %v2510
      %v2512 = vsel %vm2445, %v2507, %v2511
      %v2513 = vrot.slane %v1631, 2
      %v2514 = vrot.slane %v1634, 3
      %v2515 = vor.u32 %v2513, %v2514
      %v2516 = vsel %vm2445, %v2511, %v2515
      %v2518 = vshrl.u32 %v396, 16
      %v2520 = vrot.slane %v2518, 2
      %v2521 = vshll.u32 %v396, 16
      %v2523 = vrot.slane %v2521, 3
      %v2524 = vor.u32 %v2520, %v2523
      %v2525 = vsel %vm2445, %v2515, %v2524
      %v2527 = vsel %vm549, %v2452, 0
      %v2530 = vsel %vm549, %v2456, 0
      %v2533 = vsel %vm549, %v2460, 0
      %v2536 = vsel %vm549, %v2464, 0
      %v2539 = vsel %vm549, %v2468, 0
      %v2542 = vsel %vm549, %v2472, 0
      %v2545 = vsel %vm549, %v2476, 0
      %v2548 = vsel %vm549, %v2480, 0
      %v2551 = vsel %vm549, %v2484, 0
      %v2554 = vsel %vm549, %v2488, 0
      %v2557 = vsel %vm549, %v2492, 0
      %v2560 = vsel %vm549, %v2496, 0
      %v2563 = vsel %vm549, %v2500, 0
      %v2566 = vsel %vm549, %v2504, 0
      %v2569 = vsel %vm549, %v2508, 0
      %v2572 = vsel %vm549, %v2512, 0
      %v2575 = vsel %vm549, %v2516, 0
      %v2578 = vsel %vm549, %v2525, 0
      %v2581 = vsel %vm604, %v2444, 0
      %2583 = vmatprep.subr.bf16.mxu0 0
      %2584 = vmatpush1.bf16.msra.mxu0 %v2581
      %2585 = vmatprep.subr.bf16.mxu0 0
      %2586 = vmatpush1.bf16.msra.mxu0 0
      %2587 = vmatprep.subr.bf16.mxu0 0
      %2588 = vmatpush1.bf16.msra.mxu0 0
      %2589 = vmatprep.subr.bf16.mxu0 0
      %2590 = vmatpush1.bf16.msra.mxu0 0
      %2591 = vmatprep.subr.bf16.mxu0 0
      %2592 = vmatpush1.bf16.msra.mxu0 0
      %2593 = vmatprep.subr.bf16.mxu0 0
      %2594 = vmatpush1.bf16.msra.mxu0 0
      %2595 = vmatprep.subr.bf16.mxu0 0
      %2596 = vmatpush1.bf16.msra.mxu0 0
      %2597 = vmatprep.subr.bf16.mxu0 0
      %2598 = vmatpush1.bf16.msra.mxu0 0
      %2599 = vmatprep.subr.bf16.mxu0 0
      %2600 = vmatpush1.bf16.msra.mxu0 0
      %2601 = vmatprep.subr.bf16.mxu0 0
      %2602 = vmatpush1.bf16.msra.mxu0 0
      %2603 = vmatprep.subr.bf16.mxu0 0
      %2604 = vmatpush1.bf16.msra.mxu0 0
      %2605 = vmatprep.subr.bf16.mxu0 0
      %2606 = vmatpush1.bf16.msra.mxu0 0
      %2607 = vmatprep.subr.bf16.mxu0 0
      %2608 = vmatpush1.bf16.msra.mxu0 0
      %2609 = vmatprep.subr.bf16.mxu0 0
      %2610 = vmatpush1.bf16.msra.mxu0 0
      %2611 = vmatprep.subr.bf16.mxu0 0
      %2612 = vmatpush1.bf16.msra.mxu0 0
      %2613 = vmatprep.subr.bf16.mxu0 0
      %2614 = vmatpush1.bf16.msra.mxu0 0
      %2615 = vmatprep.mubr.bf16.mxu0 0
      %2616 = vmatmul.mubr.bf16.gmra.mrb[0].mxu0 %v2527
      %v2617 = vpop.f32.mrb[0].mxu0
      %v2618 = vadd.f32 0.0, %v2617
      %v2619 = vpop.f32.mrb[0].mxu0
      %v2620 = vpop.f32.mrb[0].mxu0
      %v2621 = vadd.f32 0.0, %v2620
      %v2622 = vpop.f32.mrb[0].mxu0
      %2623 = vmatprep.mubr.bf16.mxu0 0
      %2624 = vmatmul.mubr.bf16.gmra.mrb[0].mxu0 %v2530
      %v2625 = vpop.f32.mrb[0].mxu0
      %v2626 = vadd.f32 0.0, %v2625
      %v2627 = vpop.f32.mrb[0].mxu0
      %v2628 = vpop.f32.mrb[0].mxu0
      %v2629 = vadd.f32 0.0, %v2628
      %v2630 = vpop.f32.mrb[0].mxu0
      %2631 = vmatprep.mubr.bf16.mxu0 0
      %2632 = vmatmul.mubr.bf16.gmra.mrb[0].mxu0 %v2533
      %v2633 = vpop.f32.mrb[0].mxu0
      %v2634 = vadd.f32 0.0, %v2633
      %v2635 = vpop.f32.mrb[0].mxu0
      %v2636 = vpop.f32.mrb[0].mxu0
      %v2637 = vadd.f32 0.0, %v2636
      %v2638 = vpop.f32.mrb[0].mxu0
      %2639 = vmatprep.mubr.bf16.mxu0 0
      %2640 = vmatmul.mubr.bf16.gmra.mrb[0].mxu0 %v2536
      %v2641 = vpop.f32.mrb[0].mxu0
      %v2642 = vadd.f32 0.0, %v2641
      %v2643 = vpop.f32.mrb[0].mxu0
      %v2644 = vpop.f32.mrb[0].mxu0
      %v2645 = vadd.f32 0.0, %v2644
      %v2646 = vpop.f32.mrb[0].mxu0
      %2647 = vmatprep.mubr.bf16.mxu0 0
      %2648 = vmatmul.mubr.bf16.gmra.mrb[0].mxu0 %v2539
      %v2649 = vpop.f32.mrb[0].mxu0
      %v2650 = vadd.f32 0.0, %v2649
      %v2651 = vpop.f32.mrb[0].mxu0
      %v2652 = vpop.f32.mrb[0].mxu0
      %v2653 = vadd.f32 0.0, %v2652
      %v2654 = vpop.f32.mrb[0].mxu0
      %2655 = vmatprep.mubr.bf16.mxu0 0
      %2656 = vmatmul.mubr.bf16.gmra.mrb[0].mxu0 %v2542
      %v2657 = vpop.f32.mrb[0].mxu0
      %v2658 = vadd.f32 0.0, %v2657
      %v2659 = vpop.f32.mrb[0].mxu0
      %v2660 = vpop.f32.mrb[0].mxu0
      %v2661 = vadd.f32 0.0, %v2660
      %v2662 = vpop.f32.mrb[0].mxu0
      %2663 = vmatprep.mubr.bf16.mxu0 0
      %2664 = vmatmul.mubr.bf16.gmra.mrb[0].mxu0 %v2545
      %v2665 = vpop.f32.mrb[0].mxu0
      %v2666 = vadd.f32 0.0, %v2665
      %v2667 = vpop.f32.mrb[0].mxu0
      %v2668 = vpop.f32.mrb[0].mxu0
      %v2669 = vadd.f32 0.0, %v2668
      %v2670 = vpop.f32.mrb[0].mxu0
      %2671 = vmatprep.mubr.bf16.mxu0 0
      %2672 = vmatmul.mubr.bf16.gmra.mrb[0].mxu0 %v2548
      %v2673 = vpop.f32.mrb[0].mxu0
      %v2674 = vadd.f32 0.0, %v2673
      %v2675 = vpop.f32.mrb[0].mxu0
      %v2676 = vpop.f32.mrb[0].mxu0
      %v2677 = vadd.f32 0.0, %v2676
      %v2678 = vpop.f32.mrb[0].mxu0
      %2679 = vmatprep.mubr.bf16.mxu0 0
      %2680 = vmatmul.mubr.bf16.gmra.mrb[0].mxu0 %v2551
      %v2681 = vpop.f32.mrb[0].mxu0
      %v2682 = vadd.f32 0.0, %v2681
      %v2683 = vpop.f32.mrb[0].mxu0
      %v2684 = vpop.f32.mrb[0].mxu0
      %v2685 = vadd.f32 0.0, %v2684
      %v2686 = vpop.f32.mrb[0].mxu0
      %2687 = vmatprep.mubr.bf16.mxu0 0
      %2688 = vmatmul.mubr.bf16.gmra.mrb[0].mxu0 %v2554
      %v2689 = vpop.f32.mrb[0].mxu0
      %v2690 = vadd.f32 0.0, %v2689
      %v2691 = vpop.f32.mrb[0].mxu0
      %v2692 = vpop.f32.mrb[0].mxu0
      %v2693 = vadd.f32 0.0, %v2692
      %v2694 = vpop.f32.mrb[0].mxu0
      %2695 = vmatprep.mubr.bf16.mxu0 0
      %2696 = vmatmul.mubr.bf16.gmra.mrb[0].mxu0 %v2557
      %v2697 = vpop.f32.mrb[0].mxu0
      %v2698 = vadd.f32 0.0, %v2697
      %v2699 = vpop.f32.mrb[0].mxu0
      %v2700 = vpop.f32.mrb[0].mxu0
      %v2701 = vadd.f32 0.0, %v2700
      %v2702 = vpop.f32.mrb[0].mxu0
      %2703 = vmatprep.mubr.bf16.mxu0 0
      %2704 = vmatmul.mubr.bf16.gmra.mrb[0].mxu0 %v2560
      %v2705 = vpop.f32.mrb[0].mxu0
      %v2706 = vadd.f32 0.0, %v2705
      %v2707 = vpop.f32.mrb[0].mxu0
      %v2708 = vpop.f32.mrb[0].mxu0
      %v2709 = vadd.f32 0.0, %v2708
      %v2710 = vpop.f32.mrb[0].mxu0
      %2711 = vmatprep.mubr.bf16.mxu0 0
      %2712 = vmatmul.mubr.bf16.gmra.mrb[0].mxu0 %v2563
      %v2713 = vpop.f32.mrb[0].mxu0
      %v2714 = vadd.f32 0.0, %v2713
      %v2715 = vpop.f32.mrb[0].mxu0
      %v2716 = vpop.f32.mrb[0].mxu0
      %v2717 = vadd.f32 0.0, %v2716
      %v2718 = vpop.f32.mrb[0].mxu0
      %2719 = vmatprep.mubr.bf16.mxu0 0
      %2720 = vmatmul.mubr.bf16.gmra.mrb[0].mxu0 %v2566
      %v2721 = vpop.f32.mrb[0].mxu0
      %v2722 = vadd.f32 0.0, %v2721
      %v2723 = vpop.f32.mrb[0].mxu0
      %v2724 = vpop.f32.mrb[0].mxu0
      %v2725 = vadd.f32 0.0, %v2724
      %v2726 = vpop.f32.mrb[0].mxu0
      %2727 = vmatprep.mubr.bf16.mxu0 0
      %2728 = vmatmul.mubr.bf16.gmra.mrb[0].mxu0 %v2569
      %v2729 = vpop.f32.mrb[0].mxu0
      %v2730 = vadd.f32 0.0, %v2729
      %v2731 = vpop.f32.mrb[0].mxu0
      %v2732 = vpop.f32.mrb[0].mxu0
      %v2733 = vadd.f32 0.0, %v2732
      %v2734 = vpop.f32.mrb[0].mxu0
      %2735 = vmatprep.mubr.bf16.mxu0 0
      %2736 = vmatmul.mubr.bf16.gmra.mrb[0].mxu0 %v2572
      %v2737 = vpop.f32.mrb[0].mxu0
      %v2738 = vadd.f32 0.0, %v2737
      %v2739 = vpop.f32.mrb[0].mxu0
      %v2740 = vpop.f32.mrb[0].mxu0
      %v2741 = vadd.f32 0.0, %v2740
      %v2742 = vpop.f32.mrb[0].mxu0
      %2743 = vmatprep.mubr.bf16.mxu0 0
      %2744 = vmatmul.mubr.bf16.gmra.mrb[0].mxu0 %v2575
      %v2745 = vpop.f32.mrb[0].mxu0
      %v2746 = vadd.f32 0.0, %v2745
      %v2747 = vpop.f32.mrb[0].mxu0
      %v2748 = vpop.f32.mrb[0].mxu0
      %v2749 = vadd.f32 0.0, %v2748
      %v2750 = vpop.f32.mrb[0].mxu0
      %2751 = vmatprep.mubr.bf16.mxu0 0
      %2752 = vmatmul.mubr.bf16.gmra.mrb[0].mxu0 %v2578
      %v2753 = vpop.f32.mrb[0].mxu0
      %v2754 = vadd.f32 0.0, %v2753
      %v2755 = vpop.f32.mrb[0].mxu0
      %v2756 = vpop.f32.mrb[0].mxu0
      %v2757 = vadd.f32 0.0, %v2756
      %v2758 = vpop.f32.mrb[0].mxu0
      %2759 = vdwg.mxu0
      %v2760 = vadd.f32 %v2407, %v2618
      %v2761 = vadd.f32 %v2408, %v2621
      %v2762 = vadd.f32 %v2409, %v2626
      %v2763 = vadd.f32 %v2410, %v2629
      %v2764 = vadd.f32 %v2411, %v2634
      %v2765 = vadd.f32 %v2412, %v2637
      %v2766 = vadd.f32 %v2413, %v2642
      %v2767 = vadd.f32 %v2414, %v2645
      %v2768 = vadd.f32 %v2415, %v2650
      %v2769 = vadd.f32 %v2416, %v2653
      %v2770 = vadd.f32 %v2417, %v2658
      %v2771 = vadd.f32 %v2418, %v2661
      %v2772 = vadd.f32 %v2419, %v2666
      %v2773 = vadd.f32 %v2420, %v2669
      %v2774 = vadd.f32 %v2421, %v2674
      %v2775 = vadd.f32 %v2422, %v2677
      %v2776 = vadd.f32 %v2423, %v2682
      %v2777 = vadd.f32 %v2424, %v2685
      %v2778 = vadd.f32 %v2425, %v2690
      %v2779 = vadd.f32 %v2426, %v2693
      %v2780 = vadd.f32 %v2427, %v2698
      %v2781 = vadd.f32 %v2428, %v2701
      %v2782 = vadd.f32 %v2429, %v2706
      %v2783 = vadd.f32 %v2430, %v2709
      %v2784 = vadd.f32 %v2431, %v2714
      %v2785 = vadd.f32 %v2432, %v2717
      %v2786 = vadd.f32 %v2433, %v2722
      %v2787 = vadd.f32 %v2434, %v2725
      %v2788 = vadd.f32 %v2435, %v2730
      %v2789 = vadd.f32 %v2436, %v2733
      %v2790 = vadd.f32 %v2437, %v2738
      %v2791 = vadd.f32 %v2438, %v2741
      %v2792 = vadd.f32 %v2439, %v2746
      %v2793 = vadd.f32 %v2440, %v2749
      %v2794 = vadd.f32 %v2441, %v2754
      %v2795 = vadd.f32 %v2442, %v2757
      %s2796 = scalar_lea.vmem %s1, 16
      %v2797 = vld [vmem:[%s2796] sm:$0x3]
      %vm2798 = vcmask 1044480
      %v2799 = vrot.slane %v378, 3
      %v2800 = vrot.slane %v379, 3
      %v2801 = vsel %vm2798, %v2799, %v2800
      %v2802 = vrot.slane %v380, 3
      %v2803 = vsel %vm2798, %v2800, %v2802
      %v2804 = vrot.slane %v381, 3
      %v2805 = vsel %vm2798, %v2802, %v2804
      %v2806 = vrot.slane %v382, 3
      %v2807 = vsel %vm2798, %v2804, %v2806
      %v2808 = vrot.slane %v383, 3
      %v2809 = vsel %vm2798, %v2806, %v2808
      %v2810 = vrot.slane %v384, 3
      %v2811 = vsel %vm2798, %v2808, %v2810
      %v2812 = vrot.slane %v385, 3
      %v2813 = vsel %vm2798, %v2810, %v2812
      %v2814 = vrot.slane %v386, 3
      %v2815 = vsel %vm2798, %v2812, %v2814
      %v2816 = vrot.slane %v387, 3
      %v2817 = vsel %vm2798, %v2814, %v2816
      %v2818 = vrot.slane %v388, 3
      %v2819 = vsel %vm2798, %v2816, %v2818
      %v2820 = vrot.slane %v389, 3
      %v2821 = vsel %vm2798, %v2818, %v2820
      %v2822 = vrot.slane %v390, 3
      %v2823 = vsel %vm2798, %v2820, %v2822
      %v2824 = vrot.slane %v391, 3
      %v2825 = vsel %vm2798, %v2822, %v2824
      %v2826 = vrot.slane %v392, 3
      %v2827 = vsel %vm2798, %v2824, %v2826
      %v2828 = vrot.slane %v393, 3
      %v2829 = vsel %vm2798, %v2826, %v2828
      %v2830 = vrot.slane %v394, 3
      %v2831 = vsel %vm2798, %v2828, %v2830
      %v2832 = vrot.slane %v395, 3
      %v2833 = vsel %vm2798, %v2830, %v2832
      %v2834 = vrot.slane %v396, 3
      %v2835 = vsel %vm2798, %v2832, %v2834
      %v2837 = vsel %vm549, %v2801, 0
      %v2840 = vsel %vm549, %v2803, 0
      %v2843 = vsel %vm549, %v2805, 0
      %v2846 = vsel %vm549, %v2807, 0
      %v2849 = vsel %vm549, %v2809, 0
      %v2852 = vsel %vm549, %v2811, 0
      %v2855 = vsel %vm549, %v2813, 0
      %v2858 = vsel %vm549, %v2815, 0
      %v2861 = vsel %vm549, %v2817, 0
      %v2864 = vsel %vm549, %v2819, 0
      %v2867 = vsel %vm549, %v2821, 0
      %v2870 = vsel %vm549, %v2823, 0
      %v2873 = vsel %vm549, %v2825, 0
      %v2876 = vsel %vm549, %v2827, 0
      %v2879 = vsel %vm549, %v2829, 0
      %v2882 = vsel %vm549, %v2831, 0
      %v2885 = vsel %vm549, %v2833, 0
      %v2888 = vsel %vm549, %v2835, 0
      %v2891 = vsel %vm604, %v2797, 0
      %2893 = vmatprep.subr.bf16.mxu0 0
      %2894 = vmatpush1.bf16.msra.mxu0 %v2891
      %2895 = vmatprep.subr.bf16.mxu0 0
      %2896 = vmatpush1.bf16.msra.mxu0 0
      %2897 = vmatprep.subr.bf16.mxu0 0
      %2898 = vmatpush1.bf16.msra.mxu0 0
      %2899 = vmatprep.subr.bf16.mxu0 0
      %2900 = vmatpush1.bf16.msra.mxu0 0
      %2901 = vmatprep.subr.bf16.mxu0 0
      %2902 = vmatpush1.bf16.msra.mxu0 0
      %2903 = vmatprep.subr.bf16.mxu0 0
      %2904 = vmatpush1.bf16.msra.mxu0 0
      %2905 = vmatprep.subr.bf16.mxu0 0
      %2906 = vmatpush1.bf16.msra.mxu0 0
      %2907 = vmatprep.subr.bf16.mxu0 0
      %2908 = vmatpush1.bf16.msra.mxu0 0
      %2909 = vmatprep.subr.bf16.mxu0 0
      %2910 = vmatpush1.bf16.msra.mxu0 0
      %2911 = vmatprep.subr.bf16.mxu0 0
      %2912 = vmatpush1.bf16.msra.mxu0 0
      %2913 = vmatprep.subr.bf16.mxu0 0
      %2914 = vmatpush1.bf16.msra.mxu0 0
      %2915 = vmatprep.subr.bf16.mxu0 0
      %2916 = vmatpush1.bf16.msra.mxu0 0
      %2917 = vmatprep.subr.bf16.mxu0 0
      %2918 = vmatpush1.bf16.msra.mxu0 0
      %2919 = vmatprep.subr.bf16.mxu0 0
      %2920 = vmatpush1.bf16.msra.mxu0 0
      %2921 = vmatprep.subr.bf16.mxu0 0
      %2922 = vmatpush1.bf16.msra.mxu0 0
      %2923 = vmatprep.subr.bf16.mxu0 0
      %2924 = vmatpush1.bf16.msra.mxu0 0
      %2925 = vmatprep.mubr.bf16.mxu0 0
      %2926 = vmatmul.mubr.bf16.gmra.mrb[0].mxu0 %v2837
      %v2927 = vpop.f32.mrb[0].mxu0
      %v2928 = vadd.f32 0.0, %v2927
      %v2929 = vpop.f32.mrb[0].mxu0
      %v2930 = vpop.f32.mrb[0].mxu0
      %v2931 = vadd.f32 0.0, %v2930
      %v2932 = vpop.f32.mrb[0].mxu0
      %2933 = vmatprep.mubr.bf16.mxu0 0
      %2934 = vmatmul.mubr.bf16.gmra.mrb[0].mxu0 %v2840
      %v2935 = vpop.f32.mrb[0].mxu0
      %v2936 = vadd.f32 0.0, %v2935
      %v2937 = vpop.f32.mrb[0].mxu0
      %v2938 = vpop.f32.mrb[0].mxu0
      %v2939 = vadd.f32 0.0, %v2938
      %v2940 = vpop.f32.mrb[0].mxu0
      %2941 = vmatprep.mubr.bf16.mxu0 0
      %2942 = vmatmul.mubr.bf16.gmra.mrb[0].mxu0 %v2843
      %v2943 = vpop.f32.mrb[0].mxu0
      %v2944 = vadd.f32 0.0, %v2943
      %v2945 = vpop.f32.mrb[0].mxu0
      %v2946 = vpop.f32.mrb[0].mxu0
      %v2947 = vadd.f32 0.0, %v2946
      %v2948 = vpop.f32.mrb[0].mxu0
      %2949 = vmatprep.mubr.bf16.mxu0 0
      %2950 = vmatmul.mubr.bf16.gmra.mrb[0].mxu0 %v2846
      %v2951 = vpop.f32.mrb[0].mxu0
      %v2952 = vadd.f32 0.0, %v2951
      %v2953 = vpop.f32.mrb[0].mxu0
      %v2954 = vpop.f32.mrb[0].mxu0
      %v2955 = vadd.f32 0.0, %v2954
      %v2956 = vpop.f32.mrb[0].mxu0
      %2957 = vmatprep.mubr.bf16.mxu0 0
      %2958 = vmatmul.mubr.bf16.gmra.mrb[0].mxu0 %v2849
      %v2959 = vpop.f32.mrb[0].mxu0
      %v2960 = vadd.f32 0.0, %v2959
      %v2961 = vpop.f32.mrb[0].mxu0
      %v2962 = vpop.f32.mrb[0].mxu0
      %v2963 = vadd.f32 0.0, %v2962
      %v2964 = vpop.f32.mrb[0].mxu0
      %2965 = vmatprep.mubr.bf16.mxu0 0
      %2966 = vmatmul.mubr.bf16.gmra.mrb[0].mxu0 %v2852
      %v2967 = vpop.f32.mrb[0].mxu0
      %v2968 = vadd.f32 0.0, %v2967
      %v2969 = vpop.f32.mrb[0].mxu0
      %v2970 = vpop.f32.mrb[0].mxu0
      %v2971 = vadd.f32 0.0, %v2970
      %v2972 = vpop.f32.mrb[0].mxu0
      %2973 = vmatprep.mubr.bf16.mxu0 0
      %2974 = vmatmul.mubr.bf16.gmra.mrb[0].mxu0 %v2855
      %v2975 = vpop.f32.mrb[0].mxu0
      %v2976 = vadd.f32 0.0, %v2975
      %v2977 = vpop.f32.mrb[0].mxu0
      %v2978 = vpop.f32.mrb[0].mxu0
      %v2979 = vadd.f32 0.0, %v2978
      %v2980 = vpop.f32.mrb[0].mxu0
      %2981 = vmatprep.mubr.bf16.mxu0 0
      %2982 = vmatmul.mubr.bf16.gmra.mrb[0].mxu0 %v2858
      %v2983 = vpop.f32.mrb[0].mxu0
      %v2984 = vadd.f32 0.0, %v2983
      %v2985 = vpop.f32.mrb[0].mxu0
      %v2986 = vpop.f32.mrb[0].mxu0
      %v2987 = vadd.f32 0.0, %v2986
      %v2988 = vpop.f32.mrb[0].mxu0
      %2989 = vmatprep.mubr.bf16.mxu0 0
      %2990 = vmatmul.mubr.bf16.gmra.mrb[0].mxu0 %v2861
      %v2991 = vpop.f32.mrb[0].mxu0
      %v2992 = vadd.f32 0.0, %v2991
      %v2993 = vpop.f32.mrb[0].mxu0
      %v2994 = vpop.f32.mrb[0].mxu0
      %v2995 = vadd.f32 0.0, %v2994
      %v2996 = vpop.f32.mrb[0].mxu0
      %2997 = vmatprep.mubr.bf16.mxu0 0
      %2998 = vmatmul.mubr.bf16.gmra.mrb[0].mxu0 %v2864
      %v2999 = vpop.f32.mrb[0].mxu0
      %v3000 = vadd.f32 0.0, %v2999
      %v3001 = vpop.f32.mrb[0].mxu0
      %v3002 = vpop.f32.mrb[0].mxu0
      %v3003 = vadd.f32 0.0, %v3002
      %v3004 = vpop.f32.mrb[0].mxu0
      %3005 = vmatprep.mubr.bf16.mxu0 0
      %3006 = vmatmul.mubr.bf16.gmra.mrb[0].mxu0 %v2867
      %v3007 = vpop.f32.mrb[0].mxu0
      %v3008 = vadd.f32 0.0, %v3007
      %v3009 = vpop.f32.mrb[0].mxu0
      %v3010 = vpop.f32.mrb[0].mxu0
      %v3011 = vadd.f32 0.0, %v3010
      %v3012 = vpop.f32.mrb[0].mxu0
      %3013 = vmatprep.mubr.bf16.mxu0 0
      %3014 = vmatmul.mubr.bf16.gmra.mrb[0].mxu0 %v2870
      %v3015 = vpop.f32.mrb[0].mxu0
      %v3016 = vadd.f32 0.0, %v3015
      %v3017 = vpop.f32.mrb[0].mxu0
      %v3018 = vpop.f32.mrb[0].mxu0
      %v3019 = vadd.f32 0.0, %v3018
      %v3020 = vpop.f32.mrb[0].mxu0
      %3021 = vmatprep.mubr.bf16.mxu0 0
      %3022 = vmatmul.mubr.bf16.gmra.mrb[0].mxu0 %v2873
      %v3023 = vpop.f32.mrb[0].mxu0
      %v3024 = vadd.f32 0.0, %v3023
      %v3025 = vpop.f32.mrb[0].mxu0
      %v3026 = vpop.f32.mrb[0].mxu0
      %v3027 = vadd.f32 0.0, %v3026
      %v3028 = vpop.f32.mrb[0].mxu0
      %3029 = vmatprep.mubr.bf16.mxu0 0
      %3030 = vmatmul.mubr.bf16.gmra.mrb[0].mxu0 %v2876
      %v3031 = vpop.f32.mrb[0].mxu0
      %v3032 = vadd.f32 0.0, %v3031
      %v3033 = vpop.f32.mrb[0].mxu0
      %v3034 = vpop.f32.mrb[0].mxu0
      %v3035 = vadd.f32 0.0, %v3034
      %v3036 = vpop.f32.mrb[0].mxu0
      %3037 = vmatprep.mubr.bf16.mxu0 0
      %3038 = vmatmul.mubr.bf16.gmra.mrb[0].mxu0 %v2879
      %v3039 = vpop.f32.mrb[0].mxu0
      %v3040 = vadd.f32 0.0, %v3039
      %v3041 = vpop.f32.mrb[0].mxu0
      %v3042 = vpop.f32.mrb[0].mxu0
      %v3043 = vadd.f32 0.0, %v3042
      %v3044 = vpop.f32.mrb[0].mxu0
      %3045 = vmatprep.mubr.bf16.mxu0 0
      %3046 = vmatmul.mubr.bf16.gmra.mrb[0].mxu0 %v2882
      %v3047 = vpop.f32.mrb[0].mxu0
      %v3048 = vadd.f32 0.0, %v3047
      %v3049 = vpop.f32.mrb[0].mxu0
      %v3050 = vpop.f32.mrb[0].mxu0
      %v3051 = vadd.f32 0.0, %v3050
      %v3052 = vpop.f32.mrb[0].mxu0
      %3053 = vmatprep.mubr.bf16.mxu0 0
      %3054 = vmatmul.mubr.bf16.gmra.mrb[0].mxu0 %v2885
      %v3055 = vpop.f32.mrb[0].mxu0
      %v3056 = vadd.f32 0.0, %v3055
      %v3057 = vpop.f32.mrb[0].mxu0
      %v3058 = vpop.f32.mrb[0].mxu0
      %v3059 = vadd.f32 0.0, %v3058
      %v3060 = vpop.f32.mrb[0].mxu0
      %3061 = vmatprep.mubr.bf16.mxu0 0
      %3062 = vmatmul.mubr.bf16.gmra.mrb[0].mxu0 %v2888
      %v3063 = vpop.f32.mrb[0].mxu0
      %v3064 = vadd.f32 0.0, %v3063
      %v3065 = vpop.f32.mrb[0].mxu0
      %v3066 = vpop.f32.mrb[0].mxu0
      %v3067 = vadd.f32 0.0, %v3066
      %v3068 = vpop.f32.mrb[0].mxu0
      %3069 = vdwg.mxu0
      %v3070 = vadd.f32 %v2760, %v2928
      %v3071 = vadd.f32 %v2761, %v2931
      %v3072 = vadd.f32 %v2762, %v2936
      %v3073 = vadd.f32 %v2763, %v2939
      %v3074 = vadd.f32 %v2764, %v2944
      %v3075 = vadd.f32 %v2765, %v2947
      %v3076 = vadd.f32 %v2766, %v2952
      %v3077 = vadd.f32 %v2767, %v2955
      %v3078 = vadd.f32 %v2768, %v2960
      %v3079 = vadd.f32 %v2769, %v2963
      %v3080 = vadd.f32 %v2770, %v2968
      %v3081 = vadd.f32 %v2771, %v2971
      %v3082 = vadd.f32 %v2772, %v2976
      %v3083 = vadd.f32 %v2773, %v2979
      %v3084 = vadd.f32 %v2774, %v2984
      %v3085 = vadd.f32 %v2775, %v2987
      %v3086 = vadd.f32 %v2776, %v2992
      %v3087 = vadd.f32 %v2777, %v2995
      %v3088 = vadd.f32 %v2778, %v3000
      %v3089 = vadd.f32 %v2779, %v3003
      %v3090 = vadd.f32 %v2780, %v3008
      %v3091 = vadd.f32 %v2781, %v3011
      %v3092 = vadd.f32 %v2782, %v3016
      %v3093 = vadd.f32 %v2783, %v3019
      %v3094 = vadd.f32 %v2784, %v3024
      %v3095 = vadd.f32 %v2785, %v3027
      %v3096 = vadd.f32 %v2786, %v3032
      %v3097 = vadd.f32 %v2787, %v3035
      %v3098 = vadd.f32 %v2788, %v3040
      %v3099 = vadd.f32 %v2789, %v3043
      %v3100 = vadd.f32 %v2790, %v3048
      %v3101 = vadd.f32 %v2791, %v3051
      %v3102 = vadd.f32 %v2792, %v3056
      %v3103 = vadd.f32 %v2793, %v3059
      %v3104 = vadd.f32 %v2794, %v3064
      %v3105 = vadd.f32 %v2795, %v3067
      %3107 = vset.pattern.permute.xlu0 0
      %3108 = vperm.xlu0 %3107, %v339
      %v3109 = vpop.permute.xlu0 %3108
      %3111 = vset.pattern.permute.xlu0 0
      %3112 = vperm.xlu0 %3111, %v340
      %v3113 = vpop.permute.xlu0 %3112
      %3115 = vset.pattern.permute.xlu0 0
      %3116 = vperm.xlu0 %3115, %v341
      %v3117 = vpop.permute.xlu0 %3116
      %3119 = vset.pattern.permute.xlu0 0
      %3120 = vperm.xlu0 %3119, %v342
      %v3121 = vpop.permute.xlu0 %3120
      %3123 = vset.pattern.permute.xlu0 0
      %3124 = vperm.xlu0 %3123, %v343
      %v3125 = vpop.permute.xlu0 %3124
      %3127 = vset.pattern.permute.xlu0 0
      %3128 = vperm.xlu0 %3127, %v344
      %v3129 = vpop.permute.xlu0 %3128
      %3131 = vset.pattern.permute.xlu0 0
      %3132 = vperm.xlu0 %3131, %v345
      %v3133 = vpop.permute.xlu0 %3132
      %3135 = vset.pattern.permute.xlu0 0
      %3136 = vperm.xlu0 %3135, %v346
      %v3137 = vpop.permute.xlu0 %3136
      %3139 = vset.pattern.permute.xlu0 0
      %3140 = vperm.xlu0 %3139, %v347
      %v3141 = vpop.permute.xlu0 %3140
      %3143 = vset.pattern.permute.xlu0 0
      %3144 = vperm.xlu0 %3143, %v348
      %v3145 = vpop.permute.xlu0 %3144
      %3147 = vset.pattern.permute.xlu0 0
      %3148 = vperm.xlu0 %3147, %v349
      %v3149 = vpop.permute.xlu0 %3148
      %3151 = vset.pattern.permute.xlu0 0
      %3152 = vperm.xlu0 %3151, %v350
      %v3153 = vpop.permute.xlu0 %3152
      %3155 = vset.pattern.permute.xlu0 0
      %3156 = vperm.xlu0 %3155, %v351
      %v3157 = vpop.permute.xlu0 %3156
      %3159 = vset.pattern.permute.xlu0 0
      %3160 = vperm.xlu0 %3159, %v352
      %v3161 = vpop.permute.xlu0 %3160
      %3163 = vset.pattern.permute.xlu0 0
      %3164 = vperm.xlu0 %3163, %v353
      %v3165 = vpop.permute.xlu0 %3164
      %3167 = vset.pattern.permute.xlu0 0
      %3168 = vperm.xlu0 %3167, %v354
      %v3169 = vpop.permute.xlu0 %3168
      %3171 = vset.pattern.permute.xlu0 0
      %3172 = vperm.xlu0 %3171, %v355
      %v3173 = vpop.permute.xlu0 %3172
      %3175 = vset.pattern.permute.xlu0 0
      %3176 = vperm.xlu0 %3175, %v356
      %v3177 = vpop.permute.xlu0 %3176
      %3179 = vset.pattern.permute.xlu0 0
      %3180 = vperm.xlu0 %3179, %v357
      %v3181 = vpop.permute.xlu0 %3180
      %3183 = vset.pattern.permute.xlu0 0
      %3184 = vperm.xlu0 %3183, %v358
      %v3185 = vpop.permute.xlu0 %3184
      %3187 = vset.pattern.permute.xlu0 0
      %3188 = vperm.xlu0 %3187, %v359
      %v3189 = vpop.permute.xlu0 %3188
      %3191 = vset.pattern.permute.xlu0 0
      %3192 = vperm.xlu0 %3191, %v360
      %v3193 = vpop.permute.xlu0 %3192
      %3195 = vset.pattern.permute.xlu0 0
      %3196 = vperm.xlu0 %3195, %v361
      %v3197 = vpop.permute.xlu0 %3196
      %3199 = vset.pattern.permute.xlu0 0
      %3200 = vperm.xlu0 %3199, %v362
      %v3201 = vpop.permute.xlu0 %3200
      %3203 = vset.pattern.permute.xlu0 0
      %3204 = vperm.xlu0 %3203, %v363
      %v3205 = vpop.permute.xlu0 %3204
      %3207 = vset.pattern.permute.xlu0 0
      %3208 = vperm.xlu0 %3207, %v364
      %v3209 = vpop.permute.xlu0 %3208
      %3211 = vset.pattern.permute.xlu0 0
      %3212 = vperm.xlu0 %3211, %v365
      %v3213 = vpop.permute.xlu0 %3212
      %3215 = vset.pattern.permute.xlu0 0
      %3216 = vperm.xlu0 %3215, %v366
      %v3217 = vpop.permute.xlu0 %3216
      %3219 = vset.pattern.permute.xlu0 0
      %3220 = vperm.xlu0 %3219, %v367
      %v3221 = vpop.permute.xlu0 %3220
      %3223 = vset.pattern.permute.xlu0 0
      %3224 = vperm.xlu0 %3223, %v368
      %v3225 = vpop.permute.xlu0 %3224
      %3227 = vset.pattern.permute.xlu0 0
      %3228 = vperm.xlu0 %3227, %v369
      %v3229 = vpop.permute.xlu0 %3228
      %3231 = vset.pattern.permute.xlu0 0
      %3232 = vperm.xlu0 %3231, %v370
      %v3233 = vpop.permute.xlu0 %3232
      %3235 = vset.pattern.permute.xlu0 0
      %3236 = vperm.xlu0 %3235, %v371
      %v3237 = vpop.permute.xlu0 %3236
      %3239 = vset.pattern.permute.xlu0 0
      %3240 = vperm.xlu0 %3239, %v372
      %v3241 = vpop.permute.xlu0 %3240
      %3243 = vset.pattern.permute.xlu0 0
      %3244 = vperm.xlu0 %3243, %v373
      %v3245 = vpop.permute.xlu0 %3244
      %3247 = vset.pattern.permute.xlu0 0
      %3248 = vperm.xlu0 %3247, %v374
      %v3249 = vpop.permute.xlu0 %3248
      %3251 = vset.pattern.permute.xlu0 0
      %3252 = vperm.xlu0 %3251, %v375
      %v3253 = vpop.permute.xlu0 %3252
      %vm3254 = vcmask 1044480
      %v3255 = vrot.slane %v3109, 3
      %v3256 = vrot.slane %v3113, 3
      %v3257 = vsel %vm3254, %v3255, %v3256
      %v3258 = vrot.slane %v3117, 3
      %v3259 = vsel %vm3254, %v3256, %v3258
      %v3260 = vrot.slane %v3121, 3
      %v3261 = vsel %vm3254, %v3258, %v3260
      %v3262 = vrot.slane %v3125, 3
      %v3263 = vsel %vm3254, %v3260, %v3262
      %v3264 = vrot.slane %v3129, 3
      %v3265 = vsel %vm3254, %v3262, %v3264
      %v3266 = vrot.slane %v3133, 3
      %v3267 = vsel %vm3254, %v3264, %v3266
      %v3268 = vrot.slane %v3137, 3
      %v3269 = vsel %vm3254, %v3266, %v3268
      %v3270 = vrot.slane %v3141, 3
      %v3271 = vsel %vm3254, %v3268, %v3270
      %v3272 = vrot.slane %v3145, 3
      %v3273 = vsel %vm3254, %v3270, %v3272
      %v3274 = vrot.slane %v3149, 3
      %v3275 = vsel %vm3254, %v3272, %v3274
      %v3276 = vrot.slane %v3153, 3
      %v3277 = vsel %vm3254, %v3274, %v3276
      %v3278 = vrot.slane %v3157, 3
      %v3279 = vsel %vm3254, %v3276, %v3278
      %v3280 = vrot.slane %v3161, 3
      %v3281 = vsel %vm3254, %v3278, %v3280
      %v3282 = vrot.slane %v3165, 3
      %v3283 = vsel %vm3254, %v3280, %v3282
      %v3284 = vrot.slane %v3169, 3
      %v3285 = vsel %vm3254, %v3282, %v3284
      %v3286 = vrot.slane %v3173, 3
      %v3287 = vsel %vm3254, %v3284, %v3286
      %v3288 = vrot.slane %v3177, 3
      %v3289 = vsel %vm3254, %v3286, %v3288
      %v3290 = vrot.slane %v3181, 3
      %v3291 = vsel %vm3254, %v3288, %v3290
      %v3292 = vrot.slane %v3185, 3
      %v3293 = vsel %vm3254, %v3290, %v3292
      %v3294 = vrot.slane %v3189, 3
      %v3295 = vsel %vm3254, %v3292, %v3294
      %v3296 = vrot.slane %v3193, 3
      %v3297 = vsel %vm3254, %v3294, %v3296
      %v3298 = vrot.slane %v3197, 3
      %v3299 = vsel %vm3254, %v3296, %v3298
      %v3300 = vrot.slane %v3201, 3
      %v3301 = vsel %vm3254, %v3298, %v3300
      %v3302 = vrot.slane %v3205, 3
      %v3303 = vsel %vm3254, %v3300, %v3302
      %v3304 = vrot.slane %v3209, 3
      %v3305 = vsel %vm3254, %v3302, %v3304
      %v3306 = vrot.slane %v3213, 3
      %v3307 = vsel %vm3254, %v3304, %v3306
      %v3308 = vrot.slane %v3217, 3
      %v3309 = vsel %vm3254, %v3306, %v3308
      %v3310 = vrot.slane %v3221, 3
      %v3311 = vsel %vm3254, %v3308, %v3310
      %v3312 = vrot.slane %v3225, 3
      %v3313 = vsel %vm3254, %v3310, %v3312
      %v3314 = vrot.slane %v3229, 3
      %v3315 = vsel %vm3254, %v3312, %v3314
      %v3316 = vrot.slane %v3233, 3
      %v3317 = vsel %vm3254, %v3314, %v3316
      %v3318 = vrot.slane %v3237, 3
      %v3319 = vsel %vm3254, %v3316, %v3318
      %v3320 = vrot.slane %v3241, 3
      %v3321 = vsel %vm3254, %v3318, %v3320
      %v3322 = vrot.slane %v3245, 3
      %v3323 = vsel %vm3254, %v3320, %v3322
      %v3324 = vrot.slane %v3249, 3
      %v3325 = vsel %vm3254, %v3322, %v3324
      %v3326 = vrot.slane %v3253, 3
      %v3327 = vsel %vm3254, %v3324, %v3326
      %v3364 = vmul.f32 %v3070, %v3257
      %v3365 = vmul.f32 %v3071, %v3259
      %v3366 = vmul.f32 %v3072, %v3261
      %v3367 = vmul.f32 %v3073, %v3263
      %v3368 = vmul.f32 %v3074, %v3265
      %v3369 = vmul.f32 %v3075, %v3267
      %v3370 = vmul.f32 %v3076, %v3269
      %v3371 = vmul.f32 %v3077, %v3271
      %v3372 = vmul.f32 %v3078, %v3273
      %v3373 = vmul.f32 %v3079, %v3275
      %v3374 = vmul.f32 %v3080, %v3277
      %v3375 = vmul.f32 %v3081, %v3279
      %v3376 = vmul.f32 %v3082, %v3281
      %v3377 = vmul.f32 %v3083, %v3283
      %v3378 = vmul.f32 %v3084, %v3285
      %v3379 = vmul.f32 %v3085, %v3287
      %v3380 = vmul.f32 %v3086, %v3289
      %v3381 = vmul.f32 %v3087, %v3291
      %v3382 = vmul.f32 %v3088, %v3293
      %v3383 = vmul.f32 %v3089, %v3295
      %v3384 = vmul.f32 %v3090, %v3297
      %v3385 = vmul.f32 %v3091, %v3299
      %v3386 = vmul.f32 %v3092, %v3301
      %v3387 = vmul.f32 %v3093, %v3303
      %v3388 = vmul.f32 %v3094, %v3305
      %v3389 = vmul.f32 %v3095, %v3307
      %v3390 = vmul.f32 %v3096, %v3309
      %v3391 = vmul.f32 %v3097, %v3311
      %v3392 = vmul.f32 %v3098, %v3313
      %v3393 = vmul.f32 %v3099, %v3315
      %v3394 = vmul.f32 %v3100, %v3317
      %v3395 = vmul.f32 %v3101, %v3319
      %v3396 = vmul.f32 %v3102, %v3321
      %v3397 = vmul.f32 %v3103, %v3323
      %v3398 = vmul.f32 %v3104, %v3325
      %v3399 = vmul.f32 %v3105, %v3327
      %vm3400 = vcmask 261120
      %v3401 = vsel %vm3400, %v3364, 0.0
      %v3402 = vsel %vm3400, %v3365, 0.0
      %v3403 = vadd.f32 %v3401, %v3402
      %v3404 = vsel %vm3400, %v3366, 0.0
      %v3405 = vadd.f32 %v3403, %v3404
      %v3406 = vsel %vm3400, %v3367, 0.0
      %v3407 = vadd.f32 %v3405, %v3406
      %v3408 = vsel %vm3400, %v3368, 0.0
      %v3409 = vadd.f32 %v3407, %v3408
      %v3410 = vsel %vm3400, %v3369, 0.0
      %v3411 = vadd.f32 %v3409, %v3410
      %v3412 = vsel %vm3400, %v3370, 0.0
      %v3413 = vadd.f32 %v3411, %v3412
      %v3414 = vsel %vm3400, %v3371, 0.0
      %v3415 = vadd.f32 %v3413, %v3414
      %v3416 = vsel %vm3400, %v3372, 0.0
      %v3417 = vadd.f32 %v3415, %v3416
      %v3418 = vsel %vm3400, %v3373, 0.0
      %v3419 = vadd.f32 %v3417, %v3418
      %v3420 = vsel %vm3400, %v3374, 0.0
      %v3421 = vadd.f32 %v3419, %v3420
      %v3422 = vsel %vm3400, %v3375, 0.0
      %v3423 = vadd.f32 %v3421, %v3422
      %v3424 = vsel %vm3400, %v3376, 0.0
      %v3425 = vadd.f32 %v3423, %v3424
      %v3426 = vsel %vm3400, %v3377, 0.0
      %v3427 = vadd.f32 %v3425, %v3426
      %v3428 = vsel %vm3400, %v3378, 0.0
      %v3429 = vadd.f32 %v3427, %v3428
      %v3430 = vsel %vm3400, %v3379, 0.0
      %v3431 = vadd.f32 %v3429, %v3430
      %v3432 = vsel %vm3400, %v3380, 0.0
      %v3433 = vadd.f32 %v3431, %v3432
      %v3434 = vsel %vm3400, %v3381, 0.0
      %v3435 = vadd.f32 %v3433, %v3434
      %v3436 = vsel %vm3400, %v3382, 0.0
      %v3437 = vadd.f32 %v3435, %v3436
      %v3438 = vsel %vm3400, %v3383, 0.0
      %v3439 = vadd.f32 %v3437, %v3438
      %v3440 = vsel %vm3400, %v3384, 0.0
      %v3441 = vadd.f32 %v3439, %v3440
      %v3442 = vsel %vm3400, %v3385, 0.0
      %v3443 = vadd.f32 %v3441, %v3442
      %v3444 = vsel %vm3400, %v3386, 0.0
      %v3445 = vadd.f32 %v3443, %v3444
      %v3446 = vsel %vm3400, %v3387, 0.0
      %v3447 = vadd.f32 %v3445, %v3446
      %v3448 = vsel %vm3400, %v3388, 0.0
      %v3449 = vadd.f32 %v3447, %v3448
      %v3450 = vsel %vm3400, %v3389, 0.0
      %v3451 = vadd.f32 %v3449, %v3450
      %v3452 = vsel %vm3400, %v3390, 0.0
      %v3453 = vadd.f32 %v3451, %v3452
      %v3454 = vsel %vm3400, %v3391, 0.0
      %v3455 = vadd.f32 %v3453, %v3454
      %v3456 = vsel %vm3400, %v3392, 0.0
      %v3457 = vadd.f32 %v3455, %v3456
      %v3458 = vsel %vm3400, %v3393, 0.0
      %v3459 = vadd.f32 %v3457, %v3458
      %v3460 = vsel %vm3400, %v3394, 0.0
      %v3461 = vadd.f32 %v3459, %v3460
      %v3462 = vsel %vm3400, %v3395, 0.0
      %v3463 = vadd.f32 %v3461, %v3462
      %v3464 = vsel %vm3400, %v3396, 0.0
      %v3465 = vadd.f32 %v3463, %v3464
      %v3466 = vsel %vm3400, %v3397, 0.0
      %v3467 = vadd.f32 %v3465, %v3466
      %v3468 = vsel %vm3400, %v3398, 0.0
      %v3469 = vadd.f32 %v3467, %v3468
      %v3470 = vsel %vm3400, %v3399, 0.0
      %v3471 = vadd.f32 %v3469, %v3470
      %v3472 = vrot.slane %v3471, 4
      %v3473 = vadd.f32 %v3471, %v3472
      %v3474 = vrot.slane %v3473, 2
      %v3475 = vadd.f32 %v3473, %v3474
      %v3476 = vrot.slane %v3475, 1
      %v3477 = vadd.f32 %v3475, %v3476
      %vm3478 = vcmask 253952
      %3479 = vst.msk [vmem:[%s292] sm:$0x1] %vm3478, %v3477
      %v3480 = vmul.f32 %v3364, %v3364
      %v3481 = vmul.f32 %v3365, %v3365
      %v3482 = vmul.f32 %v3366, %v3366
      %v3483 = vmul.f32 %v3367, %v3367
      %v3484 = vmul.f32 %v3368, %v3368
      %v3485 = vmul.f32 %v3369, %v3369
      %v3486 = vmul.f32 %v3370, %v3370
      %v3487 = vmul.f32 %v3371, %v3371
      %v3488 = vmul.f32 %v3372, %v3372
      %v3489 = vmul.f32 %v3373, %v3373
      %v3490 = vmul.f32 %v3374, %v3374
      %v3491 = vmul.f32 %v3375, %v3375
      %v3492 = vmul.f32 %v3376, %v3376
      %v3493 = vmul.f32 %v3377, %v3377
      %v3494 = vmul.f32 %v3378, %v3378
      %v3495 = vmul.f32 %v3379, %v3379
      %v3496 = vmul.f32 %v3380, %v3380
      %v3497 = vmul.f32 %v3381, %v3381
      %v3498 = vmul.f32 %v3382, %v3382
      %v3499 = vmul.f32 %v3383, %v3383
      %v3500 = vmul.f32 %v3384, %v3384
      %v3501 = vmul.f32 %v3385, %v3385
      %v3502 = vmul.f32 %v3386, %v3386
      %v3503 = vmul.f32 %v3387, %v3387
      %v3504 = vmul.f32 %v3388, %v3388
      %v3505 = vmul.f32 %v3389, %v3389
      %v3506 = vmul.f32 %v3390, %v3390
      %v3507 = vmul.f32 %v3391, %v3391
      %v3508 = vmul.f32 %v3392, %v3392
      %v3509 = vmul.f32 %v3393, %v3393
      %v3510 = vmul.f32 %v3394, %v3394
      %v3511 = vmul.f32 %v3395, %v3395
      %v3512 = vmul.f32 %v3396, %v3396
      %v3513 = vmul.f32 %v3397, %v3397
      %v3514 = vmul.f32 %v3398, %v3398
      %v3515 = vmul.f32 %v3399, %v3399
      %v3516 = vsel %vm3400, %v3480, 0.0
      %v3517 = vsel %vm3400, %v3481, 0.0
      %v3518 = vadd.f32 %v3516, %v3517
      %v3519 = vsel %vm3400, %v3482, 0.0
      %v3520 = vadd.f32 %v3518, %v3519
      %v3521 = vsel %vm3400, %v3483, 0.0
      %v3522 = vadd.f32 %v3520, %v3521
      %v3523 = vsel %vm3400, %v3484, 0.0
      %v3524 = vadd.f32 %v3522, %v3523
      %v3525 = vsel %vm3400, %v3485, 0.0
      %v3526 = vadd.f32 %v3524, %v3525
      %v3527 = vsel %vm3400, %v3486, 0.0
      %v3528 = vadd.f32 %v3526, %v3527
      %v3529 = vsel %vm3400, %v3487, 0.0
      %v3530 = vadd.f32 %v3528, %v3529
      %v3531 = vsel %vm3400, %v3488, 0.0
      %v3532 = vadd.f32 %v3530, %v3531
      %v3533 = vsel %vm3400, %v3489, 0.0
      %v3534 = vadd.f32 %v3532, %v3533
      %v3535 = vsel %vm3400, %v3490, 0.0
      %v3536 = vadd.f32 %v3534, %v3535
      %v3537 = vsel %vm3400, %v3491, 0.0
      %v3538 = vadd.f32 %v3536, %v3537
      %v3539 = vsel %vm3400, %v3492, 0.0
      %v3540 = vadd.f32 %v3538, %v3539
      %v3541 = vsel %vm3400, %v3493, 0.0
      %v3542 = vadd.f32 %v3540, %v3541
      %v3543 = vsel %vm3400, %v3494, 0.0
      %v3544 = vadd.f32 %v3542, %v3543
      %v3545 = vsel %vm3400, %v3495, 0.0
      %v3546 = vadd.f32 %v3544, %v3545
      %v3547 = vsel %vm3400, %v3496, 0.0
      %v3548 = vadd.f32 %v3546, %v3547
      %v3549 = vsel %vm3400, %v3497, 0.0
      %v3550 = vadd.f32 %v3548, %v3549
      %v3551 = vsel %vm3400, %v3498, 0.0
      %v3552 = vadd.f32 %v3550, %v3551
      %v3553 = vsel %vm3400, %v3499, 0.0
      %v3554 = vadd.f32 %v3552, %v3553
      %v3555 = vsel %vm3400, %v3500, 0.0
      %v3556 = vadd.f32 %v3554, %v3555
      %v3557 = vsel %vm3400, %v3501, 0.0
      %v3558 = vadd.f32 %v3556, %v3557
      %v3559 = vsel %vm3400, %v3502, 0.0
      %v3560 = vadd.f32 %v3558, %v3559
      %v3561 = vsel %vm3400, %v3503, 0.0
      %v3562 = vadd.f32 %v3560, %v3561
      %v3563 = vsel %vm3400, %v3504, 0.0
      %v3564 = vadd.f32 %v3562, %v3563
      %v3565 = vsel %vm3400, %v3505, 0.0
      %v3566 = vadd.f32 %v3564, %v3565
      %v3567 = vsel %vm3400, %v3506, 0.0
      %v3568 = vadd.f32 %v3566, %v3567
      %v3569 = vsel %vm3400, %v3507, 0.0
      %v3570 = vadd.f32 %v3568, %v3569
      %v3571 = vsel %vm3400, %v3508, 0.0
      %v3572 = vadd.f32 %v3570, %v3571
      %v3573 = vsel %vm3400, %v3509, 0.0
      %v3574 = vadd.f32 %v3572, %v3573
      %v3575 = vsel %vm3400, %v3510, 0.0
      %v3576 = vadd.f32 %v3574, %v3575
      %v3577 = vsel %vm3400, %v3511, 0.0
      %v3578 = vadd.f32 %v3576, %v3577
      %v3579 = vsel %vm3400, %v3512, 0.0
      %v3580 = vadd.f32 %v3578, %v3579
      %v3581 = vsel %vm3400, %v3513, 0.0
      %v3582 = vadd.f32 %v3580, %v3581
      %v3583 = vsel %vm3400, %v3514, 0.0
      %v3584 = vadd.f32 %v3582, %v3583
      %v3585 = vsel %vm3400, %v3515, 0.0
      %v3586 = vadd.f32 %v3584, %v3585
      %v3587 = vrot.slane %v3586, 4
      %v3588 = vadd.f32 %v3586, %v3587
      %v3589 = vrot.slane %v3588, 2
      %v3590 = vadd.f32 %v3588, %v3589
      %v3591 = vrot.slane %v3590, 1
      %v3592 = vadd.f32 %v3590, %v3591
      %3593 = vst.msk [vmem:[%s295] sm:$0x1] %vm3478, %v3592
      %3594 = vst.msk [vmem:[%s289] sm:$0xff] %vm3400, 0.0
      %3595 = vst.msk [vmem:[%s289 + $0x8] sm:$0xff] %vm3400, 0.0
      %vm3596 = vcmask 256000
      %3597 = vst.msk [vmem:[%s289 + $0x10] sm:$0x7] %vm3596, 0.0
      %3598 = vst.msk [vmem:[%s289 + $0x13] sm:$0xff] %vm3400, %v3364
      %3599 = vst.msk [vmem:[%s289 + $0x1b] sm:$0xff] %vm3400, %v3365
      %3600 = vst.msk [vmem:[%s289 + $0x23] sm:$0xff] %vm3400, %v3366
      %3601 = vst.msk [vmem:[%s289 + $0x2b] sm:$0xff] %vm3400, %v3367
      %3602 = vst.msk [vmem:[%s289 + $0x33] sm:$0xff] %vm3400, %v3368
      %3603 = vst.msk [vmem:[%s289 + $0x3b] sm:$0xff] %vm3400, %v3369
      %3604 = vst.msk [vmem:[%s289 + $0x43] sm:$0xff] %vm3400, %v3370
      %3605 = vst.msk [vmem:[%s289 + $0x4b] sm:$0xff] %vm3400, %v3371
      %3606 = vst.msk [vmem:[%s289 + $0x53] sm:$0xff] %vm3400, %v3372
      %3607 = vst.msk [vmem:[%s289 + $0x5b] sm:$0xff] %vm3400, %v3373
      %3608 = vst.msk [vmem:[%s289 + $0x63] sm:$0xff] %vm3400, %v3374
      %3609 = vst.msk [vmem:[%s289 + $0x6b] sm:$0xff] %vm3400, %v3375
      %3610 = vst.msk [vmem:[%s289 + $0x73] sm:$0xff] %vm3400, %v3376
      %3611 = vst.msk [vmem:[%s289 + $0x7b] sm:$0xff] %vm3400, %v3377
      %3612 = vst.msk [vmem:[%s289 + $0x83] sm:$0xff] %vm3400, %v3378
      %3613 = vst.msk [vmem:[%s289 + $0x8b] sm:$0xff] %vm3400, %v3379
      %3614 = vst.msk [vmem:[%s289 + $0x93] sm:$0xff] %vm3400, %v3380
      %3615 = vst.msk [vmem:[%s289 + $0x9b] sm:$0xff] %vm3400, %v3381
      %3616 = vst.msk [vmem:[%s289 + $0xa3] sm:$0xff] %vm3400, %v3382
      %3617 = vst.msk [vmem:[%s289 + $0xab] sm:$0xff] %vm3400, %v3383
      %3618 = vst.msk [vmem:[%s289 + $0xb3] sm:$0xff] %vm3400, %v3384
      %3619 = vst.msk [vmem:[%s289 + $0xbb] sm:$0xff] %vm3400, %v3385
      %3620 = vst.msk [vmem:[%s289 + $0xc3] sm:$0xff] %vm3400, %v3386
      %3621 = vst.msk [vmem:[%s289 + $0xcb] sm:$0xff] %vm3400, %v3387
      %3622 = vst.msk [vmem:[%s289 + $0xd3] sm:$0xff] %vm3400, %v3388
      %3623 = vst.msk [vmem:[%s289 + $0xdb] sm:$0xff] %vm3400, %v3389
      %3624 = vst.msk [vmem:[%s289 + $0xe3] sm:$0xff] %vm3400, %v3390
      %3625 = vst.msk [vmem:[%s289 + $0xeb] sm:$0xff] %vm3400, %v3391
      %3626 = vst.msk [vmem:[%s289 + $0xf3] sm:$0xff] %vm3400, %v3392
      %3627 = vst.msk [vmem:[%s289 + $0xfb] sm:$0xff] %vm3400, %v3393
      %3628 = vst.msk [vmem:[%s289 + $0x103] sm:$0xff] %vm3400, %v3394
      %3629 = vst.msk [vmem:[%s289 + $0x10b] sm:$0xff] %vm3400, %v3395
      %3630 = vst.msk [vmem:[%s289 + $0x113] sm:$0xff] %vm3400, %v3396
      %3631 = vst.msk [vmem:[%s289 + $0x11b] sm:$0xff] %vm3400, %v3397
      %3632 = vst.msk [vmem:[%s289 + $0x123] sm:$0xff] %vm3400, %v3398
      %3633 = vst.msk [vmem:[%s289 + $0x12b] sm:$0xff] %vm3400, %v3399
      %3634 = vst.msk [vmem:[%s289 + $0x133] sm:$0xff] %vm3400, 0.0
      %3635 = vst.msk [vmem:[%s289 + $0x13b] sm:$0xff] %vm3400, 0.0
      %3636 = vst.msk [vmem:[%s289 + $0x143] sm:$0xff] %vm3400, 0.0
      %3637 = vst.msk [vmem:[%s289 + $0x14b] sm:$0xff] %vm3400, 0.0
      %3638 = vst.msk [vmem:[%s289 + $0x153] sm:$0x7] %vm3596, 0.0
      %p3639 = scmp.lt.s32.totalorder %s19, 1
      %s3640 = scalar_select %p3639, %s19, 1
      %s3641 = smul.addr %s3640, 43
      %s3642 = smul.addr %s3641, 8
      %s3643 = scalar_lea.vmem %s5, %s3642
      %p3644 = scmp.lt.s32.totalorder %s19, 1
      %s3645 = scalar_select %p3644, %s19, 1
      %s3646 = scalar_lea.vmem %s6, %s3645
      %p3647 = scmp.lt.s32.totalorder %s19, 1
      %s3648 = scalar_select %p3647, %s19, 1
      %s3649 = scalar_lea.vmem %s7, %s3648
      // Predicated region
      $region41: #{inconv_forward.3} parent=39 // pred_check
        %p3650 = pneg %p147
      $region42: #{inconv_forward.3} parent=39 // pred_check_branch
        %3652 = sbr.rel (%p3650) target = $region44
      $region43: #{inconv_forward.3} parent=39 // pred_region
        _
      $region44: #{inconv_forward.3} parent=39 // pred_fallthru
        _
      // Predicated region
      $region45: #{inconv_forward.3} parent=39 // pred_check
        %p3653 = pneg %p173
      $region46: #{inconv_forward.3} parent=39 // pred_check_branch
        %3655 = sbr.rel (%p3653) target = $region48
      $region47: #{inconv_forward.3} parent=39 // pred_region
        _
      $region48: #{inconv_forward.3} parent=39 // pred_fallthru
        _
      // Predicated region
      $region49: #{inconv_forward.3} parent=39 // pred_check
        %p3656 = pneg %p199
      $region50: #{inconv_forward.3} parent=39 // pred_check_branch
        %3658 = sbr.rel (%p3656) target = $region52
      $region51: #{inconv_forward.3} parent=39 // pred_region
        _
      $region52: #{inconv_forward.3} parent=39 // pred_fallthru
        _
    $region40: #{inconv_forward.3} parent=5 // pred_fallthru
      _
    %p3659 = scmp.le.s32.totalorder 2, %s14
    // Predicated region
    $region53: #{inconv_forward.3} parent=5 // pred_check
      %p3660 = pneg %p3659
    $region54: #{inconv_forward.3} parent=5 // pred_check_branch
      %3662 = sbr.rel (%p3660) target = $region56
    $region55: #{inconv_forward.3} parent=5 // pred_region
      %s3663 = ssub.s32 %s14, 2
      // Predicated region
      $region57: #{inconv_forward.3} parent=55 // pred_check
        %p3664 = pneg %p153
      $region58: #{inconv_forward.3} parent=55 // pred_check_branch
        %3666 = sbr.rel (%p3664) target = $region60
      $region59: #{inconv_forward.3} parent=55 // pred_region
        %p3667 = scmp.lt.s32.totalorder %s20, 1
        %s3668 = scalar_select %p3667, %s20, 1
        %s3669 = smul.addr %s3668, 43
        %s3670 = smul.addr %s3669, 8
        %s3671 = scalar_lea.vmem %s5, %s3670
      $region60: #{inconv_forward.3} parent=55 // pred_fallthru
        _
      // Predicated region
      $region61: #{inconv_forward.3} parent=55 // pred_check
        %p3672 = pneg %p179
      $region62: #{inconv_forward.3} parent=55 // pred_check_branch
        %3674 = sbr.rel (%p3672) target = $region64
      $region63: #{inconv_forward.3} parent=55 // pred_region
        %p3675 = scmp.lt.s32.totalorder %s20, 1
        %s3676 = scalar_select %p3675, %s20, 1
        %s3677 = scalar_lea.vmem %s6, %s3676
      $region64: #{inconv_forward.3} parent=55 // pred_fallthru
        _
      // Predicated region
      $region65: #{inconv_forward.3} parent=55 // pred_check
        %p3678 = pneg %p205
      $region66: #{inconv_forward.3} parent=55 // pred_check_branch
        %3680 = sbr.rel (%p3678) target = $region68
      $region67: #{inconv_forward.3} parent=55 // pred_region
        %p3681 = scmp.lt.s32.totalorder %s20, 1
        %s3682 = scalar_select %p3681, %s20, 1
        %s3683 = scalar_lea.vmem %s7, %s3682
      $region68: #{inconv_forward.3} parent=55 // pred_fallthru
        _
    $region56: #{inconv_forward.3} parent=5 // pred_fallthru
      _
  $region6: #{inconv_forward.3} parent=0 // loop_footer
    %s18 = sadd.s32 1, %s14
  $region7: #{inconv_forward.3} parent=0 // loop_footer_branch
    %13 = sbr.rel target = $region3
  $region8: #{inconv_forward.3} parent=0 // loop_exit
    _

// kernel: inconv_forward.4
$region0: #{inconv_forward.4}
  #allocation0 [shape = 'u32[]', space=smem, size = 0x4, offset = 0x4, fixed_abs, tag = 'smem constant byte address 0x4 - core index']
  #allocation1 [shape = 'u32[144,128]{1,0:T(1,128)}', space=vmem, size = 0x12000, scoped, tag = 'internal scratch']
  %s0 = inlined_call_operand.vmem [shape: f32[2,342,32], index: 0, kind: input, shape index: {}]
  %s1 = inlined_call_operand.vmem [shape: bf16[9,32,32], index: 1, kind: input, shape index: {}]
  %s2 = inlined_call_operand.vmem [shape: f32[1,32], index: 2, kind: input, shape index: {}]
  %s3 = inlined_call_operand.vmem [shape: f32[1,32], index: 3, kind: input, shape index: {}]
  %s4 = inlined_call_operand.vmem [shape: f32[1,342,1], index: 4, kind: input, shape index: {}]
  %s5 = inlined_call_operand.vmem [shape: f32[2,342,32], index: 5, kind: output, shape index: {0}]
  %s6 = inlined_call_operand.vmem [shape: f32[2,1,32], index: 6, kind: output, shape index: {1}]
  %s7 = inlined_call_operand.vmem [shape: f32[2,1,32], index: 7, kind: output, shape index: {2}]
  %8 = xla_tuple %s5, %s6, %s7
  %s9 = sld [smem:[#allocation0]]
  $region69: #{inconv_forward.4} parent=0
    _
  %s11 = ssub.s32 1, %s9
  %s12 = scalar_select 0, %s11, %s9
  loop: start=0, step=1, limit=4
  $region2: #{inconv_forward.4} parent=0 // loop_pre_header
    _
  $region3: #{inconv_forward.4} parent=0 // loop_header
    %s14 = sphi 0, %s18
    %p15 = scmp.ge.s32.totalorder %s14, 4
    %s24 = sphi 0, %s26
    %s27 = sphi 0, %s24
    %s28 = sphi 0, %s27
    %s44 = sphi 0, %s28
    %s48 = sphi 0, %s48
    %s50 = sphi 0, %s48
    %s51 = sphi 0, %s50
    %s65 = sphi 0, %s51
    %s69 = sphi 0, %s69
    %s71 = sphi 0, %s69
    %s72 = sphi 0, %s71
    %s86 = sphi 0, %s72
    %s90 = sphi 0, %s90
    %s92 = sphi 0, %s90
    %s93 = sphi 0, %s92
    %s107 = sphi 0, %s93
    %s111 = sphi 0, %s111
    %s113 = sphi 0, %s111
    %s114 = sphi 0, %s113
    %s128 = sphi 0, %s114
    %s134 = sphi 0, %s136
    %s137 = sphi 0, %s134
    %s138 = sphi 0, %s137
    %s154 = sphi 0, %s138
    %s160 = sphi 0, %s162
    %s163 = sphi 0, %s160
    %s164 = sphi 0, %s163
    %s180 = sphi 0, %s164
    %s186 = sphi 0, %s188
    %s189 = sphi 0, %s186
    %s190 = sphi 0, %s189
    %s206 = sphi 0, %s190
  $region4: #{inconv_forward.4} parent=0 // loop_header_branch
    %17 = sbr.rel (%p15) target = $region8
  $region5: #{inconv_forward.4} parent=0 // loop_body
    %s19 = ssub.s32 %s14, 1
    %s20 = ssub.s32 %s14, 2
    %s21 = sadd.s32 %s14, 1
    %s22 = ssub.s32 %s14, %s21
    %p23 = scmp.eq.s32.totalorder %s22, 0
    %s25 = sadd.s32 %s24, 1
    %s26 = scalar_select %p23, %s24, %s25
    %p29 = pneg %p23
    %p30 = scmp.eq.s32.totalorder %s14, 1
    %p31 = por %p29, %p30
    %p32 = scmp.ne.s32.totalorder %s24, %s27
    %p33 = scmp.eq.s32.totalorder %s14, 0
    %p34 = por %p32, %p33
    %p35 = scmp.ne.s32.totalorder %s24, %s27
    %p36 = scmp.eq.s32.totalorder %s19, 1
    %p37 = por %p35, %p36
    %p38 = scmp.ne.s32.totalorder %s27, %s28
    %p39 = scmp.eq.s32.totalorder %s19, 0
    %p40 = por %p38, %p39
    %p41 = scmp.ne.s32.totalorder %s27, %s28
    %p42 = scmp.eq.s32.totalorder %s20, 1
    %p43 = por %p41, %p42
    %p45 = scmp.ne.s32.totalorder %s28, %s44
    %p46 = scmp.eq.s32.totalorder %s20, 0
    %p47 = por %p45, %p46
    %s49 = sadd.s32 %s48, 1
    %p52 = scmp.eq.s32.totalorder %s14, 1
    %p53 = scmp.ne.s32.totalorder %s48, %s50
    %p54 = scmp.eq.s32.totalorder %s14, 0
    %p55 = por %p53, %p54
    %p56 = scmp.ne.s32.totalorder %s48, %s50
    %p57 = scmp.eq.s32.totalorder %s19, 1
    %p58 = por %p56, %p57
    %p59 = scmp.ne.s32.totalorder %s50, %s51
    %p60 = scmp.eq.s32.totalorder %s19, 0
    %p61 = por %p59, %p60
    %p62 = scmp.ne.s32.totalorder %s50, %s51
    %p63 = scmp.eq.s32.totalorder %s20, 1
    %p64 = por %p62, %p63
    %p66 = scmp.ne.s32.totalorder %s51, %s65
    %p67 = scmp.eq.s32.totalorder %s20, 0
    %p68 = por %p66, %p67
    %s70 = sadd.s32 %s69, 1
    %p73 = scmp.eq.s32.totalorder %s14, 1
    %p74 = scmp.ne.s32.totalorder %s69, %s71
    %p75 = scmp.eq.s32.totalorder %s14, 0
    %p76 = por %p74, %p75
    %p77 = scmp.ne.s32.totalorder %s69, %s71
    %p78 = scmp.eq.s32.totalorder %s19, 1
    %p79 = por %p77, %p78
    %p80 = scmp.ne.s32.totalorder %s71, %s72
    %p81 = scmp.eq.s32.totalorder %s19, 0
    %p82 = por %p80, %p81
    %p83 = scmp.ne.s32.totalorder %s71, %s72
    %p84 = scmp.eq.s32.totalorder %s20, 1
    %p85 = por %p83, %p84
    %p87 = scmp.ne.s32.totalorder %s72, %s86
    %p88 = scmp.eq.s32.totalorder %s20, 0
    %p89 = por %p87, %p88
    %s91 = sadd.s32 %s90, 1
    %p94 = scmp.eq.s32.totalorder %s14, 1
    %p95 = scmp.ne.s32.totalorder %s90, %s92
    %p96 = scmp.eq.s32.totalorder %s14, 0
    %p97 = por %p95, %p96
    %p98 = scmp.ne.s32.totalorder %s90, %s92
    %p99 = scmp.eq.s32.totalorder %s19, 1
    %p100 = por %p98, %p99
    %p101 = scmp.ne.s32.totalorder %s92, %s93
    %p102 = scmp.eq.s32.totalorder %s19, 0
    %p103 = por %p101, %p102
    %p104 = scmp.ne.s32.totalorder %s92, %s93
    %p105 = scmp.eq.s32.totalorder %s20, 1
    %p106 = por %p104, %p105
    %p108 = scmp.ne.s32.totalorder %s93, %s107
    %p109 = scmp.eq.s32.totalorder %s20, 0
    %p110 = por %p108, %p109
    %s112 = sadd.s32 %s111, 1
    %p115 = scmp.eq.s32.totalorder %s14, 1
    %p116 = scmp.ne.s32.totalorder %s111, %s113
    %p117 = scmp.eq.s32.totalorder %s14, 0
    %p118 = por %p116, %p117
    %p119 = scmp.ne.s32.totalorder %s111, %s113
    %p120 = scmp.eq.s32.totalorder %s19, 1
    %p121 = por %p119, %p120
    %p122 = scmp.ne.s32.totalorder %s113, %s114
    %p123 = scmp.eq.s32.totalorder %s19, 0
    %p124 = por %p122, %p123
    %p125 = scmp.ne.s32.totalorder %s113, %s114
    %p126 = scmp.eq.s32.totalorder %s20, 1
    %p127 = por %p125, %p126
    %p129 = scmp.ne.s32.totalorder %s114, %s128
    %p130 = scmp.eq.s32.totalorder %s20, 0
    %p131 = por %p129, %p130
    %s132 = ssub.s32 %s14, %s21
    %p133 = scmp.eq.s32.totalorder %s132, 0
    %s135 = sadd.s32 %s134, 1
    %s136 = scalar_select %p133, %s134, %s135
    %p139 = pneg %p133
    %p140 = scmp.eq.s32.totalorder %s14, 1
    %p141 = por %p139, %p140
    %p142 = scmp.ne.s32.totalorder %s134, %s137
    %p143 = scmp.eq.s32.totalorder %s14, 0
    %p144 = por %p142, %p143
    %p145 = scmp.ne.s32.totalorder %s134, %s137
    %p146 = scmp.eq.s32.totalorder %s19, 1
    %p147 = por %p145, %p146
    %p148 = scmp.ne.s32.totalorder %s137, %s138
    %p149 = scmp.eq.s32.totalorder %s19, 0
    %p150 = por %p148, %p149
    %p151 = scmp.ne.s32.totalorder %s137, %s138
    %p152 = scmp.eq.s32.totalorder %s20, 1
    %p153 = por %p151, %p152
    %p155 = scmp.ne.s32.totalorder %s138, %s154
    %p156 = scmp.eq.s32.totalorder %s20, 0
    %p157 = por %p155, %p156
    %s158 = ssub.s32 %s14, %s21
    %p159 = scmp.eq.s32.totalorder %s158, 0
    %s161 = sadd.s32 %s160, 1
    %s162 = scalar_select %p159, %s160, %s161
    %p165 = pneg %p159
    %p166 = scmp.eq.s32.totalorder %s14, 1
    %p167 = por %p165, %p166
    %p168 = scmp.ne.s32.totalorder %s160, %s163
    %p169 = scmp.eq.s32.totalorder %s14, 0
    %p170 = por %p168, %p169
    %p171 = scmp.ne.s32.totalorder %s160, %s163
    %p172 = scmp.eq.s32.totalorder %s19, 1
    %p173 = por %p171, %p172
    %p174 = scmp.ne.s32.totalorder %s163, %s164
    %p175 = scmp.eq.s32.totalorder %s19, 0
    %p176 = por %p174, %p175
    %p177 = scmp.ne.s32.totalorder %s163, %s164
    %p178 = scmp.eq.s32.totalorder %s20, 1
    %p179 = por %p177, %p178
    %p181 = scmp.ne.s32.totalorder %s164, %s180
    %p182 = scmp.eq.s32.totalorder %s20, 0
    %p183 = por %p181, %p182
    %s184 = ssub.s32 %s14, %s21
    %p185 = scmp.eq.s32.totalorder %s184, 0
    %s187 = sadd.s32 %s186, 1
    %s188 = scalar_select %p185, %s186, %s187
    %p191 = pneg %p185
    %p192 = scmp.eq.s32.totalorder %s14, 1
    %p193 = por %p191, %p192
    %p194 = scmp.ne.s32.totalorder %s186, %s189
    %p195 = scmp.eq.s32.totalorder %s14, 0
    %p196 = por %p194, %p195
    %p197 = scmp.ne.s32.totalorder %s186, %s189
    %p198 = scmp.eq.s32.totalorder %s19, 1
    %p199 = por %p197, %p198
    %p200 = scmp.ne.s32.totalorder %s189, %s190
    %p201 = scmp.eq.s32.totalorder %s19, 0
    %p202 = por %p200, %p201
    %p203 = scmp.ne.s32.totalorder %s189, %s190
    %p204 = scmp.eq.s32.totalorder %s20, 1
    %p205 = por %p203, %p204
    %p207 = scmp.ne.s32.totalorder %s190, %s206
    %p208 = scmp.eq.s32.totalorder %s20, 0
    %p209 = por %p207, %p208
    %p210 = scmp.le.s32.totalorder 1, %s14
    %p211 = scmp.lt.s32.totalorder %s14, 3
    %p212 = pnand %p210, %p211
    %p213 = pneg %p212
    // Predicated region
    $region9: #{inconv_forward.4} parent=5 // pred_check
      _
    $region10: #{inconv_forward.4} parent=5 // pred_check_branch
      %215 = sbr.rel (%p212) target = $region12
    $region11: #{inconv_forward.4} parent=5 // pred_region
      %s216 = ssub.s32 %s14, 1
      // Predicated region
      $region13: #{inconv_forward.4} parent=11 // pred_check
        %p217 = pneg %p61
      $region14: #{inconv_forward.4} parent=11 // pred_check_branch
        %219 = sbr.rel (%p217) target = $region16
      $region15: #{inconv_forward.4} parent=11 // pred_region
        _
      $region16: #{inconv_forward.4} parent=11 // pred_fallthru
        _
      // Predicated region
      $region17: #{inconv_forward.4} parent=11 // pred_check
        %p220 = pneg %p82
      $region18: #{inconv_forward.4} parent=11 // pred_check_branch
        %222 = sbr.rel (%p220) target = $region20
      $region19: #{inconv_forward.4} parent=11 // pred_region
        _
      $region20: #{inconv_forward.4} parent=11 // pred_fallthru
        _
      // Predicated region
      $region21: #{inconv_forward.4} parent=11 // pred_check
        %p223 = pneg %p103
      $region22: #{inconv_forward.4} parent=11 // pred_check_branch
        %225 = sbr.rel (%p223) target = $region24
      $region23: #{inconv_forward.4} parent=11 // pred_region
        _
      $region24: #{inconv_forward.4} parent=11 // pred_fallthru
        _
      // Predicated region
      $region25: #{inconv_forward.4} parent=11 // pred_check
        %p226 = pneg %p124
      $region26: #{inconv_forward.4} parent=11 // pred_check_branch
        %228 = sbr.rel (%p226) target = $region28
      $region27: #{inconv_forward.4} parent=11 // pred_region
        _
      $region28: #{inconv_forward.4} parent=11 // pred_fallthru
        _
    $region12: #{inconv_forward.4} parent=5 // pred_fallthru
      _
    %p229 = scmp.lt.s32.totalorder %s14, 2
    // Predicated region
    $region29: #{inconv_forward.4} parent=5 // pred_check
      %p230 = pneg %p229
    $region30: #{inconv_forward.4} parent=5 // pred_check_branch
      %232 = sbr.rel (%p230) target = $region32
    $region31: #{inconv_forward.4} parent=5 // pred_region
      // Predicated region
      $region33: #{inconv_forward.4} parent=31 // pred_check
        %p233 = pneg %p34
      $region34: #{inconv_forward.4} parent=31 // pred_check_branch
        %235 = sbr.rel (%p233) target = $region36
      $region35: #{inconv_forward.4} parent=31 // pred_region
        %p236 = scmp.lt.s32.totalorder %s14, 1
        %s237 = scalar_select %p236, %s14, 1
        %s238 = smul.addr %s237, 43
        %s239 = smul.addr %s238, 8
        %s240 = scalar_lea.vmem %s0, %s239
      $region36: #{inconv_forward.4} parent=31 // pred_fallthru
        _
    $region32: #{inconv_forward.4} parent=5 // pred_fallthru
      _
    %p241 = scmp.le.s32.totalorder 1, %s14
    %p242 = scmp.lt.s32.totalorder %s14, 3
    %p243 = pnand %p241, %p242
    %p244 = pneg %p243
    // Predicated region
    $region37: #{inconv_forward.4} parent=5 // pred_check
      _
    $region38: #{inconv_forward.4} parent=5 // pred_check_branch
      %246 = sbr.rel (%p243) target = $region40
    $region39: #{inconv_forward.4} parent=5 // pred_region
      %s247 = ssub.s32 %s14, 1
      %p248 = scmp.lt.s32.totalorder %s19, 1
      %s249 = scalar_select %p248, %s19, 1
      %s250 = smul.addr %s249, 43
      %s251 = smul.addr %s250, 8
      %s252 = scalar_lea.vmem %s0, %s251
      %p253 = pneg %p40
      %p254 = pneg %p37
      %p255 = pneg %p61
      %p256 = pneg %p58
      %p257 = pneg %p82
      %p258 = pneg %p79
      %p259 = pneg %p103
      %p260 = pneg %p100
      %p261 = pneg %p124
      %p262 = pneg %p121
      %p263 = pneg %p150
      %p264 = pneg %p147
      %p265 = scmp.lt.s32.totalorder %s19, 1
      %s266 = scalar_select %p265, %s19, 1
      %s267 = smul.addr %s266, 43
      %s268 = smul.addr %s267, 8
      %s269 = scalar_lea.vmem %s5, %s268
      %p270 = pneg %p176
      %p271 = pneg %p173
      %p272 = scmp.lt.s32.totalorder %s19, 1
      %s273 = scalar_select %p272, %s19, 1
      %s274 = scalar_lea.vmem %s6, %s273
      %p275 = pneg %p202
      %p276 = pneg %p199
      %p277 = scmp.lt.s32.totalorder %s19, 1
      %s278 = scalar_select %p277, %s19, 1
      %s279 = scalar_lea.vmem %s7, %s278
      %p280 = scmp.lt.s32.totalorder %s19, 1
      %s281 = scalar_select %p280, %s19, 1
      %s282 = smul.addr %s281, 43
      %s283 = smul.addr %s282, 8
      %s284 = scalar_lea.vmem %s0, %s283
      %p285 = scmp.lt.s32.totalorder %s19, 1
      %s286 = scalar_select %p285, %s19, 1
      %s287 = smul.addr %s286, 43
      %s288 = smul.addr %s287, 8
      %s289 = scalar_lea.vmem %s5, %s288
      %p290 = scmp.lt.s32.totalorder %s19, 1
      %s291 = scalar_select %p290, %s19, 1
      %s292 = scalar_lea.vmem %s6, %s291
      %p293 = scmp.lt.s32.totalorder %s19, 1
      %s294 = scalar_select %p293, %s19, 1
      %s295 = scalar_lea.vmem %s7, %s294
      %v297 = vld [vmem:[%s284] sm:$0xff]
      %v298 = vld [vmem:[%s284 + $0x8] sm:$0xff]
      %v299 = vld [vmem:[%s284 + $0x10] sm:$0xff]
      %v300 = vld [vmem:[%s284 + $0x18] sm:$0xff]
      %v301 = vld [vmem:[%s284 + $0x20] sm:$0xff]
      %v302 = vld [vmem:[%s284 + $0x28] sm:$0xff]
      %v303 = vld [vmem:[%s284 + $0x30] sm:$0xff]
      %v304 = vld [vmem:[%s284 + $0x38] sm:$0xff]
      %v305 = vld [vmem:[%s284 + $0x40] sm:$0xff]
      %v306 = vld [vmem:[%s284 + $0x48] sm:$0xff]
      %v307 = vld [vmem:[%s284 + $0x50] sm:$0xff]
      %v308 = vld [vmem:[%s284 + $0x58] sm:$0xff]
      %v309 = vld [vmem:[%s284 + $0x60] sm:$0xff]
      %v310 = vld [vmem:[%s284 + $0x68] sm:$0xff]
      %v311 = vld [vmem:[%s284 + $0x70] sm:$0xff]
      %v312 = vld [vmem:[%s284 + $0x78] sm:$0xff]
      %v313 = vld [vmem:[%s284 + $0x80] sm:$0xff]
      %v314 = vld [vmem:[%s284 + $0x88] sm:$0xff]
      %v315 = vld [vmem:[%s284 + $0x90] sm:$0xff]
      %v316 = vld [vmem:[%s284 + $0x98] sm:$0xff]
      %v317 = vld [vmem:[%s284 + $0xa0] sm:$0xff]
      %v318 = vld [vmem:[%s284 + $0xa8] sm:$0xff]
      %v319 = vld [vmem:[%s284 + $0xb0] sm:$0xff]
      %v320 = vld [vmem:[%s284 + $0xb8] sm:$0xff]
      %v321 = vld [vmem:[%s284 + $0xc0] sm:$0xff]
      %v322 = vld [vmem:[%s284 + $0xc8] sm:$0xff]
      %v323 = vld [vmem:[%s284 + $0xd0] sm:$0xff]
      %v324 = vld [vmem:[%s284 + $0xd8] sm:$0xff]
      %v325 = vld [vmem:[%s284 + $0xe0] sm:$0xff]
      %v326 = vld [vmem:[%s284 + $0xe8] sm:$0xff]
      %v327 = vld [vmem:[%s284 + $0xf0] sm:$0xff]
      %v328 = vld [vmem:[%s284 + $0xf8] sm:$0xff]
      %v329 = vld [vmem:[%s284 + $0x100] sm:$0xff]
      %v330 = vld [vmem:[%s284 + $0x108] sm:$0xff]
      %v331 = vld [vmem:[%s284 + $0x110] sm:$0xff]
      %v332 = vld [vmem:[%s284 + $0x118] sm:$0xff]
      %v333 = vld [vmem:[%s284 + $0x120] sm:$0xff]
      %v334 = vld [vmem:[%s284 + $0x128] sm:$0xff]
      %v335 = vld [vmem:[%s284 + $0x130] sm:$0xff]
      %v336 = vld [vmem:[%s284 + $0x138] sm:$0xff]
      %v337 = vld [vmem:[%s284 + $0x140] sm:$0xff]
      %v338 = vld [vmem:[%s284 + $0x148] sm:$0xff]
      %v339 = vld [vmem:[%s4] sm:$0xff]
      %v340 = vld [vmem:[%s4 + $0x8] sm:$0xff]
      %v341 = vld [vmem:[%s4 + $0x10] sm:$0xff]
      %v342 = vld [vmem:[%s4 + $0x18] sm:$0xff]
      %v343 = vld [vmem:[%s4 + $0x20] sm:$0xff]
      %v344 = vld [vmem:[%s4 + $0x28] sm:$0xff]
      %v345 = vld [vmem:[%s4 + $0x30] sm:$0xff]
      %v346 = vld [vmem:[%s4 + $0x38] sm:$0xff]
      %v347 = vld [vmem:[%s4 + $0x40] sm:$0xff]
      %v348 = vld [vmem:[%s4 + $0x48] sm:$0xff]
      %v349 = vld [vmem:[%s4 + $0x50] sm:$0xff]
      %v350 = vld [vmem:[%s4 + $0x58] sm:$0xff]
      %v351 = vld [vmem:[%s4 + $0x60] sm:$0xff]
      %v352 = vld [vmem:[%s4 + $0x68] sm:$0xff]
      %v353 = vld [vmem:[%s4 + $0x70] sm:$0xff]
      %v354 = vld [vmem:[%s4 + $0x78] sm:$0xff]
      %v355 = vld [vmem:[%s4 + $0x80] sm:$0xff]
      %v356 = vld [vmem:[%s4 + $0x88] sm:$0xff]
      %v357 = vld [vmem:[%s4 + $0x90] sm:$0xff]
      %v358 = vld [vmem:[%s4 + $0x98] sm:$0xff]
      %v359 = vld [vmem:[%s4 + $0xa0] sm:$0xff]
      %v360 = vld [vmem:[%s4 + $0xa8] sm:$0xff]
      %v361 = vld [vmem:[%s4 + $0xb0] sm:$0xff]
      %v362 = vld [vmem:[%s4 + $0xb8] sm:$0xff]
      %v363 = vld [vmem:[%s4 + $0xc0] sm:$0xff]
      %v364 = vld [vmem:[%s4 + $0xc8] sm:$0xff]
      %v365 = vld [vmem:[%s4 + $0xd0] sm:$0xff]
      %v366 = vld [vmem:[%s4 + $0xd8] sm:$0xff]
      %v367 = vld [vmem:[%s4 + $0xe0] sm:$0xff]
      %v368 = vld [vmem:[%s4 + $0xe8] sm:$0xff]
      %v369 = vld [vmem:[%s4 + $0xf0] sm:$0xff]
      %v370 = vld [vmem:[%s4 + $0xf8] sm:$0xff]
      %v371 = vld [vmem:[%s4 + $0x100] sm:$0xff]
      %v372 = vld [vmem:[%s4 + $0x108] sm:$0xff]
      %v373 = vld [vmem:[%s4 + $0x110] sm:$0xff]
      %v374 = vld [vmem:[%s4 + $0x118] sm:$0xff]
      %v375 = vld [vmem:[%s4 + $0x120] sm:$0xff]
      %v376 = vld [vmem:[%s4 + $0x128] sm:$0xff]
      %v377 = vld [vmem:[%s4 + $0x130] sm:$0xff]
      %v378 = vld [vmem:[%s4 + $0x138] sm:$0xff]
      %v379 = vld [vmem:[%s4 + $0x140] sm:$0xff]
      %v380 = vld [vmem:[%s4 + $0x148] sm:$0xff]
      %v381 = vld [vmem:[%s2] sm:$0x1]
      %v383 = vlaneseq
      %v384 = vshrl.u32 %v383, 7
      %v385 = vsub.s32 0, %v384
      %v386 = vrot.slane %v381, %v385
      %v388 = vmul.f32 %v297, %v386
      %v389 = vmul.f32 %v298, %v386
      %v390 = vmul.f32 %v299, %v386
      %v391 = vmul.f32 %v300, %v386
      %v392 = vmul.f32 %v301, %v386
      %v393 = vmul.f32 %v302, %v386
      %v394 = vmul.f32 %v303, %v386
      %v395 = vmul.f32 %v304, %v386
      %v396 = vmul.f32 %v305, %v386
      %v397 = vmul.f32 %v306, %v386
      %v398 = vmul.f32 %v307, %v386
      %v399 = vmul.f32 %v308, %v386
      %v400 = vmul.f32 %v309, %v386
      %v401 = vmul.f32 %v310, %v386
      %v402 = vmul.f32 %v311, %v386
      %v403 = vmul.f32 %v312, %v386
      %v404 = vmul.f32 %v313, %v386
      %v405 = vmul.f32 %v314, %v386
      %v406 = vmul.f32 %v315, %v386
      %v407 = vmul.f32 %v316, %v386
      %v408 = vmul.f32 %v317, %v386
      %v409 = vmul.f32 %v318, %v386
      %v410 = vmul.f32 %v319, %v386
      %v411 = vmul.f32 %v320, %v386
      %v412 = vmul.f32 %v321, %v386
      %v413 = vmul.f32 %v322, %v386
      %v414 = vmul.f32 %v323, %v386
      %v415 = vmul.f32 %v324, %v386
      %v416 = vmul.f32 %v325, %v386
      %v417 = vmul.f32 %v326, %v386
      %v418 = vmul.f32 %v327, %v386
      %v419 = vmul.f32 %v328, %v386
      %v420 = vmul.f32 %v329, %v386
      %v421 = vmul.f32 %v330, %v386
      %v422 = vmul.f32 %v331, %v386
      %v423 = vmul.f32 %v332, %v386
      %v424 = vmul.f32 %v333, %v386
      %v425 = vmul.f32 %v334, %v386
      %v426 = vmul.f32 %v335, %v386
      %v427 = vmul.f32 %v336, %v386
      %v428 = vmul.f32 %v337, %v386
      %v429 = vmul.f32 %v338, %v386
      %v430 = vld [vmem:[%s3] sm:$0x1]
      %v432 = vlaneseq
      %v433 = vshrl.u32 %v432, 7
      %v434 = vsub.s32 0, %v433
      %v435 = vrot.slane %v430, %v434
      %v437 = vadd.f32 %v388, %v435
      %v438 = vadd.f32 %v389, %v435
      %v439 = vadd.f32 %v390, %v435
      %v440 = vadd.f32 %v391, %v435
      %v441 = vadd.f32 %v392, %v435
      %v442 = vadd.f32 %v393, %v435
      %v443 = vadd.f32 %v394, %v435
      %v444 = vadd.f32 %v395, %v435
      %v445 = vadd.f32 %v396, %v435
      %v446 = vadd.f32 %v397, %v435
      %v447 = vadd.f32 %v398, %v435
      %v448 = vadd.f32 %v399, %v435
      %v449 = vadd.f32 %v400, %v435
      %v450 = vadd.f32 %v401, %v435
      %v451 = vadd.f32 %v402, %v435
      %v452 = vadd.f32 %v403, %v435
      %v453 = vadd.f32 %v404, %v435
      %v454 = vadd.f32 %v405, %v435
      %v455 = vadd.f32 %v406, %v435
      %v456 = vadd.f32 %v407, %v435
      %v457 = vadd.f32 %v408, %v435
      %v458 = vadd.f32 %v409, %v435
      %v459 = vadd.f32 %v410, %v435
      %v460 = vadd.f32 %v411, %v435
      %v461 = vadd.f32 %v412, %v435
      %v462 = vadd.f32 %v413, %v435
      %v463 = vadd.f32 %v414, %v435
      %v464 = vadd.f32 %v415, %v435
      %v465 = vadd.f32 %v416, %v435
      %v466 = vadd.f32 %v417, %v435
      %v467 = vadd.f32 %v418, %v435
      %v468 = vadd.f32 %v419, %v435
      %v469 = vadd.f32 %v420, %v435
      %v470 = vadd.f32 %v421, %v435
      %v471 = vadd.f32 %v422, %v435
      %v472 = vadd.f32 %v423, %v435
      %v473 = vadd.f32 %v424, %v435
      %v474 = vadd.f32 %v425, %v435
      %v475 = vadd.f32 %v426, %v435
      %v476 = vadd.f32 %v427, %v435
      %v477 = vadd.f32 %v428, %v435
      %v478 = vadd.f32 %v429, %v435
      %v479 = vmax.f32 %v437, 0.0
      %v480 = vmax.f32 %v438, 0.0
      %v481 = vmax.f32 %v439, 0.0
      %v482 = vmax.f32 %v440, 0.0
      %v483 = vmax.f32 %v441, 0.0
      %v484 = vmax.f32 %v442, 0.0
      %v485 = vmax.f32 %v443, 0.0
      %v486 = vmax.f32 %v444, 0.0
      %v487 = vmax.f32 %v445, 0.0
      %v488 = vmax.f32 %v446, 0.0
      %v489 = vmax.f32 %v447, 0.0
      %v490 = vmax.f32 %v448, 0.0
      %v491 = vmax.f32 %v449, 0.0
      %v492 = vmax.f32 %v450, 0.0
      %v493 = vmax.f32 %v451, 0.0
      %v494 = vmax.f32 %v452, 0.0
      %v495 = vmax.f32 %v453, 0.0
      %v496 = vmax.f32 %v454, 0.0
      %v497 = vmax.f32 %v455, 0.0
      %v498 = vmax.f32 %v456, 0.0
      %v499 = vmax.f32 %v457, 0.0
      %v500 = vmax.f32 %v458, 0.0
      %v501 = vmax.f32 %v459, 0.0
      %v502 = vmax.f32 %v460, 0.0
      %v503 = vmax.f32 %v461, 0.0
      %v504 = vmax.f32 %v462, 0.0
      %v505 = vmax.f32 %v463, 0.0
      %v506 = vmax.f32 %v464, 0.0
      %v507 = vmax.f32 %v465, 0.0
      %v508 = vmax.f32 %v466, 0.0
      %v509 = vmax.f32 %v467, 0.0
      %v510 = vmax.f32 %v468, 0.0
      %v511 = vmax.f32 %v469, 0.0
      %v512 = vmax.f32 %v470, 0.0
      %v513 = vmax.f32 %v471, 0.0
      %v514 = vmax.f32 %v472, 0.0
      %v515 = vmax.f32 %v473, 0.0
      %v516 = vmax.f32 %v474, 0.0
      %v517 = vmax.f32 %v475, 0.0
      %v518 = vmax.f32 %v476, 0.0
      %v519 = vmax.f32 %v477, 0.0
      %v520 = vmax.f32 %v478, 0.0
      %522 = vset.pattern.permute.xlu0 0
      %523 = vperm.xlu0 %522, %v339
      %v524 = vpop.permute.xlu0 %523
      %527 = vset.pattern.permute.xlu0 0
      %528 = vperm.xlu0 %527, %v340
      %v529 = vpop.permute.xlu0 %528
      %532 = vset.pattern.permute.xlu0 0
      %533 = vperm.xlu0 %532, %v341
      %v534 = vpop.permute.xlu0 %533
      %537 = vset.pattern.permute.xlu0 0
      %538 = vperm.xlu0 %537, %v342
      %v539 = vpop.permute.xlu0 %538
      %542 = vset.pattern.permute.xlu0 0
      %543 = vperm.xlu0 %542, %v343
      %v544 = vpop.permute.xlu0 %543
      %547 = vset.pattern.permute.xlu0 0
      %548 = vperm.xlu0 %547, %v344
      %v549 = vpop.permute.xlu0 %548
      %552 = vset.pattern.permute.xlu0 0
      %553 = vperm.xlu0 %552, %v345
      %v554 = vpop.permute.xlu0 %553
      %557 = vset.pattern.permute.xlu0 0
      %558 = vperm.xlu0 %557, %v346
      %v559 = vpop.permute.xlu0 %558
      %562 = vset.pattern.permute.xlu0 0
      %563 = vperm.xlu0 %562, %v347
      %v564 = vpop.permute.xlu0 %563
      %567 = vset.pattern.permute.xlu0 0
      %568 = vperm.xlu0 %567, %v348
      %v569 = vpop.permute.xlu0 %568
      %572 = vset.pattern.permute.xlu0 0
      %573 = vperm.xlu0 %572, %v349
      %v574 = vpop.permute.xlu0 %573
      %577 = vset.pattern.permute.xlu0 0
      %578 = vperm.xlu0 %577, %v350
      %v579 = vpop.permute.xlu0 %578
      %582 = vset.pattern.permute.xlu0 0
      %583 = vperm.xlu0 %582, %v351
      %v584 = vpop.permute.xlu0 %583
      %587 = vset.pattern.permute.xlu0 0
      %588 = vperm.xlu0 %587, %v352
      %v589 = vpop.permute.xlu0 %588
      %592 = vset.pattern.permute.xlu0 0
      %593 = vperm.xlu0 %592, %v353
      %v594 = vpop.permute.xlu0 %593
      %597 = vset.pattern.permute.xlu0 0
      %598 = vperm.xlu0 %597, %v354
      %v599 = vpop.permute.xlu0 %598
      %602 = vset.pattern.permute.xlu0 0
      %603 = vperm.xlu0 %602, %v355
      %v604 = vpop.permute.xlu0 %603
      %607 = vset.pattern.permute.xlu0 0
      %608 = vperm.xlu0 %607, %v356
      %v609 = vpop.permute.xlu0 %608
      %612 = vset.pattern.permute.xlu0 0
      %613 = vperm.xlu0 %612, %v357
      %v614 = vpop.permute.xlu0 %613
      %617 = vset.pattern.permute.xlu0 0
      %618 = vperm.xlu0 %617, %v358
      %v619 = vpop.permute.xlu0 %618
      %622 = vset.pattern.permute.xlu0 0
      %623 = vperm.xlu0 %622, %v359
      %v624 = vpop.permute.xlu0 %623
      %627 = vset.pattern.permute.xlu0 0
      %628 = vperm.xlu0 %627, %v360
      %v629 = vpop.permute.xlu0 %628
      %632 = vset.pattern.permute.xlu0 0
      %633 = vperm.xlu0 %632, %v361
      %v634 = vpop.permute.xlu0 %633
      %637 = vset.pattern.permute.xlu0 0
      %638 = vperm.xlu0 %637, %v362
      %v639 = vpop.permute.xlu0 %638
      %642 = vset.pattern.permute.xlu0 0
      %643 = vperm.xlu0 %642, %v363
      %v644 = vpop.permute.xlu0 %643
      %647 = vset.pattern.permute.xlu0 0
      %648 = vperm.xlu0 %647, %v364
      %v649 = vpop.permute.xlu0 %648
      %652 = vset.pattern.permute.xlu0 0
      %653 = vperm.xlu0 %652, %v365
      %v654 = vpop.permute.xlu0 %653
      %657 = vset.pattern.permute.xlu0 0
      %658 = vperm.xlu0 %657, %v366
      %v659 = vpop.permute.xlu0 %658
      %662 = vset.pattern.permute.xlu0 0
      %663 = vperm.xlu0 %662, %v367
      %v664 = vpop.permute.xlu0 %663
      %667 = vset.pattern.permute.xlu0 0
      %668 = vperm.xlu0 %667, %v368
      %v669 = vpop.permute.xlu0 %668
      %672 = vset.pattern.permute.xlu0 0
      %673 = vperm.xlu0 %672, %v369
      %v674 = vpop.permute.xlu0 %673
      %677 = vset.pattern.permute.xlu0 0
      %678 = vperm.xlu0 %677, %v370
      %v679 = vpop.permute.xlu0 %678
      %682 = vset.pattern.permute.xlu0 0
      %683 = vperm.xlu0 %682, %v371
      %v684 = vpop.permute.xlu0 %683
      %687 = vset.pattern.permute.xlu0 0
      %688 = vperm.xlu0 %687, %v372
      %v689 = vpop.permute.xlu0 %688
      %692 = vset.pattern.permute.xlu0 0
      %693 = vperm.xlu0 %692, %v373
      %v694 = vpop.permute.xlu0 %693
      %697 = vset.pattern.permute.xlu0 0
      %698 = vperm.xlu0 %697, %v374
      %v699 = vpop.permute.xlu0 %698
      %702 = vset.pattern.permute.xlu0 0
      %703 = vperm.xlu0 %702, %v375
      %v704 = vpop.permute.xlu0 %703
      %707 = vset.pattern.permute.xlu0 0
      %708 = vperm.xlu0 %707, %v376
      %v709 = vpop.permute.xlu0 %708
      %712 = vset.pattern.permute.xlu0 0
      %713 = vperm.xlu0 %712, %v377
      %v714 = vpop.permute.xlu0 %713
      %717 = vset.pattern.permute.xlu0 0
      %718 = vperm.xlu0 %717, %v378
      %v719 = vpop.permute.xlu0 %718
      %722 = vset.pattern.permute.xlu0 0
      %723 = vperm.xlu0 %722, %v379
      %v724 = vpop.permute.xlu0 %723
      %727 = vset.pattern.permute.xlu0 0
      %728 = vperm.xlu0 %727, %v380
      %v729 = vpop.permute.xlu0 %728
      %v731 = vmul.f32 %v479, %v524
      %v732 = vmul.f32 %v480, %v529
      %v733 = vmul.f32 %v481, %v534
      %v734 = vmul.f32 %v482, %v539
      %v735 = vmul.f32 %v483, %v544
      %v736 = vmul.f32 %v484, %v549
      %v737 = vmul.f32 %v485, %v554
      %v738 = vmul.f32 %v486, %v559
      %v739 = vmul.f32 %v487, %v564
      %v740 = vmul.f32 %v488, %v569
      %v741 = vmul.f32 %v489, %v574
      %v742 = vmul.f32 %v490, %v579
      %v743 = vmul.f32 %v491, %v584
      %v744 = vmul.f32 %v492, %v589
      %v745 = vmul.f32 %v493, %v594
      %v746 = vmul.f32 %v494, %v599
      %v747 = vmul.f32 %v495, %v604
      %v748 = vmul.f32 %v496, %v609
      %v749 = vmul.f32 %v497, %v614
      %v750 = vmul.f32 %v498, %v619
      %v751 = vmul.f32 %v499, %v624
      %v752 = vmul.f32 %v500, %v629
      %v753 = vmul.f32 %v501, %v634
      %v754 = vmul.f32 %v502, %v639
      %v755 = vmul.f32 %v503, %v644
      %v756 = vmul.f32 %v504, %v649
      %v757 = vmul.f32 %v505, %v654
      %v758 = vmul.f32 %v506, %v659
      %v759 = vmul.f32 %v507, %v664
      %v760 = vmul.f32 %v508, %v669
      %v761 = vmul.f32 %v509, %v674
      %v762 = vmul.f32 %v510, %v679
      %v763 = vmul.f32 %v511, %v684
      %v764 = vmul.f32 %v512, %v689
      %v765 = vmul.f32 %v513, %v694
      %v766 = vmul.f32 %v514, %v699
      %v767 = vmul.f32 %v515, %v704
      %v768 = vmul.f32 %v516, %v709
      %v769 = vmul.f32 %v517, %v714
      %v770 = vmul.f32 %v518, %v719
      %v771 = vmul.f32 %v519, %v724
      %v772 = vmul.f32 %v520, %v729
      %v773 = vpack.c.bf16 %v732, %v731
      %v774 = vpack.c.bf16 %v734, %v733
      %v775 = vpack.c.bf16 %v736, %v735
      %v776 = vpack.c.bf16 %v738, %v737
      %v777 = vpack.c.bf16 %v740, %v739
      %v778 = vpack.c.bf16 %v742, %v741
      %v779 = vpack.c.bf16 %v744, %v743
      %v780 = vpack.c.bf16 %v746, %v745
      %v781 = vpack.c.bf16 %v748, %v747
      %v782 = vpack.c.bf16 %v750, %v749
      %v783 = vpack.c.bf16 %v752, %v751
      %v784 = vpack.c.bf16 %v754, %v753
      %v785 = vpack.c.bf16 %v756, %v755
      %v786 = vpack.c.bf16 %v758, %v757
      %v787 = vpack.c.bf16 %v760, %v759
      %v788 = vpack.c.bf16 %v762, %v761
      %v789 = vpack.c.bf16 %v764, %v763
      %v790 = vpack.c.bf16 %v766, %v765
      %v791 = vpack.c.bf16 %v768, %v767
      %v792 = vpack.c.bf16 %v770, %v769
      %v793 = vpack.c.bf16 %v772, %v771
      %v794 = vld [vmem:[%s1] sm:$0xf]
      %v795 = vld [vmem:[%s1 + $0x4] sm:$0xf]
      %v796 = vld [vmem:[%s1 + $0x8] sm:$0xf]
      %v797 = vld [vmem:[%s1 + $0xc] sm:$0xf]
      %s798 = scalar_lea.vmem %s1, 16
      %v799 = vld [vmem:[%s798] sm:$0xf]
      %v800 = vld [vmem:[%s798 + $0x4] sm:$0xf]
      %v801 = vld [vmem:[%s798 + $0x8] sm:$0xf]
      %v802 = vld [vmem:[%s798 + $0xc] sm:$0xf]
      %vm803 = vsmask.f32 7424
      %v805 = vshrl.u32 %v773, 16
      %v807 = vshll.u32 %v773, 16
      %v809 = vrot.slane %v807, 1
      %v810 = vor.u32 %v805, %v809
      %v812 = vshll.u32 %v774, 16
      %v814 = vrot.slane %v812, 1
      %v815 = vsel %vm803, %v810, %v814
      %v816 = vshrl.u32 %v774, 16
      %v818 = vor.u32 %v816, %v814
      %v820 = vshll.u32 %v775, 16
      %v822 = vrot.slane %v820, 1
      %v823 = vsel %vm803, %v818, %v822
      %v824 = vshrl.u32 %v775, 16
      %v826 = vor.u32 %v824, %v822
      %v828 = vshll.u32 %v776, 16
      %v830 = vrot.slane %v828, 1
      %v831 = vsel %vm803, %v826, %v830
      %v832 = vshrl.u32 %v776, 16
      %v834 = vor.u32 %v832, %v830
      %v836 = vshll.u32 %v777, 16
      %v838 = vrot.slane %v836, 1
      %v839 = vsel %vm803, %v834, %v838
      %v840 = vshrl.u32 %v777, 16
      %v842 = vor.u32 %v840, %v838
      %v844 = vshll.u32 %v778, 16
      %v846 = vrot.slane %v844, 1
      %v847 = vsel %vm803, %v842, %v846
      %v848 = vshrl.u32 %v778, 16
      %v850 = vor.u32 %v848, %v846
      %v852 = vshll.u32 %v779, 16
      %v854 = vrot.slane %v852, 1
      %v855 = vsel %vm803, %v850, %v854
      %v856 = vshrl.u32 %v779, 16
      %v858 = vor.u32 %v856, %v854
      %v860 = vshll.u32 %v780, 16
      %v862 = vrot.slane %v860, 1
      %v863 = vsel %vm803, %v858, %v862
      %v864 = vshrl.u32 %v780, 16
      %v866 = vor.u32 %v864, %v862
      %v868 = vshll.u32 %v781, 16
      %v870 = vrot.slane %v868, 1
      %v871 = vsel %vm803, %v866, %v870
      %v872 = vshrl.u32 %v781, 16
      %v874 = vor.u32 %v872, %v870
      %v876 = vshll.u32 %v782, 16
      %v878 = vrot.slane %v876, 1
      %v879 = vsel %vm803, %v874, %v878
      %v880 = vshrl.u32 %v782, 16
      %v882 = vor.u32 %v880, %v878
      %v884 = vshll.u32 %v783, 16
      %v886 = vrot.slane %v884, 1
      %v887 = vsel %vm803, %v882, %v886
      %v888 = vshrl.u32 %v783, 16
      %v890 = vor.u32 %v888, %v886
      %v892 = vshll.u32 %v784, 16
      %v894 = vrot.slane %v892, 1
      %v895 = vsel %vm803, %v890, %v894
      %v896 = vshrl.u32 %v784, 16
      %v898 = vor.u32 %v896, %v894
      %v900 = vshll.u32 %v785, 16
      %v902 = vrot.slane %v900, 1
      %v903 = vsel %vm803, %v898, %v902
      %v904 = vshrl.u32 %v785, 16
      %v906 = vor.u32 %v904, %v902
      %v908 = vshll.u32 %v786, 16
      %v910 = vrot.slane %v908, 1
      %v911 = vsel %vm803, %v906, %v910
      %v912 = vshrl.u32 %v786, 16
      %v914 = vor.u32 %v912, %v910
      %v916 = vshll.u32 %v787, 16
      %v918 = vrot.slane %v916, 1
      %v919 = vsel %vm803, %v914, %v918
      %v920 = vshrl.u32 %v787, 16
      %v922 = vor.u32 %v920, %v918
      %v924 = vshll.u32 %v788, 16
      %v926 = vrot.slane %v924, 1
      %v927 = vsel %vm803, %v922, %v926
      %v928 = vshrl.u32 %v788, 16
      %v930 = vor.u32 %v928, %v926
      %v932 = vshll.u32 %v789, 16
      %v934 = vrot.slane %v932, 1
      %v935 = vsel %vm803, %v930, %v934
      %v936 = vshrl.u32 %v789, 16
      %v938 = vor.u32 %v936, %v934
      %v940 = vshll.u32 %v790, 16
      %v942 = vrot.slane %v940, 1
      %v943 = vsel %vm803, %v938, %v942
      %v944 = vshrl.u32 %v790, 16
      %v946 = vor.u32 %v944, %v942
      %v948 = vshll.u32 %v791, 16
      %v950 = vrot.slane %v948, 1
      %v951 = vsel %vm803, %v946, %v950
      %v956 = vunpack.c.l.b16 %v799
      %v957 = vunpack.c.l.b16 %v800
      %v958 = vunpack.c.l.b16 %v801
      %v959 = vunpack.c.l.b16 %v802
      %v960 = vpack.c.b16 %v957, %v956
      %v961 = vpack.c.b16 %v959, %v958
      %vm964 = vcmask 261120
      %v966 = vsel %vm964, %v815, 0
      %v969 = vsel %vm964, %v823, 0
      %v972 = vsel %vm964, %v831, 0
      %v975 = vsel %vm964, %v839, 0
      %v978 = vsel %vm964, %v847, 0
      %v981 = vsel %vm964, %v855, 0
      %v984 = vsel %vm964, %v863, 0
      %v987 = vsel %vm964, %v871, 0
      %v990 = vsel %vm964, %v879, 0
      %v993 = vsel %vm964, %v887, 0
      %v996 = vsel %vm964, %v895, 0
      %v999 = vsel %vm964, %v903, 0
      %v1002 = vsel %vm964, %v911, 0
      %v1005 = vsel %vm964, %v919, 0
      %v1008 = vsel %vm964, %v927, 0
      %v1011 = vsel %vm964, %v935, 0
      %v1014 = vsel %vm964, %v943, 0
      %v1017 = vsel %vm964, %v951, 0
      %1019 = vmatprep.subr.bf16.mxu0 0
      %1020 = vmatpush1.bf16.msra.mxu0 %v960
      %1021 = vmatprep.subr.bf16.mxu0 0
      %1022 = vmatpush1.bf16.msra.mxu0 %v961
      %1023 = vmatprep.subr.bf16.mxu0 0
      %1024 = vmatpush1.bf16.msra.mxu0 0
      %1025 = vmatprep.subr.bf16.mxu0 0
      %1026 = vmatpush1.bf16.msra.mxu0 0
      %1027 = vmatprep.subr.bf16.mxu0 0
      %1028 = vmatpush1.bf16.msra.mxu0 0
      %1029 = vmatprep.subr.bf16.mxu0 0
      %1030 = vmatpush1.bf16.msra.mxu0 0
      %1031 = vmatprep.subr.bf16.mxu0 0
      %1032 = vmatpush1.bf16.msra.mxu0 0
      %1033 = vmatprep.subr.bf16.mxu0 0
      %1034 = vmatpush1.bf16.msra.mxu0 0
      %1035 = vmatprep.subr.bf16.mxu0 0
      %1036 = vmatpush1.bf16.msra.mxu0 0
      %1037 = vmatprep.subr.bf16.mxu0 0
      %1038 = vmatpush1.bf16.msra.mxu0 0
      %1039 = vmatprep.subr.bf16.mxu0 0
      %1040 = vmatpush1.bf16.msra.mxu0 0
      %1041 = vmatprep.subr.bf16.mxu0 0
      %1042 = vmatpush1.bf16.msra.mxu0 0
      %1043 = vmatprep.subr.bf16.mxu0 0
      %1044 = vmatpush1.bf16.msra.mxu0 0
      %1045 = vmatprep.subr.bf16.mxu0 0
      %1046 = vmatpush1.bf16.msra.mxu0 0
      %1047 = vmatprep.subr.bf16.mxu0 0
      %1048 = vmatpush1.bf16.msra.mxu0 0
      %1049 = vmatprep.subr.bf16.mxu0 0
      %1050 = vmatpush1.bf16.msra.mxu0 0
      %1051 = vmatprep.mubr.bf16.mxu0 0
      %1052 = vmatmul.mubr.bf16.gmra.mrb[0].mxu0 %v966
      %v1053 = vpop.f32.mrb[0].mxu0
      %v1054 = vadd.f32 0.0, %v1053
      %v1055 = vpop.f32.mrb[0].mxu0
      %v1056 = vpop.f32.mrb[0].mxu0
      %v1057 = vadd.f32 0.0, %v1056
      %v1058 = vpop.f32.mrb[0].mxu0
      %1059 = vmatprep.mubr.bf16.mxu0 0
      %1060 = vmatmul.mubr.bf16.gmra.mrb[0].mxu0 %v969
      %v1061 = vpop.f32.mrb[0].mxu0
      %v1062 = vadd.f32 0.0, %v1061
      %v1063 = vpop.f32.mrb[0].mxu0
      %v1064 = vpop.f32.mrb[0].mxu0
      %v1065 = vadd.f32 0.0, %v1064
      %v1066 = vpop.f32.mrb[0].mxu0
      %1067 = vmatprep.mubr.bf16.mxu0 0
      %1068 = vmatmul.mubr.bf16.gmra.mrb[0].mxu0 %v972
      %v1069 = vpop.f32.mrb[0].mxu0
      %v1070 = vadd.f32 0.0, %v1069
      %v1071 = vpop.f32.mrb[0].mxu0
      %v1072 = vpop.f32.mrb[0].mxu0
      %v1073 = vadd.f32 0.0, %v1072
      %v1074 = vpop.f32.mrb[0].mxu0
      %1075 = vmatprep.mubr.bf16.mxu0 0
      %1076 = vmatmul.mubr.bf16.gmra.mrb[0].mxu0 %v975
      %v1077 = vpop.f32.mrb[0].mxu0
      %v1078 = vadd.f32 0.0, %v1077
      %v1079 = vpop.f32.mrb[0].mxu0
      %v1080 = vpop.f32.mrb[0].mxu0
      %v1081 = vadd.f32 0.0, %v1080
      %v1082 = vpop.f32.mrb[0].mxu0
      %1083 = vmatprep.mubr.bf16.mxu0 0
      %1084 = vmatmul.mubr.bf16.gmra.mrb[0].mxu0 %v978
      %v1085 = vpop.f32.mrb[0].mxu0
      %v1086 = vadd.f32 0.0, %v1085
      %v1087 = vpop.f32.mrb[0].mxu0
      %v1088 = vpop.f32.mrb[0].mxu0
      %v1089 = vadd.f32 0.0, %v1088
      %v1090 = vpop.f32.mrb[0].mxu0
      %1091 = vmatprep.mubr.bf16.mxu0 0
      %1092 = vmatmul.mubr.bf16.gmra.mrb[0].mxu0 %v981
      %v1093 = vpop.f32.mrb[0].mxu0
      %v1094 = vadd.f32 0.0, %v1093
      %v1095 = vpop.f32.mrb[0].mxu0
      %v1096 = vpop.f32.mrb[0].mxu0
      %v1097 = vadd.f32 0.0, %v1096
      %v1098 = vpop.f32.mrb[0].mxu0
      %1099 = vmatprep.mubr.bf16.mxu0 0
      %1100 = vmatmul.mubr.bf16.gmra.mrb[0].mxu0 %v984
      %v1101 = vpop.f32.mrb[0].mxu0
      %v1102 = vadd.f32 0.0, %v1101
      %v1103 = vpop.f32.mrb[0].mxu0
      %v1104 = vpop.f32.mrb[0].mxu0
      %v1105 = vadd.f32 0.0, %v1104
      %v1106 = vpop.f32.mrb[0].mxu0
      %1107 = vmatprep.mubr.bf16.mxu0 0
      %1108 = vmatmul.mubr.bf16.gmra.mrb[0].mxu0 %v987
      %v1109 = vpop.f32.mrb[0].mxu0
      %v1110 = vadd.f32 0.0, %v1109
      %v1111 = vpop.f32.mrb[0].mxu0
      %v1112 = vpop.f32.mrb[0].mxu0
      %v1113 = vadd.f32 0.0, %v1112
      %v1114 = vpop.f32.mrb[0].mxu0
      %1115 = vmatprep.mubr.bf16.mxu0 0
      %1116 = vmatmul.mubr.bf16.gmra.mrb[0].mxu0 %v990
      %v1117 = vpop.f32.mrb[0].mxu0
      %v1118 = vadd.f32 0.0, %v1117
      %v1119 = vpop.f32.mrb[0].mxu0
      %v1120 = vpop.f32.mrb[0].mxu0
      %v1121 = vadd.f32 0.0, %v1120
      %v1122 = vpop.f32.mrb[0].mxu0
      %1123 = vmatprep.mubr.bf16.mxu0 0
      %1124 = vmatmul.mubr.bf16.gmra.mrb[0].mxu0 %v993
      %v1125 = vpop.f32.mrb[0].mxu0
      %v1126 = vadd.f32 0.0, %v1125
      %v1127 = vpop.f32.mrb[0].mxu0
      %v1128 = vpop.f32.mrb[0].mxu0
      %v1129 = vadd.f32 0.0, %v1128
      %v1130 = vpop.f32.mrb[0].mxu0
      %1131 = vmatprep.mubr.bf16.mxu0 0
      %1132 = vmatmul.mubr.bf16.gmra.mrb[0].mxu0 %v996
      %v1133 = vpop.f32.mrb[0].mxu0
      %v1134 = vadd.f32 0.0, %v1133
      %v1135 = vpop.f32.mrb[0].mxu0
      %v1136 = vpop.f32.mrb[0].mxu0
      %v1137 = vadd.f32 0.0, %v1136
      %v1138 = vpop.f32.mrb[0].mxu0
      %1139 = vmatprep.mubr.bf16.mxu0 0
      %1140 = vmatmul.mubr.bf16.gmra.mrb[0].mxu0 %v999
      %v1141 = vpop.f32.mrb[0].mxu0
      %v1142 = vadd.f32 0.0, %v1141
      %v1143 = vpop.f32.mrb[0].mxu0
      %v1144 = vpop.f32.mrb[0].mxu0
      %v1145 = vadd.f32 0.0, %v1144
      %v1146 = vpop.f32.mrb[0].mxu0
      %1147 = vmatprep.mubr.bf16.mxu0 0
      %1148 = vmatmul.mubr.bf16.gmra.mrb[0].mxu0 %v1002
      %v1149 = vpop.f32.mrb[0].mxu0
      %v1150 = vadd.f32 0.0, %v1149
      %v1151 = vpop.f32.mrb[0].mxu0
      %v1152 = vpop.f32.mrb[0].mxu0
      %v1153 = vadd.f32 0.0, %v1152
      %v1154 = vpop.f32.mrb[0].mxu0
      %1155 = vmatprep.mubr.bf16.mxu0 0
      %1156 = vmatmul.mubr.bf16.gmra.mrb[0].mxu0 %v1005
      %v1157 = vpop.f32.mrb[0].mxu0
      %v1158 = vadd.f32 0.0, %v1157
      %v1159 = vpop.f32.mrb[0].mxu0
      %v1160 = vpop.f32.mrb[0].mxu0
      %v1161 = vadd.f32 0.0, %v1160
      %v1162 = vpop.f32.mrb[0].mxu0
      %1163 = vmatprep.mubr.bf16.mxu0 0
      %1164 = vmatmul.mubr.bf16.gmra.mrb[0].mxu0 %v1008
      %v1165 = vpop.f32.mrb[0].mxu0
      %v1166 = vadd.f32 0.0, %v1165
      %v1167 = vpop.f32.mrb[0].mxu0
      %v1168 = vpop.f32.mrb[0].mxu0
      %v1169 = vadd.f32 0.0, %v1168
      %v1170 = vpop.f32.mrb[0].mxu0
      %1171 = vmatprep.mubr.bf16.mxu0 0
      %1172 = vmatmul.mubr.bf16.gmra.mrb[0].mxu0 %v1011
      %v1173 = vpop.f32.mrb[0].mxu0
      %v1174 = vadd.f32 0.0, %v1173
      %v1175 = vpop.f32.mrb[0].mxu0
      %v1176 = vpop.f32.mrb[0].mxu0
      %v1177 = vadd.f32 0.0, %v1176
      %v1178 = vpop.f32.mrb[0].mxu0
      %1179 = vmatprep.mubr.bf16.mxu0 0
      %1180 = vmatmul.mubr.bf16.gmra.mrb[0].mxu0 %v1014
      %v1181 = vpop.f32.mrb[0].mxu0
      %v1182 = vadd.f32 0.0, %v1181
      %v1183 = vpop.f32.mrb[0].mxu0
      %v1184 = vpop.f32.mrb[0].mxu0
      %v1185 = vadd.f32 0.0, %v1184
      %v1186 = vpop.f32.mrb[0].mxu0
      %1187 = vmatprep.mubr.bf16.mxu0 0
      %1188 = vmatmul.mubr.bf16.gmra.mrb[0].mxu0 %v1017
      %v1189 = vpop.f32.mrb[0].mxu0
      %v1190 = vadd.f32 0.0, %v1189
      %v1191 = vpop.f32.mrb[0].mxu0
      %v1192 = vpop.f32.mrb[0].mxu0
      %v1193 = vadd.f32 0.0, %v1192
      %v1194 = vpop.f32.mrb[0].mxu0
      %1195 = vdwg.mxu0
      %v1200 = vunpack.c.l.b16 %v794
      %v1201 = vunpack.c.l.b16 %v795
      %v1202 = vunpack.c.l.b16 %v796
      %v1203 = vunpack.c.l.b16 %v797
      %v1204 = vpack.c.b16 %v1201, %v1200
      %v1205 = vpack.c.b16 %v1203, %v1202
      %v1208 = vsel %vm964, %v773, 0
      %v1210 = vsel %vm964, %v774, 0
      %v1212 = vsel %vm964, %v775, 0
      %v1214 = vsel %vm964, %v776, 0
      %v1216 = vsel %vm964, %v777, 0
      %v1218 = vsel %vm964, %v778, 0
      %v1220 = vsel %vm964, %v779, 0
      %v1222 = vsel %vm964, %v780, 0
      %v1224 = vsel %vm964, %v781, 0
      %v1226 = vsel %vm964, %v782, 0
      %v1228 = vsel %vm964, %v783, 0
      %v1230 = vsel %vm964, %v784, 0
      %v1232 = vsel %vm964, %v785, 0
      %v1234 = vsel %vm964, %v786, 0
      %v1236 = vsel %vm964, %v787, 0
      %v1238 = vsel %vm964, %v788, 0
      %v1240 = vsel %vm964, %v789, 0
      %v1242 = vsel %vm964, %v790, 0
      %1244 = vmatprep.subr.bf16.mxu0 0
      %1245 = vmatpush1.bf16.msra.mxu0 %v1204
      %1246 = vmatprep.subr.bf16.mxu0 0
      %1247 = vmatpush1.bf16.msra.mxu0 %v1205
      %1248 = vmatprep.subr.bf16.mxu0 0
      %1249 = vmatpush1.bf16.msra.mxu0 0
      %1250 = vmatprep.subr.bf16.mxu0 0
      %1251 = vmatpush1.bf16.msra.mxu0 0
      %1252 = vmatprep.subr.bf16.mxu0 0
      %1253 = vmatpush1.bf16.msra.mxu0 0
      %1254 = vmatprep.subr.bf16.mxu0 0
      %1255 = vmatpush1.bf16.msra.mxu0 0
      %1256 = vmatprep.subr.bf16.mxu0 0
      %1257 = vmatpush1.bf16.msra.mxu0 0
      %1258 = vmatprep.subr.bf16.mxu0 0
      %1259 = vmatpush1.bf16.msra.mxu0 0
      %1260 = vmatprep.subr.bf16.mxu0 0
      %1261 = vmatpush1.bf16.msra.mxu0 0
      %1262 = vmatprep.subr.bf16.mxu0 0
      %1263 = vmatpush1.bf16.msra.mxu0 0
      %1264 = vmatprep.subr.bf16.mxu0 0
      %1265 = vmatpush1.bf16.msra.mxu0 0
      %1266 = vmatprep.subr.bf16.mxu0 0
      %1267 = vmatpush1.bf16.msra.mxu0 0
      %1268 = vmatprep.subr.bf16.mxu0 0
      %1269 = vmatpush1.bf16.msra.mxu0 0
      %1270 = vmatprep.subr.bf16.mxu0 0
      %1271 = vmatpush1.bf16.msra.mxu0 0
      %1272 = vmatprep.subr.bf16.mxu0 0
      %1273 = vmatpush1.bf16.msra.mxu0 0
      %1274 = vmatprep.subr.bf16.mxu0 0
      %1275 = vmatpush1.bf16.msra.mxu0 0
      %1276 = vmatprep.mubr.bf16.mxu0 0
      %1277 = vmatmul.mubr.bf16.gmra.mrb[0].mxu0 %v1208
      %v1278 = vpop.f32.mrb[0].mxu0
      %v1279 = vadd.f32 %v1054, %v1278
      %v1280 = vpop.f32.mrb[0].mxu0
      %v1281 = vpop.f32.mrb[0].mxu0
      %v1282 = vadd.f32 %v1057, %v1281
      %v1283 = vpop.f32.mrb[0].mxu0
      %1284 = vmatprep.mubr.bf16.mxu0 0
      %1285 = vmatmul.mubr.bf16.gmra.mrb[0].mxu0 %v1210
      %v1286 = vpop.f32.mrb[0].mxu0
      %v1287 = vadd.f32 %v1062, %v1286
      %v1288 = vpop.f32.mrb[0].mxu0
      %v1289 = vpop.f32.mrb[0].mxu0
      %v1290 = vadd.f32 %v1065, %v1289
      %v1291 = vpop.f32.mrb[0].mxu0
      %1292 = vmatprep.mubr.bf16.mxu0 0
      %1293 = vmatmul.mubr.bf16.gmra.mrb[0].mxu0 %v1212
      %v1294 = vpop.f32.mrb[0].mxu0
      %v1295 = vadd.f32 %v1070, %v1294
      %v1296 = vpop.f32.mrb[0].mxu0
      %v1297 = vpop.f32.mrb[0].mxu0
      %v1298 = vadd.f32 %v1073, %v1297
      %v1299 = vpop.f32.mrb[0].mxu0
      %1300 = vmatprep.mubr.bf16.mxu0 0
      %1301 = vmatmul.mubr.bf16.gmra.mrb[0].mxu0 %v1214
      %v1302 = vpop.f32.mrb[0].mxu0
      %v1303 = vadd.f32 %v1078, %v1302
      %v1304 = vpop.f32.mrb[0].mxu0
      %v1305 = vpop.f32.mrb[0].mxu0
      %v1306 = vadd.f32 %v1081, %v1305
      %v1307 = vpop.f32.mrb[0].mxu0
      %1308 = vmatprep.mubr.bf16.mxu0 0
      %1309 = vmatmul.mubr.bf16.gmra.mrb[0].mxu0 %v1216
      %v1310 = vpop.f32.mrb[0].mxu0
      %v1311 = vadd.f32 %v1086, %v1310
      %v1312 = vpop.f32.mrb[0].mxu0
      %v1313 = vpop.f32.mrb[0].mxu0
      %v1314 = vadd.f32 %v1089, %v1313
      %v1315 = vpop.f32.mrb[0].mxu0
      %1316 = vmatprep.mubr.bf16.mxu0 0
      %1317 = vmatmul.mubr.bf16.gmra.mrb[0].mxu0 %v1218
      %v1318 = vpop.f32.mrb[0].mxu0
      %v1319 = vadd.f32 %v1094, %v1318
      %v1320 = vpop.f32.mrb[0].mxu0
      %v1321 = vpop.f32.mrb[0].mxu0
      %v1322 = vadd.f32 %v1097, %v1321
      %v1323 = vpop.f32.mrb[0].mxu0
      %1324 = vmatprep.mubr.bf16.mxu0 0
      %1325 = vmatmul.mubr.bf16.gmra.mrb[0].mxu0 %v1220
      %v1326 = vpop.f32.mrb[0].mxu0
      %v1327 = vadd.f32 %v1102, %v1326
      %v1328 = vpop.f32.mrb[0].mxu0
      %v1329 = vpop.f32.mrb[0].mxu0
      %v1330 = vadd.f32 %v1105, %v1329
      %v1331 = vpop.f32.mrb[0].mxu0
      %1332 = vmatprep.mubr.bf16.mxu0 0
      %1333 = vmatmul.mubr.bf16.gmra.mrb[0].mxu0 %v1222
      %v1334 = vpop.f32.mrb[0].mxu0
      %v1335 = vadd.f32 %v1110, %v1334
      %v1336 = vpop.f32.mrb[0].mxu0
      %v1337 = vpop.f32.mrb[0].mxu0
      %v1338 = vadd.f32 %v1113, %v1337
      %v1339 = vpop.f32.mrb[0].mxu0
      %1340 = vmatprep.mubr.bf16.mxu0 0
      %1341 = vmatmul.mubr.bf16.gmra.mrb[0].mxu0 %v1224
      %v1342 = vpop.f32.mrb[0].mxu0
      %v1343 = vadd.f32 %v1118, %v1342
      %v1344 = vpop.f32.mrb[0].mxu0
      %v1345 = vpop.f32.mrb[0].mxu0
      %v1346 = vadd.f32 %v1121, %v1345
      %v1347 = vpop.f32.mrb[0].mxu0
      %1348 = vmatprep.mubr.bf16.mxu0 0
      %1349 = vmatmul.mubr.bf16.gmra.mrb[0].mxu0 %v1226
      %v1350 = vpop.f32.mrb[0].mxu0
      %v1351 = vadd.f32 %v1126, %v1350
      %v1352 = vpop.f32.mrb[0].mxu0
      %v1353 = vpop.f32.mrb[0].mxu0
      %v1354 = vadd.f32 %v1129, %v1353
      %v1355 = vpop.f32.mrb[0].mxu0
      %1356 = vmatprep.mubr.bf16.mxu0 0
      %1357 = vmatmul.mubr.bf16.gmra.mrb[0].mxu0 %v1228
      %v1358 = vpop.f32.mrb[0].mxu0
      %v1359 = vadd.f32 %v1134, %v1358
      %v1360 = vpop.f32.mrb[0].mxu0
      %v1361 = vpop.f32.mrb[0].mxu0
      %v1362 = vadd.f32 %v1137, %v1361
      %v1363 = vpop.f32.mrb[0].mxu0
      %1364 = vmatprep.mubr.bf16.mxu0 0
      %1365 = vmatmul.mubr.bf16.gmra.mrb[0].mxu0 %v1230
      %v1366 = vpop.f32.mrb[0].mxu0
      %v1367 = vadd.f32 %v1142, %v1366
      %v1368 = vpop.f32.mrb[0].mxu0
      %v1369 = vpop.f32.mrb[0].mxu0
      %v1370 = vadd.f32 %v1145, %v1369
      %v1371 = vpop.f32.mrb[0].mxu0
      %1372 = vmatprep.mubr.bf16.mxu0 0
      %1373 = vmatmul.mubr.bf16.gmra.mrb[0].mxu0 %v1232
      %v1374 = vpop.f32.mrb[0].mxu0
      %v1375 = vadd.f32 %v1150, %v1374
      %v1376 = vpop.f32.mrb[0].mxu0
      %v1377 = vpop.f32.mrb[0].mxu0
      %v1378 = vadd.f32 %v1153, %v1377
      %v1379 = vpop.f32.mrb[0].mxu0
      %1380 = vmatprep.mubr.bf16.mxu0 0
      %1381 = vmatmul.mubr.bf16.gmra.mrb[0].mxu0 %v1234
      %v1382 = vpop.f32.mrb[0].mxu0
      %v1383 = vadd.f32 %v1158, %v1382
      %v1384 = vpop.f32.mrb[0].mxu0
      %v1385 = vpop.f32.mrb[0].mxu0
      %v1386 = vadd.f32 %v1161, %v1385
      %v1387 = vpop.f32.mrb[0].mxu0
      %1388 = vmatprep.mubr.bf16.mxu0 0
      %1389 = vmatmul.mubr.bf16.gmra.mrb[0].mxu0 %v1236
      %v1390 = vpop.f32.mrb[0].mxu0
      %v1391 = vadd.f32 %v1166, %v1390
      %v1392 = vpop.f32.mrb[0].mxu0
      %v1393 = vpop.f32.mrb[0].mxu0
      %v1394 = vadd.f32 %v1169, %v1393
      %v1395 = vpop.f32.mrb[0].mxu0
      %1396 = vmatprep.mubr.bf16.mxu0 0
      %1397 = vmatmul.mubr.bf16.gmra.mrb[0].mxu0 %v1238
      %v1398 = vpop.f32.mrb[0].mxu0
      %v1399 = vadd.f32 %v1174, %v1398
      %v1400 = vpop.f32.mrb[0].mxu0
      %v1401 = vpop.f32.mrb[0].mxu0
      %v1402 = vadd.f32 %v1177, %v1401
      %v1403 = vpop.f32.mrb[0].mxu0
      %1404 = vmatprep.mubr.bf16.mxu0 0
      %1405 = vmatmul.mubr.bf16.gmra.mrb[0].mxu0 %v1240
      %v1406 = vpop.f32.mrb[0].mxu0
      %v1407 = vadd.f32 %v1182, %v1406
      %v1408 = vpop.f32.mrb[0].mxu0
      %v1409 = vpop.f32.mrb[0].mxu0
      %v1410 = vadd.f32 %v1185, %v1409
      %v1411 = vpop.f32.mrb[0].mxu0
      %1412 = vmatprep.mubr.bf16.mxu0 0
      %1413 = vmatmul.mubr.bf16.gmra.mrb[0].mxu0 %v1242
      %v1414 = vpop.f32.mrb[0].mxu0
      %v1415 = vadd.f32 %v1190, %v1414
      %v1416 = vpop.f32.mrb[0].mxu0
      %v1417 = vpop.f32.mrb[0].mxu0
      %v1418 = vadd.f32 %v1193, %v1417
      %v1419 = vpop.f32.mrb[0].mxu0
      %1420 = vdwg.mxu0
      %s1421 = scalar_lea.vmem %s1, 32
      %v1422 = vld [vmem:[%s1421] sm:$0xf]
      %v1423 = vld [vmem:[%s1421 + $0x4] sm:$0xf]
      %v1424 = vld [vmem:[%s1421 + $0x8] sm:$0xf]
      %v1425 = vld [vmem:[%s1421 + $0xc] sm:$0xf]
      %vm1445 = vcmask 1046528
      %v1446 = vrot.slane %v773, 1
      %v1447 = vrot.slane %v774, 1
      %v1448 = vsel %vm1445, %v1446, %v1447
      %v1449 = vrot.slane %v775, 1
      %v1450 = vsel %vm1445, %v1447, %v1449
      %v1451 = vrot.slane %v776, 1
      %v1452 = vsel %vm1445, %v1449, %v1451
      %v1453 = vrot.slane %v777, 1
      %v1454 = vsel %vm1445, %v1451, %v1453
      %v1455 = vrot.slane %v778, 1
      %v1456 = vsel %vm1445, %v1453, %v1455
      %v1457 = vrot.slane %v779, 1
      %v1458 = vsel %vm1445, %v1455, %v1457
      %v1459 = vrot.slane %v780, 1
      %v1460 = vsel %vm1445, %v1457, %v1459
      %v1461 = vrot.slane %v781, 1
      %v1462 = vsel %vm1445, %v1459, %v1461
      %v1463 = vrot.slane %v782, 1
      %v1464 = vsel %vm1445, %v1461, %v1463
      %v1465 = vrot.slane %v783, 1
      %v1466 = vsel %vm1445, %v1463, %v1465
      %v1467 = vrot.slane %v784, 1
      %v1468 = vsel %vm1445, %v1465, %v1467
      %v1469 = vrot.slane %v785, 1
      %v1470 = vsel %vm1445, %v1467, %v1469
      %v1471 = vrot.slane %v786, 1
      %v1472 = vsel %vm1445, %v1469, %v1471
      %v1473 = vrot.slane %v787, 1
      %v1474 = vsel %vm1445, %v1471, %v1473
      %v1475 = vrot.slane %v788, 1
      %v1476 = vsel %vm1445, %v1473, %v1475
      %v1477 = vrot.slane %v789, 1
      %v1478 = vsel %vm1445, %v1475, %v1477
      %v1479 = vrot.slane %v790, 1
      %v1480 = vsel %vm1445, %v1477, %v1479
      %v1481 = vrot.slane %v791, 1
      %v1482 = vsel %vm1445, %v1479, %v1481
      %v1487 = vunpack.c.l.b16 %v1422
      %v1488 = vunpack.c.l.b16 %v1423
      %v1489 = vunpack.c.l.b16 %v1424
      %v1490 = vunpack.c.l.b16 %v1425
      %v1491 = vpack.c.b16 %v1488, %v1487
      %v1492 = vpack.c.b16 %v1490, %v1489
      %v1496 = vsel %vm964, %v1448, 0
      %v1499 = vsel %vm964, %v1450, 0
      %v1502 = vsel %vm964, %v1452, 0
      %v1505 = vsel %vm964, %v1454, 0
      %v1508 = vsel %vm964, %v1456, 0
      %v1511 = vsel %vm964, %v1458, 0
      %v1514 = vsel %vm964, %v1460, 0
      %v1517 = vsel %vm964, %v1462, 0
      %v1520 = vsel %vm964, %v1464, 0
      %v1523 = vsel %vm964, %v1466, 0
      %v1526 = vsel %vm964, %v1468, 0
      %v1529 = vsel %vm964, %v1470, 0
      %v1532 = vsel %vm964, %v1472, 0
      %v1535 = vsel %vm964, %v1474, 0
      %v1538 = vsel %vm964, %v1476, 0
      %v1541 = vsel %vm964, %v1478, 0
      %v1544 = vsel %vm964, %v1480, 0
      %v1547 = vsel %vm964, %v1482, 0
      %1549 = vmatprep.subr.bf16.mxu0 0
      %1550 = vmatpush1.bf16.msra.mxu0 %v1491
      %1551 = vmatprep.subr.bf16.mxu0 0
      %1552 = vmatpush1.bf16.msra.mxu0 %v1492
      %1553 = vmatprep.subr.bf16.mxu0 0
      %1554 = vmatpush1.bf16.msra.mxu0 0
      %1555 = vmatprep.subr.bf16.mxu0 0
      %1556 = vmatpush1.bf16.msra.mxu0 0
      %1557 = vmatprep.subr.bf16.mxu0 0
      %1558 = vmatpush1.bf16.msra.mxu0 0
      %1559 = vmatprep.subr.bf16.mxu0 0
      %1560 = vmatpush1.bf16.msra.mxu0 0
      %1561 = vmatprep.subr.bf16.mxu0 0
      %1562 = vmatpush1.bf16.msra.mxu0 0
      %1563 = vmatprep.subr.bf16.mxu0 0
      %1564 = vmatpush1.bf16.msra.mxu0 0
      %1565 = vmatprep.subr.bf16.mxu0 0
      %1566 = vmatpush1.bf16.msra.mxu0 0
      %1567 = vmatprep.subr.bf16.mxu0 0
      %1568 = vmatpush1.bf16.msra.mxu0 0
      %1569 = vmatprep.subr.bf16.mxu0 0
      %1570 = vmatpush1.bf16.msra.mxu0 0
      %1571 = vmatprep.subr.bf16.mxu0 0
      %1572 = vmatpush1.bf16.msra.mxu0 0
      %1573 = vmatprep.subr.bf16.mxu0 0
      %1574 = vmatpush1.bf16.msra.mxu0 0
      %1575 = vmatprep.subr.bf16.mxu0 0
      %1576 = vmatpush1.bf16.msra.mxu0 0
      %1577 = vmatprep.subr.bf16.mxu0 0
      %1578 = vmatpush1.bf16.msra.mxu0 0
      %1579 = vmatprep.subr.bf16.mxu0 0
      %1580 = vmatpush1.bf16.msra.mxu0 0
      %1581 = vmatprep.mubr.bf16.mxu0 0
      %1582 = vmatmul.mubr.bf16.gmra.mrb[0].mxu0 %v1496
      %v1583 = vpop.f32.mrb[0].mxu0
      %v1584 = vadd.f32 0.0, %v1583
      %v1585 = vpop.f32.mrb[0].mxu0
      %v1586 = vpop.f32.mrb[0].mxu0
      %v1587 = vadd.f32 0.0, %v1586
      %v1588 = vpop.f32.mrb[0].mxu0
      %1589 = vmatprep.mubr.bf16.mxu0 0
      %1590 = vmatmul.mubr.bf16.gmra.mrb[0].mxu0 %v1499
      %v1591 = vpop.f32.mrb[0].mxu0
      %v1592 = vadd.f32 0.0, %v1591
      %v1593 = vpop.f32.mrb[0].mxu0
      %v1594 = vpop.f32.mrb[0].mxu0
      %v1595 = vadd.f32 0.0, %v1594
      %v1596 = vpop.f32.mrb[0].mxu0
      %1597 = vmatprep.mubr.bf16.mxu0 0
      %1598 = vmatmul.mubr.bf16.gmra.mrb[0].mxu0 %v1502
      %v1599 = vpop.f32.mrb[0].mxu0
      %v1600 = vadd.f32 0.0, %v1599
      %v1601 = vpop.f32.mrb[0].mxu0
      %v1602 = vpop.f32.mrb[0].mxu0
      %v1603 = vadd.f32 0.0, %v1602
      %v1604 = vpop.f32.mrb[0].mxu0
      %1605 = vmatprep.mubr.bf16.mxu0 0
      %1606 = vmatmul.mubr.bf16.gmra.mrb[0].mxu0 %v1505
      %v1607 = vpop.f32.mrb[0].mxu0
      %v1608 = vadd.f32 0.0, %v1607
      %v1609 = vpop.f32.mrb[0].mxu0
      %v1610 = vpop.f32.mrb[0].mxu0
      %v1611 = vadd.f32 0.0, %v1610
      %v1612 = vpop.f32.mrb[0].mxu0
      %1613 = vmatprep.mubr.bf16.mxu0 0
      %1614 = vmatmul.mubr.bf16.gmra.mrb[0].mxu0 %v1508
      %v1615 = vpop.f32.mrb[0].mxu0
      %v1616 = vadd.f32 0.0, %v1615
      %v1617 = vpop.f32.mrb[0].mxu0
      %v1618 = vpop.f32.mrb[0].mxu0
      %v1619 = vadd.f32 0.0, %v1618
      %v1620 = vpop.f32.mrb[0].mxu0
      %1621 = vmatprep.mubr.bf16.mxu0 0
      %1622 = vmatmul.mubr.bf16.gmra.mrb[0].mxu0 %v1511
      %v1623 = vpop.f32.mrb[0].mxu0
      %v1624 = vadd.f32 0.0, %v1623
      %v1625 = vpop.f32.mrb[0].mxu0
      %v1626 = vpop.f32.mrb[0].mxu0
      %v1627 = vadd.f32 0.0, %v1626
      %v1628 = vpop.f32.mrb[0].mxu0
      %1629 = vmatprep.mubr.bf16.mxu0 0
      %1630 = vmatmul.mubr.bf16.gmra.mrb[0].mxu0 %v1514
      %v1631 = vpop.f32.mrb[0].mxu0
      %v1632 = vadd.f32 0.0, %v1631
      %v1633 = vpop.f32.mrb[0].mxu0
      %v1634 = vpop.f32.mrb[0].mxu0
      %v1635 = vadd.f32 0.0, %v1634
      %v1636 = vpop.f32.mrb[0].mxu0
      %1637 = vmatprep.mubr.bf16.mxu0 0
      %1638 = vmatmul.mubr.bf16.gmra.mrb[0].mxu0 %v1517
      %v1639 = vpop.f32.mrb[0].mxu0
      %v1640 = vadd.f32 0.0, %v1639
      %v1641 = vpop.f32.mrb[0].mxu0
      %v1642 = vpop.f32.mrb[0].mxu0
      %v1643 = vadd.f32 0.0, %v1642
      %v1644 = vpop.f32.mrb[0].mxu0
      %1645 = vmatprep.mubr.bf16.mxu0 0
      %1646 = vmatmul.mubr.bf16.gmra.mrb[0].mxu0 %v1520
      %v1647 = vpop.f32.mrb[0].mxu0
      %v1648 = vadd.f32 0.0, %v1647
      %v1649 = vpop.f32.mrb[0].mxu0
      %v1650 = vpop.f32.mrb[0].mxu0
      %v1651 = vadd.f32 0.0, %v1650
      %v1652 = vpop.f32.mrb[0].mxu0
      %1653 = vmatprep.mubr.bf16.mxu0 0
      %1654 = vmatmul.mubr.bf16.gmra.mrb[0].mxu0 %v1523
      %v1655 = vpop.f32.mrb[0].mxu0
      %v1656 = vadd.f32 0.0, %v1655
      %v1657 = vpop.f32.mrb[0].mxu0
      %v1658 = vpop.f32.mrb[0].mxu0
      %v1659 = vadd.f32 0.0, %v1658
      %v1660 = vpop.f32.mrb[0].mxu0
      %1661 = vmatprep.mubr.bf16.mxu0 0
      %1662 = vmatmul.mubr.bf16.gmra.mrb[0].mxu0 %v1526
      %v1663 = vpop.f32.mrb[0].mxu0
      %v1664 = vadd.f32 0.0, %v1663
      %v1665 = vpop.f32.mrb[0].mxu0
      %v1666 = vpop.f32.mrb[0].mxu0
      %v1667 = vadd.f32 0.0, %v1666
      %v1668 = vpop.f32.mrb[0].mxu0
      %1669 = vmatprep.mubr.bf16.mxu0 0
      %1670 = vmatmul.mubr.bf16.gmra.mrb[0].mxu0 %v1529
      %v1671 = vpop.f32.mrb[0].mxu0
      %v1672 = vadd.f32 0.0, %v1671
      %v1673 = vpop.f32.mrb[0].mxu0
      %v1674 = vpop.f32.mrb[0].mxu0
      %v1675 = vadd.f32 0.0, %v1674
      %v1676 = vpop.f32.mrb[0].mxu0
      %1677 = vmatprep.mubr.bf16.mxu0 0
      %1678 = vmatmul.mubr.bf16.gmra.mrb[0].mxu0 %v1532
      %v1679 = vpop.f32.mrb[0].mxu0
      %v1680 = vadd.f32 0.0, %v1679
      %v1681 = vpop.f32.mrb[0].mxu0
      %v1682 = vpop.f32.mrb[0].mxu0
      %v1683 = vadd.f32 0.0, %v1682
      %v1684 = vpop.f32.mrb[0].mxu0
      %1685 = vmatprep.mubr.bf16.mxu0 0
      %1686 = vmatmul.mubr.bf16.gmra.mrb[0].mxu0 %v1535
      %v1687 = vpop.f32.mrb[0].mxu0
      %v1688 = vadd.f32 0.0, %v1687
      %v1689 = vpop.f32.mrb[0].mxu0
      %v1690 = vpop.f32.mrb[0].mxu0
      %v1691 = vadd.f32 0.0, %v1690
      %v1692 = vpop.f32.mrb[0].mxu0
      %1693 = vmatprep.mubr.bf16.mxu0 0
      %1694 = vmatmul.mubr.bf16.gmra.mrb[0].mxu0 %v1538
      %v1695 = vpop.f32.mrb[0].mxu0
      %v1696 = vadd.f32 0.0, %v1695
      %v1697 = vpop.f32.mrb[0].mxu0
      %v1698 = vpop.f32.mrb[0].mxu0
      %v1699 = vadd.f32 0.0, %v1698
      %v1700 = vpop.f32.mrb[0].mxu0
      %1701 = vmatprep.mubr.bf16.mxu0 0
      %1702 = vmatmul.mubr.bf16.gmra.mrb[0].mxu0 %v1541
      %v1703 = vpop.f32.mrb[0].mxu0
      %v1704 = vadd.f32 0.0, %v1703
      %v1705 = vpop.f32.mrb[0].mxu0
      %v1706 = vpop.f32.mrb[0].mxu0
      %v1707 = vadd.f32 0.0, %v1706
      %v1708 = vpop.f32.mrb[0].mxu0
      %1709 = vmatprep.mubr.bf16.mxu0 0
      %1710 = vmatmul.mubr.bf16.gmra.mrb[0].mxu0 %v1544
      %v1711 = vpop.f32.mrb[0].mxu0
      %v1712 = vadd.f32 0.0, %v1711
      %v1713 = vpop.f32.mrb[0].mxu0
      %v1714 = vpop.f32.mrb[0].mxu0
      %v1715 = vadd.f32 0.0, %v1714
      %v1716 = vpop.f32.mrb[0].mxu0
      %1717 = vmatprep.mubr.bf16.mxu0 0
      %1718 = vmatmul.mubr.bf16.gmra.mrb[0].mxu0 %v1547
      %v1719 = vpop.f32.mrb[0].mxu0
      %v1720 = vadd.f32 0.0, %v1719
      %v1721 = vpop.f32.mrb[0].mxu0
      %v1722 = vpop.f32.mrb[0].mxu0
      %v1723 = vadd.f32 0.0, %v1722
      %v1724 = vpop.f32.mrb[0].mxu0
      %1725 = vdwg.mxu0
      %v1726 = vadd.f32 %v1279, %v1584
      %v1727 = vadd.f32 %v1282, %v1587
      %v1728 = vadd.f32 %v1287, %v1592
      %v1729 = vadd.f32 %v1290, %v1595
      %v1730 = vadd.f32 %v1295, %v1600
      %v1731 = vadd.f32 %v1298, %v1603
      %v1732 = vadd.f32 %v1303, %v1608
      %v1733 = vadd.f32 %v1306, %v1611
      %v1734 = vadd.f32 %v1311, %v1616
      %v1735 = vadd.f32 %v1314, %v1619
      %v1736 = vadd.f32 %v1319, %v1624
      %v1737 = vadd.f32 %v1322, %v1627
      %v1738 = vadd.f32 %v1327, %v1632
      %v1739 = vadd.f32 %v1330, %v1635
      %v1740 = vadd.f32 %v1335, %v1640
      %v1741 = vadd.f32 %v1338, %v1643
      %v1742 = vadd.f32 %v1343, %v1648
      %v1743 = vadd.f32 %v1346, %v1651
      %v1744 = vadd.f32 %v1351, %v1656
      %v1745 = vadd.f32 %v1354, %v1659
      %v1746 = vadd.f32 %v1359, %v1664
      %v1747 = vadd.f32 %v1362, %v1667
      %v1748 = vadd.f32 %v1367, %v1672
      %v1749 = vadd.f32 %v1370, %v1675
      %v1750 = vadd.f32 %v1375, %v1680
      %v1751 = vadd.f32 %v1378, %v1683
      %v1752 = vadd.f32 %v1383, %v1688
      %v1753 = vadd.f32 %v1386, %v1691
      %v1754 = vadd.f32 %v1391, %v1696
      %v1755 = vadd.f32 %v1394, %v1699
      %v1756 = vadd.f32 %v1399, %v1704
      %v1757 = vadd.f32 %v1402, %v1707
      %v1758 = vadd.f32 %v1407, %v1712
      %v1759 = vadd.f32 %v1410, %v1715
      %v1760 = vadd.f32 %v1415, %v1720
      %v1761 = vadd.f32 %v1418, %v1723
      %s1762 = scalar_lea.vmem %s1, 48
      %v1763 = vld [vmem:[%s1762] sm:$0xf]
      %v1764 = vld [vmem:[%s1762 + $0x4] sm:$0xf]
      %v1765 = vld [vmem:[%s1762 + $0x8] sm:$0xf]
      %v1766 = vld [vmem:[%s1762 + $0xc] sm:$0xf]
      %v1768 = vrot.slane %v792, 1
      %v1769 = vsel %vm1445, %v1481, %v1768
      %v1774 = vunpack.c.l.b16 %v1763
      %v1775 = vunpack.c.l.b16 %v1764
      %v1776 = vunpack.c.l.b16 %v1765
      %v1777 = vunpack.c.l.b16 %v1766
      %v1778 = vpack.c.b16 %v1775, %v1774
      %v1779 = vpack.c.b16 %v1777, %v1776
      %v1783 = vsel %vm964, %v1769, 0
      %1785 = vmatprep.subr.bf16.mxu0 0
      %1786 = vmatpush1.bf16.msra.mxu0 %v1778
      %1787 = vmatprep.subr.bf16.mxu0 0
      %1788 = vmatpush1.bf16.msra.mxu0 %v1779
      %1789 = vmatprep.subr.bf16.mxu0 0
      %1790 = vmatpush1.bf16.msra.mxu0 0
      %1791 = vmatprep.subr.bf16.mxu0 0
      %1792 = vmatpush1.bf16.msra.mxu0 0
      %1793 = vmatprep.subr.bf16.mxu0 0
      %1794 = vmatpush1.bf16.msra.mxu0 0
      %1795 = vmatprep.subr.bf16.mxu0 0
      %1796 = vmatpush1.bf16.msra.mxu0 0
      %1797 = vmatprep.subr.bf16.mxu0 0
      %1798 = vmatpush1.bf16.msra.mxu0 0
      %1799 = vmatprep.subr.bf16.mxu0 0
      %1800 = vmatpush1.bf16.msra.mxu0 0
      %1801 = vmatprep.subr.bf16.mxu0 0
      %1802 = vmatpush1.bf16.msra.mxu0 0
      %1803 = vmatprep.subr.bf16.mxu0 0
      %1804 = vmatpush1.bf16.msra.mxu0 0
      %1805 = vmatprep.subr.bf16.mxu0 0
      %1806 = vmatpush1.bf16.msra.mxu0 0
      %1807 = vmatprep.subr.bf16.mxu0 0
      %1808 = vmatpush1.bf16.msra.mxu0 0
      %1809 = vmatprep.subr.bf16.mxu0 0
      %1810 = vmatpush1.bf16.msra.mxu0 0
      %1811 = vmatprep.subr.bf16.mxu0 0
      %1812 = vmatpush1.bf16.msra.mxu0 0
      %1813 = vmatprep.subr.bf16.mxu0 0
      %1814 = vmatpush1.bf16.msra.mxu0 0
      %1815 = vmatprep.subr.bf16.mxu0 0
      %1816 = vmatpush1.bf16.msra.mxu0 0
      %1817 = vmatprep.mubr.bf16.mxu0 0
      %1818 = vmatmul.mubr.bf16.gmra.mrb[0].mxu0 %v1499
      %v1819 = vpop.f32.mrb[0].mxu0
      %v1820 = vadd.f32 0.0, %v1819
      %v1821 = vpop.f32.mrb[0].mxu0
      %v1822 = vpop.f32.mrb[0].mxu0
      %v1823 = vadd.f32 0.0, %v1822
      %v1824 = vpop.f32.mrb[0].mxu0
      %1825 = vmatprep.mubr.bf16.mxu0 0
      %1826 = vmatmul.mubr.bf16.gmra.mrb[0].mxu0 %v1502
      %v1827 = vpop.f32.mrb[0].mxu0
      %v1828 = vadd.f32 0.0, %v1827
      %v1829 = vpop.f32.mrb[0].mxu0
      %v1830 = vpop.f32.mrb[0].mxu0
      %v1831 = vadd.f32 0.0, %v1830
      %v1832 = vpop.f32.mrb[0].mxu0
      %1833 = vmatprep.mubr.bf16.mxu0 0
      %1834 = vmatmul.mubr.bf16.gmra.mrb[0].mxu0 %v1505
      %v1835 = vpop.f32.mrb[0].mxu0
      %v1836 = vadd.f32 0.0, %v1835
      %v1837 = vpop.f32.mrb[0].mxu0
      %v1838 = vpop.f32.mrb[0].mxu0
      %v1839 = vadd.f32 0.0, %v1838
      %v1840 = vpop.f32.mrb[0].mxu0
      %1841 = vmatprep.mubr.bf16.mxu0 0
      %1842 = vmatmul.mubr.bf16.gmra.mrb[0].mxu0 %v1508
      %v1843 = vpop.f32.mrb[0].mxu0
      %v1844 = vadd.f32 0.0, %v1843
      %v1845 = vpop.f32.mrb[0].mxu0
      %v1846 = vpop.f32.mrb[0].mxu0
      %v1847 = vadd.f32 0.0, %v1846
      %v1848 = vpop.f32.mrb[0].mxu0
      %1849 = vmatprep.mubr.bf16.mxu0 0
      %1850 = vmatmul.mubr.bf16.gmra.mrb[0].mxu0 %v1511
      %v1851 = vpop.f32.mrb[0].mxu0
      %v1852 = vadd.f32 0.0, %v1851
      %v1853 = vpop.f32.mrb[0].mxu0
      %v1854 = vpop.f32.mrb[0].mxu0
      %v1855 = vadd.f32 0.0, %v1854
      %v1856 = vpop.f32.mrb[0].mxu0
      %1857 = vmatprep.mubr.bf16.mxu0 0
      %1858 = vmatmul.mubr.bf16.gmra.mrb[0].mxu0 %v1514
      %v1859 = vpop.f32.mrb[0].mxu0
      %v1860 = vadd.f32 0.0, %v1859
      %v1861 = vpop.f32.mrb[0].mxu0
      %v1862 = vpop.f32.mrb[0].mxu0
      %v1863 = vadd.f32 0.0, %v1862
      %v1864 = vpop.f32.mrb[0].mxu0
      %1865 = vmatprep.mubr.bf16.mxu0 0
      %1866 = vmatmul.mubr.bf16.gmra.mrb[0].mxu0 %v1517
      %v1867 = vpop.f32.mrb[0].mxu0
      %v1868 = vadd.f32 0.0, %v1867
      %v1869 = vpop.f32.mrb[0].mxu0
      %v1870 = vpop.f32.mrb[0].mxu0
      %v1871 = vadd.f32 0.0, %v1870
      %v1872 = vpop.f32.mrb[0].mxu0
      %1873 = vmatprep.mubr.bf16.mxu0 0
      %1874 = vmatmul.mubr.bf16.gmra.mrb[0].mxu0 %v1520
      %v1875 = vpop.f32.mrb[0].mxu0
      %v1876 = vadd.f32 0.0, %v1875
      %v1877 = vpop.f32.mrb[0].mxu0
      %v1878 = vpop.f32.mrb[0].mxu0
      %v1879 = vadd.f32 0.0, %v1878
      %v1880 = vpop.f32.mrb[0].mxu0
      %1881 = vmatprep.mubr.bf16.mxu0 0
      %1882 = vmatmul.mubr.bf16.gmra.mrb[0].mxu0 %v1523
      %v1883 = vpop.f32.mrb[0].mxu0
      %v1884 = vadd.f32 0.0, %v1883
      %v1885 = vpop.f32.mrb[0].mxu0
      %v1886 = vpop.f32.mrb[0].mxu0
      %v1887 = vadd.f32 0.0, %v1886
      %v1888 = vpop.f32.mrb[0].mxu0
      %1889 = vmatprep.mubr.bf16.mxu0 0
      %1890 = vmatmul.mubr.bf16.gmra.mrb[0].mxu0 %v1526
      %v1891 = vpop.f32.mrb[0].mxu0
      %v1892 = vadd.f32 0.0, %v1891
      %v1893 = vpop.f32.mrb[0].mxu0
      %v1894 = vpop.f32.mrb[0].mxu0
      %v1895 = vadd.f32 0.0, %v1894
      %v1896 = vpop.f32.mrb[0].mxu0
      %1897 = vmatprep.mubr.bf16.mxu0 0
      %1898 = vmatmul.mubr.bf16.gmra.mrb[0].mxu0 %v1529
      %v1899 = vpop.f32.mrb[0].mxu0
      %v1900 = vadd.f32 0.0, %v1899
      %v1901 = vpop.f32.mrb[0].mxu0
      %v1902 = vpop.f32.mrb[0].mxu0
      %v1903 = vadd.f32 0.0, %v1902
      %v1904 = vpop.f32.mrb[0].mxu0
      %1905 = vmatprep.mubr.bf16.mxu0 0
      %1906 = vmatmul.mubr.bf16.gmra.mrb[0].mxu0 %v1532
      %v1907 = vpop.f32.mrb[0].mxu0
      %v1908 = vadd.f32 0.0, %v1907
      %v1909 = vpop.f32.mrb[0].mxu0
      %v1910 = vpop.f32.mrb[0].mxu0
      %v1911 = vadd.f32 0.0, %v1910
      %v1912 = vpop.f32.mrb[0].mxu0
      %1913 = vmatprep.mubr.bf16.mxu0 0
      %1914 = vmatmul.mubr.bf16.gmra.mrb[0].mxu0 %v1535
      %v1915 = vpop.f32.mrb[0].mxu0
      %v1916 = vadd.f32 0.0, %v1915
      %v1917 = vpop.f32.mrb[0].mxu0
      %v1918 = vpop.f32.mrb[0].mxu0
      %v1919 = vadd.f32 0.0, %v1918
      %v1920 = vpop.f32.mrb[0].mxu0
      %1921 = vmatprep.mubr.bf16.mxu0 0
      %1922 = vmatmul.mubr.bf16.gmra.mrb[0].mxu0 %v1538
      %v1923 = vpop.f32.mrb[0].mxu0
      %v1924 = vadd.f32 0.0, %v1923
      %v1925 = vpop.f32.mrb[0].mxu0
      %v1926 = vpop.f32.mrb[0].mxu0
      %v1927 = vadd.f32 0.0, %v1926
      %v1928 = vpop.f32.mrb[0].mxu0
      %1929 = vmatprep.mubr.bf16.mxu0 0
      %1930 = vmatmul.mubr.bf16.gmra.mrb[0].mxu0 %v1541
      %v1931 = vpop.f32.mrb[0].mxu0
      %v1932 = vadd.f32 0.0, %v1931
      %v1933 = vpop.f32.mrb[0].mxu0
      %v1934 = vpop.f32.mrb[0].mxu0
      %v1935 = vadd.f32 0.0, %v1934
      %v1936 = vpop.f32.mrb[0].mxu0
      %1937 = vmatprep.mubr.bf16.mxu0 0
      %1938 = vmatmul.mubr.bf16.gmra.mrb[0].mxu0 %v1544
      %v1939 = vpop.f32.mrb[0].mxu0
      %v1940 = vadd.f32 0.0, %v1939
      %v1941 = vpop.f32.mrb[0].mxu0
      %v1942 = vpop.f32.mrb[0].mxu0
      %v1943 = vadd.f32 0.0, %v1942
      %v1944 = vpop.f32.mrb[0].mxu0
      %1945 = vmatprep.mubr.bf16.mxu0 0
      %1946 = vmatmul.mubr.bf16.gmra.mrb[0].mxu0 %v1547
      %v1947 = vpop.f32.mrb[0].mxu0
      %v1948 = vadd.f32 0.0, %v1947
      %v1949 = vpop.f32.mrb[0].mxu0
      %v1950 = vpop.f32.mrb[0].mxu0
      %v1951 = vadd.f32 0.0, %v1950
      %v1952 = vpop.f32.mrb[0].mxu0
      %1953 = vmatprep.mubr.bf16.mxu0 0
      %1954 = vmatmul.mubr.bf16.gmra.mrb[0].mxu0 %v1783
      %v1955 = vpop.f32.mrb[0].mxu0
      %v1956 = vadd.f32 0.0, %v1955
      %v1957 = vpop.f32.mrb[0].mxu0
      %v1958 = vpop.f32.mrb[0].mxu0
      %v1959 = vadd.f32 0.0, %v1958
      %v1960 = vpop.f32.mrb[0].mxu0
      %1961 = vdwg.mxu0
      %v1962 = vadd.f32 %v1726, %v1820
      %v1963 = vadd.f32 %v1727, %v1823
      %v1964 = vadd.f32 %v1728, %v1828
      %v1965 = vadd.f32 %v1729, %v1831
      %v1966 = vadd.f32 %v1730, %v1836
      %v1967 = vadd.f32 %v1731, %v1839
      %v1968 = vadd.f32 %v1732, %v1844
      %v1969 = vadd.f32 %v1733, %v1847
      %v1970 = vadd.f32 %v1734, %v1852
      %v1971 = vadd.f32 %v1735, %v1855
      %v1972 = vadd.f32 %v1736, %v1860
      %v1973 = vadd.f32 %v1737, %v1863
      %v1974 = vadd.f32 %v1738, %v1868
      %v1975 = vadd.f32 %v1739, %v1871
      %v1976 = vadd.f32 %v1740, %v1876
      %v1977 = vadd.f32 %v1741, %v1879
      %v1978 = vadd.f32 %v1742, %v1884
      %v1979 = vadd.f32 %v1743, %v1887
      %v1980 = vadd.f32 %v1744, %v1892
      %v1981 = vadd.f32 %v1745, %v1895
      %v1982 = vadd.f32 %v1746, %v1900
      %v1983 = vadd.f32 %v1747, %v1903
      %v1984 = vadd.f32 %v1748, %v1908
      %v1985 = vadd.f32 %v1749, %v1911
      %v1986 = vadd.f32 %v1750, %v1916
      %v1987 = vadd.f32 %v1751, %v1919
      %v1988 = vadd.f32 %v1752, %v1924
      %v1989 = vadd.f32 %v1753, %v1927
      %v1990 = vadd.f32 %v1754, %v1932
      %v1991 = vadd.f32 %v1755, %v1935
      %v1992 = vadd.f32 %v1756, %v1940
      %v1993 = vadd.f32 %v1757, %v1943
      %v1994 = vadd.f32 %v1758, %v1948
      %v1995 = vadd.f32 %v1759, %v1951
      %v1996 = vadd.f32 %v1760, %v1956
      %v1997 = vadd.f32 %v1761, %v1959
      %s1998 = scalar_lea.vmem %s1, 64
      %v1999 = vld [vmem:[%s1998] sm:$0xf]
      %v2000 = vld [vmem:[%s1998 + $0x4] sm:$0xf]
      %v2001 = vld [vmem:[%s1998 + $0x8] sm:$0xf]
      %v2002 = vld [vmem:[%s1998 + $0xc] sm:$0xf]
      %vm2003 = vsmask.f32 6400
      %v2004 = vrot.slane %v816, 1
      %v2005 = vrot.slane %v812, 2
      %v2006 = vor.u32 %v2004, %v2005
      %v2007 = vrot.slane %v824, 1
      %v2008 = vrot.slane %v820, 2
      %v2009 = vor.u32 %v2007, %v2008
      %v2010 = vsel %vm2003, %v2006, %v2009
      %v2011 = vrot.slane %v832, 1
      %v2012 = vrot.slane %v828, 2
      %v2013 = vor.u32 %v2011, %v2012
      %v2014 = vsel %vm2003, %v2009, %v2013
      %v2015 = vrot.slane %v840, 1
      %v2016 = vrot.slane %v836, 2
      %v2017 = vor.u32 %v2015, %v2016
      %v2018 = vsel %vm2003, %v2013, %v2017
      %v2019 = vrot.slane %v848, 1
      %v2020 = vrot.slane %v844, 2
      %v2021 = vor.u32 %v2019, %v2020
      %v2022 = vsel %vm2003, %v2017, %v2021
      %v2023 = vrot.slane %v856, 1
      %v2024 = vrot.slane %v852, 2
      %v2025 = vor.u32 %v2023, %v2024
      %v2026 = vsel %vm2003, %v2021, %v2025
      %v2027 = vrot.slane %v864, 1
      %v2028 = vrot.slane %v860, 2
      %v2029 = vor.u32 %v2027, %v2028
      %v2030 = vsel %vm2003, %v2025, %v2029
      %v2031 = vrot.slane %v872, 1
      %v2032 = vrot.slane %v868, 2
      %v2033 = vor.u32 %v2031, %v2032
      %v2034 = vsel %vm2003, %v2029, %v2033
      %v2035 = vrot.slane %v880, 1
      %v2036 = vrot.slane %v876, 2
      %v2037 = vor.u32 %v2035, %v2036
      %v2038 = vsel %vm2003, %v2033, %v2037
      %v2039 = vrot.slane %v888, 1
      %v2040 = vrot.slane %v884, 2
      %v2041 = vor.u32 %v2039, %v2040
      %v2042 = vsel %vm2003, %v2037, %v2041
      %v2043 = vrot.slane %v896, 1
      %v2044 = vrot.slane %v892, 2
      %v2045 = vor.u32 %v2043, %v2044
      %v2046 = vsel %vm2003, %v2041, %v2045
      %v2047 = vrot.slane %v904, 1
      %v2048 = vrot.slane %v900, 2
      %v2049 = vor.u32 %v2047, %v2048
      %v2050 = vsel %vm2003, %v2045, %v2049
      %v2051 = vrot.slane %v912, 1
      %v2052 = vrot.slane %v908, 2
      %v2053 = vor.u32 %v2051, %v2052
      %v2054 = vsel %vm2003, %v2049, %v2053
      %v2055 = vrot.slane %v920, 1
      %v2056 = vrot.slane %v916, 2
      %v2057 = vor.u32 %v2055, %v2056
      %v2058 = vsel %vm2003, %v2053, %v2057
      %v2059 = vrot.slane %v928, 1
      %v2060 = vrot.slane %v924, 2
      %v2061 = vor.u32 %v2059, %v2060
      %v2062 = vsel %vm2003, %v2057, %v2061
      %v2063 = vrot.slane %v936, 1
      %v2064 = vrot.slane %v932, 2
      %v2065 = vor.u32 %v2063, %v2064
      %v2066 = vsel %vm2003, %v2061, %v2065
      %v2067 = vrot.slane %v944, 1
      %v2068 = vrot.slane %v940, 2
      %v2069 = vor.u32 %v2067, %v2068
      %v2070 = vsel %vm2003, %v2065, %v2069
      %v2071 = vshrl.u32 %v791, 16
      %v2073 = vrot.slane %v2071, 1
      %v2074 = vrot.slane %v948, 2
      %v2075 = vor.u32 %v2073, %v2074
      %v2076 = vsel %vm2003, %v2069, %v2075
      %v2078 = vshrl.u32 %v792, 16
      %v2080 = vrot.slane %v2078, 1
      %v2081 = vshll.u32 %v792, 16
      %v2083 = vrot.slane %v2081, 2
      %v2084 = vor.u32 %v2080, %v2083
      %v2085 = vsel %vm2003, %v2075, %v2084
      %v2090 = vunpack.c.l.b16 %v1999
      %v2091 = vunpack.c.l.b16 %v2000
      %v2092 = vunpack.c.l.b16 %v2001
      %v2093 = vunpack.c.l.b16 %v2002
      %v2094 = vpack.c.b16 %v2091, %v2090
      %v2095 = vpack.c.b16 %v2093, %v2092
      %v2099 = vsel %vm964, %v2010, 0
      %v2102 = vsel %vm964, %v2014, 0
      %v2105 = vsel %vm964, %v2018, 0
      %v2108 = vsel %vm964, %v2022, 0
      %v2111 = vsel %vm964, %v2026, 0
      %v2114 = vsel %vm964, %v2030, 0
      %v2117 = vsel %vm964, %v2034, 0
      %v2120 = vsel %vm964, %v2038, 0
      %v2123 = vsel %vm964, %v2042, 0
      %v2126 = vsel %vm964, %v2046, 0
      %v2129 = vsel %vm964, %v2050, 0
      %v2132 = vsel %vm964, %v2054, 0
      %v2135 = vsel %vm964, %v2058, 0
      %v2138 = vsel %vm964, %v2062, 0
      %v2141 = vsel %vm964, %v2066, 0
      %v2144 = vsel %vm964, %v2070, 0
      %v2147 = vsel %vm964, %v2076, 0
      %v2150 = vsel %vm964, %v2085, 0
      %2152 = vmatprep.subr.bf16.mxu0 0
      %2153 = vmatpush1.bf16.msra.mxu0 %v2094
      %2154 = vmatprep.subr.bf16.mxu0 0
      %2155 = vmatpush1.bf16.msra.mxu0 %v2095
      %2156 = vmatprep.subr.bf16.mxu0 0
      %2157 = vmatpush1.bf16.msra.mxu0 0
      %2158 = vmatprep.subr.bf16.mxu0 0
      %2159 = vmatpush1.bf16.msra.mxu0 0
      %2160 = vmatprep.subr.bf16.mxu0 0
      %2161 = vmatpush1.bf16.msra.mxu0 0
      %2162 = vmatprep.subr.bf16.mxu0 0
      %2163 = vmatpush1.bf16.msra.mxu0 0
      %2164 = vmatprep.subr.bf16.mxu0 0
      %2165 = vmatpush1.bf16.msra.mxu0 0
      %2166 = vmatprep.subr.bf16.mxu0 0
      %2167 = vmatpush1.bf16.msra.mxu0 0
      %2168 = vmatprep.subr.bf16.mxu0 0
      %2169 = vmatpush1.bf16.msra.mxu0 0
      %2170 = vmatprep.subr.bf16.mxu0 0
      %2171 = vmatpush1.bf16.msra.mxu0 0
      %2172 = vmatprep.subr.bf16.mxu0 0
      %2173 = vmatpush1.bf16.msra.mxu0 0
      %2174 = vmatprep.subr.bf16.mxu0 0
      %2175 = vmatpush1.bf16.msra.mxu0 0
      %2176 = vmatprep.subr.bf16.mxu0 0
      %2177 = vmatpush1.bf16.msra.mxu0 0
      %2178 = vmatprep.subr.bf16.mxu0 0
      %2179 = vmatpush1.bf16.msra.mxu0 0
      %2180 = vmatprep.subr.bf16.mxu0 0
      %2181 = vmatpush1.bf16.msra.mxu0 0
      %2182 = vmatprep.subr.bf16.mxu0 0
      %2183 = vmatpush1.bf16.msra.mxu0 0
      %2184 = vmatprep.mubr.bf16.mxu0 0
      %2185 = vmatmul.mubr.bf16.gmra.mrb[0].mxu0 %v2099
      %v2186 = vpop.f32.mrb[0].mxu0
      %v2187 = vadd.f32 0.0, %v2186
      %v2188 = vpop.f32.mrb[0].mxu0
      %v2189 = vpop.f32.mrb[0].mxu0
      %v2190 = vadd.f32 0.0, %v2189
      %v2191 = vpop.f32.mrb[0].mxu0
      %2192 = vmatprep.mubr.bf16.mxu0 0
      %2193 = vmatmul.mubr.bf16.gmra.mrb[0].mxu0 %v2102
      %v2194 = vpop.f32.mrb[0].mxu0
      %v2195 = vadd.f32 0.0, %v2194
      %v2196 = vpop.f32.mrb[0].mxu0
      %v2197 = vpop.f32.mrb[0].mxu0
      %v2198 = vadd.f32 0.0, %v2197
      %v2199 = vpop.f32.mrb[0].mxu0
      %2200 = vmatprep.mubr.bf16.mxu0 0
      %2201 = vmatmul.mubr.bf16.gmra.mrb[0].mxu0 %v2105
      %v2202 = vpop.f32.mrb[0].mxu0
      %v2203 = vadd.f32 0.0, %v2202
      %v2204 = vpop.f32.mrb[0].mxu0
      %v2205 = vpop.f32.mrb[0].mxu0
      %v2206 = vadd.f32 0.0, %v2205
      %v2207 = vpop.f32.mrb[0].mxu0
      %2208 = vmatprep.mubr.bf16.mxu0 0
      %2209 = vmatmul.mubr.bf16.gmra.mrb[0].mxu0 %v2108
      %v2210 = vpop.f32.mrb[0].mxu0
      %v2211 = vadd.f32 0.0, %v2210
      %v2212 = vpop.f32.mrb[0].mxu0
      %v2213 = vpop.f32.mrb[0].mxu0
      %v2214 = vadd.f32 0.0, %v2213
      %v2215 = vpop.f32.mrb[0].mxu0
      %2216 = vmatprep.mubr.bf16.mxu0 0
      %2217 = vmatmul.mubr.bf16.gmra.mrb[0].mxu0 %v2111
      %v2218 = vpop.f32.mrb[0].mxu0
      %v2219 = vadd.f32 0.0, %v2218
      %v2220 = vpop.f32.mrb[0].mxu0
      %v2221 = vpop.f32.mrb[0].mxu0
      %v2222 = vadd.f32 0.0, %v2221
      %v2223 = vpop.f32.mrb[0].mxu0
      %2224 = vmatprep.mubr.bf16.mxu0 0
      %2225 = vmatmul.mubr.bf16.gmra.mrb[0].mxu0 %v2114
      %v2226 = vpop.f32.mrb[0].mxu0
      %v2227 = vadd.f32 0.0, %v2226
      %v2228 = vpop.f32.mrb[0].mxu0
      %v2229 = vpop.f32.mrb[0].mxu0
      %v2230 = vadd.f32 0.0, %v2229
      %v2231 = vpop.f32.mrb[0].mxu0
      %2232 = vmatprep.mubr.bf16.mxu0 0
      %2233 = vmatmul.mubr.bf16.gmra.mrb[0].mxu0 %v2117
      %v2234 = vpop.f32.mrb[0].mxu0
      %v2235 = vadd.f32 0.0, %v2234
      %v2236 = vpop.f32.mrb[0].mxu0
      %v2237 = vpop.f32.mrb[0].mxu0
      %v2238 = vadd.f32 0.0, %v2237
      %v2239 = vpop.f32.mrb[0].mxu0
      %2240 = vmatprep.mubr.bf16.mxu0 0
      %2241 = vmatmul.mubr.bf16.gmra.mrb[0].mxu0 %v2120
      %v2242 = vpop.f32.mrb[0].mxu0
      %v2243 = vadd.f32 0.0, %v2242
      %v2244 = vpop.f32.mrb[0].mxu0
      %v2245 = vpop.f32.mrb[0].mxu0
      %v2246 = vadd.f32 0.0, %v2245
      %v2247 = vpop.f32.mrb[0].mxu0
      %2248 = vmatprep.mubr.bf16.mxu0 0
      %2249 = vmatmul.mubr.bf16.gmra.mrb[0].mxu0 %v2123
      %v2250 = vpop.f32.mrb[0].mxu0
      %v2251 = vadd.f32 0.0, %v2250
      %v2252 = vpop.f32.mrb[0].mxu0
      %v2253 = vpop.f32.mrb[0].mxu0
      %v2254 = vadd.f32 0.0, %v2253
      %v2255 = vpop.f32.mrb[0].mxu0
      %2256 = vmatprep.mubr.bf16.mxu0 0
      %2257 = vmatmul.mubr.bf16.gmra.mrb[0].mxu0 %v2126
      %v2258 = vpop.f32.mrb[0].mxu0
      %v2259 = vadd.f32 0.0, %v2258
      %v2260 = vpop.f32.mrb[0].mxu0
      %v2261 = vpop.f32.mrb[0].mxu0
      %v2262 = vadd.f32 0.0, %v2261
      %v2263 = vpop.f32.mrb[0].mxu0
      %2264 = vmatprep.mubr.bf16.mxu0 0
      %2265 = vmatmul.mubr.bf16.gmra.mrb[0].mxu0 %v2129
      %v2266 = vpop.f32.mrb[0].mxu0
      %v2267 = vadd.f32 0.0, %v2266
      %v2268 = vpop.f32.mrb[0].mxu0
      %v2269 = vpop.f32.mrb[0].mxu0
      %v2270 = vadd.f32 0.0, %v2269
      %v2271 = vpop.f32.mrb[0].mxu0
      %2272 = vmatprep.mubr.bf16.mxu0 0
      %2273 = vmatmul.mubr.bf16.gmra.mrb[0].mxu0 %v2132
      %v2274 = vpop.f32.mrb[0].mxu0
      %v2275 = vadd.f32 0.0, %v2274
      %v2276 = vpop.f32.mrb[0].mxu0
      %v2277 = vpop.f32.mrb[0].mxu0
      %v2278 = vadd.f32 0.0, %v2277
      %v2279 = vpop.f32.mrb[0].mxu0
      %2280 = vmatprep.mubr.bf16.mxu0 0
      %2281 = vmatmul.mubr.bf16.gmra.mrb[0].mxu0 %v2135
      %v2282 = vpop.f32.mrb[0].mxu0
      %v2283 = vadd.f32 0.0, %v2282
      %v2284 = vpop.f32.mrb[0].mxu0
      %v2285 = vpop.f32.mrb[0].mxu0
      %v2286 = vadd.f32 0.0, %v2285
      %v2287 = vpop.f32.mrb[0].mxu0
      %2288 = vmatprep.mubr.bf16.mxu0 0
      %2289 = vmatmul.mubr.bf16.gmra.mrb[0].mxu0 %v2138
      %v2290 = vpop.f32.mrb[0].mxu0
      %v2291 = vadd.f32 0.0, %v2290
      %v2292 = vpop.f32.mrb[0].mxu0
      %v2293 = vpop.f32.mrb[0].mxu0
      %v2294 = vadd.f32 0.0, %v2293
      %v2295 = vpop.f32.mrb[0].mxu0
      %2296 = vmatprep.mubr.bf16.mxu0 0
      %2297 = vmatmul.mubr.bf16.gmra.mrb[0].mxu0 %v2141
      %v2298 = vpop.f32.mrb[0].mxu0
      %v2299 = vadd.f32 0.0, %v2298
      %v2300 = vpop.f32.mrb[0].mxu0
      %v2301 = vpop.f32.mrb[0].mxu0
      %v2302 = vadd.f32 0.0, %v2301
      %v2303 = vpop.f32.mrb[0].mxu0
      %2304 = vmatprep.mubr.bf16.mxu0 0
      %2305 = vmatmul.mubr.bf16.gmra.mrb[0].mxu0 %v2144
      %v2306 = vpop.f32.mrb[0].mxu0
      %v2307 = vadd.f32 0.0, %v2306
      %v2308 = vpop.f32.mrb[0].mxu0
      %v2309 = vpop.f32.mrb[0].mxu0
      %v2310 = vadd.f32 0.0, %v2309
      %v2311 = vpop.f32.mrb[0].mxu0
      %2312 = vmatprep.mubr.bf16.mxu0 0
      %2313 = vmatmul.mubr.bf16.gmra.mrb[0].mxu0 %v2147
      %v2314 = vpop.f32.mrb[0].mxu0
      %v2315 = vadd.f32 0.0, %v2314
      %v2316 = vpop.f32.mrb[0].mxu0
      %v2317 = vpop.f32.mrb[0].mxu0
      %v2318 = vadd.f32 0.0, %v2317
      %v2319 = vpop.f32.mrb[0].mxu0
      %2320 = vmatprep.mubr.bf16.mxu0 0
      %2321 = vmatmul.mubr.bf16.gmra.mrb[0].mxu0 %v2150
      %v2322 = vpop.f32.mrb[0].mxu0
      %v2323 = vadd.f32 0.0, %v2322
      %v2324 = vpop.f32.mrb[0].mxu0
      %v2325 = vpop.f32.mrb[0].mxu0
      %v2326 = vadd.f32 0.0, %v2325
      %v2327 = vpop.f32.mrb[0].mxu0
      %2328 = vdwg.mxu0
      %v2329 = vadd.f32 %v1962, %v2187
      %v2330 = vadd.f32 %v1963, %v2190
      %v2331 = vadd.f32 %v1964, %v2195
      %v2332 = vadd.f32 %v1965, %v2198
      %v2333 = vadd.f32 %v1966, %v2203
      %v2334 = vadd.f32 %v1967, %v2206
      %v2335 = vadd.f32 %v1968, %v2211
      %v2336 = vadd.f32 %v1969, %v2214
      %v2337 = vadd.f32 %v1970, %v2219
      %v2338 = vadd.f32 %v1971, %v2222
      %v2339 = vadd.f32 %v1972, %v2227
      %v2340 = vadd.f32 %v1973, %v2230
      %v2341 = vadd.f32 %v1974, %v2235
      %v2342 = vadd.f32 %v1975, %v2238
      %v2343 = vadd.f32 %v1976, %v2243
      %v2344 = vadd.f32 %v1977, %v2246
      %v2345 = vadd.f32 %v1978, %v2251
      %v2346 = vadd.f32 %v1979, %v2254
      %v2347 = vadd.f32 %v1980, %v2259
      %v2348 = vadd.f32 %v1981, %v2262
      %v2349 = vadd.f32 %v1982, %v2267
      %v2350 = vadd.f32 %v1983, %v2270
      %v2351 = vadd.f32 %v1984, %v2275
      %v2352 = vadd.f32 %v1985, %v2278
      %v2353 = vadd.f32 %v1986, %v2283
      %v2354 = vadd.f32 %v1987, %v2286
      %v2355 = vadd.f32 %v1988, %v2291
      %v2356 = vadd.f32 %v1989, %v2294
      %v2357 = vadd.f32 %v1990, %v2299
      %v2358 = vadd.f32 %v1991, %v2302
      %v2359 = vadd.f32 %v1992, %v2307
      %v2360 = vadd.f32 %v1993, %v2310
      %v2361 = vadd.f32 %v1994, %v2315
      %v2362 = vadd.f32 %v1995, %v2318
      %v2363 = vadd.f32 %v1996, %v2323
      %v2364 = vadd.f32 %v1997, %v2326
      %s2365 = scalar_lea.vmem %s1, 80
      %v2366 = vld [vmem:[%s2365] sm:$0xf]
      %v2367 = vld [vmem:[%s2365 + $0x4] sm:$0xf]
      %v2368 = vld [vmem:[%s2365 + $0x8] sm:$0xf]
      %v2369 = vld [vmem:[%s2365 + $0xc] sm:$0xf]
      %vm2370 = vcmask 1045504
      %v2371 = vrot.slane %v774, 2
      %v2372 = vrot.slane %v775, 2
      %v2373 = vsel %vm2370, %v2371, %v2372
      %v2374 = vrot.slane %v776, 2
      %v2375 = vsel %vm2370, %v2372, %v2374
      %v2376 = vrot.slane %v777, 2
      %v2377 = vsel %vm2370, %v2374, %v2376
      %v2378 = vrot.slane %v778, 2
      %v2379 = vsel %vm2370, %v2376, %v2378
      %v2380 = vrot.slane %v779, 2
      %v2381 = vsel %vm2370, %v2378, %v2380
      %v2382 = vrot.slane %v780, 2
      %v2383 = vsel %vm2370, %v2380, %v2382
      %v2384 = vrot.slane %v781, 2
      %v2385 = vsel %vm2370, %v2382, %v2384
      %v2386 = vrot.slane %v782, 2
      %v2387 = vsel %vm2370, %v2384, %v2386
      %v2388 = vrot.slane %v783, 2
      %v2389 = vsel %vm2370, %v2386, %v2388
      %v2390 = vrot.slane %v784, 2
      %v2391 = vsel %vm2370, %v2388, %v2390
      %v2392 = vrot.slane %v785, 2
      %v2393 = vsel %vm2370, %v2390, %v2392
      %v2394 = vrot.slane %v786, 2
      %v2395 = vsel %vm2370, %v2392, %v2394
      %v2396 = vrot.slane %v787, 2
      %v2397 = vsel %vm2370, %v2394, %v2396
      %v2398 = vrot.slane %v788, 2
      %v2399 = vsel %vm2370, %v2396, %v2398
      %v2400 = vrot.slane %v789, 2
      %v2401 = vsel %vm2370, %v2398, %v2400
      %v2402 = vrot.slane %v790, 2
      %v2403 = vsel %vm2370, %v2400, %v2402
      %v2404 = vrot.slane %v791, 2
      %v2405 = vsel %vm2370, %v2402, %v2404
      %v2406 = vrot.slane %v792, 2
      %v2407 = vsel %vm2370, %v2404, %v2406
      %v2412 = vunpack.c.l.b16 %v2366
      %v2413 = vunpack.c.l.b16 %v2367
      %v2414 = vunpack.c.l.b16 %v2368
      %v2415 = vunpack.c.l.b16 %v2369
      %v2416 = vpack.c.b16 %v2413, %v2412
      %v2417 = vpack.c.b16 %v2415, %v2414
      %v2421 = vsel %vm964, %v2373, 0
      %v2424 = vsel %vm964, %v2375, 0
      %v2427 = vsel %vm964, %v2377, 0
      %v2430 = vsel %vm964, %v2379, 0
      %v2433 = vsel %vm964, %v2381, 0
      %v2436 = vsel %vm964, %v2383, 0
      %v2439 = vsel %vm964, %v2385, 0
      %v2442 = vsel %vm964, %v2387, 0
      %v2445 = vsel %vm964, %v2389, 0
      %v2448 = vsel %vm964, %v2391, 0
      %v2451 = vsel %vm964, %v2393, 0
      %v2454 = vsel %vm964, %v2395, 0
      %v2457 = vsel %vm964, %v2397, 0
      %v2460 = vsel %vm964, %v2399, 0
      %v2463 = vsel %vm964, %v2401, 0
      %v2466 = vsel %vm964, %v2403, 0
      %v2469 = vsel %vm964, %v2405, 0
      %v2472 = vsel %vm964, %v2407, 0
      %2474 = vmatprep.subr.bf16.mxu0 0
      %2475 = vmatpush1.bf16.msra.mxu0 %v2416
      %2476 = vmatprep.subr.bf16.mxu0 0
      %2477 = vmatpush1.bf16.msra.mxu0 %v2417
      %2478 = vmatprep.subr.bf16.mxu0 0
      %2479 = vmatpush1.bf16.msra.mxu0 0
      %2480 = vmatprep.subr.bf16.mxu0 0
      %2481 = vmatpush1.bf16.msra.mxu0 0
      %2482 = vmatprep.subr.bf16.mxu0 0
      %2483 = vmatpush1.bf16.msra.mxu0 0
      %2484 = vmatprep.subr.bf16.mxu0 0
      %2485 = vmatpush1.bf16.msra.mxu0 0
      %2486 = vmatprep.subr.bf16.mxu0 0
      %2487 = vmatpush1.bf16.msra.mxu0 0
      %2488 = vmatprep.subr.bf16.mxu0 0
      %2489 = vmatpush1.bf16.msra.mxu0 0
      %2490 = vmatprep.subr.bf16.mxu0 0
      %2491 = vmatpush1.bf16.msra.mxu0 0
      %2492 = vmatprep.subr.bf16.mxu0 0
      %2493 = vmatpush1.bf16.msra.mxu0 0
      %2494 = vmatprep.subr.bf16.mxu0 0
      %2495 = vmatpush1.bf16.msra.mxu0 0
      %2496 = vmatprep.subr.bf16.mxu0 0
      %2497 = vmatpush1.bf16.msra.mxu0 0
      %2498 = vmatprep.subr.bf16.mxu0 0
      %2499 = vmatpush1.bf16.msra.mxu0 0
      %2500 = vmatprep.subr.bf16.mxu0 0
      %2501 = vmatpush1.bf16.msra.mxu0 0
      %2502 = vmatprep.subr.bf16.mxu0 0
      %2503 = vmatpush1.bf16.msra.mxu0 0
      %2504 = vmatprep.subr.bf16.mxu0 0
      %2505 = vmatpush1.bf16.msra.mxu0 0
      %2506 = vmatprep.mubr.bf16.mxu0 0
      %2507 = vmatmul.mubr.bf16.gmra.mrb[0].mxu0 %v2421
      %v2508 = vpop.f32.mrb[0].mxu0
      %v2509 = vadd.f32 0.0, %v2508
      %v2510 = vpop.f32.mrb[0].mxu0
      %v2511 = vpop.f32.mrb[0].mxu0
      %v2512 = vadd.f32 0.0, %v2511
      %v2513 = vpop.f32.mrb[0].mxu0
      %2514 = vmatprep.mubr.bf16.mxu0 0
      %2515 = vmatmul.mubr.bf16.gmra.mrb[0].mxu0 %v2424
      %v2516 = vpop.f32.mrb[0].mxu0
      %v2517 = vadd.f32 0.0, %v2516
      %v2518 = vpop.f32.mrb[0].mxu0
      %v2519 = vpop.f32.mrb[0].mxu0
      %v2520 = vadd.f32 0.0, %v2519
      %v2521 = vpop.f32.mrb[0].mxu0
      %2522 = vmatprep.mubr.bf16.mxu0 0
      %2523 = vmatmul.mubr.bf16.gmra.mrb[0].mxu0 %v2427
      %v2524 = vpop.f32.mrb[0].mxu0
      %v2525 = vadd.f32 0.0, %v2524
      %v2526 = vpop.f32.mrb[0].mxu0
      %v2527 = vpop.f32.mrb[0].mxu0
      %v2528 = vadd.f32 0.0, %v2527
      %v2529 = vpop.f32.mrb[0].mxu0
      %2530 = vmatprep.mubr.bf16.mxu0 0
      %2531 = vmatmul.mubr.bf16.gmra.mrb[0].mxu0 %v2430
      %v2532 = vpop.f32.mrb[0].mxu0
      %v2533 = vadd.f32 0.0, %v2532
      %v2534 = vpop.f32.mrb[0].mxu0
      %v2535 = vpop.f32.mrb[0].mxu0
      %v2536 = vadd.f32 0.0, %v2535
      %v2537 = vpop.f32.mrb[0].mxu0
      %2538 = vmatprep.mubr.bf16.mxu0 0
      %2539 = vmatmul.mubr.bf16.gmra.mrb[0].mxu0 %v2433
      %v2540 = vpop.f32.mrb[0].mxu0
      %v2541 = vadd.f32 0.0, %v2540
      %v2542 = vpop.f32.mrb[0].mxu0
      %v2543 = vpop.f32.mrb[0].mxu0
      %v2544 = vadd.f32 0.0, %v2543
      %v2545 = vpop.f32.mrb[0].mxu0
      %2546 = vmatprep.mubr.bf16.mxu0 0
      %2547 = vmatmul.mubr.bf16.gmra.mrb[0].mxu0 %v2436
      %v2548 = vpop.f32.mrb[0].mxu0
      %v2549 = vadd.f32 0.0, %v2548
      %v2550 = vpop.f32.mrb[0].mxu0
      %v2551 = vpop.f32.mrb[0].mxu0
      %v2552 = vadd.f32 0.0, %v2551
      %v2553 = vpop.f32.mrb[0].mxu0
      %2554 = vmatprep.mubr.bf16.mxu0 0
      %2555 = vmatmul.mubr.bf16.gmra.mrb[0].mxu0 %v2439
      %v2556 = vpop.f32.mrb[0].mxu0
      %v2557 = vadd.f32 0.0, %v2556
      %v2558 = vpop.f32.mrb[0].mxu0
      %v2559 = vpop.f32.mrb[0].mxu0
      %v2560 = vadd.f32 0.0, %v2559
      %v2561 = vpop.f32.mrb[0].mxu0
      %2562 = vmatprep.mubr.bf16.mxu0 0
      %2563 = vmatmul.mubr.bf16.gmra.mrb[0].mxu0 %v2442
      %v2564 = vpop.f32.mrb[0].mxu0
      %v2565 = vadd.f32 0.0, %v2564
      %v2566 = vpop.f32.mrb[0].mxu0
      %v2567 = vpop.f32.mrb[0].mxu0
      %v2568 = vadd.f32 0.0, %v2567
      %v2569 = vpop.f32.mrb[0].mxu0
      %2570 = vmatprep.mubr.bf16.mxu0 0
      %2571 = vmatmul.mubr.bf16.gmra.mrb[0].mxu0 %v2445
      %v2572 = vpop.f32.mrb[0].mxu0
      %v2573 = vadd.f32 0.0, %v2572
      %v2574 = vpop.f32.mrb[0].mxu0
      %v2575 = vpop.f32.mrb[0].mxu0
      %v2576 = vadd.f32 0.0, %v2575
      %v2577 = vpop.f32.mrb[0].mxu0
      %2578 = vmatprep.mubr.bf16.mxu0 0
      %2579 = vmatmul.mubr.bf16.gmra.mrb[0].mxu0 %v2448
      %v2580 = vpop.f32.mrb[0].mxu0
      %v2581 = vadd.f32 0.0, %v2580
      %v2582 = vpop.f32.mrb[0].mxu0
      %v2583 = vpop.f32.mrb[0].mxu0
      %v2584 = vadd.f32 0.0, %v2583
      %v2585 = vpop.f32.mrb[0].mxu0
      %2586 = vmatprep.mubr.bf16.mxu0 0
      %2587 = vmatmul.mubr.bf16.gmra.mrb[0].mxu0 %v2451
      %v2588 = vpop.f32.mrb[0].mxu0
      %v2589 = vadd.f32 0.0, %v2588
      %v2590 = vpop.f32.mrb[0].mxu0
      %v2591 = vpop.f32.mrb[0].mxu0
      %v2592 = vadd.f32 0.0, %v2591
      %v2593 = vpop.f32.mrb[0].mxu0
      %2594 = vmatprep.mubr.bf16.mxu0 0
      %2595 = vmatmul.mubr.bf16.gmra.mrb[0].mxu0 %v2454
      %v2596 = vpop.f32.mrb[0].mxu0
      %v2597 = vadd.f32 0.0, %v2596
      %v2598 = vpop.f32.mrb[0].mxu0
      %v2599 = vpop.f32.mrb[0].mxu0
      %v2600 = vadd.f32 0.0, %v2599
      %v2601 = vpop.f32.mrb[0].mxu0
      %2602 = vmatprep.mubr.bf16.mxu0 0
      %2603 = vmatmul.mubr.bf16.gmra.mrb[0].mxu0 %v2457
      %v2604 = vpop.f32.mrb[0].mxu0
      %v2605 = vadd.f32 0.0, %v2604
      %v2606 = vpop.f32.mrb[0].mxu0
      %v2607 = vpop.f32.mrb[0].mxu0
      %v2608 = vadd.f32 0.0, %v2607
      %v2609 = vpop.f32.mrb[0].mxu0
      %2610 = vmatprep.mubr.bf16.mxu0 0
      %2611 = vmatmul.mubr.bf16.gmra.mrb[0].mxu0 %v2460
      %v2612 = vpop.f32.mrb[0].mxu0
      %v2613 = vadd.f32 0.0, %v2612
      %v2614 = vpop.f32.mrb[0].mxu0
      %v2615 = vpop.f32.mrb[0].mxu0
      %v2616 = vadd.f32 0.0, %v2615
      %v2617 = vpop.f32.mrb[0].mxu0
      %2618 = vmatprep.mubr.bf16.mxu0 0
      %2619 = vmatmul.mubr.bf16.gmra.mrb[0].mxu0 %v2463
      %v2620 = vpop.f32.mrb[0].mxu0
      %v2621 = vadd.f32 0.0, %v2620
      %v2622 = vpop.f32.mrb[0].mxu0
      %v2623 = vpop.f32.mrb[0].mxu0
      %v2624 = vadd.f32 0.0, %v2623
      %v2625 = vpop.f32.mrb[0].mxu0
      %2626 = vmatprep.mubr.bf16.mxu0 0
      %2627 = vmatmul.mubr.bf16.gmra.mrb[0].mxu0 %v2466
      %v2628 = vpop.f32.mrb[0].mxu0
      %v2629 = vadd.f32 0.0, %v2628
      %v2630 = vpop.f32.mrb[0].mxu0
      %v2631 = vpop.f32.mrb[0].mxu0
      %v2632 = vadd.f32 0.0, %v2631
      %v2633 = vpop.f32.mrb[0].mxu0
      %2634 = vmatprep.mubr.bf16.mxu0 0
      %2635 = vmatmul.mubr.bf16.gmra.mrb[0].mxu0 %v2469
      %v2636 = vpop.f32.mrb[0].mxu0
      %v2637 = vadd.f32 0.0, %v2636
      %v2638 = vpop.f32.mrb[0].mxu0
      %v2639 = vpop.f32.mrb[0].mxu0
      %v2640 = vadd.f32 0.0, %v2639
      %v2641 = vpop.f32.mrb[0].mxu0
      %2642 = vmatprep.mubr.bf16.mxu0 0
      %2643 = vmatmul.mubr.bf16.gmra.mrb[0].mxu0 %v2472
      %v2644 = vpop.f32.mrb[0].mxu0
      %v2645 = vadd.f32 0.0, %v2644
      %v2646 = vpop.f32.mrb[0].mxu0
      %v2647 = vpop.f32.mrb[0].mxu0
      %v2648 = vadd.f32 0.0, %v2647
      %v2649 = vpop.f32.mrb[0].mxu0
      %2650 = vdwg.mxu0
      %v2651 = vadd.f32 %v2329, %v2509
      %v2652 = vadd.f32 %v2330, %v2512
      %v2653 = vadd.f32 %v2331, %v2517
      %v2654 = vadd.f32 %v2332, %v2520
      %v2655 = vadd.f32 %v2333, %v2525
      %v2656 = vadd.f32 %v2334, %v2528
      %v2657 = vadd.f32 %v2335, %v2533
      %v2658 = vadd.f32 %v2336, %v2536
      %v2659 = vadd.f32 %v2337, %v2541
      %v2660 = vadd.f32 %v2338, %v2544
      %v2661 = vadd.f32 %v2339, %v2549
      %v2662 = vadd.f32 %v2340, %v2552
      %v2663 = vadd.f32 %v2341, %v2557
      %v2664 = vadd.f32 %v2342, %v2560
      %v2665 = vadd.f32 %v2343, %v2565
      %v2666 = vadd.f32 %v2344, %v2568
      %v2667 = vadd.f32 %v2345, %v2573
      %v2668 = vadd.f32 %v2346, %v2576
      %v2669 = vadd.f32 %v2347, %v2581
      %v2670 = vadd.f32 %v2348, %v2584
      %v2671 = vadd.f32 %v2349, %v2589
      %v2672 = vadd.f32 %v2350, %v2592
      %v2673 = vadd.f32 %v2351, %v2597
      %v2674 = vadd.f32 %v2352, %v2600
      %v2675 = vadd.f32 %v2353, %v2605
      %v2676 = vadd.f32 %v2354, %v2608
      %v2677 = vadd.f32 %v2355, %v2613
      %v2678 = vadd.f32 %v2356, %v2616
      %v2679 = vadd.f32 %v2357, %v2621
      %v2680 = vadd.f32 %v2358, %v2624
      %v2681 = vadd.f32 %v2359, %v2629
      %v2682 = vadd.f32 %v2360, %v2632
      %v2683 = vadd.f32 %v2361, %v2637
      %v2684 = vadd.f32 %v2362, %v2640
      %v2685 = vadd.f32 %v2363, %v2645
      %v2686 = vadd.f32 %v2364, %v2648
      %s2687 = scalar_lea.vmem %s1, 96
      %v2688 = vld [vmem:[%s2687] sm:$0xf]
      %v2689 = vld [vmem:[%s2687 + $0x4] sm:$0xf]
      %v2690 = vld [vmem:[%s2687 + $0x8] sm:$0xf]
      %v2691 = vld [vmem:[%s2687 + $0xc] sm:$0xf]
      %v2693 = vrot.slane %v793, 2
      %v2694 = vsel %vm2370, %v2406, %v2693
      %v2699 = vunpack.c.l.b16 %v2688
      %v2700 = vunpack.c.l.b16 %v2689
      %v2701 = vunpack.c.l.b16 %v2690
      %v2702 = vunpack.c.l.b16 %v2691
      %v2703 = vpack.c.b16 %v2700, %v2699
      %v2704 = vpack.c.b16 %v2702, %v2701
      %v2708 = vsel %vm964, %v2694, 0
      %2710 = vmatprep.subr.bf16.mxu0 0
      %2711 = vmatpush1.bf16.msra.mxu0 %v2703
      %2712 = vmatprep.subr.bf16.mxu0 0
      %2713 = vmatpush1.bf16.msra.mxu0 %v2704
      %2714 = vmatprep.subr.bf16.mxu0 0
      %2715 = vmatpush1.bf16.msra.mxu0 0
      %2716 = vmatprep.subr.bf16.mxu0 0
      %2717 = vmatpush1.bf16.msra.mxu0 0
      %2718 = vmatprep.subr.bf16.mxu0 0
      %2719 = vmatpush1.bf16.msra.mxu0 0
      %2720 = vmatprep.subr.bf16.mxu0 0
      %2721 = vmatpush1.bf16.msra.mxu0 0
      %2722 = vmatprep.subr.bf16.mxu0 0
      %2723 = vmatpush1.bf16.msra.mxu0 0
      %2724 = vmatprep.subr.bf16.mxu0 0
      %2725 = vmatpush1.bf16.msra.mxu0 0
      %2726 = vmatprep.subr.bf16.mxu0 0
      %2727 = vmatpush1.bf16.msra.mxu0 0
      %2728 = vmatprep.subr.bf16.mxu0 0
      %2729 = vmatpush1.bf16.msra.mxu0 0
      %2730 = vmatprep.subr.bf16.mxu0 0
      %2731 = vmatpush1.bf16.msra.mxu0 0
      %2732 = vmatprep.subr.bf16.mxu0 0
      %2733 = vmatpush1.bf16.msra.mxu0 0
      %2734 = vmatprep.subr.bf16.mxu0 0
      %2735 = vmatpush1.bf16.msra.mxu0 0
      %2736 = vmatprep.subr.bf16.mxu0 0
      %2737 = vmatpush1.bf16.msra.mxu0 0
      %2738 = vmatprep.subr.bf16.mxu0 0
      %2739 = vmatpush1.bf16.msra.mxu0 0
      %2740 = vmatprep.subr.bf16.mxu0 0
      %2741 = vmatpush1.bf16.msra.mxu0 0
      %2742 = vmatprep.mubr.bf16.mxu0 0
      %2743 = vmatmul.mubr.bf16.gmra.mrb[0].mxu0 %v2424
      %v2744 = vpop.f32.mrb[0].mxu0
      %v2745 = vadd.f32 0.0, %v2744
      %v2746 = vpop.f32.mrb[0].mxu0
      %v2747 = vpop.f32.mrb[0].mxu0
      %v2748 = vadd.f32 0.0, %v2747
      %v2749 = vpop.f32.mrb[0].mxu0
      %2750 = vmatprep.mubr.bf16.mxu0 0
      %2751 = vmatmul.mubr.bf16.gmra.mrb[0].mxu0 %v2427
      %v2752 = vpop.f32.mrb[0].mxu0
      %v2753 = vadd.f32 0.0, %v2752
      %v2754 = vpop.f32.mrb[0].mxu0
      %v2755 = vpop.f32.mrb[0].mxu0
      %v2756 = vadd.f32 0.0, %v2755
      %v2757 = vpop.f32.mrb[0].mxu0
      %2758 = vmatprep.mubr.bf16.mxu0 0
      %2759 = vmatmul.mubr.bf16.gmra.mrb[0].mxu0 %v2430
      %v2760 = vpop.f32.mrb[0].mxu0
      %v2761 = vadd.f32 0.0, %v2760
      %v2762 = vpop.f32.mrb[0].mxu0
      %v2763 = vpop.f32.mrb[0].mxu0
      %v2764 = vadd.f32 0.0, %v2763
      %v2765 = vpop.f32.mrb[0].mxu0
      %2766 = vmatprep.mubr.bf16.mxu0 0
      %2767 = vmatmul.mubr.bf16.gmra.mrb[0].mxu0 %v2433
      %v2768 = vpop.f32.mrb[0].mxu0
      %v2769 = vadd.f32 0.0, %v2768
      %v2770 = vpop.f32.mrb[0].mxu0
      %v2771 = vpop.f32.mrb[0].mxu0
      %v2772 = vadd.f32 0.0, %v2771
      %v2773 = vpop.f32.mrb[0].mxu0
      %2774 = vmatprep.mubr.bf16.mxu0 0
      %2775 = vmatmul.mubr.bf16.gmra.mrb[0].mxu0 %v2436
      %v2776 = vpop.f32.mrb[0].mxu0
      %v2777 = vadd.f32 0.0, %v2776
      %v2778 = vpop.f32.mrb[0].mxu0
      %v2779 = vpop.f32.mrb[0].mxu0
      %v2780 = vadd.f32 0.0, %v2779
      %v2781 = vpop.f32.mrb[0].mxu0
      %2782 = vmatprep.mubr.bf16.mxu0 0
      %2783 = vmatmul.mubr.bf16.gmra.mrb[0].mxu0 %v2439
      %v2784 = vpop.f32.mrb[0].mxu0
      %v2785 = vadd.f32 0.0, %v2784
      %v2786 = vpop.f32.mrb[0].mxu0
      %v2787 = vpop.f32.mrb[0].mxu0
      %v2788 = vadd.f32 0.0, %v2787
      %v2789 = vpop.f32.mrb[0].mxu0
      %2790 = vmatprep.mubr.bf16.mxu0 0
      %2791 = vmatmul.mubr.bf16.gmra.mrb[0].mxu0 %v2442
      %v2792 = vpop.f32.mrb[0].mxu0
      %v2793 = vadd.f32 0.0, %v2792
      %v2794 = vpop.f32.mrb[0].mxu0
      %v2795 = vpop.f32.mrb[0].mxu0
      %v2796 = vadd.f32 0.0, %v2795
      %v2797 = vpop.f32.mrb[0].mxu0
      %2798 = vmatprep.mubr.bf16.mxu0 0
      %2799 = vmatmul.mubr.bf16.gmra.mrb[0].mxu0 %v2445
      %v2800 = vpop.f32.mrb[0].mxu0
      %v2801 = vadd.f32 0.0, %v2800
      %v2802 = vpop.f32.mrb[0].mxu0
      %v2803 = vpop.f32.mrb[0].mxu0
      %v2804 = vadd.f32 0.0, %v2803
      %v2805 = vpop.f32.mrb[0].mxu0
      %2806 = vmatprep.mubr.bf16.mxu0 0
      %2807 = vmatmul.mubr.bf16.gmra.mrb[0].mxu0 %v2448
      %v2808 = vpop.f32.mrb[0].mxu0
      %v2809 = vadd.f32 0.0, %v2808
      %v2810 = vpop.f32.mrb[0].mxu0
      %v2811 = vpop.f32.mrb[0].mxu0
      %v2812 = vadd.f32 0.0, %v2811
      %v2813 = vpop.f32.mrb[0].mxu0
      %2814 = vmatprep.mubr.bf16.mxu0 0
      %2815 = vmatmul.mubr.bf16.gmra.mrb[0].mxu0 %v2451
      %v2816 = vpop.f32.mrb[0].mxu0
      %v2817 = vadd.f32 0.0, %v2816
      %v2818 = vpop.f32.mrb[0].mxu0
      %v2819 = vpop.f32.mrb[0].mxu0
      %v2820 = vadd.f32 0.0, %v2819
      %v2821 = vpop.f32.mrb[0].mxu0
      %2822 = vmatprep.mubr.bf16.mxu0 0
      %2823 = vmatmul.mubr.bf16.gmra.mrb[0].mxu0 %v2454
      %v2824 = vpop.f32.mrb[0].mxu0
      %v2825 = vadd.f32 0.0, %v2824
      %v2826 = vpop.f32.mrb[0].mxu0
      %v2827 = vpop.f32.mrb[0].mxu0
      %v2828 = vadd.f32 0.0, %v2827
      %v2829 = vpop.f32.mrb[0].mxu0
      %2830 = vmatprep.mubr.bf16.mxu0 0
      %2831 = vmatmul.mubr.bf16.gmra.mrb[0].mxu0 %v2457
      %v2832 = vpop.f32.mrb[0].mxu0
      %v2833 = vadd.f32 0.0, %v2832
      %v2834 = vpop.f32.mrb[0].mxu0
      %v2835 = vpop.f32.mrb[0].mxu0
      %v2836 = vadd.f32 0.0, %v2835
      %v2837 = vpop.f32.mrb[0].mxu0
      %2838 = vmatprep.mubr.bf16.mxu0 0
      %2839 = vmatmul.mubr.bf16.gmra.mrb[0].mxu0 %v2460
      %v2840 = vpop.f32.mrb[0].mxu0
      %v2841 = vadd.f32 0.0, %v2840
      %v2842 = vpop.f32.mrb[0].mxu0
      %v2843 = vpop.f32.mrb[0].mxu0
      %v2844 = vadd.f32 0.0, %v2843
      %v2845 = vpop.f32.mrb[0].mxu0
      %2846 = vmatprep.mubr.bf16.mxu0 0
      %2847 = vmatmul.mubr.bf16.gmra.mrb[0].mxu0 %v2463
      %v2848 = vpop.f32.mrb[0].mxu0
      %v2849 = vadd.f32 0.0, %v2848
      %v2850 = vpop.f32.mrb[0].mxu0
      %v2851 = vpop.f32.mrb[0].mxu0
      %v2852 = vadd.f32 0.0, %v2851
      %v2853 = vpop.f32.mrb[0].mxu0
      %2854 = vmatprep.mubr.bf16.mxu0 0
      %2855 = vmatmul.mubr.bf16.gmra.mrb[0].mxu0 %v2466
      %v2856 = vpop.f32.mrb[0].mxu0
      %v2857 = vadd.f32 0.0, %v2856
      %v2858 = vpop.f32.mrb[0].mxu0
      %v2859 = vpop.f32.mrb[0].mxu0
      %v2860 = vadd.f32 0.0, %v2859
      %v2861 = vpop.f32.mrb[0].mxu0
      %2862 = vmatprep.mubr.bf16.mxu0 0
      %2863 = vmatmul.mubr.bf16.gmra.mrb[0].mxu0 %v2469
      %v2864 = vpop.f32.mrb[0].mxu0
      %v2865 = vadd.f32 0.0, %v2864
      %v2866 = vpop.f32.mrb[0].mxu0
      %v2867 = vpop.f32.mrb[0].mxu0
      %v2868 = vadd.f32 0.0, %v2867
      %v2869 = vpop.f32.mrb[0].mxu0
      %2870 = vmatprep.mubr.bf16.mxu0 0
      %2871 = vmatmul.mubr.bf16.gmra.mrb[0].mxu0 %v2472
      %v2872 = vpop.f32.mrb[0].mxu0
      %v2873 = vadd.f32 0.0, %v2872
      %v2874 = vpop.f32.mrb[0].mxu0
      %v2875 = vpop.f32.mrb[0].mxu0
      %v2876 = vadd.f32 0.0, %v2875
      %v2877 = vpop.f32.mrb[0].mxu0
      %2878 = vmatprep.mubr.bf16.mxu0 0
      %2879 = vmatmul.mubr.bf16.gmra.mrb[0].mxu0 %v2708
      %v2880 = vpop.f32.mrb[0].mxu0
      %v2881 = vadd.f32 0.0, %v2880
      %v2882 = vpop.f32.mrb[0].mxu0
      %v2883 = vpop.f32.mrb[0].mxu0
      %v2884 = vadd.f32 0.0, %v2883
      %v2885 = vpop.f32.mrb[0].mxu0
      %2886 = vdwg.mxu0
      %v2887 = vadd.f32 %v2651, %v2745
      %v2888 = vadd.f32 %v2652, %v2748
      %v2889 = vadd.f32 %v2653, %v2753
      %v2890 = vadd.f32 %v2654, %v2756
      %v2891 = vadd.f32 %v2655, %v2761
      %v2892 = vadd.f32 %v2656, %v2764
      %v2893 = vadd.f32 %v2657, %v2769
      %v2894 = vadd.f32 %v2658, %v2772
      %v2895 = vadd.f32 %v2659, %v2777
      %v2896 = vadd.f32 %v2660, %v2780
      %v2897 = vadd.f32 %v2661, %v2785
      %v2898 = vadd.f32 %v2662, %v2788
      %v2899 = vadd.f32 %v2663, %v2793
      %v2900 = vadd.f32 %v2664, %v2796
      %v2901 = vadd.f32 %v2665, %v2801
      %v2902 = vadd.f32 %v2666, %v2804
      %v2903 = vadd.f32 %v2667, %v2809
      %v2904 = vadd.f32 %v2668, %v2812
      %v2905 = vadd.f32 %v2669, %v2817
      %v2906 = vadd.f32 %v2670, %v2820
      %v2907 = vadd.f32 %v2671, %v2825
      %v2908 = vadd.f32 %v2672, %v2828
      %v2909 = vadd.f32 %v2673, %v2833
      %v2910 = vadd.f32 %v2674, %v2836
      %v2911 = vadd.f32 %v2675, %v2841
      %v2912 = vadd.f32 %v2676, %v2844
      %v2913 = vadd.f32 %v2677, %v2849
      %v2914 = vadd.f32 %v2678, %v2852
      %v2915 = vadd.f32 %v2679, %v2857
      %v2916 = vadd.f32 %v2680, %v2860
      %v2917 = vadd.f32 %v2681, %v2865
      %v2918 = vadd.f32 %v2682, %v2868
      %v2919 = vadd.f32 %v2683, %v2873
      %v2920 = vadd.f32 %v2684, %v2876
      %v2921 = vadd.f32 %v2685, %v2881
      %v2922 = vadd.f32 %v2686, %v2884
      %s2923 = scalar_lea.vmem %s1, 112
      %v2924 = vld [vmem:[%s2923] sm:$0xf]
      %v2925 = vld [vmem:[%s2923 + $0x4] sm:$0xf]
      %v2926 = vld [vmem:[%s2923 + $0x8] sm:$0xf]
      %v2927 = vld [vmem:[%s2923 + $0xc] sm:$0xf]
      %vm2928 = vsmask.f32 5376
      %v2929 = vrot.slane %v824, 2
      %v2930 = vrot.slane %v820, 3
      %v2931 = vor.u32 %v2929, %v2930
      %v2932 = vrot.slane %v832, 2
      %v2933 = vrot.slane %v828, 3
      %v2934 = vor.u32 %v2932, %v2933
      %v2935 = vsel %vm2928, %v2931, %v2934
      %v2936 = vrot.slane %v840, 2
      %v2937 = vrot.slane %v836, 3
      %v2938 = vor.u32 %v2936, %v2937
      %v2939 = vsel %vm2928, %v2934, %v2938
      %v2940 = vrot.slane %v848, 2
      %v2941 = vrot.slane %v844, 3
      %v2942 = vor.u32 %v2940, %v2941
      %v2943 = vsel %vm2928, %v2938, %v2942
      %v2944 = vrot.slane %v856, 2
      %v2945 = vrot.slane %v852, 3
      %v2946 = vor.u32 %v2944, %v2945
      %v2947 = vsel %vm2928, %v2942, %v2946
      %v2948 = vrot.slane %v864, 2
      %v2949 = vrot.slane %v860, 3
      %v2950 = vor.u32 %v2948, %v2949
      %v2951 = vsel %vm2928, %v2946, %v2950
      %v2952 = vrot.slane %v872, 2
      %v2953 = vrot.slane %v868, 3
      %v2954 = vor.u32 %v2952, %v2953
      %v2955 = vsel %vm2928, %v2950, %v2954
      %v2956 = vrot.slane %v880, 2
      %v2957 = vrot.slane %v876, 3
      %v2958 = vor.u32 %v2956, %v2957
      %v2959 = vsel %vm2928, %v2954, %v2958
      %v2960 = vrot.slane %v888, 2
      %v2961 = vrot.slane %v884, 3
      %v2962 = vor.u32 %v2960, %v2961
      %v2963 = vsel %vm2928, %v2958, %v2962
      %v2964 = vrot.slane %v896, 2
      %v2965 = vrot.slane %v892, 3
      %v2966 = vor.u32 %v2964, %v2965
      %v2967 = vsel %vm2928, %v2962, %v2966
      %v2968 = vrot.slane %v904, 2
      %v2969 = vrot.slane %v900, 3
      %v2970 = vor.u32 %v2968, %v2969
      %v2971 = vsel %vm2928, %v2966, %v2970
      %v2972 = vrot.slane %v912, 2
      %v2973 = vrot.slane %v908, 3
      %v2974 = vor.u32 %v2972, %v2973
      %v2975 = vsel %vm2928, %v2970, %v2974
      %v2976 = vrot.slane %v920, 2
      %v2977 = vrot.slane %v916, 3
      %v2978 = vor.u32 %v2976, %v2977
      %v2979 = vsel %vm2928, %v2974, %v2978
      %v2980 = vrot.slane %v928, 2
      %v2981 = vrot.slane %v924, 3
      %v2982 = vor.u32 %v2980, %v2981
      %v2983 = vsel %vm2928, %v2978, %v2982
      %v2984 = vrot.slane %v936, 2
      %v2985 = vrot.slane %v932, 3
      %v2986 = vor.u32 %v2984, %v2985
      %v2987 = vsel %vm2928, %v2982, %v2986
      %v2988 = vrot.slane %v944, 2
      %v2989 = vrot.slane %v940, 3
      %v2990 = vor.u32 %v2988, %v2989
      %v2991 = vsel %vm2928, %v2986, %v2990
      %v2992 = vrot.slane %v2071, 2
      %v2993 = vrot.slane %v948, 3
      %v2994 = vor.u32 %v2992, %v2993
      %v2995 = vsel %vm2928, %v2990, %v2994
      %v2996 = vrot.slane %v2078, 2
      %v2997 = vrot.slane %v2081, 3
      %v2998 = vor.u32 %v2996, %v2997
      %v2999 = vsel %vm2928, %v2994, %v2998
      %v3001 = vshrl.u32 %v793, 16
      %v3003 = vrot.slane %v3001, 2
      %v3004 = vshll.u32 %v793, 16
      %v3006 = vrot.slane %v3004, 3
      %v3007 = vor.u32 %v3003, %v3006
      %v3008 = vsel %vm2928, %v2998, %v3007
      %v3013 = vunpack.c.l.b16 %v2924
      %v3014 = vunpack.c.l.b16 %v2925
      %v3015 = vunpack.c.l.b16 %v2926
      %v3016 = vunpack.c.l.b16 %v2927
      %v3017 = vpack.c.b16 %v3014, %v3013
      %v3018 = vpack.c.b16 %v3016, %v3015
      %v3022 = vsel %vm964, %v2935, 0
      %v3025 = vsel %vm964, %v2939, 0
      %v3028 = vsel %vm964, %v2943, 0
      %v3031 = vsel %vm964, %v2947, 0
      %v3034 = vsel %vm964, %v2951, 0
      %v3037 = vsel %vm964, %v2955, 0
      %v3040 = vsel %vm964, %v2959, 0
      %v3043 = vsel %vm964, %v2963, 0
      %v3046 = vsel %vm964, %v2967, 0
      %v3049 = vsel %vm964, %v2971, 0
      %v3052 = vsel %vm964, %v2975, 0
      %v3055 = vsel %vm964, %v2979, 0
      %v3058 = vsel %vm964, %v2983, 0
      %v3061 = vsel %vm964, %v2987, 0
      %v3064 = vsel %vm964, %v2991, 0
      %v3067 = vsel %vm964, %v2995, 0
      %v3070 = vsel %vm964, %v2999, 0
      %v3073 = vsel %vm964, %v3008, 0
      %3075 = vmatprep.subr.bf16.mxu0 0
      %3076 = vmatpush1.bf16.msra.mxu0 %v3017
      %3077 = vmatprep.subr.bf16.mxu0 0
      %3078 = vmatpush1.bf16.msra.mxu0 %v3018
      %3079 = vmatprep.subr.bf16.mxu0 0
      %3080 = vmatpush1.bf16.msra.mxu0 0
      %3081 = vmatprep.subr.bf16.mxu0 0
      %3082 = vmatpush1.bf16.msra.mxu0 0
      %3083 = vmatprep.subr.bf16.mxu0 0
      %3084 = vmatpush1.bf16.msra.mxu0 0
      %3085 = vmatprep.subr.bf16.mxu0 0
      %3086 = vmatpush1.bf16.msra.mxu0 0
      %3087 = vmatprep.subr.bf16.mxu0 0
      %3088 = vmatpush1.bf16.msra.mxu0 0
      %3089 = vmatprep.subr.bf16.mxu0 0
      %3090 = vmatpush1.bf16.msra.mxu0 0
      %3091 = vmatprep.subr.bf16.mxu0 0
      %3092 = vmatpush1.bf16.msra.mxu0 0
      %3093 = vmatprep.subr.bf16.mxu0 0
      %3094 = vmatpush1.bf16.msra.mxu0 0
      %3095 = vmatprep.subr.bf16.mxu0 0
      %3096 = vmatpush1.bf16.msra.mxu0 0
      %3097 = vmatprep.subr.bf16.mxu0 0
      %3098 = vmatpush1.bf16.msra.mxu0 0
      %3099 = vmatprep.subr.bf16.mxu0 0
      %3100 = vmatpush1.bf16.msra.mxu0 0
      %3101 = vmatprep.subr.bf16.mxu0 0
      %3102 = vmatpush1.bf16.msra.mxu0 0
      %3103 = vmatprep.subr.bf16.mxu0 0
      %3104 = vmatpush1.bf16.msra.mxu0 0
      %3105 = vmatprep.subr.bf16.mxu0 0
      %3106 = vmatpush1.bf16.msra.mxu0 0
      %3107 = vmatprep.mubr.bf16.mxu0 0
      %3108 = vmatmul.mubr.bf16.gmra.mrb[0].mxu0 %v3022
      %v3109 = vpop.f32.mrb[0].mxu0
      %v3110 = vadd.f32 0.0, %v3109
      %v3111 = vpop.f32.mrb[0].mxu0
      %v3112 = vpop.f32.mrb[0].mxu0
      %v3113 = vadd.f32 0.0, %v3112
      %v3114 = vpop.f32.mrb[0].mxu0
      %3115 = vmatprep.mubr.bf16.mxu0 0
      %3116 = vmatmul.mubr.bf16.gmra.mrb[0].mxu0 %v3025
      %v3117 = vpop.f32.mrb[0].mxu0
      %v3118 = vadd.f32 0.0, %v3117
      %v3119 = vpop.f32.mrb[0].mxu0
      %v3120 = vpop.f32.mrb[0].mxu0
      %v3121 = vadd.f32 0.0, %v3120
      %v3122 = vpop.f32.mrb[0].mxu0
      %3123 = vmatprep.mubr.bf16.mxu0 0
      %3124 = vmatmul.mubr.bf16.gmra.mrb[0].mxu0 %v3028
      %v3125 = vpop.f32.mrb[0].mxu0
      %v3126 = vadd.f32 0.0, %v3125
      %v3127 = vpop.f32.mrb[0].mxu0
      %v3128 = vpop.f32.mrb[0].mxu0
      %v3129 = vadd.f32 0.0, %v3128
      %v3130 = vpop.f32.mrb[0].mxu0
      %3131 = vmatprep.mubr.bf16.mxu0 0
      %3132 = vmatmul.mubr.bf16.gmra.mrb[0].mxu0 %v3031
      %v3133 = vpop.f32.mrb[0].mxu0
      %v3134 = vadd.f32 0.0, %v3133
      %v3135 = vpop.f32.mrb[0].mxu0
      %v3136 = vpop.f32.mrb[0].mxu0
      %v3137 = vadd.f32 0.0, %v3136
      %v3138 = vpop.f32.mrb[0].mxu0
      %3139 = vmatprep.mubr.bf16.mxu0 0
      %3140 = vmatmul.mubr.bf16.gmra.mrb[0].mxu0 %v3034
      %v3141 = vpop.f32.mrb[0].mxu0
      %v3142 = vadd.f32 0.0, %v3141
      %v3143 = vpop.f32.mrb[0].mxu0
      %v3144 = vpop.f32.mrb[0].mxu0
      %v3145 = vadd.f32 0.0, %v3144
      %v3146 = vpop.f32.mrb[0].mxu0
      %3147 = vmatprep.mubr.bf16.mxu0 0
      %3148 = vmatmul.mubr.bf16.gmra.mrb[0].mxu0 %v3037
      %v3149 = vpop.f32.mrb[0].mxu0
      %v3150 = vadd.f32 0.0, %v3149
      %v3151 = vpop.f32.mrb[0].mxu0
      %v3152 = vpop.f32.mrb[0].mxu0
      %v3153 = vadd.f32 0.0, %v3152
      %v3154 = vpop.f32.mrb[0].mxu0
      %3155 = vmatprep.mubr.bf16.mxu0 0
      %3156 = vmatmul.mubr.bf16.gmra.mrb[0].mxu0 %v3040
      %v3157 = vpop.f32.mrb[0].mxu0
      %v3158 = vadd.f32 0.0, %v3157
      %v3159 = vpop.f32.mrb[0].mxu0
      %v3160 = vpop.f32.mrb[0].mxu0
      %v3161 = vadd.f32 0.0, %v3160
      %v3162 = vpop.f32.mrb[0].mxu0
      %3163 = vmatprep.mubr.bf16.mxu0 0
      %3164 = vmatmul.mubr.bf16.gmra.mrb[0].mxu0 %v3043
      %v3165 = vpop.f32.mrb[0].mxu0
      %v3166 = vadd.f32 0.0, %v3165
      %v3167 = vpop.f32.mrb[0].mxu0
      %v3168 = vpop.f32.mrb[0].mxu0
      %v3169 = vadd.f32 0.0, %v3168
      %v3170 = vpop.f32.mrb[0].mxu0
      %3171 = vmatprep.mubr.bf16.mxu0 0
      %3172 = vmatmul.mubr.bf16.gmra.mrb[0].mxu0 %v3046
      %v3173 = vpop.f32.mrb[0].mxu0
      %v3174 = vadd.f32 0.0, %v3173
      %v3175 = vpop.f32.mrb[0].mxu0
      %v3176 = vpop.f32.mrb[0].mxu0
      %v3177 = vadd.f32 0.0, %v3176
      %v3178 = vpop.f32.mrb[0].mxu0
      %3179 = vmatprep.mubr.bf16.mxu0 0
      %3180 = vmatmul.mubr.bf16.gmra.mrb[0].mxu0 %v3049
      %v3181 = vpop.f32.mrb[0].mxu0
      %v3182 = vadd.f32 0.0, %v3181
      %v3183 = vpop.f32.mrb[0].mxu0
      %v3184 = vpop.f32.mrb[0].mxu0
      %v3185 = vadd.f32 0.0, %v3184
      %v3186 = vpop.f32.mrb[0].mxu0
      %3187 = vmatprep.mubr.bf16.mxu0 0
      %3188 = vmatmul.mubr.bf16.gmra.mrb[0].mxu0 %v3052
      %v3189 = vpop.f32.mrb[0].mxu0
      %v3190 = vadd.f32 0.0, %v3189
      %v3191 = vpop.f32.mrb[0].mxu0
      %v3192 = vpop.f32.mrb[0].mxu0
      %v3193 = vadd.f32 0.0, %v3192
      %v3194 = vpop.f32.mrb[0].mxu0
      %3195 = vmatprep.mubr.bf16.mxu0 0
      %3196 = vmatmul.mubr.bf16.gmra.mrb[0].mxu0 %v3055
      %v3197 = vpop.f32.mrb[0].mxu0
      %v3198 = vadd.f32 0.0, %v3197
      %v3199 = vpop.f32.mrb[0].mxu0
      %v3200 = vpop.f32.mrb[0].mxu0
      %v3201 = vadd.f32 0.0, %v3200
      %v3202 = vpop.f32.mrb[0].mxu0
      %3203 = vmatprep.mubr.bf16.mxu0 0
      %3204 = vmatmul.mubr.bf16.gmra.mrb[0].mxu0 %v3058
      %v3205 = vpop.f32.mrb[0].mxu0
      %v3206 = vadd.f32 0.0, %v3205
      %v3207 = vpop.f32.mrb[0].mxu0
      %v3208 = vpop.f32.mrb[0].mxu0
      %v3209 = vadd.f32 0.0, %v3208
      %v3210 = vpop.f32.mrb[0].mxu0
      %3211 = vmatprep.mubr.bf16.mxu0 0
      %3212 = vmatmul.mubr.bf16.gmra.mrb[0].mxu0 %v3061
      %v3213 = vpop.f32.mrb[0].mxu0
      %v3214 = vadd.f32 0.0, %v3213
      %v3215 = vpop.f32.mrb[0].mxu0
      %v3216 = vpop.f32.mrb[0].mxu0
      %v3217 = vadd.f32 0.0, %v3216
      %v3218 = vpop.f32.mrb[0].mxu0
      %3219 = vmatprep.mubr.bf16.mxu0 0
      %3220 = vmatmul.mubr.bf16.gmra.mrb[0].mxu0 %v3064
      %v3221 = vpop.f32.mrb[0].mxu0
      %v3222 = vadd.f32 0.0, %v3221
      %v3223 = vpop.f32.mrb[0].mxu0
      %v3224 = vpop.f32.mrb[0].mxu0
      %v3225 = vadd.f32 0.0, %v3224
      %v3226 = vpop.f32.mrb[0].mxu0
      %3227 = vmatprep.mubr.bf16.mxu0 0
      %3228 = vmatmul.mubr.bf16.gmra.mrb[0].mxu0 %v3067
      %v3229 = vpop.f32.mrb[0].mxu0
      %v3230 = vadd.f32 0.0, %v3229
      %v3231 = vpop.f32.mrb[0].mxu0
      %v3232 = vpop.f32.mrb[0].mxu0
      %v3233 = vadd.f32 0.0, %v3232
      %v3234 = vpop.f32.mrb[0].mxu0
      %3235 = vmatprep.mubr.bf16.mxu0 0
      %3236 = vmatmul.mubr.bf16.gmra.mrb[0].mxu0 %v3070
      %v3237 = vpop.f32.mrb[0].mxu0
      %v3238 = vadd.f32 0.0, %v3237
      %v3239 = vpop.f32.mrb[0].mxu0
      %v3240 = vpop.f32.mrb[0].mxu0
      %v3241 = vadd.f32 0.0, %v3240
      %v3242 = vpop.f32.mrb[0].mxu0
      %3243 = vmatprep.mubr.bf16.mxu0 0
      %3244 = vmatmul.mubr.bf16.gmra.mrb[0].mxu0 %v3073
      %v3245 = vpop.f32.mrb[0].mxu0
      %v3246 = vadd.f32 0.0, %v3245
      %v3247 = vpop.f32.mrb[0].mxu0
      %v3248 = vpop.f32.mrb[0].mxu0
      %v3249 = vadd.f32 0.0, %v3248
      %v3250 = vpop.f32.mrb[0].mxu0
      %3251 = vdwg.mxu0
      %v3252 = vadd.f32 %v2887, %v3110
      %v3253 = vadd.f32 %v2888, %v3113
      %v3254 = vadd.f32 %v2889, %v3118
      %v3255 = vadd.f32 %v2890, %v3121
      %v3256 = vadd.f32 %v2891, %v3126
      %v3257 = vadd.f32 %v2892, %v3129
      %v3258 = vadd.f32 %v2893, %v3134
      %v3259 = vadd.f32 %v2894, %v3137
      %v3260 = vadd.f32 %v2895, %v3142
      %v3261 = vadd.f32 %v2896, %v3145
      %v3262 = vadd.f32 %v2897, %v3150
      %v3263 = vadd.f32 %v2898, %v3153
      %v3264 = vadd.f32 %v2899, %v3158
      %v3265 = vadd.f32 %v2900, %v3161
      %v3266 = vadd.f32 %v2901, %v3166
      %v3267 = vadd.f32 %v2902, %v3169
      %v3268 = vadd.f32 %v2903, %v3174
      %v3269 = vadd.f32 %v2904, %v3177
      %v3270 = vadd.f32 %v2905, %v3182
      %v3271 = vadd.f32 %v2906, %v3185
      %v3272 = vadd.f32 %v2907, %v3190
      %v3273 = vadd.f32 %v2908, %v3193
      %v3274 = vadd.f32 %v2909, %v3198
      %v3275 = vadd.f32 %v2910, %v3201
      %v3276 = vadd.f32 %v2911, %v3206
      %v3277 = vadd.f32 %v2912, %v3209
      %v3278 = vadd.f32 %v2913, %v3214
      %v3279 = vadd.f32 %v2914, %v3217
      %v3280 = vadd.f32 %v2915, %v3222
      %v3281 = vadd.f32 %v2916, %v3225
      %v3282 = vadd.f32 %v2917, %v3230
      %v3283 = vadd.f32 %v2918, %v3233
      %v3284 = vadd.f32 %v2919, %v3238
      %v3285 = vadd.f32 %v2920, %v3241
      %v3286 = vadd.f32 %v2921, %v3246
      %v3287 = vadd.f32 %v2922, %v3249
      %s3288 = scalar_lea.vmem %s1, 128
      %v3289 = vld [vmem:[%s3288] sm:$0xf]
      %v3290 = vld [vmem:[%s3288 + $0x4] sm:$0xf]
      %v3291 = vld [vmem:[%s3288 + $0x8] sm:$0xf]
      %v3292 = vld [vmem:[%s3288 + $0xc] sm:$0xf]
      %vm3293 = vcmask 1044480
      %v3294 = vrot.slane %v775, 3
      %v3295 = vrot.slane %v776, 3
      %v3296 = vsel %vm3293, %v3294, %v3295
      %v3297 = vrot.slane %v777, 3
      %v3298 = vsel %vm3293, %v3295, %v3297
      %v3299 = vrot.slane %v778, 3
      %v3300 = vsel %vm3293, %v3297, %v3299
      %v3301 = vrot.slane %v779, 3
      %v3302 = vsel %vm3293, %v3299, %v3301
      %v3303 = vrot.slane %v780, 3
      %v3304 = vsel %vm3293, %v3301, %v3303
      %v3305 = vrot.slane %v781, 3
      %v3306 = vsel %vm3293, %v3303, %v3305
      %v3307 = vrot.slane %v782, 3
      %v3308 = vsel %vm3293, %v3305, %v3307
      %v3309 = vrot.slane %v783, 3
      %v3310 = vsel %vm3293, %v3307, %v3309
      %v3311 = vrot.slane %v784, 3
      %v3312 = vsel %vm3293, %v3309, %v3311
      %v3313 = vrot.slane %v785, 3
      %v3314 = vsel %vm3293, %v3311, %v3313
      %v3315 = vrot.slane %v786, 3
      %v3316 = vsel %vm3293, %v3313, %v3315
      %v3317 = vrot.slane %v787, 3
      %v3318 = vsel %vm3293, %v3315, %v3317
      %v3319 = vrot.slane %v788, 3
      %v3320 = vsel %vm3293, %v3317, %v3319
      %v3321 = vrot.slane %v789, 3
      %v3322 = vsel %vm3293, %v3319, %v3321
      %v3323 = vrot.slane %v790, 3
      %v3324 = vsel %vm3293, %v3321, %v3323
      %v3325 = vrot.slane %v791, 3
      %v3326 = vsel %vm3293, %v3323, %v3325
      %v3327 = vrot.slane %v792, 3
      %v3328 = vsel %vm3293, %v3325, %v3327
      %v3329 = vrot.slane %v793, 3
      %v3330 = vsel %vm3293, %v3327, %v3329
      %v3335 = vunpack.c.l.b16 %v3289
      %v3336 = vunpack.c.l.b16 %v3290
      %v3337 = vunpack.c.l.b16 %v3291
      %v3338 = vunpack.c.l.b16 %v3292
      %v3339 = vpack.c.b16 %v3336, %v3335
      %v3340 = vpack.c.b16 %v3338, %v3337
      %v3344 = vsel %vm964, %v3296, 0
      %v3347 = vsel %vm964, %v3298, 0
      %v3350 = vsel %vm964, %v3300, 0
      %v3353 = vsel %vm964, %v3302, 0
      %v3356 = vsel %vm964, %v3304, 0
      %v3359 = vsel %vm964, %v3306, 0
      %v3362 = vsel %vm964, %v3308, 0
      %v3365 = vsel %vm964, %v3310, 0
      %v3368 = vsel %vm964, %v3312, 0
      %v3371 = vsel %vm964, %v3314, 0
      %v3374 = vsel %vm964, %v3316, 0
      %v3377 = vsel %vm964, %v3318, 0
      %v3380 = vsel %vm964, %v3320, 0
      %v3383 = vsel %vm964, %v3322, 0
      %v3386 = vsel %vm964, %v3324, 0
      %v3389 = vsel %vm964, %v3326, 0
      %v3392 = vsel %vm964, %v3328, 0
      %v3395 = vsel %vm964, %v3330, 0
      %3397 = vmatprep.subr.bf16.mxu0 0
      %3398 = vmatpush1.bf16.msra.mxu0 %v3339
      %3399 = vmatprep.subr.bf16.mxu0 0
      %3400 = vmatpush1.bf16.msra.mxu0 %v3340
      %3401 = vmatprep.subr.bf16.mxu0 0
      %3402 = vmatpush1.bf16.msra.mxu0 0
      %3403 = vmatprep.subr.bf16.mxu0 0
      %3404 = vmatpush1.bf16.msra.mxu0 0
      %3405 = vmatprep.subr.bf16.mxu0 0
      %3406 = vmatpush1.bf16.msra.mxu0 0
      %3407 = vmatprep.subr.bf16.mxu0 0
      %3408 = vmatpush1.bf16.msra.mxu0 0
      %3409 = vmatprep.subr.bf16.mxu0 0
      %3410 = vmatpush1.bf16.msra.mxu0 0
      %3411 = vmatprep.subr.bf16.mxu0 0
      %3412 = vmatpush1.bf16.msra.mxu0 0
      %3413 = vmatprep.subr.bf16.mxu0 0
      %3414 = vmatpush1.bf16.msra.mxu0 0
      %3415 = vmatprep.subr.bf16.mxu0 0
      %3416 = vmatpush1.bf16.msra.mxu0 0
      %3417 = vmatprep.subr.bf16.mxu0 0
      %3418 = vmatpush1.bf16.msra.mxu0 0
      %3419 = vmatprep.subr.bf16.mxu0 0
      %3420 = vmatpush1.bf16.msra.mxu0 0
      %3421 = vmatprep.subr.bf16.mxu0 0
      %3422 = vmatpush1.bf16.msra.mxu0 0
      %3423 = vmatprep.subr.bf16.mxu0 0
      %3424 = vmatpush1.bf16.msra.mxu0 0
      %3425 = vmatprep.subr.bf16.mxu0 0
      %3426 = vmatpush1.bf16.msra.mxu0 0
      %3427 = vmatprep.subr.bf16.mxu0 0
      %3428 = vmatpush1.bf16.msra.mxu0 0
      %3429 = vmatprep.mubr.bf16.mxu0 0
      %3430 = vmatmul.mubr.bf16.gmra.mrb[0].mxu0 %v3344
      %v3431 = vpop.f32.mrb[0].mxu0
      %v3432 = vadd.f32 0.0, %v3431
      %v3433 = vpop.f32.mrb[0].mxu0
      %v3434 = vpop.f32.mrb[0].mxu0
      %v3435 = vadd.f32 0.0, %v3434
      %v3436 = vpop.f32.mrb[0].mxu0
      %3437 = vmatprep.mubr.bf16.mxu0 0
      %3438 = vmatmul.mubr.bf16.gmra.mrb[0].mxu0 %v3347
      %v3439 = vpop.f32.mrb[0].mxu0
      %v3440 = vadd.f32 0.0, %v3439
      %v3441 = vpop.f32.mrb[0].mxu0
      %v3442 = vpop.f32.mrb[0].mxu0
      %v3443 = vadd.f32 0.0, %v3442
      %v3444 = vpop.f32.mrb[0].mxu0
      %3445 = vmatprep.mubr.bf16.mxu0 0
      %3446 = vmatmul.mubr.bf16.gmra.mrb[0].mxu0 %v3350
      %v3447 = vpop.f32.mrb[0].mxu0
      %v3448 = vadd.f32 0.0, %v3447
      %v3449 = vpop.f32.mrb[0].mxu0
      %v3450 = vpop.f32.mrb[0].mxu0
      %v3451 = vadd.f32 0.0, %v3450
      %v3452 = vpop.f32.mrb[0].mxu0
      %3453 = vmatprep.mubr.bf16.mxu0 0
      %3454 = vmatmul.mubr.bf16.gmra.mrb[0].mxu0 %v3353
      %v3455 = vpop.f32.mrb[0].mxu0
      %v3456 = vadd.f32 0.0, %v3455
      %v3457 = vpop.f32.mrb[0].mxu0
      %v3458 = vpop.f32.mrb[0].mxu0
      %v3459 = vadd.f32 0.0, %v3458
      %v3460 = vpop.f32.mrb[0].mxu0
      %3461 = vmatprep.mubr.bf16.mxu0 0
      %3462 = vmatmul.mubr.bf16.gmra.mrb[0].mxu0 %v3356
      %v3463 = vpop.f32.mrb[0].mxu0
      %v3464 = vadd.f32 0.0, %v3463
      %v3465 = vpop.f32.mrb[0].mxu0
      %v3466 = vpop.f32.mrb[0].mxu0
      %v3467 = vadd.f32 0.0, %v3466
      %v3468 = vpop.f32.mrb[0].mxu0
      %3469 = vmatprep.mubr.bf16.mxu0 0
      %3470 = vmatmul.mubr.bf16.gmra.mrb[0].mxu0 %v3359
      %v3471 = vpop.f32.mrb[0].mxu0
      %v3472 = vadd.f32 0.0, %v3471
      %v3473 = vpop.f32.mrb[0].mxu0
      %v3474 = vpop.f32.mrb[0].mxu0
      %v3475 = vadd.f32 0.0, %v3474
      %v3476 = vpop.f32.mrb[0].mxu0
      %3477 = vmatprep.mubr.bf16.mxu0 0
      %3478 = vmatmul.mubr.bf16.gmra.mrb[0].mxu0 %v3362
      %v3479 = vpop.f32.mrb[0].mxu0
      %v3480 = vadd.f32 0.0, %v3479
      %v3481 = vpop.f32.mrb[0].mxu0
      %v3482 = vpop.f32.mrb[0].mxu0
      %v3483 = vadd.f32 0.0, %v3482
      %v3484 = vpop.f32.mrb[0].mxu0
      %3485 = vmatprep.mubr.bf16.mxu0 0
      %3486 = vmatmul.mubr.bf16.gmra.mrb[0].mxu0 %v3365
      %v3487 = vpop.f32.mrb[0].mxu0
      %v3488 = vadd.f32 0.0, %v3487
      %v3489 = vpop.f32.mrb[0].mxu0
      %v3490 = vpop.f32.mrb[0].mxu0
      %v3491 = vadd.f32 0.0, %v3490
      %v3492 = vpop.f32.mrb[0].mxu0
      %3493 = vmatprep.mubr.bf16.mxu0 0
      %3494 = vmatmul.mubr.bf16.gmra.mrb[0].mxu0 %v3368
      %v3495 = vpop.f32.mrb[0].mxu0
      %v3496 = vadd.f32 0.0, %v3495
      %v3497 = vpop.f32.mrb[0].mxu0
      %v3498 = vpop.f32.mrb[0].mxu0
      %v3499 = vadd.f32 0.0, %v3498
      %v3500 = vpop.f32.mrb[0].mxu0
      %3501 = vmatprep.mubr.bf16.mxu0 0
      %3502 = vmatmul.mubr.bf16.gmra.mrb[0].mxu0 %v3371
      %v3503 = vpop.f32.mrb[0].mxu0
      %v3504 = vadd.f32 0.0, %v3503
      %v3505 = vpop.f32.mrb[0].mxu0
      %v3506 = vpop.f32.mrb[0].mxu0
      %v3507 = vadd.f32 0.0, %v3506
      %v3508 = vpop.f32.mrb[0].mxu0
      %3509 = vmatprep.mubr.bf16.mxu0 0
      %3510 = vmatmul.mubr.bf16.gmra.mrb[0].mxu0 %v3374
      %v3511 = vpop.f32.mrb[0].mxu0
      %v3512 = vadd.f32 0.0, %v3511
      %v3513 = vpop.f32.mrb[0].mxu0
      %v3514 = vpop.f32.mrb[0].mxu0
      %v3515 = vadd.f32 0.0, %v3514
      %v3516 = vpop.f32.mrb[0].mxu0
      %3517 = vmatprep.mubr.bf16.mxu0 0
      %3518 = vmatmul.mubr.bf16.gmra.mrb[0].mxu0 %v3377
      %v3519 = vpop.f32.mrb[0].mxu0
      %v3520 = vadd.f32 0.0, %v3519
      %v3521 = vpop.f32.mrb[0].mxu0
      %v3522 = vpop.f32.mrb[0].mxu0
      %v3523 = vadd.f32 0.0, %v3522
      %v3524 = vpop.f32.mrb[0].mxu0
      %3525 = vmatprep.mubr.bf16.mxu0 0
      %3526 = vmatmul.mubr.bf16.gmra.mrb[0].mxu0 %v3380
      %v3527 = vpop.f32.mrb[0].mxu0
      %v3528 = vadd.f32 0.0, %v3527
      %v3529 = vpop.f32.mrb[0].mxu0
      %v3530 = vpop.f32.mrb[0].mxu0
      %v3531 = vadd.f32 0.0, %v3530
      %v3532 = vpop.f32.mrb[0].mxu0
      %3533 = vmatprep.mubr.bf16.mxu0 0
      %3534 = vmatmul.mubr.bf16.gmra.mrb[0].mxu0 %v3383
      %v3535 = vpop.f32.mrb[0].mxu0
      %v3536 = vadd.f32 0.0, %v3535
      %v3537 = vpop.f32.mrb[0].mxu0
      %v3538 = vpop.f32.mrb[0].mxu0
      %v3539 = vadd.f32 0.0, %v3538
      %v3540 = vpop.f32.mrb[0].mxu0
      %3541 = vmatprep.mubr.bf16.mxu0 0
      %3542 = vmatmul.mubr.bf16.gmra.mrb[0].mxu0 %v3386
      %v3543 = vpop.f32.mrb[0].mxu0
      %v3544 = vadd.f32 0.0, %v3543
      %v3545 = vpop.f32.mrb[0].mxu0
      %v3546 = vpop.f32.mrb[0].mxu0
      %v3547 = vadd.f32 0.0, %v3546
      %v3548 = vpop.f32.mrb[0].mxu0
      %3549 = vmatprep.mubr.bf16.mxu0 0
      %3550 = vmatmul.mubr.bf16.gmra.mrb[0].mxu0 %v3389
      %v3551 = vpop.f32.mrb[0].mxu0
      %v3552 = vadd.f32 0.0, %v3551
      %v3553 = vpop.f32.mrb[0].mxu0
      %v3554 = vpop.f32.mrb[0].mxu0
      %v3555 = vadd.f32 0.0, %v3554
      %v3556 = vpop.f32.mrb[0].mxu0
      %3557 = vmatprep.mubr.bf16.mxu0 0
      %3558 = vmatmul.mubr.bf16.gmra.mrb[0].mxu0 %v3392
      %v3559 = vpop.f32.mrb[0].mxu0
      %v3560 = vadd.f32 0.0, %v3559
      %v3561 = vpop.f32.mrb[0].mxu0
      %v3562 = vpop.f32.mrb[0].mxu0
      %v3563 = vadd.f32 0.0, %v3562
      %v3564 = vpop.f32.mrb[0].mxu0
      %3565 = vmatprep.mubr.bf16.mxu0 0
      %3566 = vmatmul.mubr.bf16.gmra.mrb[0].mxu0 %v3395
      %v3567 = vpop.f32.mrb[0].mxu0
      %v3568 = vadd.f32 0.0, %v3567
      %v3569 = vpop.f32.mrb[0].mxu0
      %v3570 = vpop.f32.mrb[0].mxu0
      %v3571 = vadd.f32 0.0, %v3570
      %v3572 = vpop.f32.mrb[0].mxu0
      %3573 = vdwg.mxu0
      %v3574 = vadd.f32 %v3252, %v3432
      %v3575 = vadd.f32 %v3253, %v3435
      %v3576 = vadd.f32 %v3254, %v3440
      %v3577 = vadd.f32 %v3255, %v3443
      %v3578 = vadd.f32 %v3256, %v3448
      %v3579 = vadd.f32 %v3257, %v3451
      %v3580 = vadd.f32 %v3258, %v3456
      %v3581 = vadd.f32 %v3259, %v3459
      %v3582 = vadd.f32 %v3260, %v3464
      %v3583 = vadd.f32 %v3261, %v3467
      %v3584 = vadd.f32 %v3262, %v3472
      %v3585 = vadd.f32 %v3263, %v3475
      %v3586 = vadd.f32 %v3264, %v3480
      %v3587 = vadd.f32 %v3265, %v3483
      %v3588 = vadd.f32 %v3266, %v3488
      %v3589 = vadd.f32 %v3267, %v3491
      %v3590 = vadd.f32 %v3268, %v3496
      %v3591 = vadd.f32 %v3269, %v3499
      %v3592 = vadd.f32 %v3270, %v3504
      %v3593 = vadd.f32 %v3271, %v3507
      %v3594 = vadd.f32 %v3272, %v3512
      %v3595 = vadd.f32 %v3273, %v3515
      %v3596 = vadd.f32 %v3274, %v3520
      %v3597 = vadd.f32 %v3275, %v3523
      %v3598 = vadd.f32 %v3276, %v3528
      %v3599 = vadd.f32 %v3277, %v3531
      %v3600 = vadd.f32 %v3278, %v3536
      %v3601 = vadd.f32 %v3279, %v3539
      %v3602 = vadd.f32 %v3280, %v3544
      %v3603 = vadd.f32 %v3281, %v3547
      %v3604 = vadd.f32 %v3282, %v3552
      %v3605 = vadd.f32 %v3283, %v3555
      %v3606 = vadd.f32 %v3284, %v3560
      %v3607 = vadd.f32 %v3285, %v3563
      %v3608 = vadd.f32 %v3286, %v3568
      %v3609 = vadd.f32 %v3287, %v3571
      %vm3610 = vcmask 1044480
      %v3611 = vrot.slane %v534, 3
      %v3612 = vrot.slane %v539, 3
      %v3613 = vsel %vm3610, %v3611, %v3612
      %v3614 = vrot.slane %v544, 3
      %v3615 = vsel %vm3610, %v3612, %v3614
      %v3616 = vrot.slane %v549, 3
      %v3617 = vsel %vm3610, %v3614, %v3616
      %v3618 = vrot.slane %v554, 3
      %v3619 = vsel %vm3610, %v3616, %v3618
      %v3620 = vrot.slane %v559, 3
      %v3621 = vsel %vm3610, %v3618, %v3620
      %v3622 = vrot.slane %v564, 3
      %v3623 = vsel %vm3610, %v3620, %v3622
      %v3624 = vrot.slane %v569, 3
      %v3625 = vsel %vm3610, %v3622, %v3624
      %v3626 = vrot.slane %v574, 3
      %v3627 = vsel %vm3610, %v3624, %v3626
      %v3628 = vrot.slane %v579, 3
      %v3629 = vsel %vm3610, %v3626, %v3628
      %v3630 = vrot.slane %v584, 3
      %v3631 = vsel %vm3610, %v3628, %v3630
      %v3632 = vrot.slane %v589, 3
      %v3633 = vsel %vm3610, %v3630, %v3632
      %v3634 = vrot.slane %v594, 3
      %v3635 = vsel %vm3610, %v3632, %v3634
      %v3636 = vrot.slane %v599, 3
      %v3637 = vsel %vm3610, %v3634, %v3636
      %v3638 = vrot.slane %v604, 3
      %v3639 = vsel %vm3610, %v3636, %v3638
      %v3640 = vrot.slane %v609, 3
      %v3641 = vsel %vm3610, %v3638, %v3640
      %v3642 = vrot.slane %v614, 3
      %v3643 = vsel %vm3610, %v3640, %v3642
      %v3644 = vrot.slane %v619, 3
      %v3645 = vsel %vm3610, %v3642, %v3644
      %v3646 = vrot.slane %v624, 3
      %v3647 = vsel %vm3610, %v3644, %v3646
      %v3648 = vrot.slane %v629, 3
      %v3649 = vsel %vm3610, %v3646, %v3648
      %v3650 = vrot.slane %v634, 3
      %v3651 = vsel %vm3610, %v3648, %v3650
      %v3652 = vrot.slane %v639, 3
      %v3653 = vsel %vm3610, %v3650, %v3652
      %v3654 = vrot.slane %v644, 3
      %v3655 = vsel %vm3610, %v3652, %v3654
      %v3656 = vrot.slane %v649, 3
      %v3657 = vsel %vm3610, %v3654, %v3656
      %v3658 = vrot.slane %v654, 3
      %v3659 = vsel %vm3610, %v3656, %v3658
      %v3660 = vrot.slane %v659, 3
      %v3661 = vsel %vm3610, %v3658, %v3660
      %v3662 = vrot.slane %v664, 3
      %v3663 = vsel %vm3610, %v3660, %v3662
      %v3664 = vrot.slane %v669, 3
      %v3665 = vsel %vm3610, %v3662, %v3664
      %v3666 = vrot.slane %v674, 3
      %v3667 = vsel %vm3610, %v3664, %v3666
      %v3668 = vrot.slane %v679, 3
      %v3669 = vsel %vm3610, %v3666, %v3668
      %v3670 = vrot.slane %v684, 3
      %v3671 = vsel %vm3610, %v3668, %v3670
      %v3672 = vrot.slane %v689, 3
      %v3673 = vsel %vm3610, %v3670, %v3672
      %v3674 = vrot.slane %v694, 3
      %v3675 = vsel %vm3610, %v3672, %v3674
      %v3676 = vrot.slane %v699, 3
      %v3677 = vsel %vm3610, %v3674, %v3676
      %v3678 = vrot.slane %v704, 3
      %v3679 = vsel %vm3610, %v3676, %v3678
      %v3680 = vrot.slane %v709, 3
      %v3681 = vsel %vm3610, %v3678, %v3680
      %v3682 = vrot.slane %v714, 3
      %v3683 = vsel %vm3610, %v3680, %v3682
      %v3720 = vmul.f32 %v3574, %v3613
      %v3721 = vmul.f32 %v3575, %v3615
      %v3722 = vmul.f32 %v3576, %v3617
      %v3723 = vmul.f32 %v3577, %v3619
      %v3724 = vmul.f32 %v3578, %v3621
      %v3725 = vmul.f32 %v3579, %v3623
      %v3726 = vmul.f32 %v3580, %v3625
      %v3727 = vmul.f32 %v3581, %v3627
      %v3728 = vmul.f32 %v3582, %v3629
      %v3729 = vmul.f32 %v3583, %v3631
      %v3730 = vmul.f32 %v3584, %v3633
      %v3731 = vmul.f32 %v3585, %v3635
      %v3732 = vmul.f32 %v3586, %v3637
      %v3733 = vmul.f32 %v3587, %v3639
      %v3734 = vmul.f32 %v3588, %v3641
      %v3735 = vmul.f32 %v3589, %v3643
      %v3736 = vmul.f32 %v3590, %v3645
      %v3737 = vmul.f32 %v3591, %v3647
      %v3738 = vmul.f32 %v3592, %v3649
      %v3739 = vmul.f32 %v3593, %v3651
      %v3740 = vmul.f32 %v3594, %v3653
      %v3741 = vmul.f32 %v3595, %v3655
      %v3742 = vmul.f32 %v3596, %v3657
      %v3743 = vmul.f32 %v3597, %v3659
      %v3744 = vmul.f32 %v3598, %v3661
      %v3745 = vmul.f32 %v3599, %v3663
      %v3746 = vmul.f32 %v3600, %v3665
      %v3747 = vmul.f32 %v3601, %v3667
      %v3748 = vmul.f32 %v3602, %v3669
      %v3749 = vmul.f32 %v3603, %v3671
      %v3750 = vmul.f32 %v3604, %v3673
      %v3751 = vmul.f32 %v3605, %v3675
      %v3752 = vmul.f32 %v3606, %v3677
      %v3753 = vmul.f32 %v3607, %v3679
      %v3754 = vmul.f32 %v3608, %v3681
      %v3755 = vmul.f32 %v3609, %v3683
      %v3756 = vsel %vm964, %v3720, 0.0
      %v3757 = vsel %vm964, %v3721, 0.0
      %v3758 = vadd.f32 %v3756, %v3757
      %v3759 = vsel %vm964, %v3722, 0.0
      %v3760 = vadd.f32 %v3758, %v3759
      %v3761 = vsel %vm964, %v3723, 0.0
      %v3762 = vadd.f32 %v3760, %v3761
      %v3763 = vsel %vm964, %v3724, 0.0
      %v3764 = vadd.f32 %v3762, %v3763
      %v3765 = vsel %vm964, %v3725, 0.0
      %v3766 = vadd.f32 %v3764, %v3765
      %v3767 = vsel %vm964, %v3726, 0.0
      %v3768 = vadd.f32 %v3766, %v3767
      %v3769 = vsel %vm964, %v3727, 0.0
      %v3770 = vadd.f32 %v3768, %v3769
      %v3771 = vsel %vm964, %v3728, 0.0
      %v3772 = vadd.f32 %v3770, %v3771
      %v3773 = vsel %vm964, %v3729, 0.0
      %v3774 = vadd.f32 %v3772, %v3773
      %v3775 = vsel %vm964, %v3730, 0.0
      %v3776 = vadd.f32 %v3774, %v3775
      %v3777 = vsel %vm964, %v3731, 0.0
      %v3778 = vadd.f32 %v3776, %v3777
      %v3779 = vsel %vm964, %v3732, 0.0
      %v3780 = vadd.f32 %v3778, %v3779
      %v3781 = vsel %vm964, %v3733, 0.0
      %v3782 = vadd.f32 %v3780, %v3781
      %v3783 = vsel %vm964, %v3734, 0.0
      %v3784 = vadd.f32 %v3782, %v3783
      %v3785 = vsel %vm964, %v3735, 0.0
      %v3786 = vadd.f32 %v3784, %v3785
      %v3787 = vsel %vm964, %v3736, 0.0
      %v3788 = vadd.f32 %v3786, %v3787
      %v3789 = vsel %vm964, %v3737, 0.0
      %v3790 = vadd.f32 %v3788, %v3789
      %v3791 = vsel %vm964, %v3738, 0.0
      %v3792 = vadd.f32 %v3790, %v3791
      %v3793 = vsel %vm964, %v3739, 0.0
      %v3794 = vadd.f32 %v3792, %v3793
      %v3795 = vsel %vm964, %v3740, 0.0
      %v3796 = vadd.f32 %v3794, %v3795
      %v3797 = vsel %vm964, %v3741, 0.0
      %v3798 = vadd.f32 %v3796, %v3797
      %v3799 = vsel %vm964, %v3742, 0.0
      %v3800 = vadd.f32 %v3798, %v3799
      %v3801 = vsel %vm964, %v3743, 0.0
      %v3802 = vadd.f32 %v3800, %v3801
      %v3803 = vsel %vm964, %v3744, 0.0
      %v3804 = vadd.f32 %v3802, %v3803
      %v3805 = vsel %vm964, %v3745, 0.0
      %v3806 = vadd.f32 %v3804, %v3805
      %v3807 = vsel %vm964, %v3746, 0.0
      %v3808 = vadd.f32 %v3806, %v3807
      %v3809 = vsel %vm964, %v3747, 0.0
      %v3810 = vadd.f32 %v3808, %v3809
      %v3811 = vsel %vm964, %v3748, 0.0
      %v3812 = vadd.f32 %v3810, %v3811
      %v3813 = vsel %vm964, %v3749, 0.0
      %v3814 = vadd.f32 %v3812, %v3813
      %v3815 = vsel %vm964, %v3750, 0.0
      %v3816 = vadd.f32 %v3814, %v3815
      %v3817 = vsel %vm964, %v3751, 0.0
      %v3818 = vadd.f32 %v3816, %v3817
      %v3819 = vsel %vm964, %v3752, 0.0
      %v3820 = vadd.f32 %v3818, %v3819
      %v3821 = vsel %vm964, %v3753, 0.0
      %v3822 = vadd.f32 %v3820, %v3821
      %v3823 = vsel %vm964, %v3754, 0.0
      %v3824 = vadd.f32 %v3822, %v3823
      %v3825 = vsel %vm964, %v3755, 0.0
      %v3826 = vadd.f32 %v3824, %v3825
      %v3827 = vrot.slane %v3826, 4
      %v3828 = vadd.f32 %v3826, %v3827
      %v3829 = vrot.slane %v3828, 2
      %v3830 = vadd.f32 %v3828, %v3829
      %v3831 = vrot.slane %v3830, 1
      %v3832 = vadd.f32 %v3830, %v3831
      %vm3833 = vcmask 253952
      %3834 = vst.msk [vmem:[%s292] sm:$0x1] %vm3833, %v3832
      %v3835 = vmul.f32 %v3720, %v3720
      %v3836 = vmul.f32 %v3721, %v3721
      %v3837 = vmul.f32 %v3722, %v3722
      %v3838 = vmul.f32 %v3723, %v3723
      %v3839 = vmul.f32 %v3724, %v3724
      %v3840 = vmul.f32 %v3725, %v3725
      %v3841 = vmul.f32 %v3726, %v3726
      %v3842 = vmul.f32 %v3727, %v3727
      %v3843 = vmul.f32 %v3728, %v3728
      %v3844 = vmul.f32 %v3729, %v3729
      %v3845 = vmul.f32 %v3730, %v3730
      %v3846 = vmul.f32 %v3731, %v3731
      %v3847 = vmul.f32 %v3732, %v3732
      %v3848 = vmul.f32 %v3733, %v3733
      %v3849 = vmul.f32 %v3734, %v3734
      %v3850 = vmul.f32 %v3735, %v3735
      %v3851 = vmul.f32 %v3736, %v3736
      %v3852 = vmul.f32 %v3737, %v3737
      %v3853 = vmul.f32 %v3738, %v3738
      %v3854 = vmul.f32 %v3739, %v3739
      %v3855 = vmul.f32 %v3740, %v3740
      %v3856 = vmul.f32 %v3741, %v3741
      %v3857 = vmul.f32 %v3742, %v3742
      %v3858 = vmul.f32 %v3743, %v3743
      %v3859 = vmul.f32 %v3744, %v3744
      %v3860 = vmul.f32 %v3745, %v3745
      %v3861 = vmul.f32 %v3746, %v3746
      %v3862 = vmul.f32 %v3747, %v3747
      %v3863 = vmul.f32 %v3748, %v3748
      %v3864 = vmul.f32 %v3749, %v3749
      %v3865 = vmul.f32 %v3750, %v3750
      %v3866 = vmul.f32 %v3751, %v3751
      %v3867 = vmul.f32 %v3752, %v3752
      %v3868 = vmul.f32 %v3753, %v3753
      %v3869 = vmul.f32 %v3754, %v3754
      %v3870 = vmul.f32 %v3755, %v3755
      %v3871 = vsel %vm964, %v3835, 0.0
      %v3872 = vsel %vm964, %v3836, 0.0
      %v3873 = vadd.f32 %v3871, %v3872
      %v3874 = vsel %vm964, %v3837, 0.0
      %v3875 = vadd.f32 %v3873, %v3874
      %v3876 = vsel %vm964, %v3838, 0.0
      %v3877 = vadd.f32 %v3875, %v3876
      %v3878 = vsel %vm964, %v3839, 0.0
      %v3879 = vadd.f32 %v3877, %v3878
      %v3880 = vsel %vm964, %v3840, 0.0
      %v3881 = vadd.f32 %v3879, %v3880
      %v3882 = vsel %vm964, %v3841, 0.0
      %v3883 = vadd.f32 %v3881, %v3882
      %v3884 = vsel %vm964, %v3842, 0.0
      %v3885 = vadd.f32 %v3883, %v3884
      %v3886 = vsel %vm964, %v3843, 0.0
      %v3887 = vadd.f32 %v3885, %v3886
      %v3888 = vsel %vm964, %v3844, 0.0
      %v3889 = vadd.f32 %v3887, %v3888
      %v3890 = vsel %vm964, %v3845, 0.0
      %v3891 = vadd.f32 %v3889, %v3890
      %v3892 = vsel %vm964, %v3846, 0.0
      %v3893 = vadd.f32 %v3891, %v3892
      %v3894 = vsel %vm964, %v3847, 0.0
      %v3895 = vadd.f32 %v3893, %v3894
      %v3896 = vsel %vm964, %v3848, 0.0
      %v3897 = vadd.f32 %v3895, %v3896
      %v3898 = vsel %vm964, %v3849, 0.0
      %v3899 = vadd.f32 %v3897, %v3898
      %v3900 = vsel %vm964, %v3850, 0.0
      %v3901 = vadd.f32 %v3899, %v3900
      %v3902 = vsel %vm964, %v3851, 0.0
      %v3903 = vadd.f32 %v3901, %v3902
      %v3904 = vsel %vm964, %v3852, 0.0
      %v3905 = vadd.f32 %v3903, %v3904
      %v3906 = vsel %vm964, %v3853, 0.0
      %v3907 = vadd.f32 %v3905, %v3906
      %v3908 = vsel %vm964, %v3854, 0.0
      %v3909 = vadd.f32 %v3907, %v3908
      %v3910 = vsel %vm964, %v3855, 0.0
      %v3911 = vadd.f32 %v3909, %v3910
      %v3912 = vsel %vm964, %v3856, 0.0
      %v3913 = vadd.f32 %v3911, %v3912
      %v3914 = vsel %vm964, %v3857, 0.0
      %v3915 = vadd.f32 %v3913, %v3914
      %v3916 = vsel %vm964, %v3858, 0.0
      %v3917 = vadd.f32 %v3915, %v3916
      %v3918 = vsel %vm964, %v3859, 0.0
      %v3919 = vadd.f32 %v3917, %v3918
      %v3920 = vsel %vm964, %v3860, 0.0
      %v3921 = vadd.f32 %v3919, %v3920
      %v3922 = vsel %vm964, %v3861, 0.0
      %v3923 = vadd.f32 %v3921, %v3922
      %v3924 = vsel %vm964, %v3862, 0.0
      %v3925 = vadd.f32 %v3923, %v3924
      %v3926 = vsel %vm964, %v3863, 0.0
      %v3927 = vadd.f32 %v3925, %v3926
      %v3928 = vsel %vm964, %v3864, 0.0
      %v3929 = vadd.f32 %v3927, %v3928
      %v3930 = vsel %vm964, %v3865, 0.0
      %v3931 = vadd.f32 %v3929, %v3930
      %v3932 = vsel %vm964, %v3866, 0.0
      %v3933 = vadd.f32 %v3931, %v3932
      %v3934 = vsel %vm964, %v3867, 0.0
      %v3935 = vadd.f32 %v3933, %v3934
      %v3936 = vsel %vm964, %v3868, 0.0
      %v3937 = vadd.f32 %v3935, %v3936
      %v3938 = vsel %vm964, %v3869, 0.0
      %v3939 = vadd.f32 %v3937, %v3938
      %v3940 = vsel %vm964, %v3870, 0.0
      %v3941 = vadd.f32 %v3939, %v3940
      %v3942 = vrot.slane %v3941, 4
      %v3943 = vadd.f32 %v3941, %v3942
      %v3944 = vrot.slane %v3943, 2
      %v3945 = vadd.f32 %v3943, %v3944
      %v3946 = vrot.slane %v3945, 1
      %v3947 = vadd.f32 %v3945, %v3946
      %3948 = vst.msk [vmem:[%s295] sm:$0x1] %vm3833, %v3947
      %3949 = vst.msk [vmem:[%s289] sm:$0xff] %vm964, 0.0
      %3950 = vst.msk [vmem:[%s289 + $0x8] sm:$0xff] %vm964, 0.0
      %vm3951 = vcmask 256000
      %3952 = vst.msk [vmem:[%s289 + $0x10] sm:$0x7] %vm3951, 0.0
      %3953 = vst.msk [vmem:[%s289 + $0x13] sm:$0xff] %vm964, %v3720
      %3954 = vst.msk [vmem:[%s289 + $0x1b] sm:$0xff] %vm964, %v3721
      %3955 = vst.msk [vmem:[%s289 + $0x23] sm:$0xff] %vm964, %v3722
      %3956 = vst.msk [vmem:[%s289 + $0x2b] sm:$0xff] %vm964, %v3723
      %3957 = vst.msk [vmem:[%s289 + $0x33] sm:$0xff] %vm964, %v3724
      %3958 = vst.msk [vmem:[%s289 + $0x3b] sm:$0xff] %vm964, %v3725
      %3959 = vst.msk [vmem:[%s289 + $0x43] sm:$0xff] %vm964, %v3726
      %3960 = vst.msk [vmem:[%s289 + $0x4b] sm:$0xff] %vm964, %v3727
      %3961 = vst.msk [vmem:[%s289 + $0x53] sm:$0xff] %vm964, %v3728
      %3962 = vst.msk [vmem:[%s289 + $0x5b] sm:$0xff] %vm964, %v3729
      %3963 = vst.msk [vmem:[%s289 + $0x63] sm:$0xff] %vm964, %v3730
      %3964 = vst.msk [vmem:[%s289 + $0x6b] sm:$0xff] %vm964, %v3731
      %3965 = vst.msk [vmem:[%s289 + $0x73] sm:$0xff] %vm964, %v3732
      %3966 = vst.msk [vmem:[%s289 + $0x7b] sm:$0xff] %vm964, %v3733
      %3967 = vst.msk [vmem:[%s289 + $0x83] sm:$0xff] %vm964, %v3734
      %3968 = vst.msk [vmem:[%s289 + $0x8b] sm:$0xff] %vm964, %v3735
      %3969 = vst.msk [vmem:[%s289 + $0x93] sm:$0xff] %vm964, %v3736
      %3970 = vst.msk [vmem:[%s289 + $0x9b] sm:$0xff] %vm964, %v3737
      %3971 = vst.msk [vmem:[%s289 + $0xa3] sm:$0xff] %vm964, %v3738
      %3972 = vst.msk [vmem:[%s289 + $0xab] sm:$0xff] %vm964, %v3739
      %3973 = vst.msk [vmem:[%s289 + $0xb3] sm:$0xff] %vm964, %v3740
      %3974 = vst.msk [vmem:[%s289 + $0xbb] sm:$0xff] %vm964, %v3741
      %3975 = vst.msk [vmem:[%s289 + $0xc3] sm:$0xff] %vm964, %v3742
      %3976 = vst.msk [vmem:[%s289 + $0xcb] sm:$0xff] %vm964, %v3743
      %3977 = vst.msk [vmem:[%s289 + $0xd3] sm:$0xff] %vm964, %v3744
      %3978 = vst.msk [vmem:[%s289 + $0xdb] sm:$0xff] %vm964, %v3745
      %3979 = vst.msk [vmem:[%s289 + $0xe3] sm:$0xff] %vm964, %v3746
      %3980 = vst.msk [vmem:[%s289 + $0xeb] sm:$0xff] %vm964, %v3747
      %3981 = vst.msk [vmem:[%s289 + $0xf3] sm:$0xff] %vm964, %v3748
      %3982 = vst.msk [vmem:[%s289 + $0xfb] sm:$0xff] %vm964, %v3749
      %3983 = vst.msk [vmem:[%s289 + $0x103] sm:$0xff] %vm964, %v3750
      %3984 = vst.msk [vmem:[%s289 + $0x10b] sm:$0xff] %vm964, %v3751
      %3985 = vst.msk [vmem:[%s289 + $0x113] sm:$0xff] %vm964, %v3752
      %3986 = vst.msk [vmem:[%s289 + $0x11b] sm:$0xff] %vm964, %v3753
      %3987 = vst.msk [vmem:[%s289 + $0x123] sm:$0xff] %vm964, %v3754
      %3988 = vst.msk [vmem:[%s289 + $0x12b] sm:$0xff] %vm964, %v3755
      %3989 = vst.msk [vmem:[%s289 + $0x133] sm:$0xff] %vm964, 0.0
      %3990 = vst.msk [vmem:[%s289 + $0x13b] sm:$0xff] %vm964, 0.0
      %3991 = vst.msk [vmem:[%s289 + $0x143] sm:$0xff] %vm964, 0.0
      %3992 = vst.msk [vmem:[%s289 + $0x14b] sm:$0xff] %vm964, 0.0
      %3993 = vst.msk [vmem:[%s289 + $0x153] sm:$0x7] %vm3951, 0.0
      %p3994 = scmp.lt.s32.totalorder %s19, 1
      %s3995 = scalar_select %p3994, %s19, 1
      %s3996 = smul.addr %s3995, 43
      %s3997 = smul.addr %s3996, 8
      %s3998 = scalar_lea.vmem %s5, %s3997
      %p3999 = scmp.lt.s32.totalorder %s19, 1
      %s4000 = scalar_select %p3999, %s19, 1
      %s4001 = scalar_lea.vmem %s6, %s4000
      %p4002 = scmp.lt.s32.totalorder %s19, 1
      %s4003 = scalar_select %p4002, %s19, 1
      %s4004 = scalar_lea.vmem %s7, %s4003
      // Predicated region
      $region41: #{inconv_forward.4} parent=39 // pred_check
        %p4005 = pneg %p147
      $region42: #{inconv_forward.4} parent=39 // pred_check_branch
        %4007 = sbr.rel (%p4005) target = $region44
      $region43: #{inconv_forward.4} parent=39 // pred_region
        _
      $region44: #{inconv_forward.4} parent=39 // pred_fallthru
        _
      // Predicated region
      $region45: #{inconv_forward.4} parent=39 // pred_check
        %p4008 = pneg %p173
      $region46: #{inconv_forward.4} parent=39 // pred_check_branch
        %4010 = sbr.rel (%p4008) target = $region48
      $region47: #{inconv_forward.4} parent=39 // pred_region
        _
      $region48: #{inconv_forward.4} parent=39 // pred_fallthru
        _
      // Predicated region
      $region49: #{inconv_forward.4} parent=39 // pred_check
        %p4011 = pneg %p199
      $region50: #{inconv_forward.4} parent=39 // pred_check_branch
        %4013 = sbr.rel (%p4011) target = $region52
      $region51: #{inconv_forward.4} parent=39 // pred_region
        _
      $region52: #{inconv_forward.4} parent=39 // pred_fallthru
        _
    $region40: #{inconv_forward.4} parent=5 // pred_fallthru
      _
    %p4014 = scmp.le.s32.totalorder 2, %s14
    // Predicated region
    $region53: #{inconv_forward.4} parent=5 // pred_check
      %p4015 = pneg %p4014
    $region54: #{inconv_forward.4} parent=5 // pred_check_branch
      %4017 = sbr.rel (%p4015) target = $region56
    $region55: #{inconv_forward.4} parent=5 // pred_region
      %s4018 = ssub.s32 %s14, 2
      // Predicated region
      $region57: #{inconv_forward.4} parent=55 // pred_check
        %p4019 = pneg %p153
      $region58: #{inconv_forward.4} parent=55 // pred_check_branch
        %4021 = sbr.rel (%p4019) target = $region60
      $region59: #{inconv_forward.4} parent=55 // pred_region
        %p4022 = scmp.lt.s32.totalorder %s20, 1
        %s4023 = scalar_select %p4022, %s20, 1
        %s4024 = smul.addr %s4023, 43
        %s4025 = smul.addr %s4024, 8
        %s4026 = scalar_lea.vmem %s5, %s4025
      $region60: #{inconv_forward.4} parent=55 // pred_fallthru
        _
      // Predicated region
      $region61: #{inconv_forward.4} parent=55 // pred_check
        %p4027 = pneg %p179
      $region62: #{inconv_forward.4} parent=55 // pred_check_branch
        %4029 = sbr.rel (%p4027) target = $region64
      $region63: #{inconv_forward.4} parent=55 // pred_region
        %p4030 = scmp.lt.s32.totalorder %s20, 1
        %s4031 = scalar_select %p4030, %s20, 1
        %s4032 = scalar_lea.vmem %s6, %s4031
      $region64: #{inconv_forward.4} parent=55 // pred_fallthru
        _
      // Predicated region
      $region65: #{inconv_forward.4} parent=55 // pred_check
        %p4033 = pneg %p205
      $region66: #{inconv_forward.4} parent=55 // pred_check_branch
        %4035 = sbr.rel (%p4033) target = $region68
      $region67: #{inconv_forward.4} parent=55 // pred_region
        %p4036 = scmp.lt.s32.totalorder %s20, 1
        %s4037 = scalar_select %p4036, %s20, 1
        %s4038 = scalar_lea.vmem %s7, %s4037
      $region68: #{inconv_forward.4} parent=55 // pred_fallthru
        _
    $region56: #{inconv_forward.4} parent=5 // pred_fallthru
      _
  $region6: #{inconv_forward.4} parent=0 // loop_footer
    %s18 = sadd.s32 1, %s14
  $region7: #{inconv_forward.4} parent=0 // loop_footer_branch
    %13 = sbr.rel target = $region3
  $region8: #{inconv_forward.4} parent=0 // loop_exit
    _

</llo_original>
